<compile_context>
chip_gen: v7x
topology: tpu7x:2x2x1
jax: 0.10.0
libtpu: 0.0.40
codegen_flags: <defaults>
</compile_context>

<pallas_src>
import functools

import jax
import jax.numpy as jnp
from jax.experimental import pallas as pl
from jax.experimental.pallas import tpu as pltpu

RMS_EPS = 1.1920928955078125e-07  # torch.finfo(torch.float32).eps (nn.RMSNorm default)


# ------------------------- shared math ---------------------------------------------

def _rmsnorm(v):
    # nn.RMSNorm(hidden, elementwise_affine=False): x * rsqrt(mean(x^2) + eps)
    ms = jnp.mean(v * v, axis=-1, keepdims=True)
    return v * jax.lax.rsqrt(ms + RMS_EPS)


# ------------------------- in-kernel building blocks --------------------------------

def _mha(q2, kv2, seq_len, ctx_len, wq_ref, wk_ref, wv_ref, wo_ref,
         bq, bk, bv, bo, num_heads, head_scr):
    """Multi-head attention on flattened (TB*seq_len, H) queries / (TB*ctx_len, H) kv.

    Weights are pre-transposed (H, H) bf16 refs; biases are (1, H) f32 values.
    Head outputs are written into the (TB*seq_len, H) f32 VMEM scratch, then a single
    K=H output projection is issued.
    """
    M, H = q2.shape
    TB = M // seq_len
    hd = H // num_heads
    scale = 1.0 / float(hd) ** 0.5
    cdt = wq_ref.dtype  # bf16 compute dtype for MXU operands

    # Projections on the full row-batch (MXU, f32 accumulate), then one bf16 cast each.
    q = (jnp.dot(q2.astype(cdt), wq_ref[...], preferred_element_type=jnp.float32) + bq).astype(cdt)
    k = (jnp.dot(kv2.astype(cdt), wk_ref[...], preferred_element_type=jnp.float32) + bk).astype(cdt)
    v = (jnp.dot(kv2.astype(cdt), wv_ref[...], preferred_element_type=jnp.float32) + bv).astype(cdt)

    for b in range(TB):                         # static unroll over folded batch elems
        rq = slice(b * seq_len, (b + 1) * seq_len)
        rk = slice(b * ctx_len, (b + 1) * ctx_len)
        for h in range(num_heads):              # static unroll over heads
            cl = slice(h * hd, (h + 1) * hd)
            # scores = q_h @ k_h^T without materializing a transpose
            s = jax.lax.dot_general(q[rq, cl], k[rk, cl], (((1,), (1,)), ((), ())),
                                    preferred_element_type=jnp.float32) * scale
            s = s - jnp.max(s, axis=-1, keepdims=True)
            p = jnp.exp(s)
            p = p * pl.reciprocal(jnp.sum(p, axis=-1, keepdims=True), approx=True)
            oh = jnp.dot(p.astype(cdt), v[rk, cl], preferred_element_type=jnp.float32)
            head_scr[rq, cl] = oh               # (seq_len, hd) slice of the scratch

    heads = head_scr[...].astype(cdt)           # (M, H), one cast
    return jnp.dot(heads, wo_ref[...], preferred_element_type=jnp.float32) + bo


def _ffn(xn, w1_ref, w2_ref, b1, b2, chunk):
    """Linear(H,4H) -> SiLU -> Linear(4H,H), hidden dim processed in `chunk` slabs."""
    M, H = xn.shape
    F = w1_ref.shape[1]
    cdt = w1_ref.dtype
    xc = xn.astype(cdt)
    acc = jnp.zeros((M, H), jnp.float32)
    for c0 in range(0, F, chunk):
        cl = slice(c0, c0 + chunk)
        h1 = jnp.dot(xc, w1_ref[:, cl], preferred_element_type=jnp.float32) + b1[:, cl]
        h1 = h1 * jax.nn.sigmoid(h1)            # SiLU in f32
        acc = acc + jnp.dot(h1.astype(cdt), w2_ref[cl, :], preferred_element_type=jnp.float32)
    return acc + b2


# -------------------------------------- kernel --------------------------------------

def _block_kernel(num_heads, seq_len, ctx_len, ffn_chunk,
                  x_ref, ctx_ref,
                  sa_wq, sa_wk, sa_wv, sa_wo,
                  ca_wq, ca_wk, ca_wv, ca_wo,
                  ffn_w1, ffn_w2,
                  bias_h, bias_f,
                  o_ref, head_scr):
    x = x_ref[...].astype(jnp.float32)      # (TB*S, H)
    ctx = ctx_ref[...].astype(jnp.float32)  # (TB*L, H)

    # self-attention sub-block (pre-norm, residual)
    xn = _rmsnorm(x)
    x = x + _mha(xn, xn, seq_len, seq_len, sa_wq, sa_wk, sa_wv, sa_wo,
                 bias_h[0:1, :], bias_h[1:2, :], bias_h[2:3, :], bias_h[3:4, :],
                 num_heads, head_scr)

    # cross-attention sub-block (context always provided here)
    xn = _rmsnorm(x)
    x = x + _mha(xn, ctx, seq_len, ctx_len, ca_wq, ca_wk, ca_wv, ca_wo,
                 bias_h[4:5, :], bias_h[5:6, :], bias_h[6:7, :], bias_h[7:8, :],
                 num_heads, head_scr)

    # FFN sub-block
    xn = _rmsnorm(x)
    x = x + _ffn(xn, ffn_w1, ffn_w2, bias_f[...], bias_h[8:9, :], ffn_chunk)

    o_ref[...] = x.astype(o_ref.dtype)


# ----------------------------------- helpers ----------------------------------------

def _pick_batch_tile(B, S, max_rows=256):
    """Largest divisor of B with tile*S <= max_rows (fold batch elems into one grid step)."""
    tb = max(1, min(B, max(1, max_rows // max(S, 1))))
    while B % tb:
        tb -= 1
    return tb


def _pick_ffn_chunk(F, target=512):
    if F <= target:
        return F
    for c in range(target, 0, -1):
        if F % c == 0:
            return c
    return F


def _vmem_limit_bytes():
    cap = 128 * 1024 * 1024
    try:
        cap = int(pltpu.get_tpu_info().vmem_capacity_bytes)
    except Exception:
        pass
    # ~16 MiB headroom for Mosaic internal scratch; 112 MiB on v5e/v6e, ~48 MiB on v7x.
    return int(max(32 * 1024 * 1024, min(cap - 16 * 1024 * 1024, 112 * 1024 * 1024)))


def prepare_weights(params, H, compute_dtype=jnp.bfloat16):
    """Split / transpose PyTorch-layout weights once on the host side.

    Matmul weights are cast to the compute dtype (bf16 MXU operands); biases stay f32
    and are packed into two arrays: (9, H) [sa q,k,v,o | ca q,k,v,o | ffn b2] and (1, 4H).
    """
    def split_attn(prefix):
        in_w = params[f"{prefix}_in_w"]            # (3H, H)
        out_w = params[f"{prefix}_out_w"]          # (H, H)
        return [
            in_w[:H].T.astype(compute_dtype),      # Wq^T  (H, H)
            in_w[H:2 * H].T.astype(compute_dtype), # Wk^T
            in_w[2 * H:].T.astype(compute_dtype),  # Wv^T
            out_w.T.astype(compute_dtype),         # Wo^T
        ]

    mats = (split_attn("sa") + split_attn("ca")
            + [params["ffn_w1"].T.astype(compute_dtype),    # (H, 4H)
               params["ffn_w2"].T.astype(compute_dtype)])   # (4H, H)

    sa_b = params["sa_in_b"].reshape(-1)
    ca_b = params["ca_in_b"].reshape(-1)
    bias_h = jnp.stack([
        sa_b[:H], sa_b[H:2 * H], sa_b[2 * H:], params["sa_out_b"].reshape(-1),
        ca_b[:H], ca_b[H:2 * H], ca_b[2 * H:], params["ca_out_b"].reshape(-1),
        params["ffn_b2"].reshape(-1),
    ], axis=0).astype(jnp.float32)                           # (9, H)
    bias_f = params["ffn_b1"].reshape(1, -1).astype(jnp.float32)  # (1, 4H)
    return mats + [bias_h, bias_f]


# ----------------------------------- wrapper -----------------------------------------

def transformer_block_pallas(x, context, weights, num_heads):
    B, S, H = x.shape
    L = context.shape[1]
    assert H % num_heads == 0, "hidden_size must be divisible by num_heads"

    TB = _pick_batch_tile(B, S)
    ffn_chunk = _pick_ffn_chunk(int(weights[8].shape[1]))

    # Flatten to 2-D so the kernel works on lane-dense (rows, H) slabs with no reshapes.
    x2 = x.reshape(B * S, H)
    ctx2 = context.reshape(B * L, H)

    kernel = functools.partial(_block_kernel, num_heads, S, L, ffn_chunk)
    grid = (B // TB,)

    x_spec = pl.BlockSpec((TB * S, H), lambda b: (b, 0))
    ctx_spec = pl.BlockSpec((TB * L, H), lambda b: (b, 0))
    out_spec = pl.BlockSpec((TB * S, H), lambda b: (b, 0))

    # Advisory cost estimate (projections + score/value matmuls + FFN), totals over B.
    F = int(weights[8].shape[1])
    f_sa = 4 * 2 * S * H * H + 2 * (2 * S * S * H)
    f_ca = 2 * (2 * S * H * H) + 2 * (2 * L * H * H) + 2 * (2 * S * L * H)
    f_ffn = 2 * (2 * S * H * F)
    flops = int(B * (f_sa + f_ca + f_ffn))
    transcendentals = int(B * (num_heads * S * S + num_heads * S * L + S * F + 3 * S))
    bytes_accessed = int((x.size + context.size + B * S * H) * 4
                         + sum(int(w.size) * w.dtype.itemsize for w in weights))

    def run(single_buffer_weights):
        w_specs = []
        for w in weights:
            nd = w.ndim
            idx = lambda b, _nd=nd: (0,) * _nd
            if single_buffer_weights:
                # Constant index map over the grid -> single-buffer (halves weight VMEM).
                w_specs.append(pl.BlockSpec(w.shape, idx, pipeline_mode=pl.Buffered(1)))
            else:
                w_specs.append(pl.BlockSpec(w.shape, idx))

        fn = pl.pallas_call(
            kernel,
            out_shape=jax.ShapeDtypeStruct((B * S, H), x.dtype),
            grid=grid,
            in_specs=[x_spec, ctx_spec] + w_specs,
            out_specs=out_spec,
            scratch_shapes=[pltpu.VMEM((TB * S, H), jnp.float32)],  # head-output scratch
            compiler_params=pltpu.CompilerParams(
                dimension_semantics=("parallel",),
                vmem_limit_bytes=_vmem_limit_bytes(),
            ),
            cost_estimate=pl.CostEstimate(
                flops=flops, transcendentals=transcendentals,
                bytes_accessed=bytes_accessed),
        )
        return fn(x2, ctx2, *weights)

    try:
        out2 = run(True)
        out2.block_until_ready()
    except Exception:
        # pl.Buffered(1) not supported by this JAX/Mosaic version: fall back to the
        # default double-buffered weight specs (correctness is unaffected).
        out2 = run(False)
    return out2.reshape(B, S, H)


# ------------------------------- pure-JAX reference ----------------------------------

def transformer_block_ref(x, context, weights, num_heads):
    (sa_wq, sa_wk, sa_wv, sa_wo, ca_wq, ca_wk, ca_wv, ca_wo,
     ffn_w1, ffn_w2, bias_h, bias_f) = weights

    def mha(q_in, kv_in, wq, wk, wv, wo, bq, bk, bv, bo):
        _, H = q_in.shape
        hd = H // num_heads
        scale = 1.0 / float(hd) ** 0.5
        cdt = wq.dtype
        q = (jnp.dot(q_in.astype(cdt), wq, preferred_element_type=jnp.float32) + bq).astype(cdt)
        k = (jnp.dot(kv_in.astype(cdt), wk, preferred_element_type=jnp.float32) + bk).astype(cdt)
        v = (jnp.dot(kv_in.astype(cdt), wv, preferred_element_type=jnp.float32) + bv).astype(cdt)
        outs = []
        for h in range(num_heads):
            cl = slice(h * hd, (h + 1) * hd)
            s = jnp.dot(q[:, cl], k[:, cl].T, preferred_element_type=jnp.float32) * scale
            s = s - jnp.max(s, axis=-1, keepdims=True)
            p = jnp.exp(s)
            p = p / jnp.sum(p, axis=-1, keepdims=True)
            outs.append(jnp.dot(p.astype(cdt), v[:, cl], preferred_element_type=jnp.float32))
        heads = jnp.concatenate(outs, axis=-1).astype(cdt)
        return jnp.dot(heads, wo, preferred_element_type=jnp.float32) + bo

    def ffn(xn):
        cdt = ffn_w1.dtype
        h1 = jnp.dot(xn.astype(cdt), ffn_w1, preferred_element_type=jnp.float32) + bias_f
        h1 = h1 * jax.nn.sigmoid(h1)
        return jnp.dot(h1.astype(cdt), ffn_w2, preferred_element_type=jnp.float32) + bias_h[8:9]

    def one(xb, cb):
        xn = _rmsnorm(xb)
        xb = xb + mha(xn, xn, sa_wq, sa_wk, sa_wv, sa_wo,
                      bias_h[0:1], bias_h[1:2], bias_h[2:3], bias_h[3:4])
        xn = _rmsnorm(xb)
        xb = xb + mha(xn, cb, ca_wq, ca_wk, ca_wv, ca_wo,
                      bias_h[4:5], bias_h[5:6], bias_h[6:7], bias_h[7:8])
        xn = _rmsnorm(xb)
        xb = xb + ffn(xn)
        return xb

    return jax.vmap(one)(x.astype(jnp.float32), context.astype(jnp.float32))


# ---------------------------------- parameters ---------------------------------------

def init_params(key, H):
    ks = jax.random.split(key, 12)

    def w(k, shape, scale=0.05):
        return (scale * jax.random.normal(k, shape)).astype(jnp.float32)

    return {
        "sa_in_w":  w(ks[0], (3 * H, H)),
        "sa_in_b":  w(ks[1], (3 * H,)),
        "sa_out_w": w(ks[2], (H, H)),
        "sa_out_b": w(ks[3], (H,)),
        "ca_in_w":  w(ks[4], (3 * H, H)),
        "ca_in_b":  w(ks[5], (3 * H,)),
        "ca_out_w": w(ks[6], (H, H)),
        "ca_out_b": w(ks[7], (H,)),
        "ffn_w1":   w(ks[8], (4 * H, H)),
        "ffn_b1":   w(ks[9], (4 * H,)),
        "ffn_w2":   w(ks[10], (H, 4 * H)),
        "ffn_b2":   w(ks[11], (H,)),
    }


# -------------------------------------- main -----------------------------------------

if __name__ == "__main__":
    B, S, L, H, NUM_HEADS = 2, 8, 8, 32, 4

    key = jax.random.PRNGKey(0)
    kx, kc, kp = jax.random.split(key, 3)
    x = jax.random.normal(kx, (B, S, H), dtype=jnp.float32)
    context = jax.random.normal(kc, (B, L, H), dtype=jnp.float32)
    params = init_params(kp, H)

    weights = prepare_weights(params, H, compute_dtype=jnp.bfloat16)

    out = jax.block_until_ready(transformer_block_pallas(x, context, weights, NUM_HEADS))
    assert out.shape == (B, S, H)

    # Same-precision (bf16 weights, f32 accumulation) reference; kernel differs only by
    # the approximate softmax reciprocal.
    ref = jax.block_until_ready(transformer_block_ref(x, context, weights, NUM_HEADS))
    err = float(jnp.max(jnp.abs(out - ref)))
    assert jnp.allclose(out, ref, atol=5e-3, rtol=5e-3), f"mismatch vs bf16 ref, max err {err}"

    # Full-f32 semantics check (matches the PyTorch eval-mode module up to bf16 weight cast).
    weights_f32 = prepare_weights(params, H, compute_dtype=jnp.float32)
    ref_f32 = jax.block_until_ready(transformer_block_ref(x, context, weights_f32, NUM_HEADS))
    err32 = float(jnp.max(jnp.abs(out - ref_f32)))
    assert jnp.allclose(out, ref_f32, atol=3e-2, rtol=3e-2), f"mismatch vs f32 ref, max err {err32}"

    print("KERNEL_OK")
</pallas_src>

<mosaic_0001>
module attributes {stable_mosaic.version = 11 : i64} {
  func.func @_block_kernel(%arg0: i32, %arg1: memref<16x32xf32, #tpu.memory_space<vmem>>, %arg2: memref<16x32xf32, #tpu.memory_space<vmem>>, %arg3: memref<32x32xbf16, #tpu.memory_space<vmem>>, %arg4: memref<32x32xbf16, #tpu.memory_space<vmem>>, %arg5: memref<32x32xbf16, #tpu.memory_space<vmem>>, %arg6: memref<32x32xbf16, #tpu.memory_space<vmem>>, %arg7: memref<32x32xbf16, #tpu.memory_space<vmem>>, %arg8: memref<32x32xbf16, #tpu.memory_space<vmem>>, %arg9: memref<32x32xbf16, #tpu.memory_space<vmem>>, %arg10: memref<32x32xbf16, #tpu.memory_space<vmem>>, %arg11: memref<32x128xbf16, #tpu.memory_space<vmem>>, %arg12: memref<128x32xbf16, #tpu.memory_space<vmem>>, %arg13: memref<9x32xf32, #tpu.memory_space<vmem>>, %arg14: memref<1x128xf32, #tpu.memory_space<vmem>>, %arg15: memref<16x32xf32, #tpu.memory_space<vmem>>, %arg16: memref<16x32xf32, #tpu.memory_space<vmem>>) attributes {dimension_semantics = [#tpu.dimension_semantics<parallel>], iteration_bounds = array<i64: 1>, scalar_prefetch = 0 : i64, scratch_operands = 1 : i64, tpu.core_type = #tpu.core_type<tc>, window_params = [{transform_indices = @transform_0, window_bounds = array<i64: 16, 32>}, {transform_indices = @transform_1, window_bounds = array<i64: 16, 32>}, {pipeline_mode = #tpu.pipeline_mode<synchronous>, transform_indices = @transform_2, window_bounds = array<i64: 32, 32>}, {pipeline_mode = #tpu.pipeline_mode<synchronous>, transform_indices = @transform_3, window_bounds = array<i64: 32, 32>}, {pipeline_mode = #tpu.pipeline_mode<synchronous>, transform_indices = @transform_4, window_bounds = array<i64: 32, 32>}, {pipeline_mode = #tpu.pipeline_mode<synchronous>, transform_indices = @transform_5, window_bounds = array<i64: 32, 32>}, {pipeline_mode = #tpu.pipeline_mode<synchronous>, transform_indices = @transform_6, window_bounds = array<i64: 32, 32>}, {pipeline_mode = #tpu.pipeline_mode<synchronous>, transform_indices = @transform_7, window_bounds = array<i64: 32, 32>}, {pipeline_mode = #tpu.pipeline_mode<synchronous>, transform_indices = @transform_8, window_bounds = array<i64: 32, 32>}, {pipeline_mode = #tpu.pipeline_mode<synchronous>, transform_indices = @transform_9, window_bounds = array<i64: 32, 32>}, {pipeline_mode = #tpu.pipeline_mode<synchronous>, transform_indices = @transform_10, window_bounds = array<i64: 32, 128>}, {pipeline_mode = #tpu.pipeline_mode<synchronous>, transform_indices = @transform_11, window_bounds = array<i64: 128, 32>}, {pipeline_mode = #tpu.pipeline_mode<synchronous>, transform_indices = @transform_12, window_bounds = array<i64: 9, 32>}, {pipeline_mode = #tpu.pipeline_mode<synchronous>, transform_indices = @transform_13, window_bounds = array<i64: 1, 128>}, {transform_indices = @transform_14, window_bounds = array<i64: 16, 32>}]} {
    %c0 = arith.constant 0 : index
    %c0_0 = arith.constant 0 : index
    %0 = vector.load %arg1[%c0, %c0_0] : memref<16x32xf32, #tpu.memory_space<vmem>>, vector<16x32xf32>
    %c0_1 = arith.constant 0 : index
    %c0_2 = arith.constant 0 : index
    %1 = vector.load %arg2[%c0_1, %c0_2] : memref<16x32xf32, #tpu.memory_space<vmem>>, vector<16x32xf32>
    %2 = arith.mulf %0, %0 : vector<16x32xf32>
    %cst = arith.constant dense<0.000000e+00> : vector<16xf32>
    %3 = vector.multi_reduction <add>, %2, %cst [1] : vector<16x32xf32> to vector<16xf32>
    %4 = vector.shape_cast %3 : vector<16xf32> to vector<16x1xf32>
    %cst_3 = arith.constant 3.200000e+01 : f32
    %5 = vector.broadcast %cst_3 : f32 to vector<16x1xf32>
    %6 = arith.divf %4, %5 : vector<16x1xf32>
    %cst_4 = arith.constant 1.1920929E-7 : f32
    %7 = vector.broadcast %cst_4 : f32 to vector<16x1xf32>
    %8 = arith.addf %6, %7 : vector<16x1xf32>
    %9 = math.rsqrt %8 : vector<16x1xf32>
    %10 = vector.broadcast %9 : vector<16x1xf32> to vector<16x32xf32>
    %11 = arith.mulf %0, %10 : vector<16x32xf32>
    %c0_5 = arith.constant 0 : index
    %c0_6 = arith.constant 0 : index
    %12 = vector.load %arg13[%c0_5, %c0_6] : memref<9x32xf32, #tpu.memory_space<vmem>>, vector<1x32xf32>
    %c1 = arith.constant 1 : index
    %c0_7 = arith.constant 0 : index
    %13 = vector.load %arg13[%c1, %c0_7] : memref<9x32xf32, #tpu.memory_space<vmem>>, vector<1x32xf32>
    %c2 = arith.constant 2 : index
    %c0_8 = arith.constant 0 : index
    %14 = vector.load %arg13[%c2, %c0_8] : memref<9x32xf32, #tpu.memory_space<vmem>>, vector<1x32xf32>
    %c3 = arith.constant 3 : index
    %c0_9 = arith.constant 0 : index
    %15 = vector.load %arg13[%c3, %c0_9] : memref<9x32xf32, #tpu.memory_space<vmem>>, vector<1x32xf32>
    %16 = arith.truncf %11 : vector<16x32xf32> to vector<16x32xbf16>
    %c0_10 = arith.constant 0 : index
    %c0_11 = arith.constant 0 : index
    %17 = vector.load %arg3[%c0_10, %c0_11] : memref<32x32xbf16, #tpu.memory_space<vmem>>, vector<32x32xbf16>
    %cst_12 = arith.constant dense<0.000000e+00> : vector<16x32xf32>
    %18 = tpu.matmul %16, %17, %cst_12 {dimension_numbers = #tpu.dot_dimension_numbers<[1], [0], [0], [1], [0, 0, 1, 1], [], []>} : vector<16x32xbf16>, vector<32x32xbf16>, vector<16x32xf32> -> vector<16x32xf32>
    %19 = vector.broadcast %12 : vector<1x32xf32> to vector<16x32xf32>
    %20 = arith.addf %18, %19 : vector<16x32xf32>
    %21 = arith.truncf %20 : vector<16x32xf32> to vector<16x32xbf16>
    %22 = arith.truncf %11 : vector<16x32xf32> to vector<16x32xbf16>
    %c0_13 = arith.constant 0 : index
    %c0_14 = arith.constant 0 : index
    %23 = vector.load %arg4[%c0_13, %c0_14] : memref<32x32xbf16, #tpu.memory_space<vmem>>, vector<32x32xbf16>
    %cst_15 = arith.constant dense<0.000000e+00> : vector<16x32xf32>
    %24 = tpu.matmul %22, %23, %cst_15 {dimension_numbers = #tpu.dot_dimension_numbers<[1], [0], [0], [1], [0, 0, 1, 1], [], []>} : vector<16x32xbf16>, vector<32x32xbf16>, vector<16x32xf32> -> vector<16x32xf32>
    %25 = vector.broadcast %13 : vector<1x32xf32> to vector<16x32xf32>
    %26 = arith.addf %24, %25 : vector<16x32xf32>
    %27 = arith.truncf %26 : vector<16x32xf32> to vector<16x32xbf16>
    %28 = arith.truncf %11 : vector<16x32xf32> to vector<16x32xbf16>
    %c0_16 = arith.constant 0 : index
    %c0_17 = arith.constant 0 : index
    %29 = vector.load %arg5[%c0_16, %c0_17] : memref<32x32xbf16, #tpu.memory_space<vmem>>, vector<32x32xbf16>
    %cst_18 = arith.constant dense<0.000000e+00> : vector<16x32xf32>
    %30 = tpu.matmul %28, %29, %cst_18 {dimension_numbers = #tpu.dot_dimension_numbers<[1], [0], [0], [1], [0, 0, 1, 1], [], []>} : vector<16x32xbf16>, vector<32x32xbf16>, vector<16x32xf32> -> vector<16x32xf32>
    %31 = vector.broadcast %14 : vector<1x32xf32> to vector<16x32xf32>
    %32 = arith.addf %30, %31 : vector<16x32xf32>
    %33 = arith.truncf %32 : vector<16x32xf32> to vector<16x32xbf16>
    %34 = vector.extract_strided_slice %21 {offsets = [0, 0], sizes = [8, 8], strides = [1, 1]} : vector<16x32xbf16> to vector<8x8xbf16>
    %35 = vector.extract_strided_slice %27 {offsets = [0, 0], sizes = [8, 8], strides = [1, 1]} : vector<16x32xbf16> to vector<8x8xbf16>
    %cst_19 = arith.constant dense<0.000000e+00> : vector<8x8xf32>
    %36 = tpu.matmul %34, %35, %cst_19 {dimension_numbers = #tpu.dot_dimension_numbers<[1], [1], [0], [0], [0, 0, 1, 0], [], []>} : vector<8x8xbf16>, vector<8x8xbf16>, vector<8x8xf32> -> vector<8x8xf32>
    %cst_20 = arith.constant 0.353553385 : f32
    %37 = vector.broadcast %cst_20 : f32 to vector<8x8xf32>
    %38 = arith.mulf %36, %37 : vector<8x8xf32>
    %cst_21 = arith.constant dense<0xFF800000> : vector<8xf32>
    %39 = vector.multi_reduction <maximumf>, %38, %cst_21 [1] : vector<8x8xf32> to vector<8xf32>
    %40 = vector.shape_cast %39 : vector<8xf32> to vector<8x1xf32>
    %41 = vector.broadcast %40 : vector<8x1xf32> to vector<8x8xf32>
    %42 = arith.subf %38, %41 : vector<8x8xf32>
    %43 = math.exp %42 : vector<8x8xf32>
    %cst_22 = arith.constant dense<0.000000e+00> : vector<8xf32>
    %44 = vector.multi_reduction <add>, %43, %cst_22 [1] : vector<8x8xf32> to vector<8xf32>
    %45 = vector.shape_cast %44 : vector<8xf32> to vector<8x1xf32>
    %46 = tpu.reciprocal %45 {approx = true} : vector<8x1xf32> -> vector<8x1xf32>
    %47 = vector.broadcast %46 : vector<8x1xf32> to vector<8x8xf32>
    %48 = arith.mulf %43, %47 : vector<8x8xf32>
    %49 = arith.truncf %48 : vector<8x8xf32> to vector<8x8xbf16>
    %50 = vector.extract_strided_slice %33 {offsets = [0, 0], sizes = [8, 8], strides = [1, 1]} : vector<16x32xbf16> to vector<8x8xbf16>
    %cst_23 = arith.constant dense<0.000000e+00> : vector<8x8xf32>
    %51 = tpu.matmul %49, %50, %cst_23 {dimension_numbers = #tpu.dot_dimension_numbers<[1], [0], [0], [1], [0, 0, 1, 1], [], []>} : vector<8x8xbf16>, vector<8x8xbf16>, vector<8x8xf32> -> vector<8x8xf32>
    %c0_24 = arith.constant 0 : index
    %c0_25 = arith.constant 0 : index
    %52 = vector.load %arg16[%c0_24, %c0_25] : memref<16x32xf32, #tpu.memory_space<vmem>>, vector<8x8xf32>
    tpu.vector_store %arg16[%c0_24, %c0_25], %51 {strides = array<i32>} : memref<16x32xf32, #tpu.memory_space<vmem>>, vector<8x8xf32>,
    %53 = vector.extract_strided_slice %21 {offsets = [0, 8], sizes = [8, 8], strides = [1, 1]} : vector<16x32xbf16> to vector<8x8xbf16>
    %54 = vector.extract_strided_slice %27 {offsets = [0, 8], sizes = [8, 8], strides = [1, 1]} : vector<16x32xbf16> to vector<8x8xbf16>
    %cst_26 = arith.constant dense<0.000000e+00> : vector<8x8xf32>
    %55 = tpu.matmul %53, %54, %cst_26 {dimension_numbers = #tpu.dot_dimension_numbers<[1], [1], [0], [0], [0, 0, 1, 0], [], []>} : vector<8x8xbf16>, vector<8x8xbf16>, vector<8x8xf32> -> vector<8x8xf32>
    %cst_27 = arith.constant 0.353553385 : f32
    %56 = vector.broadcast %cst_27 : f32 to vector<8x8xf32>
    %57 = arith.mulf %55, %56 : vector<8x8xf32>
    %cst_28 = arith.constant dense<0xFF800000> : vector<8xf32>
    %58 = vector.multi_reduction <maximumf>, %57, %cst_28 [1] : vector<8x8xf32> to vector<8xf32>
    %59 = vector.shape_cast %58 : vector<8xf32> to vector<8x1xf32>
    %60 = vector.broadcast %59 : vector<8x1xf32> to vector<8x8xf32>
    %61 = arith.subf %57, %60 : vector<8x8xf32>
    %62 = math.exp %61 : vector<8x8xf32>
    %cst_29 = arith.constant dense<0.000000e+00> : vector<8xf32>
    %63 = vector.multi_reduction <add>, %62, %cst_29 [1] : vector<8x8xf32> to vector<8xf32>
    %64 = vector.shape_cast %63 : vector<8xf32> to vector<8x1xf32>
    %65 = tpu.reciprocal %64 {approx = true} : vector<8x1xf32> -> vector<8x1xf32>
    %66 = vector.broadcast %65 : vector<8x1xf32> to vector<8x8xf32>
    %67 = arith.mulf %62, %66 : vector<8x8xf32>
    %68 = arith.truncf %67 : vector<8x8xf32> to vector<8x8xbf16>
    %69 = vector.extract_strided_slice %33 {offsets = [0, 8], sizes = [8, 8], strides = [1, 1]} : vector<16x32xbf16> to vector<8x8xbf16>
    %cst_30 = arith.constant dense<0.000000e+00> : vector<8x8xf32>
    %70 = tpu.matmul %68, %69, %cst_30 {dimension_numbers = #tpu.dot_dimension_numbers<[1], [0], [0], [1], [0, 0, 1, 1], [], []>} : vector<8x8xbf16>, vector<8x8xbf16>, vector<8x8xf32> -> vector<8x8xf32>
    %c0_31 = arith.constant 0 : index
    %c8 = arith.constant 8 : index
    %71 = vector.load %arg16[%c0_31, %c8] : memref<16x32xf32, #tpu.memory_space<vmem>>, vector<8x8xf32>
    tpu.vector_store %arg16[%c0_31, %c8], %70 {strides = array<i32>} : memref<16x32xf32, #tpu.memory_space<vmem>>, vector<8x8xf32>,
    %72 = vector.extract_strided_slice %21 {offsets = [0, 16], sizes = [8, 8], strides = [1, 1]} : vector<16x32xbf16> to vector<8x8xbf16>
    %73 = vector.extract_strided_slice %27 {offsets = [0, 16], sizes = [8, 8], strides = [1, 1]} : vector<16x32xbf16> to vector<8x8xbf16>
    %cst_32 = arith.constant dense<0.000000e+00> : vector<8x8xf32>
    %74 = tpu.matmul %72, %73, %cst_32 {dimension_numbers = #tpu.dot_dimension_numbers<[1], [1], [0], [0], [0, 0, 1, 0], [], []>} : vector<8x8xbf16>, vector<8x8xbf16>, vector<8x8xf32> -> vector<8x8xf32>
    %cst_33 = arith.constant 0.353553385 : f32
    %75 = vector.broadcast %cst_33 : f32 to vector<8x8xf32>
    %76 = arith.mulf %74, %75 : vector<8x8xf32>
    %cst_34 = arith.constant dense<0xFF800000> : vector<8xf32>
    %77 = vector.multi_reduction <maximumf>, %76, %cst_34 [1] : vector<8x8xf32> to vector<8xf32>
    %78 = vector.shape_cast %77 : vector<8xf32> to vector<8x1xf32>
    %79 = vector.broadcast %78 : vector<8x1xf32> to vector<8x8xf32>
    %80 = arith.subf %76, %79 : vector<8x8xf32>
    %81 = math.exp %80 : vector<8x8xf32>
    %cst_35 = arith.constant dense<0.000000e+00> : vector<8xf32>
    %82 = vector.multi_reduction <add>, %81, %cst_35 [1] : vector<8x8xf32> to vector<8xf32>
    %83 = vector.shape_cast %82 : vector<8xf32> to vector<8x1xf32>
    %84 = tpu.reciprocal %83 {approx = true} : vector<8x1xf32> -> vector<8x1xf32>
    %85 = vector.broadcast %84 : vector<8x1xf32> to vector<8x8xf32>
    %86 = arith.mulf %81, %85 : vector<8x8xf32>
    %87 = arith.truncf %86 : vector<8x8xf32> to vector<8x8xbf16>
    %88 = vector.extract_strided_slice %33 {offsets = [0, 16], sizes = [8, 8], strides = [1, 1]} : vector<16x32xbf16> to vector<8x8xbf16>
    %cst_36 = arith.constant dense<0.000000e+00> : vector<8x8xf32>
    %89 = tpu.matmul %87, %88, %cst_36 {dimension_numbers = #tpu.dot_dimension_numbers<[1], [0], [0], [1], [0, 0, 1, 1], [], []>} : vector<8x8xbf16>, vector<8x8xbf16>, vector<8x8xf32> -> vector<8x8xf32>
    %c0_37 = arith.constant 0 : index
    %c16 = arith.constant 16 : index
    %90 = vector.load %arg16[%c0_37, %c16] : memref<16x32xf32, #tpu.memory_space<vmem>>, vector<8x8xf32>
    tpu.vector_store %arg16[%c0_37, %c16], %89 {strides = array<i32>} : memref<16x32xf32, #tpu.memory_space<vmem>>, vector<8x8xf32>,
    %91 = vector.extract_strided_slice %21 {offsets = [0, 24], sizes = [8, 8], strides = [1, 1]} : vector<16x32xbf16> to vector<8x8xbf16>
    %92 = vector.extract_strided_slice %27 {offsets = [0, 24], sizes = [8, 8], strides = [1, 1]} : vector<16x32xbf16> to vector<8x8xbf16>
    %cst_38 = arith.constant dense<0.000000e+00> : vector<8x8xf32>
    %93 = tpu.matmul %91, %92, %cst_38 {dimension_numbers = #tpu.dot_dimension_numbers<[1], [1], [0], [0], [0, 0, 1, 0], [], []>} : vector<8x8xbf16>, vector<8x8xbf16>, vector<8x8xf32> -> vector<8x8xf32>
    %cst_39 = arith.constant 0.353553385 : f32
    %94 = vector.broadcast %cst_39 : f32 to vector<8x8xf32>
    %95 = arith.mulf %93, %94 : vector<8x8xf32>
    %cst_40 = arith.constant dense<0xFF800000> : vector<8xf32>
    %96 = vector.multi_reduction <maximumf>, %95, %cst_40 [1] : vector<8x8xf32> to vector<8xf32>
    %97 = vector.shape_cast %96 : vector<8xf32> to vector<8x1xf32>
    %98 = vector.broadcast %97 : vector<8x1xf32> to vector<8x8xf32>
    %99 = arith.subf %95, %98 : vector<8x8xf32>
    %100 = math.exp %99 : vector<8x8xf32>
    %cst_41 = arith.constant dense<0.000000e+00> : vector<8xf32>
    %101 = vector.multi_reduction <add>, %100, %cst_41 [1] : vector<8x8xf32> to vector<8xf32>
    %102 = vector.shape_cast %101 : vector<8xf32> to vector<8x1xf32>
    %103 = tpu.reciprocal %102 {approx = true} : vector<8x1xf32> -> vector<8x1xf32>
    %104 = vector.broadcast %103 : vector<8x1xf32> to vector<8x8xf32>
    %105 = arith.mulf %100, %104 : vector<8x8xf32>
    %106 = arith.truncf %105 : vector<8x8xf32> to vector<8x8xbf16>
    %107 = vector.extract_strided_slice %33 {offsets = [0, 24], sizes = [8, 8], strides = [1, 1]} : vector<16x32xbf16> to vector<8x8xbf16>
    %cst_42 = arith.constant dense<0.000000e+00> : vector<8x8xf32>
    %108 = tpu.matmul %106, %107, %cst_42 {dimension_numbers = #tpu.dot_dimension_numbers<[1], [0], [0], [1], [0, 0, 1, 1], [], []>} : vector<8x8xbf16>, vector<8x8xbf16>, vector<8x8xf32> -> vector<8x8xf32>
    %c0_43 = arith.constant 0 : index
    %c24 = arith.constant 24 : index
    %109 = vector.load %arg16[%c0_43, %c24] : memref<16x32xf32, #tpu.memory_space<vmem>>, vector<8x8xf32>
    tpu.vector_store %arg16[%c0_43, %c24], %108 {strides = array<i32>} : memref<16x32xf32, #tpu.memory_space<vmem>>, vector<8x8xf32>,
    %110 = vector.extract_strided_slice %21 {offsets = [8, 0], sizes = [8, 8], strides = [1, 1]} : vector<16x32xbf16> to vector<8x8xbf16>
    %111 = vector.extract_strided_slice %27 {offsets = [8, 0], sizes = [8, 8], strides = [1, 1]} : vector<16x32xbf16> to vector<8x8xbf16>
    %cst_44 = arith.constant dense<0.000000e+00> : vector<8x8xf32>
    %112 = tpu.matmul %110, %111, %cst_44 {dimension_numbers = #tpu.dot_dimension_numbers<[1], [1], [0], [0], [0, 0, 1, 0], [], []>} : vector<8x8xbf16>, vector<8x8xbf16>, vector<8x8xf32> -> vector<8x8xf32>
    %cst_45 = arith.constant 0.353553385 : f32
    %113 = vector.broadcast %cst_45 : f32 to vector<8x8xf32>
    %114 = arith.mulf %112, %113 : vector<8x8xf32>
    %cst_46 = arith.constant dense<0xFF800000> : vector<8xf32>
    %115 = vector.multi_reduction <maximumf>, %114, %cst_46 [1] : vector<8x8xf32> to vector<8xf32>
    %116 = vector.shape_cast %115 : vector<8xf32> to vector<8x1xf32>
    %117 = vector.broadcast %116 : vector<8x1xf32> to vector<8x8xf32>
    %118 = arith.subf %114, %117 : vector<8x8xf32>
    %119 = math.exp %118 : vector<8x8xf32>
    %cst_47 = arith.constant dense<0.000000e+00> : vector<8xf32>
    %120 = vector.multi_reduction <add>, %119, %cst_47 [1] : vector<8x8xf32> to vector<8xf32>
    %121 = vector.shape_cast %120 : vector<8xf32> to vector<8x1xf32>
    %122 = tpu.reciprocal %121 {approx = true} : vector<8x1xf32> -> vector<8x1xf32>
    %123 = vector.broadcast %122 : vector<8x1xf32> to vector<8x8xf32>
    %124 = arith.mulf %119, %123 : vector<8x8xf32>
    %125 = arith.truncf %124 : vector<8x8xf32> to vector<8x8xbf16>
    %126 = vector.extract_strided_slice %33 {offsets = [8, 0], sizes = [8, 8], strides = [1, 1]} : vector<16x32xbf16> to vector<8x8xbf16>
    %cst_48 = arith.constant dense<0.000000e+00> : vector<8x8xf32>
    %127 = tpu.matmul %125, %126, %cst_48 {dimension_numbers = #tpu.dot_dimension_numbers<[1], [0], [0], [1], [0, 0, 1, 1], [], []>} : vector<8x8xbf16>, vector<8x8xbf16>, vector<8x8xf32> -> vector<8x8xf32>
    %c8_49 = arith.constant 8 : index
    %c0_50 = arith.constant 0 : index
    %128 = vector.load %arg16[%c8_49, %c0_50] : memref<16x32xf32, #tpu.memory_space<vmem>>, vector<8x8xf32>
    tpu.vector_store %arg16[%c8_49, %c0_50], %127 {strides = array<i32>} : memref<16x32xf32, #tpu.memory_space<vmem>>, vector<8x8xf32>,
    %129 = vector.extract_strided_slice %21 {offsets = [8, 8], sizes = [8, 8], strides = [1, 1]} : vector<16x32xbf16> to vector<8x8xbf16>
    %130 = vector.extract_strided_slice %27 {offsets = [8, 8], sizes = [8, 8], strides = [1, 1]} : vector<16x32xbf16> to vector<8x8xbf16>
    %cst_51 = arith.constant dense<0.000000e+00> : vector<8x8xf32>
    %131 = tpu.matmul %129, %130, %cst_51 {dimension_numbers = #tpu.dot_dimension_numbers<[1], [1], [0], [0], [0, 0, 1, 0], [], []>} : vector<8x8xbf16>, vector<8x8xbf16>, vector<8x8xf32> -> vector<8x8xf32>
    %cst_52 = arith.constant 0.353553385 : f32
    %132 = vector.broadcast %cst_52 : f32 to vector<8x8xf32>
    %133 = arith.mulf %131, %132 : vector<8x8xf32>
    %cst_53 = arith.constant dense<0xFF800000> : vector<8xf32>
    %134 = vector.multi_reduction <maximumf>, %133, %cst_53 [1] : vector<8x8xf32> to vector<8xf32>
    %135 = vector.shape_cast %134 : vector<8xf32> to vector<8x1xf32>
    %136 = vector.broadcast %135 : vector<8x1xf32> to vector<8x8xf32>
    %137 = arith.subf %133, %136 : vector<8x8xf32>
    %138 = math.exp %137 : vector<8x8xf32>
    %cst_54 = arith.constant dense<0.000000e+00> : vector<8xf32>
    %139 = vector.multi_reduction <add>, %138, %cst_54 [1] : vector<8x8xf32> to vector<8xf32>
    %140 = vector.shape_cast %139 : vector<8xf32> to vector<8x1xf32>
    %141 = tpu.reciprocal %140 {approx = true} : vector<8x1xf32> -> vector<8x1xf32>
    %142 = vector.broadcast %141 : vector<8x1xf32> to vector<8x8xf32>
    %143 = arith.mulf %138, %142 : vector<8x8xf32>
    %144 = arith.truncf %143 : vector<8x8xf32> to vector<8x8xbf16>
    %145 = vector.extract_strided_slice %33 {offsets = [8, 8], sizes = [8, 8], strides = [1, 1]} : vector<16x32xbf16> to vector<8x8xbf16>
    %cst_55 = arith.constant dense<0.000000e+00> : vector<8x8xf32>
    %146 = tpu.matmul %144, %145, %cst_55 {dimension_numbers = #tpu.dot_dimension_numbers<[1], [0], [0], [1], [0, 0, 1, 1], [], []>} : vector<8x8xbf16>, vector<8x8xbf16>, vector<8x8xf32> -> vector<8x8xf32>
    %c8_56 = arith.constant 8 : index
    %c8_57 = arith.constant 8 : index
    %147 = vector.load %arg16[%c8_56, %c8_57] : memref<16x32xf32, #tpu.memory_space<vmem>>, vector<8x8xf32>
    tpu.vector_store %arg16[%c8_56, %c8_57], %146 {strides = array<i32>} : memref<16x32xf32, #tpu.memory_space<vmem>>, vector<8x8xf32>,
    %148 = vector.extract_strided_slice %21 {offsets = [8, 16], sizes = [8, 8], strides = [1, 1]} : vector<16x32xbf16> to vector<8x8xbf16>
    %149 = vector.extract_strided_slice %27 {offsets = [8, 16], sizes = [8, 8], strides = [1, 1]} : vector<16x32xbf16> to vector<8x8xbf16>
    %cst_58 = arith.constant dense<0.000000e+00> : vector<8x8xf32>
    %150 = tpu.matmul %148, %149, %cst_58 {dimension_numbers = #tpu.dot_dimension_numbers<[1], [1], [0], [0], [0, 0, 1, 0], [], []>} : vector<8x8xbf16>, vector<8x8xbf16>, vector<8x8xf32> -> vector<8x8xf32>
    %cst_59 = arith.constant 0.353553385 : f32
    %151 = vector.broadcast %cst_59 : f32 to vector<8x8xf32>
    %152 = arith.mulf %150, %151 : vector<8x8xf32>
    %cst_60 = arith.constant dense<0xFF800000> : vector<8xf32>
    %153 = vector.multi_reduction <maximumf>, %152, %cst_60 [1] : vector<8x8xf32> to vector<8xf32>
    %154 = vector.shape_cast %153 : vector<8xf32> to vector<8x1xf32>
    %155 = vector.broadcast %154 : vector<8x1xf32> to vector<8x8xf32>
    %156 = arith.subf %152, %155 : vector<8x8xf32>
    %157 = math.exp %156 : vector<8x8xf32>
    %cst_61 = arith.constant dense<0.000000e+00> : vector<8xf32>
    %158 = vector.multi_reduction <add>, %157, %cst_61 [1] : vector<8x8xf32> to vector<8xf32>
    %159 = vector.shape_cast %158 : vector<8xf32> to vector<8x1xf32>
    %160 = tpu.reciprocal %159 {approx = true} : vector<8x1xf32> -> vector<8x1xf32>
    %161 = vector.broadcast %160 : vector<8x1xf32> to vector<8x8xf32>
    %162 = arith.mulf %157, %161 : vector<8x8xf32>
    %163 = arith.truncf %162 : vector<8x8xf32> to vector<8x8xbf16>
    %164 = vector.extract_strided_slice %33 {offsets = [8, 16], sizes = [8, 8], strides = [1, 1]} : vector<16x32xbf16> to vector<8x8xbf16>
    %cst_62 = arith.constant dense<0.000000e+00> : vector<8x8xf32>
    %165 = tpu.matmul %163, %164, %cst_62 {dimension_numbers = #tpu.dot_dimension_numbers<[1], [0], [0], [1], [0, 0, 1, 1], [], []>} : vector<8x8xbf16>, vector<8x8xbf16>, vector<8x8xf32> -> vector<8x8xf32>
    %c8_63 = arith.constant 8 : index
    %c16_64 = arith.constant 16 : index
    %166 = vector.load %arg16[%c8_63, %c16_64] : memref<16x32xf32, #tpu.memory_space<vmem>>, vector<8x8xf32>
    tpu.vector_store %arg16[%c8_63, %c16_64], %165 {strides = array<i32>} : memref<16x32xf32, #tpu.memory_space<vmem>>, vector<8x8xf32>,
    %167 = vector.extract_strided_slice %21 {offsets = [8, 24], sizes = [8, 8], strides = [1, 1]} : vector<16x32xbf16> to vector<8x8xbf16>
    %168 = vector.extract_strided_slice %27 {offsets = [8, 24], sizes = [8, 8], strides = [1, 1]} : vector<16x32xbf16> to vector<8x8xbf16>
    %cst_65 = arith.constant dense<0.000000e+00> : vector<8x8xf32>
    %169 = tpu.matmul %167, %168, %cst_65 {dimension_numbers = #tpu.dot_dimension_numbers<[1], [1], [0], [0], [0, 0, 1, 0], [], []>} : vector<8x8xbf16>, vector<8x8xbf16>, vector<8x8xf32> -> vector<8x8xf32>
    %cst_66 = arith.constant 0.353553385 : f32
    %170 = vector.broadcast %cst_66 : f32 to vector<8x8xf32>
    %171 = arith.mulf %169, %170 : vector<8x8xf32>
    %cst_67 = arith.constant dense<0xFF800000> : vector<8xf32>
    %172 = vector.multi_reduction <maximumf>, %171, %cst_67 [1] : vector<8x8xf32> to vector<8xf32>
    %173 = vector.shape_cast %172 : vector<8xf32> to vector<8x1xf32>
    %174 = vector.broadcast %173 : vector<8x1xf32> to vector<8x8xf32>
    %175 = arith.subf %171, %174 : vector<8x8xf32>
    %176 = math.exp %175 : vector<8x8xf32>
    %cst_68 = arith.constant dense<0.000000e+00> : vector<8xf32>
    %177 = vector.multi_reduction <add>, %176, %cst_68 [1] : vector<8x8xf32> to vector<8xf32>
    %178 = vector.shape_cast %177 : vector<8xf32> to vector<8x1xf32>
    %179 = tpu.reciprocal %178 {approx = true} : vector<8x1xf32> -> vector<8x1xf32>
    %180 = vector.broadcast %179 : vector<8x1xf32> to vector<8x8xf32>
    %181 = arith.mulf %176, %180 : vector<8x8xf32>
    %182 = arith.truncf %181 : vector<8x8xf32> to vector<8x8xbf16>
    %183 = vector.extract_strided_slice %33 {offsets = [8, 24], sizes = [8, 8], strides = [1, 1]} : vector<16x32xbf16> to vector<8x8xbf16>
    %cst_69 = arith.constant dense<0.000000e+00> : vector<8x8xf32>
    %184 = tpu.matmul %182, %183, %cst_69 {dimension_numbers = #tpu.dot_dimension_numbers<[1], [0], [0], [1], [0, 0, 1, 1], [], []>} : vector<8x8xbf16>, vector<8x8xbf16>, vector<8x8xf32> -> vector<8x8xf32>
    %c8_70 = arith.constant 8 : index
    %c24_71 = arith.constant 24 : index
    %185 = vector.load %arg16[%c8_70, %c24_71] : memref<16x32xf32, #tpu.memory_space<vmem>>, vector<8x8xf32>
    tpu.vector_store %arg16[%c8_70, %c24_71], %184 {strides = array<i32>} : memref<16x32xf32, #tpu.memory_space<vmem>>, vector<8x8xf32>,
    %c0_72 = arith.constant 0 : index
    %c0_73 = arith.constant 0 : index
    %186 = vector.load %arg16[%c0_72, %c0_73] : memref<16x32xf32, #tpu.memory_space<vmem>>, vector<16x32xf32>
    %187 = arith.truncf %186 : vector<16x32xf32> to vector<16x32xbf16>
    %c0_74 = arith.constant 0 : index
    %c0_75 = arith.constant 0 : index
    %188 = vector.load %arg6[%c0_74, %c0_75] : memref<32x32xbf16, #tpu.memory_space<vmem>>, vector<32x32xbf16>
    %cst_76 = arith.constant dense<0.000000e+00> : vector<16x32xf32>
    %189 = tpu.matmul %187, %188, %cst_76 {dimension_numbers = #tpu.dot_dimension_numbers<[1], [0], [0], [1], [0, 0, 1, 1], [], []>} : vector<16x32xbf16>, vector<32x32xbf16>, vector<16x32xf32> -> vector<16x32xf32>
    %190 = vector.broadcast %15 : vector<1x32xf32> to vector<16x32xf32>
    %191 = arith.addf %189, %190 : vector<16x32xf32>
    %192 = arith.addf %0, %191 : vector<16x32xf32>
    %193 = arith.mulf %192, %192 : vector<16x32xf32>
    %cst_77 = arith.constant dense<0.000000e+00> : vector<16xf32>
    %194 = vector.multi_reduction <add>, %193, %cst_77 [1] : vector<16x32xf32> to vector<16xf32>
    %195 = vector.shape_cast %194 : vector<16xf32> to vector<16x1xf32>
    %cst_78 = arith.constant 3.200000e+01 : f32
    %196 = vector.broadcast %cst_78 : f32 to vector<16x1xf32>
    %197 = arith.divf %195, %196 : vector<16x1xf32>
    %cst_79 = arith.constant 1.1920929E-7 : f32
    %198 = vector.broadcast %cst_79 : f32 to vector<16x1xf32>
    %199 = arith.addf %197, %198 : vector<16x1xf32>
    %200 = math.rsqrt %199 : vector<16x1xf32>
    %201 = vector.broadcast %200 : vector<16x1xf32> to vector<16x32xf32>
    %202 = arith.mulf %192, %201 : vector<16x32xf32>
    %c4 = arith.constant 4 : index
    %c0_80 = arith.constant 0 : index
    %203 = vector.load %arg13[%c4, %c0_80] : memref<9x32xf32, #tpu.memory_space<vmem>>, vector<1x32xf32>
    %c5 = arith.constant 5 : index
    %c0_81 = arith.constant 0 : index
    %204 = vector.load %arg13[%c5, %c0_81] : memref<9x32xf32, #tpu.memory_space<vmem>>, vector<1x32xf32>
    %c6 = arith.constant 6 : index
    %c0_82 = arith.constant 0 : index
    %205 = vector.load %arg13[%c6, %c0_82] : memref<9x32xf32, #tpu.memory_space<vmem>>, vector<1x32xf32>
    %c7 = arith.constant 7 : index
    %c0_83 = arith.constant 0 : index
    %206 = vector.load %arg13[%c7, %c0_83] : memref<9x32xf32, #tpu.memory_space<vmem>>, vector<1x32xf32>
    %207 = arith.truncf %202 : vector<16x32xf32> to vector<16x32xbf16>
    %c0_84 = arith.constant 0 : index
    %c0_85 = arith.constant 0 : index
    %208 = vector.load %arg7[%c0_84, %c0_85] : memref<32x32xbf16, #tpu.memory_space<vmem>>, vector<32x32xbf16>
    %cst_86 = arith.constant dense<0.000000e+00> : vector<16x32xf32>
    %209 = tpu.matmul %207, %208, %cst_86 {dimension_numbers = #tpu.dot_dimension_numbers<[1], [0], [0], [1], [0, 0, 1, 1], [], []>} : vector<16x32xbf16>, vector<32x32xbf16>, vector<16x32xf32> -> vector<16x32xf32>
    %210 = vector.broadcast %203 : vector<1x32xf32> to vector<16x32xf32>
    %211 = arith.addf %209, %210 : vector<16x32xf32>
    %212 = arith.truncf %211 : vector<16x32xf32> to vector<16x32xbf16>
    %213 = arith.truncf %1 : vector<16x32xf32> to vector<16x32xbf16>
    %c0_87 = arith.constant 0 : index
    %c0_88 = arith.constant 0 : index
    %214 = vector.load %arg8[%c0_87, %c0_88] : memref<32x32xbf16, #tpu.memory_space<vmem>>, vector<32x32xbf16>
    %cst_89 = arith.constant dense<0.000000e+00> : vector<16x32xf32>
    %215 = tpu.matmul %213, %214, %cst_89 {dimension_numbers = #tpu.dot_dimension_numbers<[1], [0], [0], [1], [0, 0, 1, 1], [], []>} : vector<16x32xbf16>, vector<32x32xbf16>, vector<16x32xf32> -> vector<16x32xf32>
    %216 = vector.broadcast %204 : vector<1x32xf32> to vector<16x32xf32>
    %217 = arith.addf %215, %216 : vector<16x32xf32>
    %218 = arith.truncf %217 : vector<16x32xf32> to vector<16x32xbf16>
    %219 = arith.truncf %1 : vector<16x32xf32> to vector<16x32xbf16>
    %c0_90 = arith.constant 0 : index
    %c0_91 = arith.constant 0 : index
    %220 = vector.load %arg9[%c0_90, %c0_91] : memref<32x32xbf16, #tpu.memory_space<vmem>>, vector<32x32xbf16>
    %cst_92 = arith.constant dense<0.000000e+00> : vector<16x32xf32>
    %221 = tpu.matmul %219, %220, %cst_92 {dimension_numbers = #tpu.dot_dimension_numbers<[1], [0], [0], [1], [0, 0, 1, 1], [], []>} : vector<16x32xbf16>, vector<32x32xbf16>, vector<16x32xf32> -> vector<16x32xf32>
    %222 = vector.broadcast %205 : vector<1x32xf32> to vector<16x32xf32>
    %223 = arith.addf %221, %222 : vector<16x32xf32>
    %224 = arith.truncf %223 : vector<16x32xf32> to vector<16x32xbf16>
    %225 = vector.extract_strided_slice %212 {offsets = [0, 0], sizes = [8, 8], strides = [1, 1]} : vector<16x32xbf16> to vector<8x8xbf16>
    %226 = vector.extract_strided_slice %218 {offsets = [0, 0], sizes = [8, 8], strides = [1, 1]} : vector<16x32xbf16> to vector<8x8xbf16>
    %cst_93 = arith.constant dense<0.000000e+00> : vector<8x8xf32>
    %227 = tpu.matmul %225, %226, %cst_93 {dimension_numbers = #tpu.dot_dimension_numbers<[1], [1], [0], [0], [0, 0, 1, 0], [], []>} : vector<8x8xbf16>, vector<8x8xbf16>, vector<8x8xf32> -> vector<8x8xf32>
    %cst_94 = arith.constant 0.353553385 : f32
    %228 = vector.broadcast %cst_94 : f32 to vector<8x8xf32>
    %229 = arith.mulf %227, %228 : vector<8x8xf32>
    %cst_95 = arith.constant dense<0xFF800000> : vector<8xf32>
    %230 = vector.multi_reduction <maximumf>, %229, %cst_95 [1] : vector<8x8xf32> to vector<8xf32>
    %231 = vector.shape_cast %230 : vector<8xf32> to vector<8x1xf32>
    %232 = vector.broadcast %231 : vector<8x1xf32> to vector<8x8xf32>
    %233 = arith.subf %229, %232 : vector<8x8xf32>
    %234 = math.exp %233 : vector<8x8xf32>
    %cst_96 = arith.constant dense<0.000000e+00> : vector<8xf32>
    %235 = vector.multi_reduction <add>, %234, %cst_96 [1] : vector<8x8xf32> to vector<8xf32>
    %236 = vector.shape_cast %235 : vector<8xf32> to vector<8x1xf32>
    %237 = tpu.reciprocal %236 {approx = true} : vector<8x1xf32> -> vector<8x1xf32>
    %238 = vector.broadcast %237 : vector<8x1xf32> to vector<8x8xf32>
    %239 = arith.mulf %234, %238 : vector<8x8xf32>
    %240 = arith.truncf %239 : vector<8x8xf32> to vector<8x8xbf16>
    %241 = vector.extract_strided_slice %224 {offsets = [0, 0], sizes = [8, 8], strides = [1, 1]} : vector<16x32xbf16> to vector<8x8xbf16>
    %cst_97 = arith.constant dense<0.000000e+00> : vector<8x8xf32>
    %242 = tpu.matmul %240, %241, %cst_97 {dimension_numbers = #tpu.dot_dimension_numbers<[1], [0], [0], [1], [0, 0, 1, 1], [], []>} : vector<8x8xbf16>, vector<8x8xbf16>, vector<8x8xf32> -> vector<8x8xf32>
    %c0_98 = arith.constant 0 : index
    %c0_99 = arith.constant 0 : index
    %243 = vector.load %arg16[%c0_98, %c0_99] : memref<16x32xf32, #tpu.memory_space<vmem>>, vector<8x8xf32>
    tpu.vector_store %arg16[%c0_98, %c0_99], %242 {strides = array<i32>} : memref<16x32xf32, #tpu.memory_space<vmem>>, vector<8x8xf32>,
    %244 = vector.extract_strided_slice %212 {offsets = [0, 8], sizes = [8, 8], strides = [1, 1]} : vector<16x32xbf16> to vector<8x8xbf16>
    %245 = vector.extract_strided_slice %218 {offsets = [0, 8], sizes = [8, 8], strides = [1, 1]} : vector<16x32xbf16> to vector<8x8xbf16>
    %cst_100 = arith.constant dense<0.000000e+00> : vector<8x8xf32>
    %246 = tpu.matmul %244, %245, %cst_100 {dimension_numbers = #tpu.dot_dimension_numbers<[1], [1], [0], [0], [0, 0, 1, 0], [], []>} : vector<8x8xbf16>, vector<8x8xbf16>, vector<8x8xf32> -> vector<8x8xf32>
    %cst_101 = arith.constant 0.353553385 : f32
    %247 = vector.broadcast %cst_101 : f32 to vector<8x8xf32>
    %248 = arith.mulf %246, %247 : vector<8x8xf32>
    %cst_102 = arith.constant dense<0xFF800000> : vector<8xf32>
    %249 = vector.multi_reduction <maximumf>, %248, %cst_102 [1] : vector<8x8xf32> to vector<8xf32>
    %250 = vector.shape_cast %249 : vector<8xf32> to vector<8x1xf32>
    %251 = vector.broadcast %250 : vector<8x1xf32> to vector<8x8xf32>
    %252 = arith.subf %248, %251 : vector<8x8xf32>
    %253 = math.exp %252 : vector<8x8xf32>
    %cst_103 = arith.constant dense<0.000000e+00> : vector<8xf32>
    %254 = vector.multi_reduction <add>, %253, %cst_103 [1] : vector<8x8xf32> to vector<8xf32>
    %255 = vector.shape_cast %254 : vector<8xf32> to vector<8x1xf32>
    %256 = tpu.reciprocal %255 {approx = true} : vector<8x1xf32> -> vector<8x1xf32>
    %257 = vector.broadcast %256 : vector<8x1xf32> to vector<8x8xf32>
    %258 = arith.mulf %253, %257 : vector<8x8xf32>
    %259 = arith.truncf %258 : vector<8x8xf32> to vector<8x8xbf16>
    %260 = vector.extract_strided_slice %224 {offsets = [0, 8], sizes = [8, 8], strides = [1, 1]} : vector<16x32xbf16> to vector<8x8xbf16>
    %cst_104 = arith.constant dense<0.000000e+00> : vector<8x8xf32>
    %261 = tpu.matmul %259, %260, %cst_104 {dimension_numbers = #tpu.dot_dimension_numbers<[1], [0], [0], [1], [0, 0, 1, 1], [], []>} : vector<8x8xbf16>, vector<8x8xbf16>, vector<8x8xf32> -> vector<8x8xf32>
    %c0_105 = arith.constant 0 : index
    %c8_106 = arith.constant 8 : index
    %262 = vector.load %arg16[%c0_105, %c8_106] : memref<16x32xf32, #tpu.memory_space<vmem>>, vector<8x8xf32>
    tpu.vector_store %arg16[%c0_105, %c8_106], %261 {strides = array<i32>} : memref<16x32xf32, #tpu.memory_space<vmem>>, vector<8x8xf32>,
    %263 = vector.extract_strided_slice %212 {offsets = [0, 16], sizes = [8, 8], strides = [1, 1]} : vector<16x32xbf16> to vector<8x8xbf16>
    %264 = vector.extract_strided_slice %218 {offsets = [0, 16], sizes = [8, 8], strides = [1, 1]} : vector<16x32xbf16> to vector<8x8xbf16>
    %cst_107 = arith.constant dense<0.000000e+00> : vector<8x8xf32>
    %265 = tpu.matmul %263, %264, %cst_107 {dimension_numbers = #tpu.dot_dimension_numbers<[1], [1], [0], [0], [0, 0, 1, 0], [], []>} : vector<8x8xbf16>, vector<8x8xbf16>, vector<8x8xf32> -> vector<8x8xf32>
    %cst_108 = arith.constant 0.353553385 : f32
    %266 = vector.broadcast %cst_108 : f32 to vector<8x8xf32>
    %267 = arith.mulf %265, %266 : vector<8x8xf32>
    %cst_109 = arith.constant dense<0xFF800000> : vector<8xf32>
    %268 = vector.multi_reduction <maximumf>, %267, %cst_109 [1] : vector<8x8xf32> to vector<8xf32>
    %269 = vector.shape_cast %268 : vector<8xf32> to vector<8x1xf32>
    %270 = vector.broadcast %269 : vector<8x1xf32> to vector<8x8xf32>
    %271 = arith.subf %267, %270 : vector<8x8xf32>
    %272 = math.exp %271 : vector<8x8xf32>
    %cst_110 = arith.constant dense<0.000000e+00> : vector<8xf32>
    %273 = vector.multi_reduction <add>, %272, %cst_110 [1] : vector<8x8xf32> to vector<8xf32>
    %274 = vector.shape_cast %273 : vector<8xf32> to vector<8x1xf32>
    %275 = tpu.reciprocal %274 {approx = true} : vector<8x1xf32> -> vector<8x1xf32>
    %276 = vector.broadcast %275 : vector<8x1xf32> to vector<8x8xf32>
    %277 = arith.mulf %272, %276 : vector<8x8xf32>
    %278 = arith.truncf %277 : vector<8x8xf32> to vector<8x8xbf16>
    %279 = vector.extract_strided_slice %224 {offsets = [0, 16], sizes = [8, 8], strides = [1, 1]} : vector<16x32xbf16> to vector<8x8xbf16>
    %cst_111 = arith.constant dense<0.000000e+00> : vector<8x8xf32>
    %280 = tpu.matmul %278, %279, %cst_111 {dimension_numbers = #tpu.dot_dimension_numbers<[1], [0], [0], [1], [0, 0, 1, 1], [], []>} : vector<8x8xbf16>, vector<8x8xbf16>, vector<8x8xf32> -> vector<8x8xf32>
    %c0_112 = arith.constant 0 : index
    %c16_113 = arith.constant 16 : index
    %281 = vector.load %arg16[%c0_112, %c16_113] : memref<16x32xf32, #tpu.memory_space<vmem>>, vector<8x8xf32>
    tpu.vector_store %arg16[%c0_112, %c16_113], %280 {strides = array<i32>} : memref<16x32xf32, #tpu.memory_space<vmem>>, vector<8x8xf32>,
    %282 = vector.extract_strided_slice %212 {offsets = [0, 24], sizes = [8, 8], strides = [1, 1]} : vector<16x32xbf16> to vector<8x8xbf16>
    %283 = vector.extract_strided_slice %218 {offsets = [0, 24], sizes = [8, 8], strides = [1, 1]} : vector<16x32xbf16> to vector<8x8xbf16>
    %cst_114 = arith.constant dense<0.000000e+00> : vector<8x8xf32>
    %284 = tpu.matmul %282, %283, %cst_114 {dimension_numbers = #tpu.dot_dimension_numbers<[1], [1], [0], [0], [0, 0, 1, 0], [], []>} : vector<8x8xbf16>, vector<8x8xbf16>, vector<8x8xf32> -> vector<8x8xf32>
    %cst_115 = arith.constant 0.353553385 : f32
    %285 = vector.broadcast %cst_115 : f32 to vector<8x8xf32>
    %286 = arith.mulf %284, %285 : vector<8x8xf32>
    %cst_116 = arith.constant dense<0xFF800000> : vector<8xf32>
    %287 = vector.multi_reduction <maximumf>, %286, %cst_116 [1] : vector<8x8xf32> to vector<8xf32>
    %288 = vector.shape_cast %287 : vector<8xf32> to vector<8x1xf32>
    %289 = vector.broadcast %288 : vector<8x1xf32> to vector<8x8xf32>
    %290 = arith.subf %286, %289 : vector<8x8xf32>
    %291 = math.exp %290 : vector<8x8xf32>
    %cst_117 = arith.constant dense<0.000000e+00> : vector<8xf32>
    %292 = vector.multi_reduction <add>, %291, %cst_117 [1] : vector<8x8xf32> to vector<8xf32>
    %293 = vector.shape_cast %292 : vector<8xf32> to vector<8x1xf32>
    %294 = tpu.reciprocal %293 {approx = true} : vector<8x1xf32> -> vector<8x1xf32>
    %295 = vector.broadcast %294 : vector<8x1xf32> to vector<8x8xf32>
    %296 = arith.mulf %291, %295 : vector<8x8xf32>
    %297 = arith.truncf %296 : vector<8x8xf32> to vector<8x8xbf16>
    %298 = vector.extract_strided_slice %224 {offsets = [0, 24], sizes = [8, 8], strides = [1, 1]} : vector<16x32xbf16> to vector<8x8xbf16>
    %cst_118 = arith.constant dense<0.000000e+00> : vector<8x8xf32>
    %299 = tpu.matmul %297, %298, %cst_118 {dimension_numbers = #tpu.dot_dimension_numbers<[1], [0], [0], [1], [0, 0, 1, 1], [], []>} : vector<8x8xbf16>, vector<8x8xbf16>, vector<8x8xf32> -> vector<8x8xf32>
    %c0_119 = arith.constant 0 : index
    %c24_120 = arith.constant 24 : index
    %300 = vector.load %arg16[%c0_119, %c24_120] : memref<16x32xf32, #tpu.memory_space<vmem>>, vector<8x8xf32>
    tpu.vector_store %arg16[%c0_119, %c24_120], %299 {strides = array<i32>} : memref<16x32xf32, #tpu.memory_space<vmem>>, vector<8x8xf32>,
    %301 = vector.extract_strided_slice %212 {offsets = [8, 0], sizes = [8, 8], strides = [1, 1]} : vector<16x32xbf16> to vector<8x8xbf16>
    %302 = vector.extract_strided_slice %218 {offsets = [8, 0], sizes = [8, 8], strides = [1, 1]} : vector<16x32xbf16> to vector<8x8xbf16>
    %cst_121 = arith.constant dense<0.000000e+00> : vector<8x8xf32>
    %303 = tpu.matmul %301, %302, %cst_121 {dimension_numbers = #tpu.dot_dimension_numbers<[1], [1], [0], [0], [0, 0, 1, 0], [], []>} : vector<8x8xbf16>, vector<8x8xbf16>, vector<8x8xf32> -> vector<8x8xf32>
    %cst_122 = arith.constant 0.353553385 : f32
    %304 = vector.broadcast %cst_122 : f32 to vector<8x8xf32>
    %305 = arith.mulf %303, %304 : vector<8x8xf32>
    %cst_123 = arith.constant dense<0xFF800000> : vector<8xf32>
    %306 = vector.multi_reduction <maximumf>, %305, %cst_123 [1] : vector<8x8xf32> to vector<8xf32>
    %307 = vector.shape_cast %306 : vector<8xf32> to vector<8x1xf32>
    %308 = vector.broadcast %307 : vector<8x1xf32> to vector<8x8xf32>
    %309 = arith.subf %305, %308 : vector<8x8xf32>
    %310 = math.exp %309 : vector<8x8xf32>
    %cst_124 = arith.constant dense<0.000000e+00> : vector<8xf32>
    %311 = vector.multi_reduction <add>, %310, %cst_124 [1] : vector<8x8xf32> to vector<8xf32>
    %312 = vector.shape_cast %311 : vector<8xf32> to vector<8x1xf32>
    %313 = tpu.reciprocal %312 {approx = true} : vector<8x1xf32> -> vector<8x1xf32>
    %314 = vector.broadcast %313 : vector<8x1xf32> to vector<8x8xf32>
    %315 = arith.mulf %310, %314 : vector<8x8xf32>
    %316 = arith.truncf %315 : vector<8x8xf32> to vector<8x8xbf16>
    %317 = vector.extract_strided_slice %224 {offsets = [8, 0], sizes = [8, 8], strides = [1, 1]} : vector<16x32xbf16> to vector<8x8xbf16>
    %cst_125 = arith.constant dense<0.000000e+00> : vector<8x8xf32>
    %318 = tpu.matmul %316, %317, %cst_125 {dimension_numbers = #tpu.dot_dimension_numbers<[1], [0], [0], [1], [0, 0, 1, 1], [], []>} : vector<8x8xbf16>, vector<8x8xbf16>, vector<8x8xf32> -> vector<8x8xf32>
    %c8_126 = arith.constant 8 : index
    %c0_127 = arith.constant 0 : index
    %319 = vector.load %arg16[%c8_126, %c0_127] : memref<16x32xf32, #tpu.memory_space<vmem>>, vector<8x8xf32>
    tpu.vector_store %arg16[%c8_126, %c0_127], %318 {strides = array<i32>} : memref<16x32xf32, #tpu.memory_space<vmem>>, vector<8x8xf32>,
    %320 = vector.extract_strided_slice %212 {offsets = [8, 8], sizes = [8, 8], strides = [1, 1]} : vector<16x32xbf16> to vector<8x8xbf16>
    %321 = vector.extract_strided_slice %218 {offsets = [8, 8], sizes = [8, 8], strides = [1, 1]} : vector<16x32xbf16> to vector<8x8xbf16>
    %cst_128 = arith.constant dense<0.000000e+00> : vector<8x8xf32>
    %322 = tpu.matmul %320, %321, %cst_128 {dimension_numbers = #tpu.dot_dimension_numbers<[1], [1], [0], [0], [0, 0, 1, 0], [], []>} : vector<8x8xbf16>, vector<8x8xbf16>, vector<8x8xf32> -> vector<8x8xf32>
    %cst_129 = arith.constant 0.353553385 : f32
    %323 = vector.broadcast %cst_129 : f32 to vector<8x8xf32>
    %324 = arith.mulf %322, %323 : vector<8x8xf32>
    %cst_130 = arith.constant dense<0xFF800000> : vector<8xf32>
    %325 = vector.multi_reduction <maximumf>, %324, %cst_130 [1] : vector<8x8xf32> to vector<8xf32>
    %326 = vector.shape_cast %325 : vector<8xf32> to vector<8x1xf32>
    %327 = vector.broadcast %326 : vector<8x1xf32> to vector<8x8xf32>
    %328 = arith.subf %324, %327 : vector<8x8xf32>
    %329 = math.exp %328 : vector<8x8xf32>
    %cst_131 = arith.constant dense<0.000000e+00> : vector<8xf32>
    %330 = vector.multi_reduction <add>, %329, %cst_131 [1] : vector<8x8xf32> to vector<8xf32>
    %331 = vector.shape_cast %330 : vector<8xf32> to vector<8x1xf32>
    %332 = tpu.reciprocal %331 {approx = true} : vector<8x1xf32> -> vector<8x1xf32>
    %333 = vector.broadcast %332 : vector<8x1xf32> to vector<8x8xf32>
    %334 = arith.mulf %329, %333 : vector<8x8xf32>
    %335 = arith.truncf %334 : vector<8x8xf32> to vector<8x8xbf16>
    %336 = vector.extract_strided_slice %224 {offsets = [8, 8], sizes = [8, 8], strides = [1, 1]} : vector<16x32xbf16> to vector<8x8xbf16>
    %cst_132 = arith.constant dense<0.000000e+00> : vector<8x8xf32>
    %337 = tpu.matmul %335, %336, %cst_132 {dimension_numbers = #tpu.dot_dimension_numbers<[1], [0], [0], [1], [0, 0, 1, 1], [], []>} : vector<8x8xbf16>, vector<8x8xbf16>, vector<8x8xf32> -> vector<8x8xf32>
    %c8_133 = arith.constant 8 : index
    %c8_134 = arith.constant 8 : index
    %338 = vector.load %arg16[%c8_133, %c8_134] : memref<16x32xf32, #tpu.memory_space<vmem>>, vector<8x8xf32>
    tpu.vector_store %arg16[%c8_133, %c8_134], %337 {strides = array<i32>} : memref<16x32xf32, #tpu.memory_space<vmem>>, vector<8x8xf32>,
    %339 = vector.extract_strided_slice %212 {offsets = [8, 16], sizes = [8, 8], strides = [1, 1]} : vector<16x32xbf16> to vector<8x8xbf16>
    %340 = vector.extract_strided_slice %218 {offsets = [8, 16], sizes = [8, 8], strides = [1, 1]} : vector<16x32xbf16> to vector<8x8xbf16>
    %cst_135 = arith.constant dense<0.000000e+00> : vector<8x8xf32>
    %341 = tpu.matmul %339, %340, %cst_135 {dimension_numbers = #tpu.dot_dimension_numbers<[1], [1], [0], [0], [0, 0, 1, 0], [], []>} : vector<8x8xbf16>, vector<8x8xbf16>, vector<8x8xf32> -> vector<8x8xf32>
    %cst_136 = arith.constant 0.353553385 : f32
    %342 = vector.broadcast %cst_136 : f32 to vector<8x8xf32>
    %343 = arith.mulf %341, %342 : vector<8x8xf32>
    %cst_137 = arith.constant dense<0xFF800000> : vector<8xf32>
    %344 = vector.multi_reduction <maximumf>, %343, %cst_137 [1] : vector<8x8xf32> to vector<8xf32>
    %345 = vector.shape_cast %344 : vector<8xf32> to vector<8x1xf32>
    %346 = vector.broadcast %345 : vector<8x1xf32> to vector<8x8xf32>
    %347 = arith.subf %343, %346 : vector<8x8xf32>
    %348 = math.exp %347 : vector<8x8xf32>
    %cst_138 = arith.constant dense<0.000000e+00> : vector<8xf32>
    %349 = vector.multi_reduction <add>, %348, %cst_138 [1] : vector<8x8xf32> to vector<8xf32>
    %350 = vector.shape_cast %349 : vector<8xf32> to vector<8x1xf32>
    %351 = tpu.reciprocal %350 {approx = true} : vector<8x1xf32> -> vector<8x1xf32>
    %352 = vector.broadcast %351 : vector<8x1xf32> to vector<8x8xf32>
    %353 = arith.mulf %348, %352 : vector<8x8xf32>
    %354 = arith.truncf %353 : vector<8x8xf32> to vector<8x8xbf16>
    %355 = vector.extract_strided_slice %224 {offsets = [8, 16], sizes = [8, 8], strides = [1, 1]} : vector<16x32xbf16> to vector<8x8xbf16>
    %cst_139 = arith.constant dense<0.000000e+00> : vector<8x8xf32>
    %356 = tpu.matmul %354, %355, %cst_139 {dimension_numbers = #tpu.dot_dimension_numbers<[1], [0], [0], [1], [0, 0, 1, 1], [], []>} : vector<8x8xbf16>, vector<8x8xbf16>, vector<8x8xf32> -> vector<8x8xf32>
    %c8_140 = arith.constant 8 : index
    %c16_141 = arith.constant 16 : index
    %357 = vector.load %arg16[%c8_140, %c16_141] : memref<16x32xf32, #tpu.memory_space<vmem>>, vector<8x8xf32>
    tpu.vector_store %arg16[%c8_140, %c16_141], %356 {strides = array<i32>} : memref<16x32xf32, #tpu.memory_space<vmem>>, vector<8x8xf32>,
    %358 = vector.extract_strided_slice %212 {offsets = [8, 24], sizes = [8, 8], strides = [1, 1]} : vector<16x32xbf16> to vector<8x8xbf16>
    %359 = vector.extract_strided_slice %218 {offsets = [8, 24], sizes = [8, 8], strides = [1, 1]} : vector<16x32xbf16> to vector<8x8xbf16>
    %cst_142 = arith.constant dense<0.000000e+00> : vector<8x8xf32>
    %360 = tpu.matmul %358, %359, %cst_142 {dimension_numbers = #tpu.dot_dimension_numbers<[1], [1], [0], [0], [0, 0, 1, 0], [], []>} : vector<8x8xbf16>, vector<8x8xbf16>, vector<8x8xf32> -> vector<8x8xf32>
    %cst_143 = arith.constant 0.353553385 : f32
    %361 = vector.broadcast %cst_143 : f32 to vector<8x8xf32>
    %362 = arith.mulf %360, %361 : vector<8x8xf32>
    %cst_144 = arith.constant dense<0xFF800000> : vector<8xf32>
    %363 = vector.multi_reduction <maximumf>, %362, %cst_144 [1] : vector<8x8xf32> to vector<8xf32>
    %364 = vector.shape_cast %363 : vector<8xf32> to vector<8x1xf32>
    %365 = vector.broadcast %364 : vector<8x1xf32> to vector<8x8xf32>
    %366 = arith.subf %362, %365 : vector<8x8xf32>
    %367 = math.exp %366 : vector<8x8xf32>
    %cst_145 = arith.constant dense<0.000000e+00> : vector<8xf32>
    %368 = vector.multi_reduction <add>, %367, %cst_145 [1] : vector<8x8xf32> to vector<8xf32>
    %369 = vector.shape_cast %368 : vector<8xf32> to vector<8x1xf32>
    %370 = tpu.reciprocal %369 {approx = true} : vector<8x1xf32> -> vector<8x1xf32>
    %371 = vector.broadcast %370 : vector<8x1xf32> to vector<8x8xf32>
    %372 = arith.mulf %367, %371 : vector<8x8xf32>
    %373 = arith.truncf %372 : vector<8x8xf32> to vector<8x8xbf16>
    %374 = vector.extract_strided_slice %224 {offsets = [8, 24], sizes = [8, 8], strides = [1, 1]} : vector<16x32xbf16> to vector<8x8xbf16>
    %cst_146 = arith.constant dense<0.000000e+00> : vector<8x8xf32>
    %375 = tpu.matmul %373, %374, %cst_146 {dimension_numbers = #tpu.dot_dimension_numbers<[1], [0], [0], [1], [0, 0, 1, 1], [], []>} : vector<8x8xbf16>, vector<8x8xbf16>, vector<8x8xf32> -> vector<8x8xf32>
    %c8_147 = arith.constant 8 : index
    %c24_148 = arith.constant 24 : index
    %376 = vector.load %arg16[%c8_147, %c24_148] : memref<16x32xf32, #tpu.memory_space<vmem>>, vector<8x8xf32>
    tpu.vector_store %arg16[%c8_147, %c24_148], %375 {strides = array<i32>} : memref<16x32xf32, #tpu.memory_space<vmem>>, vector<8x8xf32>,
    %c0_149 = arith.constant 0 : index
    %c0_150 = arith.constant 0 : index
    %377 = vector.load %arg16[%c0_149, %c0_150] : memref<16x32xf32, #tpu.memory_space<vmem>>, vector<16x32xf32>
    %378 = arith.truncf %377 : vector<16x32xf32> to vector<16x32xbf16>
    %c0_151 = arith.constant 0 : index
    %c0_152 = arith.constant 0 : index
    %379 = vector.load %arg10[%c0_151, %c0_152] : memref<32x32xbf16, #tpu.memory_space<vmem>>, vector<32x32xbf16>
    %cst_153 = arith.constant dense<0.000000e+00> : vector<16x32xf32>
    %380 = tpu.matmul %378, %379, %cst_153 {dimension_numbers = #tpu.dot_dimension_numbers<[1], [0], [0], [1], [0, 0, 1, 1], [], []>} : vector<16x32xbf16>, vector<32x32xbf16>, vector<16x32xf32> -> vector<16x32xf32>
    %381 = vector.broadcast %206 : vector<1x32xf32> to vector<16x32xf32>
    %382 = arith.addf %380, %381 : vector<16x32xf32>
    %383 = arith.addf %192, %382 : vector<16x32xf32>
    %384 = arith.mulf %383, %383 : vector<16x32xf32>
    %cst_154 = arith.constant dense<0.000000e+00> : vector<16xf32>
    %385 = vector.multi_reduction <add>, %384, %cst_154 [1] : vector<16x32xf32> to vector<16xf32>
    %386 = vector.shape_cast %385 : vector<16xf32> to vector<16x1xf32>
    %cst_155 = arith.constant 3.200000e+01 : f32
    %387 = vector.broadcast %cst_155 : f32 to vector<16x1xf32>
    %388 = arith.divf %386, %387 : vector<16x1xf32>
    %cst_156 = arith.constant 1.1920929E-7 : f32
    %389 = vector.broadcast %cst_156 : f32 to vector<16x1xf32>
    %390 = arith.addf %388, %389 : vector<16x1xf32>
    %391 = math.rsqrt %390 : vector<16x1xf32>
    %392 = vector.broadcast %391 : vector<16x1xf32> to vector<16x32xf32>
    %393 = arith.mulf %383, %392 : vector<16x32xf32>
    %c0_157 = arith.constant 0 : index
    %c0_158 = arith.constant 0 : index
    %394 = vector.load %arg14[%c0_157, %c0_158] : memref<1x128xf32, #tpu.memory_space<vmem>>, vector<1x128xf32>
    %c8_159 = arith.constant 8 : index
    %c0_160 = arith.constant 0 : index
    %395 = vector.load %arg13[%c8_159, %c0_160] : memref<9x32xf32, #tpu.memory_space<vmem>>, vector<1x32xf32>
    %396 = arith.truncf %393 : vector<16x32xf32> to vector<16x32xbf16>
    %cst_161 = arith.constant 0.000000e+00 : f32
    %397 = vector.broadcast %cst_161 : f32 to vector<16x32xf32>
    %c0_162 = arith.constant 0 : index
    %c0_163 = arith.constant 0 : index
    %398 = vector.load %arg11[%c0_162, %c0_163] : memref<32x128xbf16, #tpu.memory_space<vmem>>, vector<32x128xbf16>
    %cst_164 = arith.constant dense<0.000000e+00> : vector<16x128xf32>
    %399 = tpu.matmul %396, %398, %cst_164 {dimension_numbers = #tpu.dot_dimension_numbers<[1], [0], [0], [1], [0, 0, 1, 1], [], []>} : vector<16x32xbf16>, vector<32x128xbf16>, vector<16x128xf32> -> vector<16x128xf32>
    %400 = vector.broadcast %394 : vector<1x128xf32> to vector<16x128xf32>
    %401 = arith.addf %399, %400 : vector<16x128xf32>
    %402 = arith.negf %401 : vector<16x128xf32>
    %403 = math.exp %402 : vector<16x128xf32>
    %cst_165 = arith.constant 1.000000e+00 : f32
    %404 = vector.broadcast %cst_165 : f32 to vector<16x128xf32>
    %405 = arith.addf %404, %403 : vector<16x128xf32>
    %406 = arith.divf %404, %405 : vector<16x128xf32>
    %407 = arith.mulf %401, %406 : vector<16x128xf32>
    %408 = arith.truncf %407 : vector<16x128xf32> to vector<16x128xbf16>
    %c0_166 = arith.constant 0 : index
    %c0_167 = arith.constant 0 : index
    %409 = vector.load %arg12[%c0_166, %c0_167] : memref<128x32xbf16, #tpu.memory_space<vmem>>, vector<128x32xbf16>
    %cst_168 = arith.constant dense<0.000000e+00> : vector<16x32xf32>
    %410 = tpu.matmul %408, %409, %cst_168 {dimension_numbers = #tpu.dot_dimension_numbers<[1], [0], [0], [1], [0, 0, 1, 1], [], []>} : vector<16x128xbf16>, vector<128x32xbf16>, vector<16x32xf32> -> vector<16x32xf32>
    %411 = arith.addf %397, %410 : vector<16x32xf32>
    %412 = vector.broadcast %395 : vector<1x32xf32> to vector<16x32xf32>
    %413 = arith.addf %411, %412 : vector<16x32xf32>
    %414 = arith.addf %383, %413 : vector<16x32xf32>
    %c0_169 = arith.constant 0 : index
    %c0_170 = arith.constant 0 : index
    %415 = vector.load %arg15[%c0_169, %c0_170] : memref<16x32xf32, #tpu.memory_space<vmem>>, vector<16x32xf32>
    tpu.vector_store %arg15[%c0_169, %c0_170], %414 {strides = array<i32>} : memref<16x32xf32, #tpu.memory_space<vmem>>, vector<16x32xf32>,
    return
  }
  func.func @transform_0(%arg0: i32) -> (i32, i32) {
    %c0_i32 = arith.constant 0 : i32
    %c0_i32_0 = arith.constant 0 : i32
    return %arg0, %c0_i32 : i32, i32
  }
  func.func @transform_1(%arg0: i32) -> (i32, i32) {
    %c0_i32 = arith.constant 0 : i32
    %c0_i32_0 = arith.constant 0 : i32
    return %arg0, %c0_i32 : i32, i32
  }
  func.func @transform_2(%arg0: i32) -> (i32, i32) {
    %c0_i32 = arith.constant 0 : i32
    %c0_i32_0 = arith.constant 0 : i32
    %c0_i32_1 = arith.constant 0 : i32
    return %c0_i32, %c0_i32_0 : i32, i32
  }
  func.func @transform_3(%arg0: i32) -> (i32, i32) {
    %c0_i32 = arith.constant 0 : i32
    %c0_i32_0 = arith.constant 0 : i32
    %c0_i32_1 = arith.constant 0 : i32
    return %c0_i32, %c0_i32_0 : i32, i32
  }
  func.func @transform_4(%arg0: i32) -> (i32, i32) {
    %c0_i32 = arith.constant 0 : i32
    %c0_i32_0 = arith.constant 0 : i32
    %c0_i32_1 = arith.constant 0 : i32
    return %c0_i32, %c0_i32_0 : i32, i32
  }
  func.func @transform_5(%arg0: i32) -> (i32, i32) {
    %c0_i32 = arith.constant 0 : i32
    %c0_i32_0 = arith.constant 0 : i32
    %c0_i32_1 = arith.constant 0 : i32
    return %c0_i32, %c0_i32_0 : i32, i32
  }
  func.func @transform_6(%arg0: i32) -> (i32, i32) {
    %c0_i32 = arith.constant 0 : i32
    %c0_i32_0 = arith.constant 0 : i32
    %c0_i32_1 = arith.constant 0 : i32
    return %c0_i32, %c0_i32_0 : i32, i32
  }
  func.func @transform_7(%arg0: i32) -> (i32, i32) {
    %c0_i32 = arith.constant 0 : i32
    %c0_i32_0 = arith.constant 0 : i32
    %c0_i32_1 = arith.constant 0 : i32
    return %c0_i32, %c0_i32_0 : i32, i32
  }
  func.func @transform_8(%arg0: i32) -> (i32, i32) {
    %c0_i32 = arith.constant 0 : i32
    %c0_i32_0 = arith.constant 0 : i32
    %c0_i32_1 = arith.constant 0 : i32
    return %c0_i32, %c0_i32_0 : i32, i32
  }
  func.func @transform_9(%arg0: i32) -> (i32, i32) {
    %c0_i32 = arith.constant 0 : i32
    %c0_i32_0 = arith.constant 0 : i32
    %c0_i32_1 = arith.constant 0 : i32
    return %c0_i32, %c0_i32_0 : i32, i32
  }
  func.func @transform_10(%arg0: i32) -> (i32, i32) {
    %c0_i32 = arith.constant 0 : i32
    %c0_i32_0 = arith.constant 0 : i32
    %c0_i32_1 = arith.constant 0 : i32
    return %c0_i32, %c0_i32_0 : i32, i32
  }
  func.func @transform_11(%arg0: i32) -> (i32, i32) {
    %c0_i32 = arith.constant 0 : i32
    %c0_i32_0 = arith.constant 0 : i32
    %c0_i32_1 = arith.constant 0 : i32
    return %c0_i32, %c0_i32_0 : i32, i32
  }
  func.func @transform_12(%arg0: i32) -> (i32, i32) {
    %c0_i32 = arith.constant 0 : i32
    %c0_i32_0 = arith.constant 0 : i32
    %c0_i32_1 = arith.constant 0 : i32
    return %c0_i32, %c0_i32_0 : i32, i32
  }
  func.func @transform_13(%arg0: i32) -> (i32, i32) {
    %c0_i32 = arith.constant 0 : i32
    %c0_i32_0 = arith.constant 0 : i32
    %c0_i32_1 = arith.constant 0 : i32
    return %c0_i32, %c0_i32_0 : i32, i32
  }
  func.func @transform_14(%arg0: i32) -> (i32, i32) {
    %c0_i32 = arith.constant 0 : i32
    %c0_i32_0 = arith.constant 0 : i32
    return %arg0, %c0_i32 : i32, i32
  }
}

module attributes {stable_mosaic.version = 11 : i64} {
  func.func @_block_kernel(%arg0: i32, %arg1: memref<16x32xf32, #tpu.memory_space<vmem>>, %arg2: memref<16x32xf32, #tpu.memory_space<vmem>>, %arg3: memref<32x32xbf16, #tpu.memory_space<vmem>>, %arg4: memref<32x32xbf16, #tpu.memory_space<vmem>>, %arg5: memref<32x32xbf16, #tpu.memory_space<vmem>>, %arg6: memref<32x32xbf16, #tpu.memory_space<vmem>>, %arg7: memref<32x32xbf16, #tpu.memory_space<vmem>>, %arg8: memref<32x32xbf16, #tpu.memory_space<vmem>>, %arg9: memref<32x32xbf16, #tpu.memory_space<vmem>>, %arg10: memref<32x32xbf16, #tpu.memory_space<vmem>>, %arg11: memref<32x128xbf16, #tpu.memory_space<vmem>>, %arg12: memref<128x32xbf16, #tpu.memory_space<vmem>>, %arg13: memref<9x32xf32, #tpu.memory_space<vmem>>, %arg14: memref<1x128xf32, #tpu.memory_space<vmem>>, %arg15: memref<16x32xf32, #tpu.memory_space<vmem>>, %arg16: memref<16x32xf32, #tpu.memory_space<vmem>>) attributes {dimension_semantics = [#tpu.dimension_semantics<parallel>], iteration_bounds = array<i64: 1>, scalar_prefetch = 0 : i64, scratch_operands = 1 : i64, tpu.core_type = #tpu.core_type<tc>, window_params = [{transform_indices = @transform_0, window_bounds = array<i64: 16, 32>}, {transform_indices = @transform_1, window_bounds = array<i64: 16, 32>}, {pipeline_mode = #tpu.pipeline_mode<synchronous>, transform_indices = @transform_2, window_bounds = array<i64: 32, 32>}, {pipeline_mode = #tpu.pipeline_mode<synchronous>, transform_indices = @transform_3, window_bounds = array<i64: 32, 32>}, {pipeline_mode = #tpu.pipeline_mode<synchronous>, transform_indices = @transform_4, window_bounds = array<i64: 32, 32>}, {pipeline_mode = #tpu.pipeline_mode<synchronous>, transform_indices = @transform_5, window_bounds = array<i64: 32, 32>}, {pipeline_mode = #tpu.pipeline_mode<synchronous>, transform_indices = @transform_6, window_bounds = array<i64: 32, 32>}, {pipeline_mode = #tpu.pipeline_mode<synchronous>, transform_indices = @transform_7, window_bounds = array<i64: 32, 32>}, {pipeline_mode = #tpu.pipeline_mode<synchronous>, transform_indices = @transform_8, window_bounds = array<i64: 32, 32>}, {pipeline_mode = #tpu.pipeline_mode<synchronous>, transform_indices = @transform_9, window_bounds = array<i64: 32, 32>}, {pipeline_mode = #tpu.pipeline_mode<synchronous>, transform_indices = @transform_10, window_bounds = array<i64: 32, 128>}, {pipeline_mode = #tpu.pipeline_mode<synchronous>, transform_indices = @transform_11, window_bounds = array<i64: 128, 32>}, {pipeline_mode = #tpu.pipeline_mode<synchronous>, transform_indices = @transform_12, window_bounds = array<i64: 9, 32>}, {pipeline_mode = #tpu.pipeline_mode<synchronous>, transform_indices = @transform_13, window_bounds = array<i64: 1, 128>}, {transform_indices = @transform_14, window_bounds = array<i64: 16, 32>}]} {
    %c0 = arith.constant 0 : index
    %c0_0 = arith.constant 0 : index
    %0 = vector.load %arg1[%c0, %c0_0] : memref<16x32xf32, #tpu.memory_space<vmem>>, vector<16x32xf32>
    %c0_1 = arith.constant 0 : index
    %c0_2 = arith.constant 0 : index
    %1 = vector.load %arg2[%c0_1, %c0_2] : memref<16x32xf32, #tpu.memory_space<vmem>>, vector<16x32xf32>
    %2 = arith.mulf %0, %0 : vector<16x32xf32>
    %cst = arith.constant dense<0.000000e+00> : vector<16xf32>
    %3 = vector.multi_reduction <add>, %2, %cst [1] : vector<16x32xf32> to vector<16xf32>
    %4 = vector.shape_cast %3 : vector<16xf32> to vector<16x1xf32>
    %cst_3 = arith.constant 3.200000e+01 : f32
    %5 = vector.broadcast %cst_3 : f32 to vector<16x1xf32>
    %6 = arith.divf %4, %5 : vector<16x1xf32>
    %cst_4 = arith.constant 1.1920929E-7 : f32
    %7 = vector.broadcast %cst_4 : f32 to vector<16x1xf32>
    %8 = arith.addf %6, %7 : vector<16x1xf32>
    %9 = math.rsqrt %8 : vector<16x1xf32>
    %10 = vector.broadcast %9 : vector<16x1xf32> to vector<16x32xf32>
    %11 = arith.mulf %0, %10 : vector<16x32xf32>
    %c0_5 = arith.constant 0 : index
    %c0_6 = arith.constant 0 : index
    %12 = vector.load %arg13[%c0_5, %c0_6] : memref<9x32xf32, #tpu.memory_space<vmem>>, vector<1x32xf32>
    %c1 = arith.constant 1 : index
    %c0_7 = arith.constant 0 : index
    %13 = vector.load %arg13[%c1, %c0_7] : memref<9x32xf32, #tpu.memory_space<vmem>>, vector<1x32xf32>
    %c2 = arith.constant 2 : index
    %c0_8 = arith.constant 0 : index
    %14 = vector.load %arg13[%c2, %c0_8] : memref<9x32xf32, #tpu.memory_space<vmem>>, vector<1x32xf32>
    %c3 = arith.constant 3 : index
    %c0_9 = arith.constant 0 : index
    %15 = vector.load %arg13[%c3, %c0_9] : memref<9x32xf32, #tpu.memory_space<vmem>>, vector<1x32xf32>
    %16 = arith.truncf %11 : vector<16x32xf32> to vector<16x32xbf16>
    %c0_10 = arith.constant 0 : index
    %c0_11 = arith.constant 0 : index
    %17 = vector.load %arg3[%c0_10, %c0_11] : memref<32x32xbf16, #tpu.memory_space<vmem>>, vector<32x32xbf16>
    %cst_12 = arith.constant dense<0.000000e+00> : vector<16x32xf32>
    %18 = tpu.matmul %16, %17, %cst_12 {dimension_numbers = #tpu.dot_dimension_numbers<[1], [0], [0], [1], [0, 0, 1, 1], [], []>} : vector<16x32xbf16>, vector<32x32xbf16>, vector<16x32xf32> -> vector<16x32xf32>
    %19 = vector.broadcast %12 : vector<1x32xf32> to vector<16x32xf32>
    %20 = arith.addf %18, %19 : vector<16x32xf32>
    %21 = arith.truncf %20 : vector<16x32xf32> to vector<16x32xbf16>
    %22 = arith.truncf %11 : vector<16x32xf32> to vector<16x32xbf16>
    %c0_13 = arith.constant 0 : index
    %c0_14 = arith.constant 0 : index
    %23 = vector.load %arg4[%c0_13, %c0_14] : memref<32x32xbf16, #tpu.memory_space<vmem>>, vector<32x32xbf16>
    %cst_15 = arith.constant dense<0.000000e+00> : vector<16x32xf32>
    %24 = tpu.matmul %22, %23, %cst_15 {dimension_numbers = #tpu.dot_dimension_numbers<[1], [0], [0], [1], [0, 0, 1, 1], [], []>} : vector<16x32xbf16>, vector<32x32xbf16>, vector<16x32xf32> -> vector<16x32xf32>
    %25 = vector.broadcast %13 : vector<1x32xf32> to vector<16x32xf32>
    %26 = arith.addf %24, %25 : vector<16x32xf32>
    %27 = arith.truncf %26 : vector<16x32xf32> to vector<16x32xbf16>
    %28 = arith.truncf %11 : vector<16x32xf32> to vector<16x32xbf16>
    %c0_16 = arith.constant 0 : index
    %c0_17 = arith.constant 0 : index
    %29 = vector.load %arg5[%c0_16, %c0_17] : memref<32x32xbf16, #tpu.memory_space<vmem>>, vector<32x32xbf16>
    %cst_18 = arith.constant dense<0.000000e+00> : vector<16x32xf32>
    %30 = tpu.matmul %28, %29, %cst_18 {dimension_numbers = #tpu.dot_dimension_numbers<[1], [0], [0], [1], [0, 0, 1, 1], [], []>} : vector<16x32xbf16>, vector<32x32xbf16>, vector<16x32xf32> -> vector<16x32xf32>
    %31 = vector.broadcast %14 : vector<1x32xf32> to vector<16x32xf32>
    %32 = arith.addf %30, %31 : vector<16x32xf32>
    %33 = arith.truncf %32 : vector<16x32xf32> to vector<16x32xbf16>
    %34 = vector.extract_strided_slice %21 {offsets = [0, 0], sizes = [8, 8], strides = [1, 1]} : vector<16x32xbf16> to vector<8x8xbf16>
    %35 = vector.extract_strided_slice %27 {offsets = [0, 0], sizes = [8, 8], strides = [1, 1]} : vector<16x32xbf16> to vector<8x8xbf16>
    %cst_19 = arith.constant dense<0.000000e+00> : vector<8x8xf32>
    %36 = tpu.matmul %34, %35, %cst_19 {dimension_numbers = #tpu.dot_dimension_numbers<[1], [1], [0], [0], [0, 0, 1, 0], [], []>} : vector<8x8xbf16>, vector<8x8xbf16>, vector<8x8xf32> -> vector<8x8xf32>
    %cst_20 = arith.constant 0.353553385 : f32
    %37 = vector.broadcast %cst_20 : f32 to vector<8x8xf32>
    %38 = arith.mulf %36, %37 : vector<8x8xf32>
    %cst_21 = arith.constant dense<0xFF800000> : vector<8xf32>
    %39 = vector.multi_reduction <maximumf>, %38, %cst_21 [1] : vector<8x8xf32> to vector<8xf32>
    %40 = vector.shape_cast %39 : vector<8xf32> to vector<8x1xf32>
    %41 = vector.broadcast %40 : vector<8x1xf32> to vector<8x8xf32>
    %42 = arith.subf %38, %41 : vector<8x8xf32>
    %43 = math.exp %42 : vector<8x8xf32>
    %cst_22 = arith.constant dense<0.000000e+00> : vector<8xf32>
    %44 = vector.multi_reduction <add>, %43, %cst_22 [1] : vector<8x8xf32> to vector<8xf32>
    %45 = vector.shape_cast %44 : vector<8xf32> to vector<8x1xf32>
    %46 = tpu.reciprocal %45 {approx = true} : vector<8x1xf32> -> vector<8x1xf32>
    %47 = vector.broadcast %46 : vector<8x1xf32> to vector<8x8xf32>
    %48 = arith.mulf %43, %47 : vector<8x8xf32>
    %49 = arith.truncf %48 : vector<8x8xf32> to vector<8x8xbf16>
    %50 = vector.extract_strided_slice %33 {offsets = [0, 0], sizes = [8, 8], strides = [1, 1]} : vector<16x32xbf16> to vector<8x8xbf16>
    %cst_23 = arith.constant dense<0.000000e+00> : vector<8x8xf32>
    %51 = tpu.matmul %49, %50, %cst_23 {dimension_numbers = #tpu.dot_dimension_numbers<[1], [0], [0], [1], [0, 0, 1, 1], [], []>} : vector<8x8xbf16>, vector<8x8xbf16>, vector<8x8xf32> -> vector<8x8xf32>
    %c0_24 = arith.constant 0 : index
    %c0_25 = arith.constant 0 : index
    %52 = vector.load %arg16[%c0_24, %c0_25] : memref<16x32xf32, #tpu.memory_space<vmem>>, vector<8x8xf32>
    tpu.vector_store %arg16[%c0_24, %c0_25], %51 {strides = array<i32>} : memref<16x32xf32, #tpu.memory_space<vmem>>, vector<8x8xf32>,
    %53 = vector.extract_strided_slice %21 {offsets = [0, 8], sizes = [8, 8], strides = [1, 1]} : vector<16x32xbf16> to vector<8x8xbf16>
    %54 = vector.extract_strided_slice %27 {offsets = [0, 8], sizes = [8, 8], strides = [1, 1]} : vector<16x32xbf16> to vector<8x8xbf16>
    %cst_26 = arith.constant dense<0.000000e+00> : vector<8x8xf32>
    %55 = tpu.matmul %53, %54, %cst_26 {dimension_numbers = #tpu.dot_dimension_numbers<[1], [1], [0], [0], [0, 0, 1, 0], [], []>} : vector<8x8xbf16>, vector<8x8xbf16>, vector<8x8xf32> -> vector<8x8xf32>
    %cst_27 = arith.constant 0.353553385 : f32
    %56 = vector.broadcast %cst_27 : f32 to vector<8x8xf32>
    %57 = arith.mulf %55, %56 : vector<8x8xf32>
    %cst_28 = arith.constant dense<0xFF800000> : vector<8xf32>
    %58 = vector.multi_reduction <maximumf>, %57, %cst_28 [1] : vector<8x8xf32> to vector<8xf32>
    %59 = vector.shape_cast %58 : vector<8xf32> to vector<8x1xf32>
    %60 = vector.broadcast %59 : vector<8x1xf32> to vector<8x8xf32>
    %61 = arith.subf %57, %60 : vector<8x8xf32>
    %62 = math.exp %61 : vector<8x8xf32>
    %cst_29 = arith.constant dense<0.000000e+00> : vector<8xf32>
    %63 = vector.multi_reduction <add>, %62, %cst_29 [1] : vector<8x8xf32> to vector<8xf32>
    %64 = vector.shape_cast %63 : vector<8xf32> to vector<8x1xf32>
    %65 = tpu.reciprocal %64 {approx = true} : vector<8x1xf32> -> vector<8x1xf32>
    %66 = vector.broadcast %65 : vector<8x1xf32> to vector<8x8xf32>
    %67 = arith.mulf %62, %66 : vector<8x8xf32>
    %68 = arith.truncf %67 : vector<8x8xf32> to vector<8x8xbf16>
    %69 = vector.extract_strided_slice %33 {offsets = [0, 8], sizes = [8, 8], strides = [1, 1]} : vector<16x32xbf16> to vector<8x8xbf16>
    %cst_30 = arith.constant dense<0.000000e+00> : vector<8x8xf32>
    %70 = tpu.matmul %68, %69, %cst_30 {dimension_numbers = #tpu.dot_dimension_numbers<[1], [0], [0], [1], [0, 0, 1, 1], [], []>} : vector<8x8xbf16>, vector<8x8xbf16>, vector<8x8xf32> -> vector<8x8xf32>
    %c0_31 = arith.constant 0 : index
    %c8 = arith.constant 8 : index
    %71 = vector.load %arg16[%c0_31, %c8] : memref<16x32xf32, #tpu.memory_space<vmem>>, vector<8x8xf32>
    tpu.vector_store %arg16[%c0_31, %c8], %70 {strides = array<i32>} : memref<16x32xf32, #tpu.memory_space<vmem>>, vector<8x8xf32>,
    %72 = vector.extract_strided_slice %21 {offsets = [0, 16], sizes = [8, 8], strides = [1, 1]} : vector<16x32xbf16> to vector<8x8xbf16>
    %73 = vector.extract_strided_slice %27 {offsets = [0, 16], sizes = [8, 8], strides = [1, 1]} : vector<16x32xbf16> to vector<8x8xbf16>
    %cst_32 = arith.constant dense<0.000000e+00> : vector<8x8xf32>
    %74 = tpu.matmul %72, %73, %cst_32 {dimension_numbers = #tpu.dot_dimension_numbers<[1], [1], [0], [0], [0, 0, 1, 0], [], []>} : vector<8x8xbf16>, vector<8x8xbf16>, vector<8x8xf32> -> vector<8x8xf32>
    %cst_33 = arith.constant 0.353553385 : f32
    %75 = vector.broadcast %cst_33 : f32 to vector<8x8xf32>
    %76 = arith.mulf %74, %75 : vector<8x8xf32>
    %cst_34 = arith.constant dense<0xFF800000> : vector<8xf32>
    %77 = vector.multi_reduction <maximumf>, %76, %cst_34 [1] : vector<8x8xf32> to vector<8xf32>
    %78 = vector.shape_cast %77 : vector<8xf32> to vector<8x1xf32>
    %79 = vector.broadcast %78 : vector<8x1xf32> to vector<8x8xf32>
    %80 = arith.subf %76, %79 : vector<8x8xf32>
    %81 = math.exp %80 : vector<8x8xf32>
    %cst_35 = arith.constant dense<0.000000e+00> : vector<8xf32>
    %82 = vector.multi_reduction <add>, %81, %cst_35 [1] : vector<8x8xf32> to vector<8xf32>
    %83 = vector.shape_cast %82 : vector<8xf32> to vector<8x1xf32>
    %84 = tpu.reciprocal %83 {approx = true} : vector<8x1xf32> -> vector<8x1xf32>
    %85 = vector.broadcast %84 : vector<8x1xf32> to vector<8x8xf32>
    %86 = arith.mulf %81, %85 : vector<8x8xf32>
    %87 = arith.truncf %86 : vector<8x8xf32> to vector<8x8xbf16>
    %88 = vector.extract_strided_slice %33 {offsets = [0, 16], sizes = [8, 8], strides = [1, 1]} : vector<16x32xbf16> to vector<8x8xbf16>
    %cst_36 = arith.constant dense<0.000000e+00> : vector<8x8xf32>
    %89 = tpu.matmul %87, %88, %cst_36 {dimension_numbers = #tpu.dot_dimension_numbers<[1], [0], [0], [1], [0, 0, 1, 1], [], []>} : vector<8x8xbf16>, vector<8x8xbf16>, vector<8x8xf32> -> vector<8x8xf32>
    %c0_37 = arith.constant 0 : index
    %c16 = arith.constant 16 : index
    %90 = vector.load %arg16[%c0_37, %c16] : memref<16x32xf32, #tpu.memory_space<vmem>>, vector<8x8xf32>
    tpu.vector_store %arg16[%c0_37, %c16], %89 {strides = array<i32>} : memref<16x32xf32, #tpu.memory_space<vmem>>, vector<8x8xf32>,
    %91 = vector.extract_strided_slice %21 {offsets = [0, 24], sizes = [8, 8], strides = [1, 1]} : vector<16x32xbf16> to vector<8x8xbf16>
    %92 = vector.extract_strided_slice %27 {offsets = [0, 24], sizes = [8, 8], strides = [1, 1]} : vector<16x32xbf16> to vector<8x8xbf16>
    %cst_38 = arith.constant dense<0.000000e+00> : vector<8x8xf32>
    %93 = tpu.matmul %91, %92, %cst_38 {dimension_numbers = #tpu.dot_dimension_numbers<[1], [1], [0], [0], [0, 0, 1, 0], [], []>} : vector<8x8xbf16>, vector<8x8xbf16>, vector<8x8xf32> -> vector<8x8xf32>
    %cst_39 = arith.constant 0.353553385 : f32
    %94 = vector.broadcast %cst_39 : f32 to vector<8x8xf32>
    %95 = arith.mulf %93, %94 : vector<8x8xf32>
    %cst_40 = arith.constant dense<0xFF800000> : vector<8xf32>
    %96 = vector.multi_reduction <maximumf>, %95, %cst_40 [1] : vector<8x8xf32> to vector<8xf32>
    %97 = vector.shape_cast %96 : vector<8xf32> to vector<8x1xf32>
    %98 = vector.broadcast %97 : vector<8x1xf32> to vector<8x8xf32>
    %99 = arith.subf %95, %98 : vector<8x8xf32>
    %100 = math.exp %99 : vector<8x8xf32>
    %cst_41 = arith.constant dense<0.000000e+00> : vector<8xf32>
    %101 = vector.multi_reduction <add>, %100, %cst_41 [1] : vector<8x8xf32> to vector<8xf32>
    %102 = vector.shape_cast %101 : vector<8xf32> to vector<8x1xf32>
    %103 = tpu.reciprocal %102 {approx = true} : vector<8x1xf32> -> vector<8x1xf32>
    %104 = vector.broadcast %103 : vector<8x1xf32> to vector<8x8xf32>
    %105 = arith.mulf %100, %104 : vector<8x8xf32>
    %106 = arith.truncf %105 : vector<8x8xf32> to vector<8x8xbf16>
    %107 = vector.extract_strided_slice %33 {offsets = [0, 24], sizes = [8, 8], strides = [1, 1]} : vector<16x32xbf16> to vector<8x8xbf16>
    %cst_42 = arith.constant dense<0.000000e+00> : vector<8x8xf32>
    %108 = tpu.matmul %106, %107, %cst_42 {dimension_numbers = #tpu.dot_dimension_numbers<[1], [0], [0], [1], [0, 0, 1, 1], [], []>} : vector<8x8xbf16>, vector<8x8xbf16>, vector<8x8xf32> -> vector<8x8xf32>
    %c0_43 = arith.constant 0 : index
    %c24 = arith.constant 24 : index
    %109 = vector.load %arg16[%c0_43, %c24] : memref<16x32xf32, #tpu.memory_space<vmem>>, vector<8x8xf32>
    tpu.vector_store %arg16[%c0_43, %c24], %108 {strides = array<i32>} : memref<16x32xf32, #tpu.memory_space<vmem>>, vector<8x8xf32>,
    %110 = vector.extract_strided_slice %21 {offsets = [8, 0], sizes = [8, 8], strides = [1, 1]} : vector<16x32xbf16> to vector<8x8xbf16>
    %111 = vector.extract_strided_slice %27 {offsets = [8, 0], sizes = [8, 8], strides = [1, 1]} : vector<16x32xbf16> to vector<8x8xbf16>
    %cst_44 = arith.constant dense<0.000000e+00> : vector<8x8xf32>
    %112 = tpu.matmul %110, %111, %cst_44 {dimension_numbers = #tpu.dot_dimension_numbers<[1], [1], [0], [0], [0, 0, 1, 0], [], []>} : vector<8x8xbf16>, vector<8x8xbf16>, vector<8x8xf32> -> vector<8x8xf32>
    %cst_45 = arith.constant 0.353553385 : f32
    %113 = vector.broadcast %cst_45 : f32 to vector<8x8xf32>
    %114 = arith.mulf %112, %113 : vector<8x8xf32>
    %cst_46 = arith.constant dense<0xFF800000> : vector<8xf32>
    %115 = vector.multi_reduction <maximumf>, %114, %cst_46 [1] : vector<8x8xf32> to vector<8xf32>
    %116 = vector.shape_cast %115 : vector<8xf32> to vector<8x1xf32>
    %117 = vector.broadcast %116 : vector<8x1xf32> to vector<8x8xf32>
    %118 = arith.subf %114, %117 : vector<8x8xf32>
    %119 = math.exp %118 : vector<8x8xf32>
    %cst_47 = arith.constant dense<0.000000e+00> : vector<8xf32>
    %120 = vector.multi_reduction <add>, %119, %cst_47 [1] : vector<8x8xf32> to vector<8xf32>
    %121 = vector.shape_cast %120 : vector<8xf32> to vector<8x1xf32>
    %122 = tpu.reciprocal %121 {approx = true} : vector<8x1xf32> -> vector<8x1xf32>
    %123 = vector.broadcast %122 : vector<8x1xf32> to vector<8x8xf32>
    %124 = arith.mulf %119, %123 : vector<8x8xf32>
    %125 = arith.truncf %124 : vector<8x8xf32> to vector<8x8xbf16>
    %126 = vector.extract_strided_slice %33 {offsets = [8, 0], sizes = [8, 8], strides = [1, 1]} : vector<16x32xbf16> to vector<8x8xbf16>
    %cst_48 = arith.constant dense<0.000000e+00> : vector<8x8xf32>
    %127 = tpu.matmul %125, %126, %cst_48 {dimension_numbers = #tpu.dot_dimension_numbers<[1], [0], [0], [1], [0, 0, 1, 1], [], []>} : vector<8x8xbf16>, vector<8x8xbf16>, vector<8x8xf32> -> vector<8x8xf32>
    %c8_49 = arith.constant 8 : index
    %c0_50 = arith.constant 0 : index
    %128 = vector.load %arg16[%c8_49, %c0_50] : memref<16x32xf32, #tpu.memory_space<vmem>>, vector<8x8xf32>
    tpu.vector_store %arg16[%c8_49, %c0_50], %127 {strides = array<i32>} : memref<16x32xf32, #tpu.memory_space<vmem>>, vector<8x8xf32>,
    %129 = vector.extract_strided_slice %21 {offsets = [8, 8], sizes = [8, 8], strides = [1, 1]} : vector<16x32xbf16> to vector<8x8xbf16>
    %130 = vector.extract_strided_slice %27 {offsets = [8, 8], sizes = [8, 8], strides = [1, 1]} : vector<16x32xbf16> to vector<8x8xbf16>
    %cst_51 = arith.constant dense<0.000000e+00> : vector<8x8xf32>
    %131 = tpu.matmul %129, %130, %cst_51 {dimension_numbers = #tpu.dot_dimension_numbers<[1], [1], [0], [0], [0, 0, 1, 0], [], []>} : vector<8x8xbf16>, vector<8x8xbf16>, vector<8x8xf32> -> vector<8x8xf32>
    %cst_52 = arith.constant 0.353553385 : f32
    %132 = vector.broadcast %cst_52 : f32 to vector<8x8xf32>
    %133 = arith.mulf %131, %132 : vector<8x8xf32>
    %cst_53 = arith.constant dense<0xFF800000> : vector<8xf32>
    %134 = vector.multi_reduction <maximumf>, %133, %cst_53 [1] : vector<8x8xf32> to vector<8xf32>
    %135 = vector.shape_cast %134 : vector<8xf32> to vector<8x1xf32>
    %136 = vector.broadcast %135 : vector<8x1xf32> to vector<8x8xf32>
    %137 = arith.subf %133, %136 : vector<8x8xf32>
    %138 = math.exp %137 : vector<8x8xf32>
    %cst_54 = arith.constant dense<0.000000e+00> : vector<8xf32>
    %139 = vector.multi_reduction <add>, %138, %cst_54 [1] : vector<8x8xf32> to vector<8xf32>
    %140 = vector.shape_cast %139 : vector<8xf32> to vector<8x1xf32>
    %141 = tpu.reciprocal %140 {approx = true} : vector<8x1xf32> -> vector<8x1xf32>
    %142 = vector.broadcast %141 : vector<8x1xf32> to vector<8x8xf32>
    %143 = arith.mulf %138, %142 : vector<8x8xf32>
    %144 = arith.truncf %143 : vector<8x8xf32> to vector<8x8xbf16>
    %145 = vector.extract_strided_slice %33 {offsets = [8, 8], sizes = [8, 8], strides = [1, 1]} : vector<16x32xbf16> to vector<8x8xbf16>
    %cst_55 = arith.constant dense<0.000000e+00> : vector<8x8xf32>
    %146 = tpu.matmul %144, %145, %cst_55 {dimension_numbers = #tpu.dot_dimension_numbers<[1], [0], [0], [1], [0, 0, 1, 1], [], []>} : vector<8x8xbf16>, vector<8x8xbf16>, vector<8x8xf32> -> vector<8x8xf32>
    %c8_56 = arith.constant 8 : index
    %c8_57 = arith.constant 8 : index
    %147 = vector.load %arg16[%c8_56, %c8_57] : memref<16x32xf32, #tpu.memory_space<vmem>>, vector<8x8xf32>
    tpu.vector_store %arg16[%c8_56, %c8_57], %146 {strides = array<i32>} : memref<16x32xf32, #tpu.memory_space<vmem>>, vector<8x8xf32>,
    %148 = vector.extract_strided_slice %21 {offsets = [8, 16], sizes = [8, 8], strides = [1, 1]} : vector<16x32xbf16> to vector<8x8xbf16>
    %149 = vector.extract_strided_slice %27 {offsets = [8, 16], sizes = [8, 8], strides = [1, 1]} : vector<16x32xbf16> to vector<8x8xbf16>
    %cst_58 = arith.constant dense<0.000000e+00> : vector<8x8xf32>
    %150 = tpu.matmul %148, %149, %cst_58 {dimension_numbers = #tpu.dot_dimension_numbers<[1], [1], [0], [0], [0, 0, 1, 0], [], []>} : vector<8x8xbf16>, vector<8x8xbf16>, vector<8x8xf32> -> vector<8x8xf32>
    %cst_59 = arith.constant 0.353553385 : f32
    %151 = vector.broadcast %cst_59 : f32 to vector<8x8xf32>
    %152 = arith.mulf %150, %151 : vector<8x8xf32>
    %cst_60 = arith.constant dense<0xFF800000> : vector<8xf32>
    %153 = vector.multi_reduction <maximumf>, %152, %cst_60 [1] : vector<8x8xf32> to vector<8xf32>
    %154 = vector.shape_cast %153 : vector<8xf32> to vector<8x1xf32>
    %155 = vector.broadcast %154 : vector<8x1xf32> to vector<8x8xf32>
    %156 = arith.subf %152, %155 : vector<8x8xf32>
    %157 = math.exp %156 : vector<8x8xf32>
    %cst_61 = arith.constant dense<0.000000e+00> : vector<8xf32>
    %158 = vector.multi_reduction <add>, %157, %cst_61 [1] : vector<8x8xf32> to vector<8xf32>
    %159 = vector.shape_cast %158 : vector<8xf32> to vector<8x1xf32>
    %160 = tpu.reciprocal %159 {approx = true} : vector<8x1xf32> -> vector<8x1xf32>
    %161 = vector.broadcast %160 : vector<8x1xf32> to vector<8x8xf32>
    %162 = arith.mulf %157, %161 : vector<8x8xf32>
    %163 = arith.truncf %162 : vector<8x8xf32> to vector<8x8xbf16>
    %164 = vector.extract_strided_slice %33 {offsets = [8, 16], sizes = [8, 8], strides = [1, 1]} : vector<16x32xbf16> to vector<8x8xbf16>
    %cst_62 = arith.constant dense<0.000000e+00> : vector<8x8xf32>
    %165 = tpu.matmul %163, %164, %cst_62 {dimension_numbers = #tpu.dot_dimension_numbers<[1], [0], [0], [1], [0, 0, 1, 1], [], []>} : vector<8x8xbf16>, vector<8x8xbf16>, vector<8x8xf32> -> vector<8x8xf32>
    %c8_63 = arith.constant 8 : index
    %c16_64 = arith.constant 16 : index
    %166 = vector.load %arg16[%c8_63, %c16_64] : memref<16x32xf32, #tpu.memory_space<vmem>>, vector<8x8xf32>
    tpu.vector_store %arg16[%c8_63, %c16_64], %165 {strides = array<i32>} : memref<16x32xf32, #tpu.memory_space<vmem>>, vector<8x8xf32>,
    %167 = vector.extract_strided_slice %21 {offsets = [8, 24], sizes = [8, 8], strides = [1, 1]} : vector<16x32xbf16> to vector<8x8xbf16>
    %168 = vector.extract_strided_slice %27 {offsets = [8, 24], sizes = [8, 8], strides = [1, 1]} : vector<16x32xbf16> to vector<8x8xbf16>
    %cst_65 = arith.constant dense<0.000000e+00> : vector<8x8xf32>
    %169 = tpu.matmul %167, %168, %cst_65 {dimension_numbers = #tpu.dot_dimension_numbers<[1], [1], [0], [0], [0, 0, 1, 0], [], []>} : vector<8x8xbf16>, vector<8x8xbf16>, vector<8x8xf32> -> vector<8x8xf32>
    %cst_66 = arith.constant 0.353553385 : f32
    %170 = vector.broadcast %cst_66 : f32 to vector<8x8xf32>
    %171 = arith.mulf %169, %170 : vector<8x8xf32>
    %cst_67 = arith.constant dense<0xFF800000> : vector<8xf32>
    %172 = vector.multi_reduction <maximumf>, %171, %cst_67 [1] : vector<8x8xf32> to vector<8xf32>
    %173 = vector.shape_cast %172 : vector<8xf32> to vector<8x1xf32>
    %174 = vector.broadcast %173 : vector<8x1xf32> to vector<8x8xf32>
    %175 = arith.subf %171, %174 : vector<8x8xf32>
    %176 = math.exp %175 : vector<8x8xf32>
    %cst_68 = arith.constant dense<0.000000e+00> : vector<8xf32>
    %177 = vector.multi_reduction <add>, %176, %cst_68 [1] : vector<8x8xf32> to vector<8xf32>
    %178 = vector.shape_cast %177 : vector<8xf32> to vector<8x1xf32>
    %179 = tpu.reciprocal %178 {approx = true} : vector<8x1xf32> -> vector<8x1xf32>
    %180 = vector.broadcast %179 : vector<8x1xf32> to vector<8x8xf32>
    %181 = arith.mulf %176, %180 : vector<8x8xf32>
    %182 = arith.truncf %181 : vector<8x8xf32> to vector<8x8xbf16>
    %183 = vector.extract_strided_slice %33 {offsets = [8, 24], sizes = [8, 8], strides = [1, 1]} : vector<16x32xbf16> to vector<8x8xbf16>
    %cst_69 = arith.constant dense<0.000000e+00> : vector<8x8xf32>
    %184 = tpu.matmul %182, %183, %cst_69 {dimension_numbers = #tpu.dot_dimension_numbers<[1], [0], [0], [1], [0, 0, 1, 1], [], []>} : vector<8x8xbf16>, vector<8x8xbf16>, vector<8x8xf32> -> vector<8x8xf32>
    %c8_70 = arith.constant 8 : index
    %c24_71 = arith.constant 24 : index
    %185 = vector.load %arg16[%c8_70, %c24_71] : memref<16x32xf32, #tpu.memory_space<vmem>>, vector<8x8xf32>
    tpu.vector_store %arg16[%c8_70, %c24_71], %184 {strides = array<i32>} : memref<16x32xf32, #tpu.memory_space<vmem>>, vector<8x8xf32>,
    %c0_72 = arith.constant 0 : index
    %c0_73 = arith.constant 0 : index
    %186 = vector.load %arg16[%c0_72, %c0_73] : memref<16x32xf32, #tpu.memory_space<vmem>>, vector<16x32xf32>
    %187 = arith.truncf %186 : vector<16x32xf32> to vector<16x32xbf16>
    %c0_74 = arith.constant 0 : index
    %c0_75 = arith.constant 0 : index
    %188 = vector.load %arg6[%c0_74, %c0_75] : memref<32x32xbf16, #tpu.memory_space<vmem>>, vector<32x32xbf16>
    %cst_76 = arith.constant dense<0.000000e+00> : vector<16x32xf32>
    %189 = tpu.matmul %187, %188, %cst_76 {dimension_numbers = #tpu.dot_dimension_numbers<[1], [0], [0], [1], [0, 0, 1, 1], [], []>} : vector<16x32xbf16>, vector<32x32xbf16>, vector<16x32xf32> -> vector<16x32xf32>
    %190 = vector.broadcast %15 : vector<1x32xf32> to vector<16x32xf32>
    %191 = arith.addf %189, %190 : vector<16x32xf32>
    %192 = arith.addf %0, %191 : vector<16x32xf32>
    %193 = arith.mulf %192, %192 : vector<16x32xf32>
    %cst_77 = arith.constant dense<0.000000e+00> : vector<16xf32>
    %194 = vector.multi_reduction <add>, %193, %cst_77 [1] : vector<16x32xf32> to vector<16xf32>
    %195 = vector.shape_cast %194 : vector<16xf32> to vector<16x1xf32>
    %cst_78 = arith.constant 3.200000e+01 : f32
    %196 = vector.broadcast %cst_78 : f32 to vector<16x1xf32>
    %197 = arith.divf %195, %196 : vector<16x1xf32>
    %cst_79 = arith.constant 1.1920929E-7 : f32
    %198 = vector.broadcast %cst_79 : f32 to vector<16x1xf32>
    %199 = arith.addf %197, %198 : vector<16x1xf32>
    %200 = math.rsqrt %199 : vector<16x1xf32>
    %201 = vector.broadcast %200 : vector<16x1xf32> to vector<16x32xf32>
    %202 = arith.mulf %192, %201 : vector<16x32xf32>
    %c4 = arith.constant 4 : index
    %c0_80 = arith.constant 0 : index
    %203 = vector.load %arg13[%c4, %c0_80] : memref<9x32xf32, #tpu.memory_space<vmem>>, vector<1x32xf32>
    %c5 = arith.constant 5 : index
    %c0_81 = arith.constant 0 : index
    %204 = vector.load %arg13[%c5, %c0_81] : memref<9x32xf32, #tpu.memory_space<vmem>>, vector<1x32xf32>
    %c6 = arith.constant 6 : index
    %c0_82 = arith.constant 0 : index
    %205 = vector.load %arg13[%c6, %c0_82] : memref<9x32xf32, #tpu.memory_space<vmem>>, vector<1x32xf32>
    %c7 = arith.constant 7 : index
    %c0_83 = arith.constant 0 : index
    %206 = vector.load %arg13[%c7, %c0_83] : memref<9x32xf32, #tpu.memory_space<vmem>>, vector<1x32xf32>
    %207 = arith.truncf %202 : vector<16x32xf32> to vector<16x32xbf16>
    %c0_84 = arith.constant 0 : index
    %c0_85 = arith.constant 0 : index
    %208 = vector.load %arg7[%c0_84, %c0_85] : memref<32x32xbf16, #tpu.memory_space<vmem>>, vector<32x32xbf16>
    %cst_86 = arith.constant dense<0.000000e+00> : vector<16x32xf32>
    %209 = tpu.matmul %207, %208, %cst_86 {dimension_numbers = #tpu.dot_dimension_numbers<[1], [0], [0], [1], [0, 0, 1, 1], [], []>} : vector<16x32xbf16>, vector<32x32xbf16>, vector<16x32xf32> -> vector<16x32xf32>
    %210 = vector.broadcast %203 : vector<1x32xf32> to vector<16x32xf32>
    %211 = arith.addf %209, %210 : vector<16x32xf32>
    %212 = arith.truncf %211 : vector<16x32xf32> to vector<16x32xbf16>
    %213 = arith.truncf %1 : vector<16x32xf32> to vector<16x32xbf16>
    %c0_87 = arith.constant 0 : index
    %c0_88 = arith.constant 0 : index
    %214 = vector.load %arg8[%c0_87, %c0_88] : memref<32x32xbf16, #tpu.memory_space<vmem>>, vector<32x32xbf16>
    %cst_89 = arith.constant dense<0.000000e+00> : vector<16x32xf32>
    %215 = tpu.matmul %213, %214, %cst_89 {dimension_numbers = #tpu.dot_dimension_numbers<[1], [0], [0], [1], [0, 0, 1, 1], [], []>} : vector<16x32xbf16>, vector<32x32xbf16>, vector<16x32xf32> -> vector<16x32xf32>
    %216 = vector.broadcast %204 : vector<1x32xf32> to vector<16x32xf32>
    %217 = arith.addf %215, %216 : vector<16x32xf32>
    %218 = arith.truncf %217 : vector<16x32xf32> to vector<16x32xbf16>
    %219 = arith.truncf %1 : vector<16x32xf32> to vector<16x32xbf16>
    %c0_90 = arith.constant 0 : index
    %c0_91 = arith.constant 0 : index
    %220 = vector.load %arg9[%c0_90, %c0_91] : memref<32x32xbf16, #tpu.memory_space<vmem>>, vector<32x32xbf16>
    %cst_92 = arith.constant dense<0.000000e+00> : vector<16x32xf32>
    %221 = tpu.matmul %219, %220, %cst_92 {dimension_numbers = #tpu.dot_dimension_numbers<[1], [0], [0], [1], [0, 0, 1, 1], [], []>} : vector<16x32xbf16>, vector<32x32xbf16>, vector<16x32xf32> -> vector<16x32xf32>
    %222 = vector.broadcast %205 : vector<1x32xf32> to vector<16x32xf32>
    %223 = arith.addf %221, %222 : vector<16x32xf32>
    %224 = arith.truncf %223 : vector<16x32xf32> to vector<16x32xbf16>
    %225 = vector.extract_strided_slice %212 {offsets = [0, 0], sizes = [8, 8], strides = [1, 1]} : vector<16x32xbf16> to vector<8x8xbf16>
    %226 = vector.extract_strided_slice %218 {offsets = [0, 0], sizes = [8, 8], strides = [1, 1]} : vector<16x32xbf16> to vector<8x8xbf16>
    %cst_93 = arith.constant dense<0.000000e+00> : vector<8x8xf32>
    %227 = tpu.matmul %225, %226, %cst_93 {dimension_numbers = #tpu.dot_dimension_numbers<[1], [1], [0], [0], [0, 0, 1, 0], [], []>} : vector<8x8xbf16>, vector<8x8xbf16>, vector<8x8xf32> -> vector<8x8xf32>
    %cst_94 = arith.constant 0.353553385 : f32
    %228 = vector.broadcast %cst_94 : f32 to vector<8x8xf32>
    %229 = arith.mulf %227, %228 : vector<8x8xf32>
    %cst_95 = arith.constant dense<0xFF800000> : vector<8xf32>
    %230 = vector.multi_reduction <maximumf>, %229, %cst_95 [1] : vector<8x8xf32> to vector<8xf32>
    %231 = vector.shape_cast %230 : vector<8xf32> to vector<8x1xf32>
    %232 = vector.broadcast %231 : vector<8x1xf32> to vector<8x8xf32>
    %233 = arith.subf %229, %232 : vector<8x8xf32>
    %234 = math.exp %233 : vector<8x8xf32>
    %cst_96 = arith.constant dense<0.000000e+00> : vector<8xf32>
    %235 = vector.multi_reduction <add>, %234, %cst_96 [1] : vector<8x8xf32> to vector<8xf32>
    %236 = vector.shape_cast %235 : vector<8xf32> to vector<8x1xf32>
    %237 = tpu.reciprocal %236 {approx = true} : vector<8x1xf32> -> vector<8x1xf32>
    %238 = vector.broadcast %237 : vector<8x1xf32> to vector<8x8xf32>
    %239 = arith.mulf %234, %238 : vector<8x8xf32>
    %240 = arith.truncf %239 : vector<8x8xf32> to vector<8x8xbf16>
    %241 = vector.extract_strided_slice %224 {offsets = [0, 0], sizes = [8, 8], strides = [1, 1]} : vector<16x32xbf16> to vector<8x8xbf16>
    %cst_97 = arith.constant dense<0.000000e+00> : vector<8x8xf32>
    %242 = tpu.matmul %240, %241, %cst_97 {dimension_numbers = #tpu.dot_dimension_numbers<[1], [0], [0], [1], [0, 0, 1, 1], [], []>} : vector<8x8xbf16>, vector<8x8xbf16>, vector<8x8xf32> -> vector<8x8xf32>
    %c0_98 = arith.constant 0 : index
    %c0_99 = arith.constant 0 : index
    %243 = vector.load %arg16[%c0_98, %c0_99] : memref<16x32xf32, #tpu.memory_space<vmem>>, vector<8x8xf32>
    tpu.vector_store %arg16[%c0_98, %c0_99], %242 {strides = array<i32>} : memref<16x32xf32, #tpu.memory_space<vmem>>, vector<8x8xf32>,
    %244 = vector.extract_strided_slice %212 {offsets = [0, 8], sizes = [8, 8], strides = [1, 1]} : vector<16x32xbf16> to vector<8x8xbf16>
    %245 = vector.extract_strided_slice %218 {offsets = [0, 8], sizes = [8, 8], strides = [1, 1]} : vector<16x32xbf16> to vector<8x8xbf16>
    %cst_100 = arith.constant dense<0.000000e+00> : vector<8x8xf32>
    %246 = tpu.matmul %244, %245, %cst_100 {dimension_numbers = #tpu.dot_dimension_numbers<[1], [1], [0], [0], [0, 0, 1, 0], [], []>} : vector<8x8xbf16>, vector<8x8xbf16>, vector<8x8xf32> -> vector<8x8xf32>
    %cst_101 = arith.constant 0.353553385 : f32
    %247 = vector.broadcast %cst_101 : f32 to vector<8x8xf32>
    %248 = arith.mulf %246, %247 : vector<8x8xf32>
    %cst_102 = arith.constant dense<0xFF800000> : vector<8xf32>
    %249 = vector.multi_reduction <maximumf>, %248, %cst_102 [1] : vector<8x8xf32> to vector<8xf32>
    %250 = vector.shape_cast %249 : vector<8xf32> to vector<8x1xf32>
    %251 = vector.broadcast %250 : vector<8x1xf32> to vector<8x8xf32>
    %252 = arith.subf %248, %251 : vector<8x8xf32>
    %253 = math.exp %252 : vector<8x8xf32>
    %cst_103 = arith.constant dense<0.000000e+00> : vector<8xf32>
    %254 = vector.multi_reduction <add>, %253, %cst_103 [1] : vector<8x8xf32> to vector<8xf32>
    %255 = vector.shape_cast %254 : vector<8xf32> to vector<8x1xf32>
    %256 = tpu.reciprocal %255 {approx = true} : vector<8x1xf32> -> vector<8x1xf32>
    %257 = vector.broadcast %256 : vector<8x1xf32> to vector<8x8xf32>
    %258 = arith.mulf %253, %257 : vector<8x8xf32>
    %259 = arith.truncf %258 : vector<8x8xf32> to vector<8x8xbf16>
    %260 = vector.extract_strided_slice %224 {offsets = [0, 8], sizes = [8, 8], strides = [1, 1]} : vector<16x32xbf16> to vector<8x8xbf16>
    %cst_104 = arith.constant dense<0.000000e+00> : vector<8x8xf32>
    %261 = tpu.matmul %259, %260, %cst_104 {dimension_numbers = #tpu.dot_dimension_numbers<[1], [0], [0], [1], [0, 0, 1, 1], [], []>} : vector<8x8xbf16>, vector<8x8xbf16>, vector<8x8xf32> -> vector<8x8xf32>
    %c0_105 = arith.constant 0 : index
    %c8_106 = arith.constant 8 : index
    %262 = vector.load %arg16[%c0_105, %c8_106] : memref<16x32xf32, #tpu.memory_space<vmem>>, vector<8x8xf32>
    tpu.vector_store %arg16[%c0_105, %c8_106], %261 {strides = array<i32>} : memref<16x32xf32, #tpu.memory_space<vmem>>, vector<8x8xf32>,
    %263 = vector.extract_strided_slice %212 {offsets = [0, 16], sizes = [8, 8], strides = [1, 1]} : vector<16x32xbf16> to vector<8x8xbf16>
    %264 = vector.extract_strided_slice %218 {offsets = [0, 16], sizes = [8, 8], strides = [1, 1]} : vector<16x32xbf16> to vector<8x8xbf16>
    %cst_107 = arith.constant dense<0.000000e+00> : vector<8x8xf32>
    %265 = tpu.matmul %263, %264, %cst_107 {dimension_numbers = #tpu.dot_dimension_numbers<[1], [1], [0], [0], [0, 0, 1, 0], [], []>} : vector<8x8xbf16>, vector<8x8xbf16>, vector<8x8xf32> -> vector<8x8xf32>
    %cst_108 = arith.constant 0.353553385 : f32
    %266 = vector.broadcast %cst_108 : f32 to vector<8x8xf32>
    %267 = arith.mulf %265, %266 : vector<8x8xf32>
    %cst_109 = arith.constant dense<0xFF800000> : vector<8xf32>
    %268 = vector.multi_reduction <maximumf>, %267, %cst_109 [1] : vector<8x8xf32> to vector<8xf32>
    %269 = vector.shape_cast %268 : vector<8xf32> to vector<8x1xf32>
    %270 = vector.broadcast %269 : vector<8x1xf32> to vector<8x8xf32>
    %271 = arith.subf %267, %270 : vector<8x8xf32>
    %272 = math.exp %271 : vector<8x8xf32>
    %cst_110 = arith.constant dense<0.000000e+00> : vector<8xf32>
    %273 = vector.multi_reduction <add>, %272, %cst_110 [1] : vector<8x8xf32> to vector<8xf32>
    %274 = vector.shape_cast %273 : vector<8xf32> to vector<8x1xf32>
    %275 = tpu.reciprocal %274 {approx = true} : vector<8x1xf32> -> vector<8x1xf32>
    %276 = vector.broadcast %275 : vector<8x1xf32> to vector<8x8xf32>
    %277 = arith.mulf %272, %276 : vector<8x8xf32>
    %278 = arith.truncf %277 : vector<8x8xf32> to vector<8x8xbf16>
    %279 = vector.extract_strided_slice %224 {offsets = [0, 16], sizes = [8, 8], strides = [1, 1]} : vector<16x32xbf16> to vector<8x8xbf16>
    %cst_111 = arith.constant dense<0.000000e+00> : vector<8x8xf32>
    %280 = tpu.matmul %278, %279, %cst_111 {dimension_numbers = #tpu.dot_dimension_numbers<[1], [0], [0], [1], [0, 0, 1, 1], [], []>} : vector<8x8xbf16>, vector<8x8xbf16>, vector<8x8xf32> -> vector<8x8xf32>
    %c0_112 = arith.constant 0 : index
    %c16_113 = arith.constant 16 : index
    %281 = vector.load %arg16[%c0_112, %c16_113] : memref<16x32xf32, #tpu.memory_space<vmem>>, vector<8x8xf32>
    tpu.vector_store %arg16[%c0_112, %c16_113], %280 {strides = array<i32>} : memref<16x32xf32, #tpu.memory_space<vmem>>, vector<8x8xf32>,
    %282 = vector.extract_strided_slice %212 {offsets = [0, 24], sizes = [8, 8], strides = [1, 1]} : vector<16x32xbf16> to vector<8x8xbf16>
    %283 = vector.extract_strided_slice %218 {offsets = [0, 24], sizes = [8, 8], strides = [1, 1]} : vector<16x32xbf16> to vector<8x8xbf16>
    %cst_114 = arith.constant dense<0.000000e+00> : vector<8x8xf32>
    %284 = tpu.matmul %282, %283, %cst_114 {dimension_numbers = #tpu.dot_dimension_numbers<[1], [1], [0], [0], [0, 0, 1, 0], [], []>} : vector<8x8xbf16>, vector<8x8xbf16>, vector<8x8xf32> -> vector<8x8xf32>
    %cst_115 = arith.constant 0.353553385 : f32
    %285 = vector.broadcast %cst_115 : f32 to vector<8x8xf32>
    %286 = arith.mulf %284, %285 : vector<8x8xf32>
    %cst_116 = arith.constant dense<0xFF800000> : vector<8xf32>
    %287 = vector.multi_reduction <maximumf>, %286, %cst_116 [1] : vector<8x8xf32> to vector<8xf32>
    %288 = vector.shape_cast %287 : vector<8xf32> to vector<8x1xf32>
    %289 = vector.broadcast %288 : vector<8x1xf32> to vector<8x8xf32>
    %290 = arith.subf %286, %289 : vector<8x8xf32>
    %291 = math.exp %290 : vector<8x8xf32>
    %cst_117 = arith.constant dense<0.000000e+00> : vector<8xf32>
    %292 = vector.multi_reduction <add>, %291, %cst_117 [1] : vector<8x8xf32> to vector<8xf32>
    %293 = vector.shape_cast %292 : vector<8xf32> to vector<8x1xf32>
    %294 = tpu.reciprocal %293 {approx = true} : vector<8x1xf32> -> vector<8x1xf32>
    %295 = vector.broadcast %294 : vector<8x1xf32> to vector<8x8xf32>
    %296 = arith.mulf %291, %295 : vector<8x8xf32>
    %297 = arith.truncf %296 : vector<8x8xf32> to vector<8x8xbf16>
    %298 = vector.extract_strided_slice %224 {offsets = [0, 24], sizes = [8, 8], strides = [1, 1]} : vector<16x32xbf16> to vector<8x8xbf16>
    %cst_118 = arith.constant dense<0.000000e+00> : vector<8x8xf32>
    %299 = tpu.matmul %297, %298, %cst_118 {dimension_numbers = #tpu.dot_dimension_numbers<[1], [0], [0], [1], [0, 0, 1, 1], [], []>} : vector<8x8xbf16>, vector<8x8xbf16>, vector<8x8xf32> -> vector<8x8xf32>
    %c0_119 = arith.constant 0 : index
    %c24_120 = arith.constant 24 : index
    %300 = vector.load %arg16[%c0_119, %c24_120] : memref<16x32xf32, #tpu.memory_space<vmem>>, vector<8x8xf32>
    tpu.vector_store %arg16[%c0_119, %c24_120], %299 {strides = array<i32>} : memref<16x32xf32, #tpu.memory_space<vmem>>, vector<8x8xf32>,
    %301 = vector.extract_strided_slice %212 {offsets = [8, 0], sizes = [8, 8], strides = [1, 1]} : vector<16x32xbf16> to vector<8x8xbf16>
    %302 = vector.extract_strided_slice %218 {offsets = [8, 0], sizes = [8, 8], strides = [1, 1]} : vector<16x32xbf16> to vector<8x8xbf16>
    %cst_121 = arith.constant dense<0.000000e+00> : vector<8x8xf32>
    %303 = tpu.matmul %301, %302, %cst_121 {dimension_numbers = #tpu.dot_dimension_numbers<[1], [1], [0], [0], [0, 0, 1, 0], [], []>} : vector<8x8xbf16>, vector<8x8xbf16>, vector<8x8xf32> -> vector<8x8xf32>
    %cst_122 = arith.constant 0.353553385 : f32
    %304 = vector.broadcast %cst_122 : f32 to vector<8x8xf32>
    %305 = arith.mulf %303, %304 : vector<8x8xf32>
    %cst_123 = arith.constant dense<0xFF800000> : vector<8xf32>
    %306 = vector.multi_reduction <maximumf>, %305, %cst_123 [1] : vector<8x8xf32> to vector<8xf32>
    %307 = vector.shape_cast %306 : vector<8xf32> to vector<8x1xf32>
    %308 = vector.broadcast %307 : vector<8x1xf32> to vector<8x8xf32>
    %309 = arith.subf %305, %308 : vector<8x8xf32>
    %310 = math.exp %309 : vector<8x8xf32>
    %cst_124 = arith.constant dense<0.000000e+00> : vector<8xf32>
    %311 = vector.multi_reduction <add>, %310, %cst_124 [1] : vector<8x8xf32> to vector<8xf32>
    %312 = vector.shape_cast %311 : vector<8xf32> to vector<8x1xf32>
    %313 = tpu.reciprocal %312 {approx = true} : vector<8x1xf32> -> vector<8x1xf32>
    %314 = vector.broadcast %313 : vector<8x1xf32> to vector<8x8xf32>
    %315 = arith.mulf %310, %314 : vector<8x8xf32>
    %316 = arith.truncf %315 : vector<8x8xf32> to vector<8x8xbf16>
    %317 = vector.extract_strided_slice %224 {offsets = [8, 0], sizes = [8, 8], strides = [1, 1]} : vector<16x32xbf16> to vector<8x8xbf16>
    %cst_125 = arith.constant dense<0.000000e+00> : vector<8x8xf32>
    %318 = tpu.matmul %316, %317, %cst_125 {dimension_numbers = #tpu.dot_dimension_numbers<[1], [0], [0], [1], [0, 0, 1, 1], [], []>} : vector<8x8xbf16>, vector<8x8xbf16>, vector<8x8xf32> -> vector<8x8xf32>
    %c8_126 = arith.constant 8 : index
    %c0_127 = arith.constant 0 : index
    %319 = vector.load %arg16[%c8_126, %c0_127] : memref<16x32xf32, #tpu.memory_space<vmem>>, vector<8x8xf32>
    tpu.vector_store %arg16[%c8_126, %c0_127], %318 {strides = array<i32>} : memref<16x32xf32, #tpu.memory_space<vmem>>, vector<8x8xf32>,
    %320 = vector.extract_strided_slice %212 {offsets = [8, 8], sizes = [8, 8], strides = [1, 1]} : vector<16x32xbf16> to vector<8x8xbf16>
    %321 = vector.extract_strided_slice %218 {offsets = [8, 8], sizes = [8, 8], strides = [1, 1]} : vector<16x32xbf16> to vector<8x8xbf16>
    %cst_128 = arith.constant dense<0.000000e+00> : vector<8x8xf32>
    %322 = tpu.matmul %320, %321, %cst_128 {dimension_numbers = #tpu.dot_dimension_numbers<[1], [1], [0], [0], [0, 0, 1, 0], [], []>} : vector<8x8xbf16>, vector<8x8xbf16>, vector<8x8xf32> -> vector<8x8xf32>
    %cst_129 = arith.constant 0.353553385 : f32
    %323 = vector.broadcast %cst_129 : f32 to vector<8x8xf32>
    %324 = arith.mulf %322, %323 : vector<8x8xf32>
    %cst_130 = arith.constant dense<0xFF800000> : vector<8xf32>
    %325 = vector.multi_reduction <maximumf>, %324, %cst_130 [1] : vector<8x8xf32> to vector<8xf32>
    %326 = vector.shape_cast %325 : vector<8xf32> to vector<8x1xf32>
    %327 = vector.broadcast %326 : vector<8x1xf32> to vector<8x8xf32>
    %328 = arith.subf %324, %327 : vector<8x8xf32>
    %329 = math.exp %328 : vector<8x8xf32>
    %cst_131 = arith.constant dense<0.000000e+00> : vector<8xf32>
    %330 = vector.multi_reduction <add>, %329, %cst_131 [1] : vector<8x8xf32> to vector<8xf32>
    %331 = vector.shape_cast %330 : vector<8xf32> to vector<8x1xf32>
    %332 = tpu.reciprocal %331 {approx = true} : vector<8x1xf32> -> vector<8x1xf32>
    %333 = vector.broadcast %332 : vector<8x1xf32> to vector<8x8xf32>
    %334 = arith.mulf %329, %333 : vector<8x8xf32>
    %335 = arith.truncf %334 : vector<8x8xf32> to vector<8x8xbf16>
    %336 = vector.extract_strided_slice %224 {offsets = [8, 8], sizes = [8, 8], strides = [1, 1]} : vector<16x32xbf16> to vector<8x8xbf16>
    %cst_132 = arith.constant dense<0.000000e+00> : vector<8x8xf32>
    %337 = tpu.matmul %335, %336, %cst_132 {dimension_numbers = #tpu.dot_dimension_numbers<[1], [0], [0], [1], [0, 0, 1, 1], [], []>} : vector<8x8xbf16>, vector<8x8xbf16>, vector<8x8xf32> -> vector<8x8xf32>
    %c8_133 = arith.constant 8 : index
    %c8_134 = arith.constant 8 : index
    %338 = vector.load %arg16[%c8_133, %c8_134] : memref<16x32xf32, #tpu.memory_space<vmem>>, vector<8x8xf32>
    tpu.vector_store %arg16[%c8_133, %c8_134], %337 {strides = array<i32>} : memref<16x32xf32, #tpu.memory_space<vmem>>, vector<8x8xf32>,
    %339 = vector.extract_strided_slice %212 {offsets = [8, 16], sizes = [8, 8], strides = [1, 1]} : vector<16x32xbf16> to vector<8x8xbf16>
    %340 = vector.extract_strided_slice %218 {offsets = [8, 16], sizes = [8, 8], strides = [1, 1]} : vector<16x32xbf16> to vector<8x8xbf16>
    %cst_135 = arith.constant dense<0.000000e+00> : vector<8x8xf32>
    %341 = tpu.matmul %339, %340, %cst_135 {dimension_numbers = #tpu.dot_dimension_numbers<[1], [1], [0], [0], [0, 0, 1, 0], [], []>} : vector<8x8xbf16>, vector<8x8xbf16>, vector<8x8xf32> -> vector<8x8xf32>
    %cst_136 = arith.constant 0.353553385 : f32
    %342 = vector.broadcast %cst_136 : f32 to vector<8x8xf32>
    %343 = arith.mulf %341, %342 : vector<8x8xf32>
    %cst_137 = arith.constant dense<0xFF800000> : vector<8xf32>
    %344 = vector.multi_reduction <maximumf>, %343, %cst_137 [1] : vector<8x8xf32> to vector<8xf32>
    %345 = vector.shape_cast %344 : vector<8xf32> to vector<8x1xf32>
    %346 = vector.broadcast %345 : vector<8x1xf32> to vector<8x8xf32>
    %347 = arith.subf %343, %346 : vector<8x8xf32>
    %348 = math.exp %347 : vector<8x8xf32>
    %cst_138 = arith.constant dense<0.000000e+00> : vector<8xf32>
    %349 = vector.multi_reduction <add>, %348, %cst_138 [1] : vector<8x8xf32> to vector<8xf32>
    %350 = vector.shape_cast %349 : vector<8xf32> to vector<8x1xf32>
    %351 = tpu.reciprocal %350 {approx = true} : vector<8x1xf32> -> vector<8x1xf32>
    %352 = vector.broadcast %351 : vector<8x1xf32> to vector<8x8xf32>
    %353 = arith.mulf %348, %352 : vector<8x8xf32>
    %354 = arith.truncf %353 : vector<8x8xf32> to vector<8x8xbf16>
    %355 = vector.extract_strided_slice %224 {offsets = [8, 16], sizes = [8, 8], strides = [1, 1]} : vector<16x32xbf16> to vector<8x8xbf16>
    %cst_139 = arith.constant dense<0.000000e+00> : vector<8x8xf32>
    %356 = tpu.matmul %354, %355, %cst_139 {dimension_numbers = #tpu.dot_dimension_numbers<[1], [0], [0], [1], [0, 0, 1, 1], [], []>} : vector<8x8xbf16>, vector<8x8xbf16>, vector<8x8xf32> -> vector<8x8xf32>
    %c8_140 = arith.constant 8 : index
    %c16_141 = arith.constant 16 : index
    %357 = vector.load %arg16[%c8_140, %c16_141] : memref<16x32xf32, #tpu.memory_space<vmem>>, vector<8x8xf32>
    tpu.vector_store %arg16[%c8_140, %c16_141], %356 {strides = array<i32>} : memref<16x32xf32, #tpu.memory_space<vmem>>, vector<8x8xf32>,
    %358 = vector.extract_strided_slice %212 {offsets = [8, 24], sizes = [8, 8], strides = [1, 1]} : vector<16x32xbf16> to vector<8x8xbf16>
    %359 = vector.extract_strided_slice %218 {offsets = [8, 24], sizes = [8, 8], strides = [1, 1]} : vector<16x32xbf16> to vector<8x8xbf16>
    %cst_142 = arith.constant dense<0.000000e+00> : vector<8x8xf32>
    %360 = tpu.matmul %358, %359, %cst_142 {dimension_numbers = #tpu.dot_dimension_numbers<[1], [1], [0], [0], [0, 0, 1, 0], [], []>} : vector<8x8xbf16>, vector<8x8xbf16>, vector<8x8xf32> -> vector<8x8xf32>
    %cst_143 = arith.constant 0.353553385 : f32
    %361 = vector.broadcast %cst_143 : f32 to vector<8x8xf32>
    %362 = arith.mulf %360, %361 : vector<8x8xf32>
    %cst_144 = arith.constant dense<0xFF800000> : vector<8xf32>
    %363 = vector.multi_reduction <maximumf>, %362, %cst_144 [1] : vector<8x8xf32> to vector<8xf32>
    %364 = vector.shape_cast %363 : vector<8xf32> to vector<8x1xf32>
    %365 = vector.broadcast %364 : vector<8x1xf32> to vector<8x8xf32>
    %366 = arith.subf %362, %365 : vector<8x8xf32>
    %367 = math.exp %366 : vector<8x8xf32>
    %cst_145 = arith.constant dense<0.000000e+00> : vector<8xf32>
    %368 = vector.multi_reduction <add>, %367, %cst_145 [1] : vector<8x8xf32> to vector<8xf32>
    %369 = vector.shape_cast %368 : vector<8xf32> to vector<8x1xf32>
    %370 = tpu.reciprocal %369 {approx = true} : vector<8x1xf32> -> vector<8x1xf32>
    %371 = vector.broadcast %370 : vector<8x1xf32> to vector<8x8xf32>
    %372 = arith.mulf %367, %371 : vector<8x8xf32>
    %373 = arith.truncf %372 : vector<8x8xf32> to vector<8x8xbf16>
    %374 = vector.extract_strided_slice %224 {offsets = [8, 24], sizes = [8, 8], strides = [1, 1]} : vector<16x32xbf16> to vector<8x8xbf16>
    %cst_146 = arith.constant dense<0.000000e+00> : vector<8x8xf32>
    %375 = tpu.matmul %373, %374, %cst_146 {dimension_numbers = #tpu.dot_dimension_numbers<[1], [0], [0], [1], [0, 0, 1, 1], [], []>} : vector<8x8xbf16>, vector<8x8xbf16>, vector<8x8xf32> -> vector<8x8xf32>
    %c8_147 = arith.constant 8 : index
    %c24_148 = arith.constant 24 : index
    %376 = vector.load %arg16[%c8_147, %c24_148] : memref<16x32xf32, #tpu.memory_space<vmem>>, vector<8x8xf32>
    tpu.vector_store %arg16[%c8_147, %c24_148], %375 {strides = array<i32>} : memref<16x32xf32, #tpu.memory_space<vmem>>, vector<8x8xf32>,
    %c0_149 = arith.constant 0 : index
    %c0_150 = arith.constant 0 : index
    %377 = vector.load %arg16[%c0_149, %c0_150] : memref<16x32xf32, #tpu.memory_space<vmem>>, vector<16x32xf32>
    %378 = arith.truncf %377 : vector<16x32xf32> to vector<16x32xbf16>
    %c0_151 = arith.constant 0 : index
    %c0_152 = arith.constant 0 : index
    %379 = vector.load %arg10[%c0_151, %c0_152] : memref<32x32xbf16, #tpu.memory_space<vmem>>, vector<32x32xbf16>
    %cst_153 = arith.constant dense<0.000000e+00> : vector<16x32xf32>
    %380 = tpu.matmul %378, %379, %cst_153 {dimension_numbers = #tpu.dot_dimension_numbers<[1], [0], [0], [1], [0, 0, 1, 1], [], []>} : vector<16x32xbf16>, vector<32x32xbf16>, vector<16x32xf32> -> vector<16x32xf32>
    %381 = vector.broadcast %206 : vector<1x32xf32> to vector<16x32xf32>
    %382 = arith.addf %380, %381 : vector<16x32xf32>
    %383 = arith.addf %192, %382 : vector<16x32xf32>
    %384 = arith.mulf %383, %383 : vector<16x32xf32>
    %cst_154 = arith.constant dense<0.000000e+00> : vector<16xf32>
    %385 = vector.multi_reduction <add>, %384, %cst_154 [1] : vector<16x32xf32> to vector<16xf32>
    %386 = vector.shape_cast %385 : vector<16xf32> to vector<16x1xf32>
    %cst_155 = arith.constant 3.200000e+01 : f32
    %387 = vector.broadcast %cst_155 : f32 to vector<16x1xf32>
    %388 = arith.divf %386, %387 : vector<16x1xf32>
    %cst_156 = arith.constant 1.1920929E-7 : f32
    %389 = vector.broadcast %cst_156 : f32 to vector<16x1xf32>
    %390 = arith.addf %388, %389 : vector<16x1xf32>
    %391 = math.rsqrt %390 : vector<16x1xf32>
    %392 = vector.broadcast %391 : vector<16x1xf32> to vector<16x32xf32>
    %393 = arith.mulf %383, %392 : vector<16x32xf32>
    %c0_157 = arith.constant 0 : index
    %c0_158 = arith.constant 0 : index
    %394 = vector.load %arg14[%c0_157, %c0_158] : memref<1x128xf32, #tpu.memory_space<vmem>>, vector<1x128xf32>
    %c8_159 = arith.constant 8 : index
    %c0_160 = arith.constant 0 : index
    %395 = vector.load %arg13[%c8_159, %c0_160] : memref<9x32xf32, #tpu.memory_space<vmem>>, vector<1x32xf32>
    %396 = arith.truncf %393 : vector<16x32xf32> to vector<16x32xbf16>
    %cst_161 = arith.constant 0.000000e+00 : f32
    %397 = vector.broadcast %cst_161 : f32 to vector<16x32xf32>
    %c0_162 = arith.constant 0 : index
    %c0_163 = arith.constant 0 : index
    %398 = vector.load %arg11[%c0_162, %c0_163] : memref<32x128xbf16, #tpu.memory_space<vmem>>, vector<32x128xbf16>
    %cst_164 = arith.constant dense<0.000000e+00> : vector<16x128xf32>
    %399 = tpu.matmul %396, %398, %cst_164 {dimension_numbers = #tpu.dot_dimension_numbers<[1], [0], [0], [1], [0, 0, 1, 1], [], []>} : vector<16x32xbf16>, vector<32x128xbf16>, vector<16x128xf32> -> vector<16x128xf32>
    %400 = vector.broadcast %394 : vector<1x128xf32> to vector<16x128xf32>
    %401 = arith.addf %399, %400 : vector<16x128xf32>
    %402 = arith.negf %401 : vector<16x128xf32>
    %403 = math.exp %402 : vector<16x128xf32>
    %cst_165 = arith.constant 1.000000e+00 : f32
    %404 = vector.broadcast %cst_165 : f32 to vector<16x128xf32>
    %405 = arith.addf %404, %403 : vector<16x128xf32>
    %406 = arith.divf %404, %405 : vector<16x128xf32>
    %407 = arith.mulf %401, %406 : vector<16x128xf32>
    %408 = arith.truncf %407 : vector<16x128xf32> to vector<16x128xbf16>
    %c0_166 = arith.constant 0 : index
    %c0_167 = arith.constant 0 : index
    %409 = vector.load %arg12[%c0_166, %c0_167] : memref<128x32xbf16, #tpu.memory_space<vmem>>, vector<128x32xbf16>
    %cst_168 = arith.constant dense<0.000000e+00> : vector<16x32xf32>
    %410 = tpu.matmul %408, %409, %cst_168 {dimension_numbers = #tpu.dot_dimension_numbers<[1], [0], [0], [1], [0, 0, 1, 1], [], []>} : vector<16x128xbf16>, vector<128x32xbf16>, vector<16x32xf32> -> vector<16x32xf32>
    %411 = arith.addf %397, %410 : vector<16x32xf32>
    %412 = vector.broadcast %395 : vector<1x32xf32> to vector<16x32xf32>
    %413 = arith.addf %411, %412 : vector<16x32xf32>
    %414 = arith.addf %383, %413 : vector<16x32xf32>
    %c0_169 = arith.constant 0 : index
    %c0_170 = arith.constant 0 : index
    %415 = vector.load %arg15[%c0_169, %c0_170] : memref<16x32xf32, #tpu.memory_space<vmem>>, vector<16x32xf32>
    tpu.vector_store %arg15[%c0_169, %c0_170], %414 {strides = array<i32>} : memref<16x32xf32, #tpu.memory_space<vmem>>, vector<16x32xf32>,
    return
  }
  func.func @transform_0(%arg0: i32) -> (i32, i32) {
    %c0_i32 = arith.constant 0 : i32
    %c0_i32_0 = arith.constant 0 : i32
    return %arg0, %c0_i32 : i32, i32
  }
  func.func @transform_1(%arg0: i32) -> (i32, i32) {
    %c0_i32 = arith.constant 0 : i32
    %c0_i32_0 = arith.constant 0 : i32
    return %arg0, %c0_i32 : i32, i32
  }
  func.func @transform_2(%arg0: i32) -> (i32, i32) {
    %c0_i32 = arith.constant 0 : i32
    %c0_i32_0 = arith.constant 0 : i32
    %c0_i32_1 = arith.constant 0 : i32
    return %c0_i32, %c0_i32_0 : i32, i32
  }
  func.func @transform_3(%arg0: i32) -> (i32, i32) {
    %c0_i32 = arith.constant 0 : i32
    %c0_i32_0 = arith.constant 0 : i32
    %c0_i32_1 = arith.constant 0 : i32
    return %c0_i32, %c0_i32_0 : i32, i32
  }
  func.func @transform_4(%arg0: i32) -> (i32, i32) {
    %c0_i32 = arith.constant 0 : i32
    %c0_i32_0 = arith.constant 0 : i32
    %c0_i32_1 = arith.constant 0 : i32
    return %c0_i32, %c0_i32_0 : i32, i32
  }
  func.func @transform_5(%arg0: i32) -> (i32, i32) {
    %c0_i32 = arith.constant 0 : i32
    %c0_i32_0 = arith.constant 0 : i32
    %c0_i32_1 = arith.constant 0 : i32
    return %c0_i32, %c0_i32_0 : i32, i32
  }
  func.func @transform_6(%arg0: i32) -> (i32, i32) {
    %c0_i32 = arith.constant 0 : i32
    %c0_i32_0 = arith.constant 0 : i32
    %c0_i32_1 = arith.constant 0 : i32
    return %c0_i32, %c0_i32_0 : i32, i32
  }
  func.func @transform_7(%arg0: i32) -> (i32, i32) {
    %c0_i32 = arith.constant 0 : i32
    %c0_i32_0 = arith.constant 0 : i32
    %c0_i32_1 = arith.constant 0 : i32
    return %c0_i32, %c0_i32_0 : i32, i32
  }
  func.func @transform_8(%arg0: i32) -> (i32, i32) {
    %c0_i32 = arith.constant 0 : i32
    %c0_i32_0 = arith.constant 0 : i32
    %c0_i32_1 = arith.constant 0 : i32
    return %c0_i32, %c0_i32_0 : i32, i32
  }
  func.func @transform_9(%arg0: i32) -> (i32, i32) {
    %c0_i32 = arith.constant 0 : i32
    %c0_i32_0 = arith.constant 0 : i32
    %c0_i32_1 = arith.constant 0 : i32
    return %c0_i32, %c0_i32_0 : i32, i32
  }
  func.func @transform_10(%arg0: i32) -> (i32, i32) {
    %c0_i32 = arith.constant 0 : i32
    %c0_i32_0 = arith.constant 0 : i32
    %c0_i32_1 = arith.constant 0 : i32
    return %c0_i32, %c0_i32_0 : i32, i32
  }
  func.func @transform_11(%arg0: i32) -> (i32, i32) {
    %c0_i32 = arith.constant 0 : i32
    %c0_i32_0 = arith.constant 0 : i32
    %c0_i32_1 = arith.constant 0 : i32
    return %c0_i32, %c0_i32_0 : i32, i32
  }
  func.func @transform_12(%arg0: i32) -> (i32, i32) {
    %c0_i32 = arith.constant 0 : i32
    %c0_i32_0 = arith.constant 0 : i32
    %c0_i32_1 = arith.constant 0 : i32
    return %c0_i32, %c0_i32_0 : i32, i32
  }
  func.func @transform_13(%arg0: i32) -> (i32, i32) {
    %c0_i32 = arith.constant 0 : i32
    %c0_i32_0 = arith.constant 0 : i32
    %c0_i32_1 = arith.constant 0 : i32
    return %c0_i32, %c0_i32_0 : i32, i32
  }
  func.func @transform_14(%arg0: i32) -> (i32, i32) {
    %c0_i32 = arith.constant 0 : i32
    %c0_i32_0 = arith.constant 0 : i32
    return %arg0, %c0_i32 : i32, i32
  }
}

</mosaic_0001>

<llo_original>
// kernel: tpu_custom_call.1
$region0: #{tpu_custom_call.1}
  #allocation0 [shape = 'u32[]', space=smem, size = 0x4, offset = 0x4, fixed_abs, tag = 'smem constant byte address 0x4 - core index']
  #allocation1 [shape = 'u32[144,128]{1,0:T(1,128)}', space=vmem, size = 0x12000, scoped, tag = 'internal scratch']
  #allocation2 [shape = 'f32[16,32]{1,0:T(8,128)}', space=vmem, size = 0x2000, scoped, tag = 'scratch operand']
  %s0 = inlined_call_operand.hbm [shape: f32[16,32], index: 0, kind: input, shape index: {}]
  %s1 = inlined_call_operand.hbm [shape: f32[16,32], index: 1, kind: input, shape index: {}]
  %s2 = inlined_call_operand.hbm [shape: bf16[32,32], index: 2, kind: input, shape index: {}]
  %s3 = inlined_call_operand.hbm [shape: bf16[32,32], index: 3, kind: input, shape index: {}]
  %s4 = inlined_call_operand.hbm [shape: bf16[32,32], index: 4, kind: input, shape index: {}]
  %s5 = inlined_call_operand.hbm [shape: bf16[32,32], index: 5, kind: input, shape index: {}]
  %s6 = inlined_call_operand.hbm [shape: bf16[32,32], index: 6, kind: input, shape index: {}]
  %s7 = inlined_call_operand.hbm [shape: bf16[32,32], index: 7, kind: input, shape index: {}]
  %s8 = inlined_call_operand.hbm [shape: bf16[32,32], index: 8, kind: input, shape index: {}]
  %s9 = inlined_call_operand.hbm [shape: bf16[32,32], index: 9, kind: input, shape index: {}]
  %s10 = inlined_call_operand.hbm [shape: bf16[32,128], index: 10, kind: input, shape index: {}]
  %s11 = inlined_call_operand.hbm [shape: bf16[128,32], index: 11, kind: input, shape index: {}]
  %s12 = inlined_call_operand.hbm [shape: f32[9,32], index: 12, kind: input, shape index: {}]
  %s13 = inlined_call_operand.hbm [shape: f32[1,128], index: 13, kind: input, shape index: {}]
  %s14 = inlined_call_operand.hbm [shape: f32[16,32], index: 14, kind: output, shape index: {}]
  %s15 = sld [smem:[#allocation0]]
  $region122: #{tpu_custom_call.1} parent=0
    _
  %s17 = ssub.s32 1, %s15
  %s18 = scalar_select 0, %s17, %s15
  $region1: #{tpu_custom_call.1} parent=0
    #allocation3 [shape = 'u8[8192]{0}', space=vmem, size = 0x2000, scoped, tag = 'input window, operand 0, single buffered']
    #allocation4 [shape = 's32[1]{0}', space=sflag, size = 0x4, scoped, tag = 'scoped memory for tpu_custom_call.1']
    #allocation5 [shape = 's32[1]{0}', space=sflag, size = 0x4, scoped, tag = 'scoped memory for tpu_custom_call.1']
    #allocation6 [shape = 'u8[8192]{0}', space=vmem, size = 0x2000, scoped, tag = 'input window, operand 1, single buffered']
    #allocation7 [shape = 's32[1]{0}', space=sflag, size = 0x4, scoped, tag = 'scoped memory for tpu_custom_call.1']
    #allocation8 [shape = 'u8[8192]{0}', space=vmem, size = 0x2000, scoped, tag = 'input window, operand 2, single buffered']
    #allocation9 [shape = 'u8[8192]{0}', space=vmem, size = 0x2000, scoped, tag = 'input window, operand 3, single buffered']
    #allocation10 [shape = 's32[1]{0}', space=sflag, size = 0x4, scoped, tag = 'scoped memory for tpu_custom_call.1']
    #allocation11 [shape = 'u8[8192]{0}', space=vmem, size = 0x2000, scoped, tag = 'input window, operand 4, single buffered']
    #allocation12 [shape = 'u8[8192]{0}', space=vmem, size = 0x2000, scoped, tag = 'input window, operand 5, single buffered']
    #allocation13 [shape = 's32[1]{0}', space=sflag, size = 0x4, scoped, tag = 'scoped memory for tpu_custom_call.1']
    #allocation14 [shape = 'u8[8192]{0}', space=vmem, size = 0x2000, scoped, tag = 'input window, operand 6, single buffered']
    #allocation15 [shape = 'u8[8192]{0}', space=vmem, size = 0x2000, scoped, tag = 'input window, operand 7, single buffered']
    #allocation16 [shape = 's32[1]{0}', space=sflag, size = 0x4, scoped, tag = 'scoped memory for tpu_custom_call.1']
    #allocation17 [shape = 'u8[8192]{0}', space=vmem, size = 0x2000, scoped, tag = 'input window, operand 8, single buffered']
    #allocation18 [shape = 'u8[8192]{0}', space=vmem, size = 0x2000, scoped, tag = 'input window, operand 9, single buffered']
    #allocation19 [shape = 's32[1]{0}', space=sflag, size = 0x4, scoped, tag = 'scoped memory for tpu_custom_call.1']
    #allocation20 [shape = 'u8[8192]{0}', space=vmem, size = 0x2000, scoped, tag = 'input window, operand 10, single buffered']
    #allocation21 [shape = 'u8[32768]{0}', space=vmem, size = 0x8000, scoped, tag = 'input window, operand 11, single buffered']
    #allocation22 [shape = 's32[1]{0}', space=sflag, size = 0x4, scoped, tag = 'scoped memory for tpu_custom_call.1']
    #allocation23 [shape = 'u8[8192]{0}', space=vmem, size = 0x2000, scoped, tag = 'input window, operand 12, single buffered']
    #allocation24 [shape = 'u8[512]{0}', space=vmem, size = 0x400, scoped, tag = 'input window, operand 13, single buffered']
    #allocation25 [shape = 's32[1]{0}', space=sflag, size = 0x4, scoped, tag = 'scoped memory for tpu_custom_call.1']
    #allocation26 [shape = 'u8[8192]{0}', space=vmem, size = 0x2000, scoped, tag = 'output window, operand 0, single buffered']
    %19 = vsyncpa [#allocation4], 0
    %20 = vsyncpa [#allocation7], 0
    %21 = vsyncpa [#allocation10], 0
    %22 = vsyncpa [#allocation13], 0
    %23 = vsyncpa [#allocation16], 0
    %24 = vsyncpa [#allocation19], 0
    %25 = vsyncpa [#allocation22], 0
    %26 = vsyncpa [#allocation25], 0
    %27 = vsyncpa [#allocation5], 0
    // Predicated region
    $region2: #{tpu_custom_call.1} parent=1 // pred_check
      _
    $region3: #{tpu_custom_call.1} parent=1 // pred_check_branch
      %29 = sbr.rel (0) target = $region5
    $region4: #{tpu_custom_call.1} parent=1 // pred_region
      %s31 = ssub.s32 256, 256
      %32 = vsyncadd [#allocation4], %s31
      %s33 = sshll.u32 [#allocation3], 4
      %s34 = int_to_ptr.vmem [resolvable:$true] %s33
      %39 = dma.hbm_to_vmem [thread:$0]  %s0, 256, %s34, [#allocation4], 128, 128, 8
    $region5: #{tpu_custom_call.1} parent=1 // pred_fallthru
      _
    // Predicated region
    $region6: #{tpu_custom_call.1} parent=1 // pred_check
      _
    $region7: #{tpu_custom_call.1} parent=1 // pred_check_branch
      %41 = sbr.rel (0) target = $region9
    $region8: #{tpu_custom_call.1} parent=1 // pred_region
      %s43 = ssub.s32 256, 256
      %44 = vsyncadd [#allocation7], %s43
      %s45 = sshll.u32 [#allocation6], 4
      %s46 = int_to_ptr.vmem [resolvable:$true] %s45
      %51 = dma.hbm_to_vmem [thread:$0]  %s1, 256, %s46, [#allocation7], 128, 128, 8
    $region9: #{tpu_custom_call.1} parent=1 // pred_fallthru
      _
    // Predicated region
    $region10: #{tpu_custom_call.1} parent=1 // pred_check
      _
    $region11: #{tpu_custom_call.1} parent=1 // pred_check_branch
      %53 = sbr.rel (0) target = $region13
    $region12: #{tpu_custom_call.1} parent=1 // pred_region
      %s55 = ssub.s32 256, 256
      %56 = vsyncadd [#allocation7], %s55
      %s57 = sshll.u32 [#allocation8], 4
      %s58 = int_to_ptr.vmem [resolvable:$true] %s57
      %63 = dma.hbm_to_vmem [thread:$0]  %s2, 256, %s58, [#allocation7], 64, 64, 4
    $region13: #{tpu_custom_call.1} parent=1 // pred_fallthru
      _
    // Predicated region
    $region14: #{tpu_custom_call.1} parent=1 // pred_check
      _
    $region15: #{tpu_custom_call.1} parent=1 // pred_check_branch
      %65 = sbr.rel (0) target = $region17
    $region16: #{tpu_custom_call.1} parent=1 // pred_region
      %s67 = ssub.s32 256, 256
      %68 = vsyncadd [#allocation10], %s67
      %s69 = sshll.u32 [#allocation9], 4
      %s70 = int_to_ptr.vmem [resolvable:$true] %s69
      %75 = dma.hbm_to_vmem [thread:$0]  %s3, 256, %s70, [#allocation10], 64, 64, 4
    $region17: #{tpu_custom_call.1} parent=1 // pred_fallthru
      _
    // Predicated region
    $region18: #{tpu_custom_call.1} parent=1 // pred_check
      _
    $region19: #{tpu_custom_call.1} parent=1 // pred_check_branch
      %77 = sbr.rel (0) target = $region21
    $region20: #{tpu_custom_call.1} parent=1 // pred_region
      %s79 = ssub.s32 256, 256
      %80 = vsyncadd [#allocation10], %s79
      %s81 = sshll.u32 [#allocation11], 4
      %s82 = int_to_ptr.vmem [resolvable:$true] %s81
      %87 = dma.hbm_to_vmem [thread:$0]  %s4, 256, %s82, [#allocation10], 64, 64, 4
    $region21: #{tpu_custom_call.1} parent=1 // pred_fallthru
      _
    // Predicated region
    $region22: #{tpu_custom_call.1} parent=1 // pred_check
      _
    $region23: #{tpu_custom_call.1} parent=1 // pred_check_branch
      %89 = sbr.rel (0) target = $region25
    $region24: #{tpu_custom_call.1} parent=1 // pred_region
      %s91 = ssub.s32 256, 256
      %92 = vsyncadd [#allocation13], %s91
      %s93 = sshll.u32 [#allocation12], 4
      %s94 = int_to_ptr.vmem [resolvable:$true] %s93
      %99 = dma.hbm_to_vmem [thread:$0]  %s5, 256, %s94, [#allocation13], 64, 64, 4
    $region25: #{tpu_custom_call.1} parent=1 // pred_fallthru
      _
    // Predicated region
    $region26: #{tpu_custom_call.1} parent=1 // pred_check
      _
    $region27: #{tpu_custom_call.1} parent=1 // pred_check_branch
      %101 = sbr.rel (0) target = $region29
    $region28: #{tpu_custom_call.1} parent=1 // pred_region
      %s103 = ssub.s32 256, 256
      %104 = vsyncadd [#allocation13], %s103
      %s105 = sshll.u32 [#allocation14], 4
      %s106 = int_to_ptr.vmem [resolvable:$true] %s105
      %111 = dma.hbm_to_vmem [thread:$0]  %s6, 256, %s106, [#allocation13], 64, 64, 4
    $region29: #{tpu_custom_call.1} parent=1 // pred_fallthru
      _
    // Predicated region
    $region30: #{tpu_custom_call.1} parent=1 // pred_check
      _
    $region31: #{tpu_custom_call.1} parent=1 // pred_check_branch
      %113 = sbr.rel (0) target = $region33
    $region32: #{tpu_custom_call.1} parent=1 // pred_region
      %s115 = ssub.s32 256, 256
      %116 = vsyncadd [#allocation16], %s115
      %s117 = sshll.u32 [#allocation15], 4
      %s118 = int_to_ptr.vmem [resolvable:$true] %s117
      %123 = dma.hbm_to_vmem [thread:$0]  %s7, 256, %s118, [#allocation16], 64, 64, 4
    $region33: #{tpu_custom_call.1} parent=1 // pred_fallthru
      _
    // Predicated region
    $region34: #{tpu_custom_call.1} parent=1 // pred_check
      _
    $region35: #{tpu_custom_call.1} parent=1 // pred_check_branch
      %125 = sbr.rel (0) target = $region37
    $region36: #{tpu_custom_call.1} parent=1 // pred_region
      %s127 = ssub.s32 256, 256
      %128 = vsyncadd [#allocation16], %s127
      %s129 = sshll.u32 [#allocation17], 4
      %s130 = int_to_ptr.vmem [resolvable:$true] %s129
      %135 = dma.hbm_to_vmem [thread:$0]  %s8, 256, %s130, [#allocation16], 64, 64, 4
    $region37: #{tpu_custom_call.1} parent=1 // pred_fallthru
      _
    // Predicated region
    $region38: #{tpu_custom_call.1} parent=1 // pred_check
      _
    $region39: #{tpu_custom_call.1} parent=1 // pred_check_branch
      %137 = sbr.rel (0) target = $region41
    $region40: #{tpu_custom_call.1} parent=1 // pred_region
      %s139 = ssub.s32 256, 256
      %140 = vsyncadd [#allocation19], %s139
      %s141 = sshll.u32 [#allocation18], 4
      %s142 = int_to_ptr.vmem [resolvable:$true] %s141
      %147 = dma.hbm_to_vmem [thread:$0]  %s9, 256, %s142, [#allocation19], 64, 64, 4
    $region41: #{tpu_custom_call.1} parent=1 // pred_fallthru
      _
    // Predicated region
    $region42: #{tpu_custom_call.1} parent=1 // pred_check
      _
    $region43: #{tpu_custom_call.1} parent=1 // pred_check_branch
      %149 = sbr.rel (0) target = $region45
    $region44: #{tpu_custom_call.1} parent=1 // pred_region
      %s151 = ssub.s32 256, 256
      %152 = vsyncadd [#allocation19], %s151
      %s153 = sshll.u32 [#allocation20], 4
      %s154 = int_to_ptr.vmem [resolvable:$true] %s153
      %159 = dma.hbm_to_vmem [thread:$0]  %s10, 256, %s154, [#allocation19], 64, 64, 4
    $region45: #{tpu_custom_call.1} parent=1 // pred_fallthru
      _
    // Predicated region
    $region46: #{tpu_custom_call.1} parent=1 // pred_check
      _
    $region47: #{tpu_custom_call.1} parent=1 // pred_check_branch
      %161 = sbr.rel (0) target = $region49
    $region48: #{tpu_custom_call.1} parent=1 // pred_region
      %s163 = ssub.s32 1024, 1024
      %164 = vsyncadd [#allocation22], %s163
      %s165 = sshll.u32 [#allocation21], 4
      %s166 = int_to_ptr.vmem [resolvable:$true] %s165
      %171 = dma.hbm_to_vmem [thread:$0]  %s11, 1024, %s166, [#allocation22], 64, 64, 4
    $region49: #{tpu_custom_call.1} parent=1 // pred_fallthru
      _
    // Predicated region
    $region50: #{tpu_custom_call.1} parent=1 // pred_check
      _
    $region51: #{tpu_custom_call.1} parent=1 // pred_check_branch
      %173 = sbr.rel (0) target = $region53
    $region52: #{tpu_custom_call.1} parent=1 // pred_region
      %s175 = ssub.s32 256, 256
      %176 = vsyncadd [#allocation22], %s175
      %s177 = sshll.u32 [#allocation23], 4
      %s178 = int_to_ptr.vmem [resolvable:$true] %s177
      %183 = dma.hbm_to_vmem [thread:$0]  %s12, 256, %s178, [#allocation22], 128, 128, 8
    $region53: #{tpu_custom_call.1} parent=1 // pred_fallthru
      _
    // Predicated region
    $region54: #{tpu_custom_call.1} parent=1 // pred_check
      _
    $region55: #{tpu_custom_call.1} parent=1 // pred_check_branch
      %185 = sbr.rel (0) target = $region57
    $region56: #{tpu_custom_call.1} parent=1 // pred_region
      %s187 = ssub.s32 16, 16
      %188 = vsyncadd [#allocation25], %s187
      %s190 = sshll.u32 [#allocation24], 4
      %s191 = int_to_ptr.vmem [resolvable:$true] %s190
      %193 = dma.hbm_to_vmem [thread:$0]  %s13, 16, %s191, [#allocation25]
    $region57: #{tpu_custom_call.1} parent=1 // pred_fallthru
      _
    // Predicated region
    $region58: #{tpu_custom_call.1} parent=1 // pred_check
      _
    $region59: #{tpu_custom_call.1} parent=1 // pred_check_branch
      %195 = sbr.rel (0) target = $region61
    $region60: #{tpu_custom_call.1} parent=1 // pred_region
      %196 = dma.done [#allocation4], 256
    $region61: #{tpu_custom_call.1} parent=1 // pred_fallthru
      _
    // Predicated region
    $region62: #{tpu_custom_call.1} parent=1 // pred_check
      _
    $region63: #{tpu_custom_call.1} parent=1 // pred_check_branch
      %198 = sbr.rel (0) target = $region65
    $region64: #{tpu_custom_call.1} parent=1 // pred_region
      %199 = dma.done [#allocation7], 256
    $region65: #{tpu_custom_call.1} parent=1 // pred_fallthru
      _
    // Predicated region
    $region66: #{tpu_custom_call.1} parent=1 // pred_check
      _
    $region67: #{tpu_custom_call.1} parent=1 // pred_check_branch
      %201 = sbr.rel (0) target = $region69
    $region68: #{tpu_custom_call.1} parent=1 // pred_region
      %202 = dma.done [#allocation7], 256
    $region69: #{tpu_custom_call.1} parent=1 // pred_fallthru
      _
    // Predicated region
    $region70: #{tpu_custom_call.1} parent=1 // pred_check
      _
    $region71: #{tpu_custom_call.1} parent=1 // pred_check_branch
      %204 = sbr.rel (0) target = $region73
    $region72: #{tpu_custom_call.1} parent=1 // pred_region
      %205 = dma.done [#allocation10], 256
    $region73: #{tpu_custom_call.1} parent=1 // pred_fallthru
      _
    // Predicated region
    $region74: #{tpu_custom_call.1} parent=1 // pred_check
      _
    $region75: #{tpu_custom_call.1} parent=1 // pred_check_branch
      %207 = sbr.rel (0) target = $region77
    $region76: #{tpu_custom_call.1} parent=1 // pred_region
      %208 = dma.done [#allocation10], 256
    $region77: #{tpu_custom_call.1} parent=1 // pred_fallthru
      _
    // Predicated region
    $region78: #{tpu_custom_call.1} parent=1 // pred_check
      _
    $region79: #{tpu_custom_call.1} parent=1 // pred_check_branch
      %210 = sbr.rel (0) target = $region81
    $region80: #{tpu_custom_call.1} parent=1 // pred_region
      %211 = dma.done [#allocation13], 256
    $region81: #{tpu_custom_call.1} parent=1 // pred_fallthru
      _
    // Predicated region
    $region82: #{tpu_custom_call.1} parent=1 // pred_check
      _
    $region83: #{tpu_custom_call.1} parent=1 // pred_check_branch
      %213 = sbr.rel (0) target = $region85
    $region84: #{tpu_custom_call.1} parent=1 // pred_region
      %214 = dma.done [#allocation13], 256
    $region85: #{tpu_custom_call.1} parent=1 // pred_fallthru
      _
    // Predicated region
    $region86: #{tpu_custom_call.1} parent=1 // pred_check
      _
    $region87: #{tpu_custom_call.1} parent=1 // pred_check_branch
      %216 = sbr.rel (0) target = $region89
    $region88: #{tpu_custom_call.1} parent=1 // pred_region
      %217 = dma.done [#allocation16], 256
    $region89: #{tpu_custom_call.1} parent=1 // pred_fallthru
      _
    // Predicated region
    $region90: #{tpu_custom_call.1} parent=1 // pred_check
      _
    $region91: #{tpu_custom_call.1} parent=1 // pred_check_branch
      %219 = sbr.rel (0) target = $region93
    $region92: #{tpu_custom_call.1} parent=1 // pred_region
      %220 = dma.done [#allocation16], 256
    $region93: #{tpu_custom_call.1} parent=1 // pred_fallthru
      _
    // Predicated region
    $region94: #{tpu_custom_call.1} parent=1 // pred_check
      _
    $region95: #{tpu_custom_call.1} parent=1 // pred_check_branch
      %222 = sbr.rel (0) target = $region97
    $region96: #{tpu_custom_call.1} parent=1 // pred_region
      %223 = dma.done [#allocation19], 256
    $region97: #{tpu_custom_call.1} parent=1 // pred_fallthru
      _
    // Predicated region
    $region98: #{tpu_custom_call.1} parent=1 // pred_check
      _
    $region99: #{tpu_custom_call.1} parent=1 // pred_check_branch
      %225 = sbr.rel (0) target = $region101
    $region100: #{tpu_custom_call.1} parent=1 // pred_region
      %226 = dma.done [#allocation19], 256
    $region101: #{tpu_custom_call.1} parent=1 // pred_fallthru
      _
    // Predicated region
    $region102: #{tpu_custom_call.1} parent=1 // pred_check
      _
    $region103: #{tpu_custom_call.1} parent=1 // pred_check_branch
      %228 = sbr.rel (0) target = $region105
    $region104: #{tpu_custom_call.1} parent=1 // pred_region
      %229 = dma.done [#allocation22], 1024
    $region105: #{tpu_custom_call.1} parent=1 // pred_fallthru
      _
    // Predicated region
    $region106: #{tpu_custom_call.1} parent=1 // pred_check
      _
    $region107: #{tpu_custom_call.1} parent=1 // pred_check_branch
      %231 = sbr.rel (0) target = $region109
    $region108: #{tpu_custom_call.1} parent=1 // pred_region
      %232 = dma.done [#allocation22], 256
    $region109: #{tpu_custom_call.1} parent=1 // pred_fallthru
      _
    // Predicated region
    $region110: #{tpu_custom_call.1} parent=1 // pred_check
      _
    $region111: #{tpu_custom_call.1} parent=1 // pred_check_branch
      %234 = sbr.rel (0) target = $region113
    $region112: #{tpu_custom_call.1} parent=1 // pred_region
      %235 = dma.done [#allocation25], 16
    $region113: #{tpu_custom_call.1} parent=1 // pred_fallthru
      _
    %v237 = vld [vmem:[#allocation3] sm:$0xff]
    %v238 = vld [vmem:[#allocation3 + $0x8] sm:$0xff]
    %v239 = vld [vmem:[#allocation6] sm:$0xff]
    %v240 = vld [vmem:[#allocation6 + $0x8] sm:$0xff]
    %v241 = vmul.f32 %v237, %v237
    %v242 = vmul.f32 %v238, %v238
    %vm243 = vcmask 261120
    %v244 = vsel %vm243, %v241, 0.0
    %245 = vadd.xlane.f32.xlu0 %v244
    %v246 = vpop.xlane.xlu0 %245
    %v247 = vsel %vm243, %v242, 0.0
    %248 = vadd.xlane.f32.xlu0 %v247
    %v249 = vpop.xlane.xlu0 %248
    %v250 = vrcp.pop 32.0
    %v251 = vmul.f32 %v246, %v250
    %v252 = vmul.f32 %v249, %v250
    %v253 = vadd.f32 %v251, 1.1920929e-07
    %v254 = vadd.f32 %v252, 1.1920929e-07
    %v255 = vrsqrt.pop %v253
    %v256 = vrsqrt.pop %v254
    %v257 = vmul.f32 %v237, %v255
    %v258 = vmul.f32 %v238, %v256
    %v259 = vld [vmem:[#allocation23] sm:$0x1]
    %v260 = vld [vmem:[#allocation23 + $0x1] sm:$0x1]
    %v261 = vld [vmem:[#allocation23 + $0x2] sm:$0x1]
    %v262 = vld [vmem:[#allocation23 + $0x3] sm:$0x1]
    %v263 = vpack.c.bf16 %v258, %v257
    %v264 = vld [vmem:[#allocation8] sm:$0xf]
    %v265 = vld [vmem:[#allocation8 + $0x4] sm:$0xf]
    %v266 = vld [vmem:[#allocation8 + $0x8] sm:$0xf]
    %v267 = vld [vmem:[#allocation8 + $0xc] sm:$0xf]
    %v268 = vlaneseq
    %v269 = vshrl.u32 %v268, 7
    %v270 = vsub.s32 0, %v269
    %v271 = vrot.slane %v259, %v270
    %v276 = vunpack.c.l.b16 %v264
    %v277 = vunpack.c.l.b16 %v265
    %v278 = vunpack.c.l.b16 %v266
    %v279 = vunpack.c.l.b16 %v267
    %v280 = vpack.c.b16 %v277, %v276
    %v281 = vpack.c.b16 %v279, %v278
    %v285 = vsel %vm243, %v263, 0
    %287 = vmatprep.subr.bf16.mxu0 0
    %288 = vmatpush1.bf16.msra.mxu0 %v280
    %289 = vmatprep.subr.bf16.mxu0 0
    %290 = vmatpush1.bf16.msra.mxu0 %v281
    %291 = vmatprep.subr.bf16.mxu0 0
    %292 = vmatpush1.bf16.msra.mxu0 0
    %293 = vmatprep.subr.bf16.mxu0 0
    %294 = vmatpush1.bf16.msra.mxu0 0
    %295 = vmatprep.subr.bf16.mxu0 0
    %296 = vmatpush1.bf16.msra.mxu0 0
    %297 = vmatprep.subr.bf16.mxu0 0
    %298 = vmatpush1.bf16.msra.mxu0 0
    %299 = vmatprep.subr.bf16.mxu0 0
    %300 = vmatpush1.bf16.msra.mxu0 0
    %301 = vmatprep.subr.bf16.mxu0 0
    %302 = vmatpush1.bf16.msra.mxu0 0
    %303 = vmatprep.subr.bf16.mxu0 0
    %304 = vmatpush1.bf16.msra.mxu0 0
    %305 = vmatprep.subr.bf16.mxu0 0
    %306 = vmatpush1.bf16.msra.mxu0 0
    %307 = vmatprep.subr.bf16.mxu0 0
    %308 = vmatpush1.bf16.msra.mxu0 0
    %309 = vmatprep.subr.bf16.mxu0 0
    %310 = vmatpush1.bf16.msra.mxu0 0
    %311 = vmatprep.subr.bf16.mxu0 0
    %312 = vmatpush1.bf16.msra.mxu0 0
    %313 = vmatprep.subr.bf16.mxu0 0
    %314 = vmatpush1.bf16.msra.mxu0 0
    %315 = vmatprep.subr.bf16.mxu0 0
    %316 = vmatpush1.bf16.msra.mxu0 0
    %317 = vmatprep.subr.bf16.mxu0 0
    %318 = vmatpush1.bf16.msra.mxu0 0
    %319 = vmatprep.mubr.bf16.mxu0 0
    %320 = vmatmul.mubr.bf16.gmra.mrb[0].mxu0 %v285
    %v321 = vpop.f32.mrb[0].mxu0
    %v322 = vadd.f32 %v271, %v321
    %v323 = vpop.f32.mrb[0].mxu0
    %v324 = vpop.f32.mrb[0].mxu0
    %v325 = vadd.f32 %v271, %v324
    %v326 = vpop.f32.mrb[0].mxu0
    %327 = vdwg.mxu0
    %v328 = vpack.c.bf16 %v325, %v322
    %v329 = vld [vmem:[#allocation9] sm:$0xf]
    %v330 = vld [vmem:[#allocation9 + $0x4] sm:$0xf]
    %v331 = vld [vmem:[#allocation9 + $0x8] sm:$0xf]
    %v332 = vld [vmem:[#allocation9 + $0xc] sm:$0xf]
    %v333 = vlaneseq
    %v334 = vshrl.u32 %v333, 7
    %v335 = vsub.s32 0, %v334
    %v336 = vrot.slane %v260, %v335
    %v341 = vunpack.c.l.b16 %v329
    %v342 = vunpack.c.l.b16 %v330
    %v343 = vunpack.c.l.b16 %v331
    %v344 = vunpack.c.l.b16 %v332
    %v345 = vpack.c.b16 %v342, %v341
    %v346 = vpack.c.b16 %v344, %v343
    %349 = vmatprep.subr.bf16.mxu0 0
    %350 = vmatpush1.bf16.msra.mxu0 %v345
    %351 = vmatprep.subr.bf16.mxu0 0
    %352 = vmatpush1.bf16.msra.mxu0 %v346
    %353 = vmatprep.subr.bf16.mxu0 0
    %354 = vmatpush1.bf16.msra.mxu0 0
    %355 = vmatprep.subr.bf16.mxu0 0
    %356 = vmatpush1.bf16.msra.mxu0 0
    %357 = vmatprep.subr.bf16.mxu0 0
    %358 = vmatpush1.bf16.msra.mxu0 0
    %359 = vmatprep.subr.bf16.mxu0 0
    %360 = vmatpush1.bf16.msra.mxu0 0
    %361 = vmatprep.subr.bf16.mxu0 0
    %362 = vmatpush1.bf16.msra.mxu0 0
    %363 = vmatprep.subr.bf16.mxu0 0
    %364 = vmatpush1.bf16.msra.mxu0 0
    %365 = vmatprep.subr.bf16.mxu0 0
    %366 = vmatpush1.bf16.msra.mxu0 0
    %367 = vmatprep.subr.bf16.mxu0 0
    %368 = vmatpush1.bf16.msra.mxu0 0
    %369 = vmatprep.subr.bf16.mxu0 0
    %370 = vmatpush1.bf16.msra.mxu0 0
    %371 = vmatprep.subr.bf16.mxu0 0
    %372 = vmatpush1.bf16.msra.mxu0 0
    %373 = vmatprep.subr.bf16.mxu0 0
    %374 = vmatpush1.bf16.msra.mxu0 0
    %375 = vmatprep.subr.bf16.mxu0 0
    %376 = vmatpush1.bf16.msra.mxu0 0
    %377 = vmatprep.subr.bf16.mxu0 0
    %378 = vmatpush1.bf16.msra.mxu0 0
    %379 = vmatprep.subr.bf16.mxu0 0
    %380 = vmatpush1.bf16.msra.mxu0 0
    %381 = vmatprep.mubr.bf16.mxu0 0
    %382 = vmatmul.mubr.bf16.gmra.mrb[0].mxu0 %v285
    %v383 = vpop.f32.mrb[0].mxu0
    %v384 = vadd.f32 %v336, %v383
    %v385 = vpop.f32.mrb[0].mxu0
    %v386 = vpop.f32.mrb[0].mxu0
    %v387 = vadd.f32 %v336, %v386
    %v388 = vpop.f32.mrb[0].mxu0
    %389 = vdwg.mxu0
    %v390 = vpack.c.bf16 %v387, %v384
    %v391 = vld [vmem:[#allocation11] sm:$0xf]
    %v392 = vld [vmem:[#allocation11 + $0x4] sm:$0xf]
    %v393 = vld [vmem:[#allocation11 + $0x8] sm:$0xf]
    %v394 = vld [vmem:[#allocation11 + $0xc] sm:$0xf]
    %v395 = vlaneseq
    %v396 = vshrl.u32 %v395, 7
    %v397 = vsub.s32 0, %v396
    %v398 = vrot.slane %v261, %v397
    %v403 = vunpack.c.l.b16 %v391
    %v404 = vunpack.c.l.b16 %v392
    %v405 = vunpack.c.l.b16 %v393
    %v406 = vunpack.c.l.b16 %v394
    %v407 = vpack.c.b16 %v404, %v403
    %v408 = vpack.c.b16 %v406, %v405
    %411 = vmatprep.subr.bf16.mxu0 0
    %412 = vmatpush1.bf16.msra.mxu0 %v407
    %413 = vmatprep.subr.bf16.mxu0 0
    %414 = vmatpush1.bf16.msra.mxu0 %v408
    %415 = vmatprep.subr.bf16.mxu0 0
    %416 = vmatpush1.bf16.msra.mxu0 0
    %417 = vmatprep.subr.bf16.mxu0 0
    %418 = vmatpush1.bf16.msra.mxu0 0
    %419 = vmatprep.subr.bf16.mxu0 0
    %420 = vmatpush1.bf16.msra.mxu0 0
    %421 = vmatprep.subr.bf16.mxu0 0
    %422 = vmatpush1.bf16.msra.mxu0 0
    %423 = vmatprep.subr.bf16.mxu0 0
    %424 = vmatpush1.bf16.msra.mxu0 0
    %425 = vmatprep.subr.bf16.mxu0 0
    %426 = vmatpush1.bf16.msra.mxu0 0
    %427 = vmatprep.subr.bf16.mxu0 0
    %428 = vmatpush1.bf16.msra.mxu0 0
    %429 = vmatprep.subr.bf16.mxu0 0
    %430 = vmatpush1.bf16.msra.mxu0 0
    %431 = vmatprep.subr.bf16.mxu0 0
    %432 = vmatpush1.bf16.msra.mxu0 0
    %433 = vmatprep.subr.bf16.mxu0 0
    %434 = vmatpush1.bf16.msra.mxu0 0
    %435 = vmatprep.subr.bf16.mxu0 0
    %436 = vmatpush1.bf16.msra.mxu0 0
    %437 = vmatprep.subr.bf16.mxu0 0
    %438 = vmatpush1.bf16.msra.mxu0 0
    %439 = vmatprep.subr.bf16.mxu0 0
    %440 = vmatpush1.bf16.msra.mxu0 0
    %441 = vmatprep.subr.bf16.mxu0 0
    %442 = vmatpush1.bf16.msra.mxu0 0
    %443 = vmatprep.mubr.bf16.mxu0 0
    %444 = vmatmul.mubr.bf16.gmra.mrb[0].mxu0 %v285
    %v445 = vpop.f32.mrb[0].mxu0
    %v446 = vadd.f32 %v398, %v445
    %v447 = vpop.f32.mrb[0].mxu0
    %v448 = vpop.f32.mrb[0].mxu0
    %v449 = vadd.f32 %v398, %v448
    %v450 = vpop.f32.mrb[0].mxu0
    %451 = vdwg.mxu0
    %v452 = vpack.c.bf16 %v449, %v446
    %vm453 = vcmask 64512
    %v455 = vsel %vm453, %v328, 0
    %v458 = vsel %vm453, %v390, 0
    %460 = vmatprep.subr.bf16.mxu0 0
    %461 = vmatpush1.bf16.xpose.msra.mxu0 %v458
    %462 = vmatprep.subr.bf16.mxu0 0
    %463 = vmatpush1.bf16.xpose.msra.mxu0 0
    %464 = vmatprep.subr.bf16.mxu0 0
    %465 = vmatpush1.bf16.xpose.msra.mxu0 0
    %466 = vmatprep.subr.bf16.mxu0 0
    %467 = vmatpush1.bf16.xpose.msra.mxu0 0
    %468 = vmatprep.subr.bf16.mxu0 0
    %469 = vmatpush1.bf16.xpose.msra.mxu0 0
    %470 = vmatprep.subr.bf16.mxu0 0
    %471 = vmatpush1.bf16.xpose.msra.mxu0 0
    %472 = vmatprep.subr.bf16.mxu0 0
    %473 = vmatpush1.bf16.xpose.msra.mxu0 0
    %474 = vmatprep.subr.bf16.mxu0 0
    %475 = vmatpush1.bf16.xpose.msra.mxu0 0
    %476 = vmatprep.subr.bf16.mxu0 0
    %477 = vmatpush1.bf16.xpose.msra.mxu0 0
    %478 = vmatprep.subr.bf16.mxu0 0
    %479 = vmatpush1.bf16.xpose.msra.mxu0 0
    %480 = vmatprep.subr.bf16.mxu0 0
    %481 = vmatpush1.bf16.xpose.msra.mxu0 0
    %482 = vmatprep.subr.bf16.mxu0 0
    %483 = vmatpush1.bf16.xpose.msra.mxu0 0
    %484 = vmatprep.subr.bf16.mxu0 0
    %485 = vmatpush1.bf16.xpose.msra.mxu0 0
    %486 = vmatprep.subr.bf16.mxu0 0
    %487 = vmatpush1.bf16.xpose.msra.mxu0 0
    %488 = vmatprep.subr.bf16.mxu0 0
    %489 = vmatpush1.bf16.xpose.msra.mxu0 0
    %490 = vmatprep.subr.bf16.mxu0 0
    %491 = vmatpush1.bf16.xpose.msra.mxu0 0
    %492 = vmatprep.mubr.bf16.mxu0 0
    %493 = vmatmul.mubr.bf16.gmra.mrb[0].mxu0 %v455
    %v494 = vpop.f32.mrb[0].mxu0
    %v495 = vadd.f32 0.0, %v494
    %v496 = vpop.f32.mrb[0].mxu0
    %v497 = vpop.f32.mrb[0].mxu0
    %v498 = vpop.f32.mrb[0].mxu0
    %499 = vdwg.mxu0
    %v500 = vmul.f32 %v495, 0.35355338
    %v501 = vsel %vm453, %v500, -inf
    %502 = vmax.xlane.f32.xlu0 %v501
    %v503 = vpop.xlane.xlu0 %502
    %v504 = vsub.f32 %v500, %v503
    %v505 = vmul.f32 %v504, 1.442695
    %v506 = vpow.pop %v505
    %v507 = vsel %vm453, %v506, 0.0
    %508 = vadd.xlane.f32.xlu0 %v507
    %v509 = vpop.xlane.xlu0 %508
    %v510 = vrcp.pop %v509
    %v511 = vmul.f32 %v506, %v510
    %v512 = vpack.c.bf16 %v511, %v511
    %v514 = vsel %vm453, %v512, 0
    %vm516 = vcmask 1043456
    %v518 = vsel %vm516, %v452, 0
    %520 = vmatprep.subr.bf16.mxu0 0
    %521 = vmatpush1.bf16.msra.mxu0 %v518
    %522 = vmatprep.subr.bf16.mxu0 0
    %523 = vmatpush1.bf16.msra.mxu0 0
    %524 = vmatprep.subr.bf16.mxu0 0
    %525 = vmatpush1.bf16.msra.mxu0 0
    %526 = vmatprep.subr.bf16.mxu0 0
    %527 = vmatpush1.bf16.msra.mxu0 0
    %528 = vmatprep.subr.bf16.mxu0 0
    %529 = vmatpush1.bf16.msra.mxu0 0
    %530 = vmatprep.subr.bf16.mxu0 0
    %531 = vmatpush1.bf16.msra.mxu0 0
    %532 = vmatprep.subr.bf16.mxu0 0
    %533 = vmatpush1.bf16.msra.mxu0 0
    %534 = vmatprep.subr.bf16.mxu0 0
    %535 = vmatpush1.bf16.msra.mxu0 0
    %536 = vmatprep.subr.bf16.mxu0 0
    %537 = vmatpush1.bf16.msra.mxu0 0
    %538 = vmatprep.subr.bf16.mxu0 0
    %539 = vmatpush1.bf16.msra.mxu0 0
    %540 = vmatprep.subr.bf16.mxu0 0
    %541 = vmatpush1.bf16.msra.mxu0 0
    %542 = vmatprep.subr.bf16.mxu0 0
    %543 = vmatpush1.bf16.msra.mxu0 0
    %544 = vmatprep.subr.bf16.mxu0 0
    %545 = vmatpush1.bf16.msra.mxu0 0
    %546 = vmatprep.subr.bf16.mxu0 0
    %547 = vmatpush1.bf16.msra.mxu0 0
    %548 = vmatprep.subr.bf16.mxu0 0
    %549 = vmatpush1.bf16.msra.mxu0 0
    %550 = vmatprep.subr.bf16.mxu0 0
    %551 = vmatpush1.bf16.msra.mxu0 0
    %552 = vmatprep.mubr.bf16.mxu0 0
    %553 = vmatmul.mubr.bf16.gmra.mrb[0].mxu0 %v514
    %v554 = vpop.f32.mrb[0].mxu0
    %v555 = vadd.f32 0.0, %v554
    %v556 = vpop.f32.mrb[0].mxu0
    %v557 = vpop.f32.mrb[0].mxu0
    %v558 = vpop.f32.mrb[0].mxu0
    %559 = vdwg.mxu0
    %560 = vst.msk [vmem:[#allocation2] sm:$0xff] %vm453, %v555
    %562 = vrot.lane.b32.xlu0 %v328, 120
    %v563 = vpop.permute.xlu0 %562
    %565 = vrot.lane.b32.xlu0 %v390, 120
    %v566 = vpop.permute.xlu0 %565
    %v568 = vsel %vm453, %v563, 0
    %v571 = vsel %vm453, %v566, 0
    %573 = vmatprep.subr.bf16.mxu0 0
    %574 = vmatpush1.bf16.xpose.msra.mxu0 %v571
    %575 = vmatprep.subr.bf16.mxu0 0
    %576 = vmatpush1.bf16.xpose.msra.mxu0 0
    %577 = vmatprep.subr.bf16.mxu0 0
    %578 = vmatpush1.bf16.xpose.msra.mxu0 0
    %579 = vmatprep.subr.bf16.mxu0 0
    %580 = vmatpush1.bf16.xpose.msra.mxu0 0
    %581 = vmatprep.subr.bf16.mxu0 0
    %582 = vmatpush1.bf16.xpose.msra.mxu0 0
    %583 = vmatprep.subr.bf16.mxu0 0
    %584 = vmatpush1.bf16.xpose.msra.mxu0 0
    %585 = vmatprep.subr.bf16.mxu0 0
    %586 = vmatpush1.bf16.xpose.msra.mxu0 0
    %587 = vmatprep.subr.bf16.mxu0 0
    %588 = vmatpush1.bf16.xpose.msra.mxu0 0
    %589 = vmatprep.subr.bf16.mxu0 0
    %590 = vmatpush1.bf16.xpose.msra.mxu0 0
    %591 = vmatprep.subr.bf16.mxu0 0
    %592 = vmatpush1.bf16.xpose.msra.mxu0 0
    %593 = vmatprep.subr.bf16.mxu0 0
    %594 = vmatpush1.bf16.xpose.msra.mxu0 0
    %595 = vmatprep.subr.bf16.mxu0 0
    %596 = vmatpush1.bf16.xpose.msra.mxu0 0
    %597 = vmatprep.subr.bf16.mxu0 0
    %598 = vmatpush1.bf16.xpose.msra.mxu0 0
    %599 = vmatprep.subr.bf16.mxu0 0
    %600 = vmatpush1.bf16.xpose.msra.mxu0 0
    %601 = vmatprep.subr.bf16.mxu0 0
    %602 = vmatpush1.bf16.xpose.msra.mxu0 0
    %603 = vmatprep.subr.bf16.mxu0 0
    %604 = vmatpush1.bf16.xpose.msra.mxu0 0
    %605 = vmatprep.mubr.bf16.mxu0 0
    %606 = vmatmul.mubr.bf16.gmra.mrb[0].mxu0 %v568
    %v607 = vpop.f32.mrb[0].mxu0
    %v608 = vadd.f32 0.0, %v607
    %v609 = vpop.f32.mrb[0].mxu0
    %v610 = vpop.f32.mrb[0].mxu0
    %v611 = vpop.f32.mrb[0].mxu0
    %612 = vdwg.mxu0
    %v613 = vmul.f32 %v608, 0.35355338
    %v614 = vsel %vm453, %v613, -inf
    %615 = vmax.xlane.f32.xlu0 %v614
    %v616 = vpop.xlane.xlu0 %615
    %v617 = vsub.f32 %v613, %v616
    %v618 = vmul.f32 %v617, 1.442695
    %v619 = vpow.pop %v618
    %v620 = vsel %vm453, %v619, 0.0
    %621 = vadd.xlane.f32.xlu0 %v620
    %v622 = vpop.xlane.xlu0 %621
    %v623 = vrcp.pop %v622
    %v624 = vmul.f32 %v619, %v623
    %v625 = vpack.c.bf16 %v624, %v624
    %627 = vrot.lane.b32.xlu0 %v452, 120
    %v628 = vpop.permute.xlu0 %627
    %v630 = vsel %vm453, %v625, 0
    %v633 = vsel %vm516, %v628, 0
    %635 = vmatprep.subr.bf16.mxu0 0
    %636 = vmatpush1.bf16.msra.mxu0 %v633
    %637 = vmatprep.subr.bf16.mxu0 0
    %638 = vmatpush1.bf16.msra.mxu0 0
    %639 = vmatprep.subr.bf16.mxu0 0
    %640 = vmatpush1.bf16.msra.mxu0 0
    %641 = vmatprep.subr.bf16.mxu0 0
    %642 = vmatpush1.bf16.msra.mxu0 0
    %643 = vmatprep.subr.bf16.mxu0 0
    %644 = vmatpush1.bf16.msra.mxu0 0
    %645 = vmatprep.subr.bf16.mxu0 0
    %646 = vmatpush1.bf16.msra.mxu0 0
    %647 = vmatprep.subr.bf16.mxu0 0
    %648 = vmatpush1.bf16.msra.mxu0 0
    %649 = vmatprep.subr.bf16.mxu0 0
    %650 = vmatpush1.bf16.msra.mxu0 0
    %651 = vmatprep.subr.bf16.mxu0 0
    %652 = vmatpush1.bf16.msra.mxu0 0
    %653 = vmatprep.subr.bf16.mxu0 0
    %654 = vmatpush1.bf16.msra.mxu0 0
    %655 = vmatprep.subr.bf16.mxu0 0
    %656 = vmatpush1.bf16.msra.mxu0 0
    %657 = vmatprep.subr.bf16.mxu0 0
    %658 = vmatpush1.bf16.msra.mxu0 0
    %659 = vmatprep.subr.bf16.mxu0 0
    %660 = vmatpush1.bf16.msra.mxu0 0
    %661 = vmatprep.subr.bf16.mxu0 0
    %662 = vmatpush1.bf16.msra.mxu0 0
    %663 = vmatprep.subr.bf16.mxu0 0
    %664 = vmatpush1.bf16.msra.mxu0 0
    %665 = vmatprep.subr.bf16.mxu0 0
    %666 = vmatpush1.bf16.msra.mxu0 0
    %667 = vmatprep.mubr.bf16.mxu0 0
    %668 = vmatmul.mubr.bf16.gmra.mrb[0].mxu0 %v630
    %v669 = vpop.f32.mrb[0].mxu0
    %v670 = vadd.f32 0.0, %v669
    %v671 = vpop.f32.mrb[0].mxu0
    %v672 = vpop.f32.mrb[0].mxu0
    %v673 = vpop.f32.mrb[0].mxu0
    %674 = vdwg.mxu0
    %676 = vrot.lane.b32.xlu0 %v670, 8
    %v677 = vpop.permute.xlu0 %676
    %vm679 = vcmask 130112
    %680 = vst.msk [vmem:[#allocation2] sm:$0xff] %vm679, %v677
    %681 = vrot.lane.b32.xlu0 %v328, 112
    %v682 = vpop.permute.xlu0 %681
    %683 = vrot.lane.b32.xlu0 %v390, 112
    %v684 = vpop.permute.xlu0 %683
    %v686 = vsel %vm453, %v682, 0
    %v689 = vsel %vm453, %v684, 0
    %691 = vmatprep.subr.bf16.mxu0 0
    %692 = vmatpush1.bf16.xpose.msra.mxu0 %v689
    %693 = vmatprep.subr.bf16.mxu0 0
    %694 = vmatpush1.bf16.xpose.msra.mxu0 0
    %695 = vmatprep.subr.bf16.mxu0 0
    %696 = vmatpush1.bf16.xpose.msra.mxu0 0
    %697 = vmatprep.subr.bf16.mxu0 0
    %698 = vmatpush1.bf16.xpose.msra.mxu0 0
    %699 = vmatprep.subr.bf16.mxu0 0
    %700 = vmatpush1.bf16.xpose.msra.mxu0 0
    %701 = vmatprep.subr.bf16.mxu0 0
    %702 = vmatpush1.bf16.xpose.msra.mxu0 0
    %703 = vmatprep.subr.bf16.mxu0 0
    %704 = vmatpush1.bf16.xpose.msra.mxu0 0
    %705 = vmatprep.subr.bf16.mxu0 0
    %706 = vmatpush1.bf16.xpose.msra.mxu0 0
    %707 = vmatprep.subr.bf16.mxu0 0
    %708 = vmatpush1.bf16.xpose.msra.mxu0 0
    %709 = vmatprep.subr.bf16.mxu0 0
    %710 = vmatpush1.bf16.xpose.msra.mxu0 0
    %711 = vmatprep.subr.bf16.mxu0 0
    %712 = vmatpush1.bf16.xpose.msra.mxu0 0
    %713 = vmatprep.subr.bf16.mxu0 0
    %714 = vmatpush1.bf16.xpose.msra.mxu0 0
    %715 = vmatprep.subr.bf16.mxu0 0
    %716 = vmatpush1.bf16.xpose.msra.mxu0 0
    %717 = vmatprep.subr.bf16.mxu0 0
    %718 = vmatpush1.bf16.xpose.msra.mxu0 0
    %719 = vmatprep.subr.bf16.mxu0 0
    %720 = vmatpush1.bf16.xpose.msra.mxu0 0
    %721 = vmatprep.subr.bf16.mxu0 0
    %722 = vmatpush1.bf16.xpose.msra.mxu0 0
    %723 = vmatprep.mubr.bf16.mxu0 0
    %724 = vmatmul.mubr.bf16.gmra.mrb[0].mxu0 %v686
    %v725 = vpop.f32.mrb[0].mxu0
    %v726 = vadd.f32 0.0, %v725
    %v727 = vpop.f32.mrb[0].mxu0
    %v728 = vpop.f32.mrb[0].mxu0
    %v729 = vpop.f32.mrb[0].mxu0
    %730 = vdwg.mxu0
    %v731 = vmul.f32 %v726, 0.35355338
    %v732 = vsel %vm453, %v731, -inf
    %733 = vmax.xlane.f32.xlu0 %v732
    %v734 = vpop.xlane.xlu0 %733
    %v735 = vsub.f32 %v731, %v734
    %v736 = vmul.f32 %v735, 1.442695
    %v737 = vpow.pop %v736
    %v738 = vsel %vm453, %v737, 0.0
    %739 = vadd.xlane.f32.xlu0 %v738
    %v740 = vpop.xlane.xlu0 %739
    %v741 = vrcp.pop %v740
    %v742 = vmul.f32 %v737, %v741
    %v743 = vpack.c.bf16 %v742, %v742
    %744 = vrot.lane.b32.xlu0 %v452, 112
    %v745 = vpop.permute.xlu0 %744
    %v747 = vsel %vm453, %v743, 0
    %v750 = vsel %vm516, %v745, 0
    %752 = vmatprep.subr.bf16.mxu0 0
    %753 = vmatpush1.bf16.msra.mxu0 %v750
    %754 = vmatprep.subr.bf16.mxu0 0
    %755 = vmatpush1.bf16.msra.mxu0 0
    %756 = vmatprep.subr.bf16.mxu0 0
    %757 = vmatpush1.bf16.msra.mxu0 0
    %758 = vmatprep.subr.bf16.mxu0 0
    %759 = vmatpush1.bf16.msra.mxu0 0
    %760 = vmatprep.subr.bf16.mxu0 0
    %761 = vmatpush1.bf16.msra.mxu0 0
    %762 = vmatprep.subr.bf16.mxu0 0
    %763 = vmatpush1.bf16.msra.mxu0 0
    %764 = vmatprep.subr.bf16.mxu0 0
    %765 = vmatpush1.bf16.msra.mxu0 0
    %766 = vmatprep.subr.bf16.mxu0 0
    %767 = vmatpush1.bf16.msra.mxu0 0
    %768 = vmatprep.subr.bf16.mxu0 0
    %769 = vmatpush1.bf16.msra.mxu0 0
    %770 = vmatprep.subr.bf16.mxu0 0
    %771 = vmatpush1.bf16.msra.mxu0 0
    %772 = vmatprep.subr.bf16.mxu0 0
    %773 = vmatpush1.bf16.msra.mxu0 0
    %774 = vmatprep.subr.bf16.mxu0 0
    %775 = vmatpush1.bf16.msra.mxu0 0
    %776 = vmatprep.subr.bf16.mxu0 0
    %777 = vmatpush1.bf16.msra.mxu0 0
    %778 = vmatprep.subr.bf16.mxu0 0
    %779 = vmatpush1.bf16.msra.mxu0 0
    %780 = vmatprep.subr.bf16.mxu0 0
    %781 = vmatpush1.bf16.msra.mxu0 0
    %782 = vmatprep.subr.bf16.mxu0 0
    %783 = vmatpush1.bf16.msra.mxu0 0
    %784 = vmatprep.mubr.bf16.mxu0 0
    %785 = vmatmul.mubr.bf16.gmra.mrb[0].mxu0 %v747
    %v786 = vpop.f32.mrb[0].mxu0
    %v787 = vadd.f32 0.0, %v786
    %v788 = vpop.f32.mrb[0].mxu0
    %v789 = vpop.f32.mrb[0].mxu0
    %v790 = vpop.f32.mrb[0].mxu0
    %791 = vdwg.mxu0
    %793 = vrot.lane.b32.xlu0 %v787, 16
    %v794 = vpop.permute.xlu0 %793
    %vm796 = vcmask 195712
    %797 = vst.msk [vmem:[#allocation2] sm:$0xff] %vm796, %v794
    %798 = vrot.lane.b32.xlu0 %v328, 104
    %v799 = vpop.permute.xlu0 %798
    %800 = vrot.lane.b32.xlu0 %v390, 104
    %v801 = vpop.permute.xlu0 %800
    %v803 = vsel %vm453, %v799, 0
    %v806 = vsel %vm453, %v801, 0
    %808 = vmatprep.subr.bf16.mxu0 0
    %809 = vmatpush1.bf16.xpose.msra.mxu0 %v806
    %810 = vmatprep.subr.bf16.mxu0 0
    %811 = vmatpush1.bf16.xpose.msra.mxu0 0
    %812 = vmatprep.subr.bf16.mxu0 0
    %813 = vmatpush1.bf16.xpose.msra.mxu0 0
    %814 = vmatprep.subr.bf16.mxu0 0
    %815 = vmatpush1.bf16.xpose.msra.mxu0 0
    %816 = vmatprep.subr.bf16.mxu0 0
    %817 = vmatpush1.bf16.xpose.msra.mxu0 0
    %818 = vmatprep.subr.bf16.mxu0 0
    %819 = vmatpush1.bf16.xpose.msra.mxu0 0
    %820 = vmatprep.subr.bf16.mxu0 0
    %821 = vmatpush1.bf16.xpose.msra.mxu0 0
    %822 = vmatprep.subr.bf16.mxu0 0
    %823 = vmatpush1.bf16.xpose.msra.mxu0 0
    %824 = vmatprep.subr.bf16.mxu0 0
    %825 = vmatpush1.bf16.xpose.msra.mxu0 0
    %826 = vmatprep.subr.bf16.mxu0 0
    %827 = vmatpush1.bf16.xpose.msra.mxu0 0
    %828 = vmatprep.subr.bf16.mxu0 0
    %829 = vmatpush1.bf16.xpose.msra.mxu0 0
    %830 = vmatprep.subr.bf16.mxu0 0
    %831 = vmatpush1.bf16.xpose.msra.mxu0 0
    %832 = vmatprep.subr.bf16.mxu0 0
    %833 = vmatpush1.bf16.xpose.msra.mxu0 0
    %834 = vmatprep.subr.bf16.mxu0 0
    %835 = vmatpush1.bf16.xpose.msra.mxu0 0
    %836 = vmatprep.subr.bf16.mxu0 0
    %837 = vmatpush1.bf16.xpose.msra.mxu0 0
    %838 = vmatprep.subr.bf16.mxu0 0
    %839 = vmatpush1.bf16.xpose.msra.mxu0 0
    %840 = vmatprep.mubr.bf16.mxu0 0
    %841 = vmatmul.mubr.bf16.gmra.mrb[0].mxu0 %v803
    %v842 = vpop.f32.mrb[0].mxu0
    %v843 = vadd.f32 0.0, %v842
    %v844 = vpop.f32.mrb[0].mxu0
    %v845 = vpop.f32.mrb[0].mxu0
    %v846 = vpop.f32.mrb[0].mxu0
    %847 = vdwg.mxu0
    %v848 = vmul.f32 %v843, 0.35355338
    %v849 = vsel %vm453, %v848, -inf
    %850 = vmax.xlane.f32.xlu0 %v849
    %v851 = vpop.xlane.xlu0 %850
    %v852 = vsub.f32 %v848, %v851
    %v853 = vmul.f32 %v852, 1.442695
    %v854 = vpow.pop %v853
    %v855 = vsel %vm453, %v854, 0.0
    %856 = vadd.xlane.f32.xlu0 %v855
    %v857 = vpop.xlane.xlu0 %856
    %v858 = vrcp.pop %v857
    %v859 = vmul.f32 %v854, %v858
    %v860 = vpack.c.bf16 %v859, %v859
    %861 = vrot.lane.b32.xlu0 %v452, 104
    %v862 = vpop.permute.xlu0 %861
    %v864 = vsel %vm453, %v860, 0
    %v867 = vsel %vm516, %v862, 0
    %869 = vmatprep.subr.bf16.mxu0 0
    %870 = vmatpush1.bf16.msra.mxu0 %v867
    %871 = vmatprep.subr.bf16.mxu0 0
    %872 = vmatpush1.bf16.msra.mxu0 0
    %873 = vmatprep.subr.bf16.mxu0 0
    %874 = vmatpush1.bf16.msra.mxu0 0
    %875 = vmatprep.subr.bf16.mxu0 0
    %876 = vmatpush1.bf16.msra.mxu0 0
    %877 = vmatprep.subr.bf16.mxu0 0
    %878 = vmatpush1.bf16.msra.mxu0 0
    %879 = vmatprep.subr.bf16.mxu0 0
    %880 = vmatpush1.bf16.msra.mxu0 0
    %881 = vmatprep.subr.bf16.mxu0 0
    %882 = vmatpush1.bf16.msra.mxu0 0
    %883 = vmatprep.subr.bf16.mxu0 0
    %884 = vmatpush1.bf16.msra.mxu0 0
    %885 = vmatprep.subr.bf16.mxu0 0
    %886 = vmatpush1.bf16.msra.mxu0 0
    %887 = vmatprep.subr.bf16.mxu0 0
    %888 = vmatpush1.bf16.msra.mxu0 0
    %889 = vmatprep.subr.bf16.mxu0 0
    %890 = vmatpush1.bf16.msra.mxu0 0
    %891 = vmatprep.subr.bf16.mxu0 0
    %892 = vmatpush1.bf16.msra.mxu0 0
    %893 = vmatprep.subr.bf16.mxu0 0
    %894 = vmatpush1.bf16.msra.mxu0 0
    %895 = vmatprep.subr.bf16.mxu0 0
    %896 = vmatpush1.bf16.msra.mxu0 0
    %897 = vmatprep.subr.bf16.mxu0 0
    %898 = vmatpush1.bf16.msra.mxu0 0
    %899 = vmatprep.subr.bf16.mxu0 0
    %900 = vmatpush1.bf16.msra.mxu0 0
    %901 = vmatprep.mubr.bf16.mxu0 0
    %902 = vmatmul.mubr.bf16.gmra.mrb[0].mxu0 %v864
    %v903 = vpop.f32.mrb[0].mxu0
    %v904 = vadd.f32 0.0, %v903
    %v905 = vpop.f32.mrb[0].mxu0
    %v906 = vpop.f32.mrb[0].mxu0
    %v907 = vpop.f32.mrb[0].mxu0
    %908 = vdwg.mxu0
    %910 = vrot.lane.b32.xlu0 %v904, 24
    %v911 = vpop.permute.xlu0 %910
    %vm913 = vcmask 261312
    %914 = vst.msk [vmem:[#allocation2] sm:$0xff] %vm913, %v911
    %v915 = vrot.slane %v328, 4
    %v916 = vrot.slane %v390, 4
    %v918 = vsel %vm453, %v915, 0
    %v921 = vsel %vm453, %v916, 0
    %923 = vmatprep.subr.bf16.mxu0 0
    %924 = vmatpush1.bf16.xpose.msra.mxu0 %v921
    %925 = vmatprep.subr.bf16.mxu0 0
    %926 = vmatpush1.bf16.xpose.msra.mxu0 0
    %927 = vmatprep.subr.bf16.mxu0 0
    %928 = vmatpush1.bf16.xpose.msra.mxu0 0
    %929 = vmatprep.subr.bf16.mxu0 0
    %930 = vmatpush1.bf16.xpose.msra.mxu0 0
    %931 = vmatprep.subr.bf16.mxu0 0
    %932 = vmatpush1.bf16.xpose.msra.mxu0 0
    %933 = vmatprep.subr.bf16.mxu0 0
    %934 = vmatpush1.bf16.xpose.msra.mxu0 0
    %935 = vmatprep.subr.bf16.mxu0 0
    %936 = vmatpush1.bf16.xpose.msra.mxu0 0
    %937 = vmatprep.subr.bf16.mxu0 0
    %938 = vmatpush1.bf16.xpose.msra.mxu0 0
    %939 = vmatprep.subr.bf16.mxu0 0
    %940 = vmatpush1.bf16.xpose.msra.mxu0 0
    %941 = vmatprep.subr.bf16.mxu0 0
    %942 = vmatpush1.bf16.xpose.msra.mxu0 0
    %943 = vmatprep.subr.bf16.mxu0 0
    %944 = vmatpush1.bf16.xpose.msra.mxu0 0
    %945 = vmatprep.subr.bf16.mxu0 0
    %946 = vmatpush1.bf16.xpose.msra.mxu0 0
    %947 = vmatprep.subr.bf16.mxu0 0
    %948 = vmatpush1.bf16.xpose.msra.mxu0 0
    %949 = vmatprep.subr.bf16.mxu0 0
    %950 = vmatpush1.bf16.xpose.msra.mxu0 0
    %951 = vmatprep.subr.bf16.mxu0 0
    %952 = vmatpush1.bf16.xpose.msra.mxu0 0
    %953 = vmatprep.subr.bf16.mxu0 0
    %954 = vmatpush1.bf16.xpose.msra.mxu0 0
    %955 = vmatprep.mubr.bf16.mxu0 0
    %956 = vmatmul.mubr.bf16.gmra.mrb[0].mxu0 %v918
    %v957 = vpop.f32.mrb[0].mxu0
    %v958 = vadd.f32 0.0, %v957
    %v959 = vpop.f32.mrb[0].mxu0
    %v960 = vpop.f32.mrb[0].mxu0
    %v961 = vpop.f32.mrb[0].mxu0
    %962 = vdwg.mxu0
    %v963 = vmul.f32 %v958, 0.35355338
    %v964 = vsel %vm453, %v963, -inf
    %965 = vmax.xlane.f32.xlu0 %v964
    %v966 = vpop.xlane.xlu0 %965
    %v967 = vsub.f32 %v963, %v966
    %v968 = vmul.f32 %v967, 1.442695
    %v969 = vpow.pop %v968
    %v970 = vsel %vm453, %v969, 0.0
    %971 = vadd.xlane.f32.xlu0 %v970
    %v972 = vpop.xlane.xlu0 %971
    %v973 = vrcp.pop %v972
    %v974 = vmul.f32 %v969, %v973
    %v975 = vpack.c.bf16 %v974, %v974
    %v976 = vrot.slane %v452, 4
    %v978 = vsel %vm453, %v975, 0
    %v981 = vsel %vm516, %v976, 0
    %983 = vmatprep.subr.bf16.mxu0 0
    %984 = vmatpush1.bf16.msra.mxu0 %v981
    %985 = vmatprep.subr.bf16.mxu0 0
    %986 = vmatpush1.bf16.msra.mxu0 0
    %987 = vmatprep.subr.bf16.mxu0 0
    %988 = vmatpush1.bf16.msra.mxu0 0
    %989 = vmatprep.subr.bf16.mxu0 0
    %990 = vmatpush1.bf16.msra.mxu0 0
    %991 = vmatprep.subr.bf16.mxu0 0
    %992 = vmatpush1.bf16.msra.mxu0 0
    %993 = vmatprep.subr.bf16.mxu0 0
    %994 = vmatpush1.bf16.msra.mxu0 0
    %995 = vmatprep.subr.bf16.mxu0 0
    %996 = vmatpush1.bf16.msra.mxu0 0
    %997 = vmatprep.subr.bf16.mxu0 0
    %998 = vmatpush1.bf16.msra.mxu0 0
    %999 = vmatprep.subr.bf16.mxu0 0
    %1000 = vmatpush1.bf16.msra.mxu0 0
    %1001 = vmatprep.subr.bf16.mxu0 0
    %1002 = vmatpush1.bf16.msra.mxu0 0
    %1003 = vmatprep.subr.bf16.mxu0 0
    %1004 = vmatpush1.bf16.msra.mxu0 0
    %1005 = vmatprep.subr.bf16.mxu0 0
    %1006 = vmatpush1.bf16.msra.mxu0 0
    %1007 = vmatprep.subr.bf16.mxu0 0
    %1008 = vmatpush1.bf16.msra.mxu0 0
    %1009 = vmatprep.subr.bf16.mxu0 0
    %1010 = vmatpush1.bf16.msra.mxu0 0
    %1011 = vmatprep.subr.bf16.mxu0 0
    %1012 = vmatpush1.bf16.msra.mxu0 0
    %1013 = vmatprep.subr.bf16.mxu0 0
    %1014 = vmatpush1.bf16.msra.mxu0 0
    %1015 = vmatprep.mubr.bf16.mxu0 0
    %1016 = vmatmul.mubr.bf16.gmra.mrb[0].mxu0 %v978
    %v1017 = vpop.f32.mrb[0].mxu0
    %v1018 = vadd.f32 0.0, %v1017
    %v1019 = vpop.f32.mrb[0].mxu0
    %v1020 = vpop.f32.mrb[0].mxu0
    %v1021 = vpop.f32.mrb[0].mxu0
    %1022 = vdwg.mxu0
    %1023 = vst.msk [vmem:[#allocation2 + $0x8] sm:$0xff] %vm453, %v1018
    %1024 = vrot.lane.b32.xlu0 %v915, 120
    %v1025 = vpop.permute.xlu0 %1024
    %1026 = vrot.lane.b32.xlu0 %v916, 120
    %v1027 = vpop.permute.xlu0 %1026
    %v1029 = vsel %vm453, %v1025, 0
    %v1032 = vsel %vm453, %v1027, 0
    %1034 = vmatprep.subr.bf16.mxu0 0
    %1035 = vmatpush1.bf16.xpose.msra.mxu0 %v1032
    %1036 = vmatprep.subr.bf16.mxu0 0
    %1037 = vmatpush1.bf16.xpose.msra.mxu0 0
    %1038 = vmatprep.subr.bf16.mxu0 0
    %1039 = vmatpush1.bf16.xpose.msra.mxu0 0
    %1040 = vmatprep.subr.bf16.mxu0 0
    %1041 = vmatpush1.bf16.xpose.msra.mxu0 0
    %1042 = vmatprep.subr.bf16.mxu0 0
    %1043 = vmatpush1.bf16.xpose.msra.mxu0 0
    %1044 = vmatprep.subr.bf16.mxu0 0
    %1045 = vmatpush1.bf16.xpose.msra.mxu0 0
    %1046 = vmatprep.subr.bf16.mxu0 0
    %1047 = vmatpush1.bf16.xpose.msra.mxu0 0
    %1048 = vmatprep.subr.bf16.mxu0 0
    %1049 = vmatpush1.bf16.xpose.msra.mxu0 0
    %1050 = vmatprep.subr.bf16.mxu0 0
    %1051 = vmatpush1.bf16.xpose.msra.mxu0 0
    %1052 = vmatprep.subr.bf16.mxu0 0
    %1053 = vmatpush1.bf16.xpose.msra.mxu0 0
    %1054 = vmatprep.subr.bf16.mxu0 0
    %1055 = vmatpush1.bf16.xpose.msra.mxu0 0
    %1056 = vmatprep.subr.bf16.mxu0 0
    %1057 = vmatpush1.bf16.xpose.msra.mxu0 0
    %1058 = vmatprep.subr.bf16.mxu0 0
    %1059 = vmatpush1.bf16.xpose.msra.mxu0 0
    %1060 = vmatprep.subr.bf16.mxu0 0
    %1061 = vmatpush1.bf16.xpose.msra.mxu0 0
    %1062 = vmatprep.subr.bf16.mxu0 0
    %1063 = vmatpush1.bf16.xpose.msra.mxu0 0
    %1064 = vmatprep.subr.bf16.mxu0 0
    %1065 = vmatpush1.bf16.xpose.msra.mxu0 0
    %1066 = vmatprep.mubr.bf16.mxu0 0
    %1067 = vmatmul.mubr.bf16.gmra.mrb[0].mxu0 %v1029
    %v1068 = vpop.f32.mrb[0].mxu0
    %v1069 = vadd.f32 0.0, %v1068
    %v1070 = vpop.f32.mrb[0].mxu0
    %v1071 = vpop.f32.mrb[0].mxu0
    %v1072 = vpop.f32.mrb[0].mxu0
    %1073 = vdwg.mxu0
    %v1074 = vmul.f32 %v1069, 0.35355338
    %v1075 = vsel %vm453, %v1074, -inf
    %1076 = vmax.xlane.f32.xlu0 %v1075
    %v1077 = vpop.xlane.xlu0 %1076
    %v1078 = vsub.f32 %v1074, %v1077
    %v1079 = vmul.f32 %v1078, 1.442695
    %v1080 = vpow.pop %v1079
    %v1081 = vsel %vm453, %v1080, 0.0
    %1082 = vadd.xlane.f32.xlu0 %v1081
    %v1083 = vpop.xlane.xlu0 %1082
    %v1084 = vrcp.pop %v1083
    %v1085 = vmul.f32 %v1080, %v1084
    %v1086 = vpack.c.bf16 %v1085, %v1085
    %1087 = vrot.lane.b32.xlu0 %v976, 120
    %v1088 = vpop.permute.xlu0 %1087
    %v1090 = vsel %vm453, %v1086, 0
    %v1093 = vsel %vm516, %v1088, 0
    %1095 = vmatprep.subr.bf16.mxu0 0
    %1096 = vmatpush1.bf16.msra.mxu0 %v1093
    %1097 = vmatprep.subr.bf16.mxu0 0
    %1098 = vmatpush1.bf16.msra.mxu0 0
    %1099 = vmatprep.subr.bf16.mxu0 0
    %1100 = vmatpush1.bf16.msra.mxu0 0
    %1101 = vmatprep.subr.bf16.mxu0 0
    %1102 = vmatpush1.bf16.msra.mxu0 0
    %1103 = vmatprep.subr.bf16.mxu0 0
    %1104 = vmatpush1.bf16.msra.mxu0 0
    %1105 = vmatprep.subr.bf16.mxu0 0
    %1106 = vmatpush1.bf16.msra.mxu0 0
    %1107 = vmatprep.subr.bf16.mxu0 0
    %1108 = vmatpush1.bf16.msra.mxu0 0
    %1109 = vmatprep.subr.bf16.mxu0 0
    %1110 = vmatpush1.bf16.msra.mxu0 0
    %1111 = vmatprep.subr.bf16.mxu0 0
    %1112 = vmatpush1.bf16.msra.mxu0 0
    %1113 = vmatprep.subr.bf16.mxu0 0
    %1114 = vmatpush1.bf16.msra.mxu0 0
    %1115 = vmatprep.subr.bf16.mxu0 0
    %1116 = vmatpush1.bf16.msra.mxu0 0
    %1117 = vmatprep.subr.bf16.mxu0 0
    %1118 = vmatpush1.bf16.msra.mxu0 0
    %1119 = vmatprep.subr.bf16.mxu0 0
    %1120 = vmatpush1.bf16.msra.mxu0 0
    %1121 = vmatprep.subr.bf16.mxu0 0
    %1122 = vmatpush1.bf16.msra.mxu0 0
    %1123 = vmatprep.subr.bf16.mxu0 0
    %1124 = vmatpush1.bf16.msra.mxu0 0
    %1125 = vmatprep.subr.bf16.mxu0 0
    %1126 = vmatpush1.bf16.msra.mxu0 0
    %1127 = vmatprep.mubr.bf16.mxu0 0
    %1128 = vmatmul.mubr.bf16.gmra.mrb[0].mxu0 %v1090
    %v1129 = vpop.f32.mrb[0].mxu0
    %v1130 = vadd.f32 0.0, %v1129
    %v1131 = vpop.f32.mrb[0].mxu0
    %v1132 = vpop.f32.mrb[0].mxu0
    %v1133 = vpop.f32.mrb[0].mxu0
    %1134 = vdwg.mxu0
    %1136 = vrot.lane.b32.xlu0 %v1130, 8
    %v1137 = vpop.permute.xlu0 %1136
    %1139 = vst.msk [vmem:[#allocation2 + $0x8] sm:$0xff] %vm679, %v1137
    %1140 = vrot.lane.b32.xlu0 %v915, 112
    %v1141 = vpop.permute.xlu0 %1140
    %1142 = vrot.lane.b32.xlu0 %v916, 112
    %v1143 = vpop.permute.xlu0 %1142
    %v1145 = vsel %vm453, %v1141, 0
    %v1148 = vsel %vm453, %v1143, 0
    %1150 = vmatprep.subr.bf16.mxu0 0
    %1151 = vmatpush1.bf16.xpose.msra.mxu0 %v1148
    %1152 = vmatprep.subr.bf16.mxu0 0
    %1153 = vmatpush1.bf16.xpose.msra.mxu0 0
    %1154 = vmatprep.subr.bf16.mxu0 0
    %1155 = vmatpush1.bf16.xpose.msra.mxu0 0
    %1156 = vmatprep.subr.bf16.mxu0 0
    %1157 = vmatpush1.bf16.xpose.msra.mxu0 0
    %1158 = vmatprep.subr.bf16.mxu0 0
    %1159 = vmatpush1.bf16.xpose.msra.mxu0 0
    %1160 = vmatprep.subr.bf16.mxu0 0
    %1161 = vmatpush1.bf16.xpose.msra.mxu0 0
    %1162 = vmatprep.subr.bf16.mxu0 0
    %1163 = vmatpush1.bf16.xpose.msra.mxu0 0
    %1164 = vmatprep.subr.bf16.mxu0 0
    %1165 = vmatpush1.bf16.xpose.msra.mxu0 0
    %1166 = vmatprep.subr.bf16.mxu0 0
    %1167 = vmatpush1.bf16.xpose.msra.mxu0 0
    %1168 = vmatprep.subr.bf16.mxu0 0
    %1169 = vmatpush1.bf16.xpose.msra.mxu0 0
    %1170 = vmatprep.subr.bf16.mxu0 0
    %1171 = vmatpush1.bf16.xpose.msra.mxu0 0
    %1172 = vmatprep.subr.bf16.mxu0 0
    %1173 = vmatpush1.bf16.xpose.msra.mxu0 0
    %1174 = vmatprep.subr.bf16.mxu0 0
    %1175 = vmatpush1.bf16.xpose.msra.mxu0 0
    %1176 = vmatprep.subr.bf16.mxu0 0
    %1177 = vmatpush1.bf16.xpose.msra.mxu0 0
    %1178 = vmatprep.subr.bf16.mxu0 0
    %1179 = vmatpush1.bf16.xpose.msra.mxu0 0
    %1180 = vmatprep.subr.bf16.mxu0 0
    %1181 = vmatpush1.bf16.xpose.msra.mxu0 0
    %1182 = vmatprep.mubr.bf16.mxu0 0
    %1183 = vmatmul.mubr.bf16.gmra.mrb[0].mxu0 %v1145
    %v1184 = vpop.f32.mrb[0].mxu0
    %v1185 = vadd.f32 0.0, %v1184
    %v1186 = vpop.f32.mrb[0].mxu0
    %v1187 = vpop.f32.mrb[0].mxu0
    %v1188 = vpop.f32.mrb[0].mxu0
    %1189 = vdwg.mxu0
    %v1190 = vmul.f32 %v1185, 0.35355338
    %v1191 = vsel %vm453, %v1190, -inf
    %1192 = vmax.xlane.f32.xlu0 %v1191
    %v1193 = vpop.xlane.xlu0 %1192
    %v1194 = vsub.f32 %v1190, %v1193
    %v1195 = vmul.f32 %v1194, 1.442695
    %v1196 = vpow.pop %v1195
    %v1197 = vsel %vm453, %v1196, 0.0
    %1198 = vadd.xlane.f32.xlu0 %v1197
    %v1199 = vpop.xlane.xlu0 %1198
    %v1200 = vrcp.pop %v1199
    %v1201 = vmul.f32 %v1196, %v1200
    %v1202 = vpack.c.bf16 %v1201, %v1201
    %1203 = vrot.lane.b32.xlu0 %v976, 112
    %v1204 = vpop.permute.xlu0 %1203
    %v1206 = vsel %vm453, %v1202, 0
    %v1209 = vsel %vm516, %v1204, 0
    %1211 = vmatprep.subr.bf16.mxu0 0
    %1212 = vmatpush1.bf16.msra.mxu0 %v1209
    %1213 = vmatprep.subr.bf16.mxu0 0
    %1214 = vmatpush1.bf16.msra.mxu0 0
    %1215 = vmatprep.subr.bf16.mxu0 0
    %1216 = vmatpush1.bf16.msra.mxu0 0
    %1217 = vmatprep.subr.bf16.mxu0 0
    %1218 = vmatpush1.bf16.msra.mxu0 0
    %1219 = vmatprep.subr.bf16.mxu0 0
    %1220 = vmatpush1.bf16.msra.mxu0 0
    %1221 = vmatprep.subr.bf16.mxu0 0
    %1222 = vmatpush1.bf16.msra.mxu0 0
    %1223 = vmatprep.subr.bf16.mxu0 0
    %1224 = vmatpush1.bf16.msra.mxu0 0
    %1225 = vmatprep.subr.bf16.mxu0 0
    %1226 = vmatpush1.bf16.msra.mxu0 0
    %1227 = vmatprep.subr.bf16.mxu0 0
    %1228 = vmatpush1.bf16.msra.mxu0 0
    %1229 = vmatprep.subr.bf16.mxu0 0
    %1230 = vmatpush1.bf16.msra.mxu0 0
    %1231 = vmatprep.subr.bf16.mxu0 0
    %1232 = vmatpush1.bf16.msra.mxu0 0
    %1233 = vmatprep.subr.bf16.mxu0 0
    %1234 = vmatpush1.bf16.msra.mxu0 0
    %1235 = vmatprep.subr.bf16.mxu0 0
    %1236 = vmatpush1.bf16.msra.mxu0 0
    %1237 = vmatprep.subr.bf16.mxu0 0
    %1238 = vmatpush1.bf16.msra.mxu0 0
    %1239 = vmatprep.subr.bf16.mxu0 0
    %1240 = vmatpush1.bf16.msra.mxu0 0
    %1241 = vmatprep.subr.bf16.mxu0 0
    %1242 = vmatpush1.bf16.msra.mxu0 0
    %1243 = vmatprep.mubr.bf16.mxu0 0
    %1244 = vmatmul.mubr.bf16.gmra.mrb[0].mxu0 %v1206
    %v1245 = vpop.f32.mrb[0].mxu0
    %v1246 = vadd.f32 0.0, %v1245
    %v1247 = vpop.f32.mrb[0].mxu0
    %v1248 = vpop.f32.mrb[0].mxu0
    %v1249 = vpop.f32.mrb[0].mxu0
    %1250 = vdwg.mxu0
    %1252 = vrot.lane.b32.xlu0 %v1246, 16
    %v1253 = vpop.permute.xlu0 %1252
    %1255 = vst.msk [vmem:[#allocation2 + $0x8] sm:$0xff] %vm796, %v1253
    %1256 = vrot.lane.b32.xlu0 %v915, 104
    %v1257 = vpop.permute.xlu0 %1256
    %1258 = vrot.lane.b32.xlu0 %v916, 104
    %v1259 = vpop.permute.xlu0 %1258
    %v1261 = vsel %vm453, %v1257, 0
    %v1264 = vsel %vm453, %v1259, 0
    %1266 = vmatprep.subr.bf16.mxu0 0
    %1267 = vmatpush1.bf16.xpose.msra.mxu0 %v1264
    %1268 = vmatprep.subr.bf16.mxu0 0
    %1269 = vmatpush1.bf16.xpose.msra.mxu0 0
    %1270 = vmatprep.subr.bf16.mxu0 0
    %1271 = vmatpush1.bf16.xpose.msra.mxu0 0
    %1272 = vmatprep.subr.bf16.mxu0 0
    %1273 = vmatpush1.bf16.xpose.msra.mxu0 0
    %1274 = vmatprep.subr.bf16.mxu0 0
    %1275 = vmatpush1.bf16.xpose.msra.mxu0 0
    %1276 = vmatprep.subr.bf16.mxu0 0
    %1277 = vmatpush1.bf16.xpose.msra.mxu0 0
    %1278 = vmatprep.subr.bf16.mxu0 0
    %1279 = vmatpush1.bf16.xpose.msra.mxu0 0
    %1280 = vmatprep.subr.bf16.mxu0 0
    %1281 = vmatpush1.bf16.xpose.msra.mxu0 0
    %1282 = vmatprep.subr.bf16.mxu0 0
    %1283 = vmatpush1.bf16.xpose.msra.mxu0 0
    %1284 = vmatprep.subr.bf16.mxu0 0
    %1285 = vmatpush1.bf16.xpose.msra.mxu0 0
    %1286 = vmatprep.subr.bf16.mxu0 0
    %1287 = vmatpush1.bf16.xpose.msra.mxu0 0
    %1288 = vmatprep.subr.bf16.mxu0 0
    %1289 = vmatpush1.bf16.xpose.msra.mxu0 0
    %1290 = vmatprep.subr.bf16.mxu0 0
    %1291 = vmatpush1.bf16.xpose.msra.mxu0 0
    %1292 = vmatprep.subr.bf16.mxu0 0
    %1293 = vmatpush1.bf16.xpose.msra.mxu0 0
    %1294 = vmatprep.subr.bf16.mxu0 0
    %1295 = vmatpush1.bf16.xpose.msra.mxu0 0
    %1296 = vmatprep.subr.bf16.mxu0 0
    %1297 = vmatpush1.bf16.xpose.msra.mxu0 0
    %1298 = vmatprep.mubr.bf16.mxu0 0
    %1299 = vmatmul.mubr.bf16.gmra.mrb[0].mxu0 %v1261
    %v1300 = vpop.f32.mrb[0].mxu0
    %v1301 = vadd.f32 0.0, %v1300
    %v1302 = vpop.f32.mrb[0].mxu0
    %v1303 = vpop.f32.mrb[0].mxu0
    %v1304 = vpop.f32.mrb[0].mxu0
    %1305 = vdwg.mxu0
    %v1306 = vmul.f32 %v1301, 0.35355338
    %v1307 = vsel %vm453, %v1306, -inf
    %1308 = vmax.xlane.f32.xlu0 %v1307
    %v1309 = vpop.xlane.xlu0 %1308
    %v1310 = vsub.f32 %v1306, %v1309
    %v1311 = vmul.f32 %v1310, 1.442695
    %v1312 = vpow.pop %v1311
    %v1313 = vsel %vm453, %v1312, 0.0
    %1314 = vadd.xlane.f32.xlu0 %v1313
    %v1315 = vpop.xlane.xlu0 %1314
    %v1316 = vrcp.pop %v1315
    %v1317 = vmul.f32 %v1312, %v1316
    %v1318 = vpack.c.bf16 %v1317, %v1317
    %1319 = vrot.lane.b32.xlu0 %v976, 104
    %v1320 = vpop.permute.xlu0 %1319
    %v1322 = vsel %vm453, %v1318, 0
    %v1325 = vsel %vm516, %v1320, 0
    %1327 = vmatprep.subr.bf16.mxu0 0
    %1328 = vmatpush1.bf16.msra.mxu0 %v1325
    %1329 = vmatprep.subr.bf16.mxu0 0
    %1330 = vmatpush1.bf16.msra.mxu0 0
    %1331 = vmatprep.subr.bf16.mxu0 0
    %1332 = vmatpush1.bf16.msra.mxu0 0
    %1333 = vmatprep.subr.bf16.mxu0 0
    %1334 = vmatpush1.bf16.msra.mxu0 0
    %1335 = vmatprep.subr.bf16.mxu0 0
    %1336 = vmatpush1.bf16.msra.mxu0 0
    %1337 = vmatprep.subr.bf16.mxu0 0
    %1338 = vmatpush1.bf16.msra.mxu0 0
    %1339 = vmatprep.subr.bf16.mxu0 0
    %1340 = vmatpush1.bf16.msra.mxu0 0
    %1341 = vmatprep.subr.bf16.mxu0 0
    %1342 = vmatpush1.bf16.msra.mxu0 0
    %1343 = vmatprep.subr.bf16.mxu0 0
    %1344 = vmatpush1.bf16.msra.mxu0 0
    %1345 = vmatprep.subr.bf16.mxu0 0
    %1346 = vmatpush1.bf16.msra.mxu0 0
    %1347 = vmatprep.subr.bf16.mxu0 0
    %1348 = vmatpush1.bf16.msra.mxu0 0
    %1349 = vmatprep.subr.bf16.mxu0 0
    %1350 = vmatpush1.bf16.msra.mxu0 0
    %1351 = vmatprep.subr.bf16.mxu0 0
    %1352 = vmatpush1.bf16.msra.mxu0 0
    %1353 = vmatprep.subr.bf16.mxu0 0
    %1354 = vmatpush1.bf16.msra.mxu0 0
    %1355 = vmatprep.subr.bf16.mxu0 0
    %1356 = vmatpush1.bf16.msra.mxu0 0
    %1357 = vmatprep.subr.bf16.mxu0 0
    %1358 = vmatpush1.bf16.msra.mxu0 0
    %1359 = vmatprep.mubr.bf16.mxu0 0
    %1360 = vmatmul.mubr.bf16.gmra.mrb[0].mxu0 %v1322
    %v1361 = vpop.f32.mrb[0].mxu0
    %v1362 = vadd.f32 0.0, %v1361
    %v1363 = vpop.f32.mrb[0].mxu0
    %v1364 = vpop.f32.mrb[0].mxu0
    %v1365 = vpop.f32.mrb[0].mxu0
    %1366 = vdwg.mxu0
    %1368 = vrot.lane.b32.xlu0 %v1362, 24
    %v1369 = vpop.permute.xlu0 %1368
    %1371 = vst.msk [vmem:[#allocation2 + $0x8] sm:$0xff] %vm913, %v1369
    %v1372 = vld [vmem:[#allocation2] sm:$0xff]
    %v1373 = vld [vmem:[#allocation2 + $0x8] sm:$0xff]
    %v1374 = vpack.c.bf16 %v1373, %v1372
    %v1375 = vld [vmem:[#allocation12] sm:$0xf]
    %v1376 = vld [vmem:[#allocation12 + $0x4] sm:$0xf]
    %v1377 = vld [vmem:[#allocation12 + $0x8] sm:$0xf]
    %v1378 = vld [vmem:[#allocation12 + $0xc] sm:$0xf]
    %v1379 = vlaneseq
    %v1380 = vshrl.u32 %v1379, 7
    %v1381 = vsub.s32 0, %v1380
    %v1382 = vrot.slane %v262, %v1381
    %v1387 = vunpack.c.l.b16 %v1375
    %v1388 = vunpack.c.l.b16 %v1376
    %v1389 = vunpack.c.l.b16 %v1377
    %v1390 = vunpack.c.l.b16 %v1378
    %v1391 = vpack.c.b16 %v1388, %v1387
    %v1392 = vpack.c.b16 %v1390, %v1389
    %v1396 = vsel %vm243, %v1374, 0
    %1398 = vmatprep.subr.bf16.mxu0 0
    %1399 = vmatpush1.bf16.msra.mxu0 %v1391
    %1400 = vmatprep.subr.bf16.mxu0 0
    %1401 = vmatpush1.bf16.msra.mxu0 %v1392
    %1402 = vmatprep.subr.bf16.mxu0 0
    %1403 = vmatpush1.bf16.msra.mxu0 0
    %1404 = vmatprep.subr.bf16.mxu0 0
    %1405 = vmatpush1.bf16.msra.mxu0 0
    %1406 = vmatprep.subr.bf16.mxu0 0
    %1407 = vmatpush1.bf16.msra.mxu0 0
    %1408 = vmatprep.subr.bf16.mxu0 0
    %1409 = vmatpush1.bf16.msra.mxu0 0
    %1410 = vmatprep.subr.bf16.mxu0 0
    %1411 = vmatpush1.bf16.msra.mxu0 0
    %1412 = vmatprep.subr.bf16.mxu0 0
    %1413 = vmatpush1.bf16.msra.mxu0 0
    %1414 = vmatprep.subr.bf16.mxu0 0
    %1415 = vmatpush1.bf16.msra.mxu0 0
    %1416 = vmatprep.subr.bf16.mxu0 0
    %1417 = vmatpush1.bf16.msra.mxu0 0
    %1418 = vmatprep.subr.bf16.mxu0 0
    %1419 = vmatpush1.bf16.msra.mxu0 0
    %1420 = vmatprep.subr.bf16.mxu0 0
    %1421 = vmatpush1.bf16.msra.mxu0 0
    %1422 = vmatprep.subr.bf16.mxu0 0
    %1423 = vmatpush1.bf16.msra.mxu0 0
    %1424 = vmatprep.subr.bf16.mxu0 0
    %1425 = vmatpush1.bf16.msra.mxu0 0
    %1426 = vmatprep.subr.bf16.mxu0 0
    %1427 = vmatpush1.bf16.msra.mxu0 0
    %1428 = vmatprep.subr.bf16.mxu0 0
    %1429 = vmatpush1.bf16.msra.mxu0 0
    %1430 = vmatprep.mubr.bf16.mxu0 0
    %1431 = vmatmul.mubr.bf16.gmra.mrb[0].mxu0 %v1396
    %v1432 = vpop.f32.mrb[0].mxu0
    %v1433 = vadd.f32 %v1382, %v1432
    %v1434 = vpop.f32.mrb[0].mxu0
    %v1435 = vpop.f32.mrb[0].mxu0
    %v1436 = vadd.f32 %v1382, %v1435
    %v1437 = vpop.f32.mrb[0].mxu0
    %1438 = vdwg.mxu0
    %v1439 = vadd.f32 %v237, %v1433
    %v1440 = vadd.f32 %v238, %v1436
    %v1441 = vmul.f32 %v1439, %v1439
    %v1442 = vmul.f32 %v1440, %v1440
    %v1443 = vsel %vm243, %v1441, 0.0
    %1444 = vadd.xlane.f32.xlu0 %v1443
    %v1445 = vpop.xlane.xlu0 %1444
    %v1446 = vsel %vm243, %v1442, 0.0
    %1447 = vadd.xlane.f32.xlu0 %v1446
    %v1448 = vpop.xlane.xlu0 %1447
    %v1449 = vmul.f32 %v1445, %v250
    %v1450 = vmul.f32 %v1448, %v250
    %v1451 = vadd.f32 %v1449, 1.1920929e-07
    %v1452 = vadd.f32 %v1450, 1.1920929e-07
    %v1453 = vrsqrt.pop %v1451
    %v1454 = vrsqrt.pop %v1452
    %v1455 = vmul.f32 %v1439, %v1453
    %v1456 = vmul.f32 %v1440, %v1454
    %v1457 = vld [vmem:[#allocation23 + $0x4] sm:$0x1]
    %v1458 = vld [vmem:[#allocation23 + $0x5] sm:$0x1]
    %v1459 = vld [vmem:[#allocation23 + $0x6] sm:$0x1]
    %v1460 = vld [vmem:[#allocation23 + $0x7] sm:$0x1]
    %v1461 = vpack.c.bf16 %v1456, %v1455
    %v1462 = vld [vmem:[#allocation14] sm:$0xf]
    %v1463 = vld [vmem:[#allocation14 + $0x4] sm:$0xf]
    %v1464 = vld [vmem:[#allocation14 + $0x8] sm:$0xf]
    %v1465 = vld [vmem:[#allocation14 + $0xc] sm:$0xf]
    %v1466 = vlaneseq
    %v1467 = vshrl.u32 %v1466, 7
    %v1468 = vsub.s32 0, %v1467
    %v1469 = vrot.slane %v1457, %v1468
    %v1474 = vunpack.c.l.b16 %v1462
    %v1475 = vunpack.c.l.b16 %v1463
    %v1476 = vunpack.c.l.b16 %v1464
    %v1477 = vunpack.c.l.b16 %v1465
    %v1478 = vpack.c.b16 %v1475, %v1474
    %v1479 = vpack.c.b16 %v1477, %v1476
    %v1483 = vsel %vm243, %v1461, 0
    %1485 = vmatprep.subr.bf16.mxu0 0
    %1486 = vmatpush1.bf16.msra.mxu0 %v1478
    %1487 = vmatprep.subr.bf16.mxu0 0
    %1488 = vmatpush1.bf16.msra.mxu0 %v1479
    %1489 = vmatprep.subr.bf16.mxu0 0
    %1490 = vmatpush1.bf16.msra.mxu0 0
    %1491 = vmatprep.subr.bf16.mxu0 0
    %1492 = vmatpush1.bf16.msra.mxu0 0
    %1493 = vmatprep.subr.bf16.mxu0 0
    %1494 = vmatpush1.bf16.msra.mxu0 0
    %1495 = vmatprep.subr.bf16.mxu0 0
    %1496 = vmatpush1.bf16.msra.mxu0 0
    %1497 = vmatprep.subr.bf16.mxu0 0
    %1498 = vmatpush1.bf16.msra.mxu0 0
    %1499 = vmatprep.subr.bf16.mxu0 0
    %1500 = vmatpush1.bf16.msra.mxu0 0
    %1501 = vmatprep.subr.bf16.mxu0 0
    %1502 = vmatpush1.bf16.msra.mxu0 0
    %1503 = vmatprep.subr.bf16.mxu0 0
    %1504 = vmatpush1.bf16.msra.mxu0 0
    %1505 = vmatprep.subr.bf16.mxu0 0
    %1506 = vmatpush1.bf16.msra.mxu0 0
    %1507 = vmatprep.subr.bf16.mxu0 0
    %1508 = vmatpush1.bf16.msra.mxu0 0
    %1509 = vmatprep.subr.bf16.mxu0 0
    %1510 = vmatpush1.bf16.msra.mxu0 0
    %1511 = vmatprep.subr.bf16.mxu0 0
    %1512 = vmatpush1.bf16.msra.mxu0 0
    %1513 = vmatprep.subr.bf16.mxu0 0
    %1514 = vmatpush1.bf16.msra.mxu0 0
    %1515 = vmatprep.subr.bf16.mxu0 0
    %1516 = vmatpush1.bf16.msra.mxu0 0
    %1517 = vmatprep.mubr.bf16.mxu0 0
    %1518 = vmatmul.mubr.bf16.gmra.mrb[0].mxu0 %v1483
    %v1519 = vpop.f32.mrb[0].mxu0
    %v1520 = vadd.f32 %v1469, %v1519
    %v1521 = vpop.f32.mrb[0].mxu0
    %v1522 = vpop.f32.mrb[0].mxu0
    %v1523 = vadd.f32 %v1469, %v1522
    %v1524 = vpop.f32.mrb[0].mxu0
    %1525 = vdwg.mxu0
    %v1526 = vpack.c.bf16 %v1523, %v1520
    %v1527 = vpack.c.bf16 %v240, %v239
    %v1528 = vld [vmem:[#allocation15] sm:$0xf]
    %v1529 = vld [vmem:[#allocation15 + $0x4] sm:$0xf]
    %v1530 = vld [vmem:[#allocation15 + $0x8] sm:$0xf]
    %v1531 = vld [vmem:[#allocation15 + $0xc] sm:$0xf]
    %v1532 = vlaneseq
    %v1533 = vshrl.u32 %v1532, 7
    %v1534 = vsub.s32 0, %v1533
    %v1535 = vrot.slane %v1458, %v1534
    %v1540 = vunpack.c.l.b16 %v1528
    %v1541 = vunpack.c.l.b16 %v1529
    %v1542 = vunpack.c.l.b16 %v1530
    %v1543 = vunpack.c.l.b16 %v1531
    %v1544 = vpack.c.b16 %v1541, %v1540
    %v1545 = vpack.c.b16 %v1543, %v1542
    %v1549 = vsel %vm243, %v1527, 0
    %1551 = vmatprep.subr.bf16.mxu0 0
    %1552 = vmatpush1.bf16.msra.mxu0 %v1544
    %1553 = vmatprep.subr.bf16.mxu0 0
    %1554 = vmatpush1.bf16.msra.mxu0 %v1545
    %1555 = vmatprep.subr.bf16.mxu0 0
    %1556 = vmatpush1.bf16.msra.mxu0 0
    %1557 = vmatprep.subr.bf16.mxu0 0
    %1558 = vmatpush1.bf16.msra.mxu0 0
    %1559 = vmatprep.subr.bf16.mxu0 0
    %1560 = vmatpush1.bf16.msra.mxu0 0
    %1561 = vmatprep.subr.bf16.mxu0 0
    %1562 = vmatpush1.bf16.msra.mxu0 0
    %1563 = vmatprep.subr.bf16.mxu0 0
    %1564 = vmatpush1.bf16.msra.mxu0 0
    %1565 = vmatprep.subr.bf16.mxu0 0
    %1566 = vmatpush1.bf16.msra.mxu0 0
    %1567 = vmatprep.subr.bf16.mxu0 0
    %1568 = vmatpush1.bf16.msra.mxu0 0
    %1569 = vmatprep.subr.bf16.mxu0 0
    %1570 = vmatpush1.bf16.msra.mxu0 0
    %1571 = vmatprep.subr.bf16.mxu0 0
    %1572 = vmatpush1.bf16.msra.mxu0 0
    %1573 = vmatprep.subr.bf16.mxu0 0
    %1574 = vmatpush1.bf16.msra.mxu0 0
    %1575 = vmatprep.subr.bf16.mxu0 0
    %1576 = vmatpush1.bf16.msra.mxu0 0
    %1577 = vmatprep.subr.bf16.mxu0 0
    %1578 = vmatpush1.bf16.msra.mxu0 0
    %1579 = vmatprep.subr.bf16.mxu0 0
    %1580 = vmatpush1.bf16.msra.mxu0 0
    %1581 = vmatprep.subr.bf16.mxu0 0
    %1582 = vmatpush1.bf16.msra.mxu0 0
    %1583 = vmatprep.mubr.bf16.mxu0 0
    %1584 = vmatmul.mubr.bf16.gmra.mrb[0].mxu0 %v1549
    %v1585 = vpop.f32.mrb[0].mxu0
    %v1586 = vadd.f32 %v1535, %v1585
    %v1587 = vpop.f32.mrb[0].mxu0
    %v1588 = vpop.f32.mrb[0].mxu0
    %v1589 = vadd.f32 %v1535, %v1588
    %v1590 = vpop.f32.mrb[0].mxu0
    %1591 = vdwg.mxu0
    %v1592 = vpack.c.bf16 %v1589, %v1586
    %v1593 = vld [vmem:[#allocation17] sm:$0xf]
    %v1594 = vld [vmem:[#allocation17 + $0x4] sm:$0xf]
    %v1595 = vld [vmem:[#allocation17 + $0x8] sm:$0xf]
    %v1596 = vld [vmem:[#allocation17 + $0xc] sm:$0xf]
    %v1597 = vlaneseq
    %v1598 = vshrl.u32 %v1597, 7
    %v1599 = vsub.s32 0, %v1598
    %v1600 = vrot.slane %v1459, %v1599
    %v1605 = vunpack.c.l.b16 %v1593
    %v1606 = vunpack.c.l.b16 %v1594
    %v1607 = vunpack.c.l.b16 %v1595
    %v1608 = vunpack.c.l.b16 %v1596
    %v1609 = vpack.c.b16 %v1606, %v1605
    %v1610 = vpack.c.b16 %v1608, %v1607
    %1613 = vmatprep.subr.bf16.mxu0 0
    %1614 = vmatpush1.bf16.msra.mxu0 %v1609
    %1615 = vmatprep.subr.bf16.mxu0 0
    %1616 = vmatpush1.bf16.msra.mxu0 %v1610
    %1617 = vmatprep.subr.bf16.mxu0 0
    %1618 = vmatpush1.bf16.msra.mxu0 0
    %1619 = vmatprep.subr.bf16.mxu0 0
    %1620 = vmatpush1.bf16.msra.mxu0 0
    %1621 = vmatprep.subr.bf16.mxu0 0
    %1622 = vmatpush1.bf16.msra.mxu0 0
    %1623 = vmatprep.subr.bf16.mxu0 0
    %1624 = vmatpush1.bf16.msra.mxu0 0
    %1625 = vmatprep.subr.bf16.mxu0 0
    %1626 = vmatpush1.bf16.msra.mxu0 0
    %1627 = vmatprep.subr.bf16.mxu0 0
    %1628 = vmatpush1.bf16.msra.mxu0 0
    %1629 = vmatprep.subr.bf16.mxu0 0
    %1630 = vmatpush1.bf16.msra.mxu0 0
    %1631 = vmatprep.subr.bf16.mxu0 0
    %1632 = vmatpush1.bf16.msra.mxu0 0
    %1633 = vmatprep.subr.bf16.mxu0 0
    %1634 = vmatpush1.bf16.msra.mxu0 0
    %1635 = vmatprep.subr.bf16.mxu0 0
    %1636 = vmatpush1.bf16.msra.mxu0 0
    %1637 = vmatprep.subr.bf16.mxu0 0
    %1638 = vmatpush1.bf16.msra.mxu0 0
    %1639 = vmatprep.subr.bf16.mxu0 0
    %1640 = vmatpush1.bf16.msra.mxu0 0
    %1641 = vmatprep.subr.bf16.mxu0 0
    %1642 = vmatpush1.bf16.msra.mxu0 0
    %1643 = vmatprep.subr.bf16.mxu0 0
    %1644 = vmatpush1.bf16.msra.mxu0 0
    %1645 = vmatprep.mubr.bf16.mxu0 0
    %1646 = vmatmul.mubr.bf16.gmra.mrb[0].mxu0 %v1549
    %v1647 = vpop.f32.mrb[0].mxu0
    %v1648 = vadd.f32 %v1600, %v1647
    %v1649 = vpop.f32.mrb[0].mxu0
    %v1650 = vpop.f32.mrb[0].mxu0
    %v1651 = vadd.f32 %v1600, %v1650
    %v1652 = vpop.f32.mrb[0].mxu0
    %1653 = vdwg.mxu0
    %v1654 = vpack.c.bf16 %v1651, %v1648
    %v1656 = vsel %vm453, %v1526, 0
    %v1659 = vsel %vm453, %v1592, 0
    %1661 = vmatprep.subr.bf16.mxu0 0
    %1662 = vmatpush1.bf16.xpose.msra.mxu0 %v1659
    %1663 = vmatprep.subr.bf16.mxu0 0
    %1664 = vmatpush1.bf16.xpose.msra.mxu0 0
    %1665 = vmatprep.subr.bf16.mxu0 0
    %1666 = vmatpush1.bf16.xpose.msra.mxu0 0
    %1667 = vmatprep.subr.bf16.mxu0 0
    %1668 = vmatpush1.bf16.xpose.msra.mxu0 0
    %1669 = vmatprep.subr.bf16.mxu0 0
    %1670 = vmatpush1.bf16.xpose.msra.mxu0 0
    %1671 = vmatprep.subr.bf16.mxu0 0
    %1672 = vmatpush1.bf16.xpose.msra.mxu0 0
    %1673 = vmatprep.subr.bf16.mxu0 0
    %1674 = vmatpush1.bf16.xpose.msra.mxu0 0
    %1675 = vmatprep.subr.bf16.mxu0 0
    %1676 = vmatpush1.bf16.xpose.msra.mxu0 0
    %1677 = vmatprep.subr.bf16.mxu0 0
    %1678 = vmatpush1.bf16.xpose.msra.mxu0 0
    %1679 = vmatprep.subr.bf16.mxu0 0
    %1680 = vmatpush1.bf16.xpose.msra.mxu0 0
    %1681 = vmatprep.subr.bf16.mxu0 0
    %1682 = vmatpush1.bf16.xpose.msra.mxu0 0
    %1683 = vmatprep.subr.bf16.mxu0 0
    %1684 = vmatpush1.bf16.xpose.msra.mxu0 0
    %1685 = vmatprep.subr.bf16.mxu0 0
    %1686 = vmatpush1.bf16.xpose.msra.mxu0 0
    %1687 = vmatprep.subr.bf16.mxu0 0
    %1688 = vmatpush1.bf16.xpose.msra.mxu0 0
    %1689 = vmatprep.subr.bf16.mxu0 0
    %1690 = vmatpush1.bf16.xpose.msra.mxu0 0
    %1691 = vmatprep.subr.bf16.mxu0 0
    %1692 = vmatpush1.bf16.xpose.msra.mxu0 0
    %1693 = vmatprep.mubr.bf16.mxu0 0
    %1694 = vmatmul.mubr.bf16.gmra.mrb[0].mxu0 %v1656
    %v1695 = vpop.f32.mrb[0].mxu0
    %v1696 = vadd.f32 0.0, %v1695
    %v1697 = vpop.f32.mrb[0].mxu0
    %v1698 = vpop.f32.mrb[0].mxu0
    %v1699 = vpop.f32.mrb[0].mxu0
    %1700 = vdwg.mxu0
    %v1701 = vmul.f32 %v1696, 0.35355338
    %v1702 = vsel %vm453, %v1701, -inf
    %1703 = vmax.xlane.f32.xlu0 %v1702
    %v1704 = vpop.xlane.xlu0 %1703
    %v1705 = vsub.f32 %v1701, %v1704
    %v1706 = vmul.f32 %v1705, 1.442695
    %v1707 = vpow.pop %v1706
    %v1708 = vsel %vm453, %v1707, 0.0
    %1709 = vadd.xlane.f32.xlu0 %v1708
    %v1710 = vpop.xlane.xlu0 %1709
    %v1711 = vrcp.pop %v1710
    %v1712 = vmul.f32 %v1707, %v1711
    %v1713 = vpack.c.bf16 %v1712, %v1712
    %v1715 = vsel %vm453, %v1713, 0
    %v1718 = vsel %vm516, %v1654, 0
    %1720 = vmatprep.subr.bf16.mxu0 0
    %1721 = vmatpush1.bf16.msra.mxu0 %v1718
    %1722 = vmatprep.subr.bf16.mxu0 0
    %1723 = vmatpush1.bf16.msra.mxu0 0
    %1724 = vmatprep.subr.bf16.mxu0 0
    %1725 = vmatpush1.bf16.msra.mxu0 0
    %1726 = vmatprep.subr.bf16.mxu0 0
    %1727 = vmatpush1.bf16.msra.mxu0 0
    %1728 = vmatprep.subr.bf16.mxu0 0
    %1729 = vmatpush1.bf16.msra.mxu0 0
    %1730 = vmatprep.subr.bf16.mxu0 0
    %1731 = vmatpush1.bf16.msra.mxu0 0
    %1732 = vmatprep.subr.bf16.mxu0 0
    %1733 = vmatpush1.bf16.msra.mxu0 0
    %1734 = vmatprep.subr.bf16.mxu0 0
    %1735 = vmatpush1.bf16.msra.mxu0 0
    %1736 = vmatprep.subr.bf16.mxu0 0
    %1737 = vmatpush1.bf16.msra.mxu0 0
    %1738 = vmatprep.subr.bf16.mxu0 0
    %1739 = vmatpush1.bf16.msra.mxu0 0
    %1740 = vmatprep.subr.bf16.mxu0 0
    %1741 = vmatpush1.bf16.msra.mxu0 0
    %1742 = vmatprep.subr.bf16.mxu0 0
    %1743 = vmatpush1.bf16.msra.mxu0 0
    %1744 = vmatprep.subr.bf16.mxu0 0
    %1745 = vmatpush1.bf16.msra.mxu0 0
    %1746 = vmatprep.subr.bf16.mxu0 0
    %1747 = vmatpush1.bf16.msra.mxu0 0
    %1748 = vmatprep.subr.bf16.mxu0 0
    %1749 = vmatpush1.bf16.msra.mxu0 0
    %1750 = vmatprep.subr.bf16.mxu0 0
    %1751 = vmatpush1.bf16.msra.mxu0 0
    %1752 = vmatprep.mubr.bf16.mxu0 0
    %1753 = vmatmul.mubr.bf16.gmra.mrb[0].mxu0 %v1715
    %v1754 = vpop.f32.mrb[0].mxu0
    %v1755 = vadd.f32 0.0, %v1754
    %v1756 = vpop.f32.mrb[0].mxu0
    %v1757 = vpop.f32.mrb[0].mxu0
    %v1758 = vpop.f32.mrb[0].mxu0
    %1759 = vdwg.mxu0
    %1760 = vst.msk [vmem:[#allocation2] sm:$0xff] %vm453, %v1755
    %1762 = vrot.lane.b32.xlu0 %v1526, 120
    %v1763 = vpop.permute.xlu0 %1762
    %1765 = vrot.lane.b32.xlu0 %v1592, 120
    %v1766 = vpop.permute.xlu0 %1765
    %v1768 = vsel %vm453, %v1763, 0
    %v1771 = vsel %vm453, %v1766, 0
    %1773 = vmatprep.subr.bf16.mxu0 0
    %1774 = vmatpush1.bf16.xpose.msra.mxu0 %v1771
    %1775 = vmatprep.subr.bf16.mxu0 0
    %1776 = vmatpush1.bf16.xpose.msra.mxu0 0
    %1777 = vmatprep.subr.bf16.mxu0 0
    %1778 = vmatpush1.bf16.xpose.msra.mxu0 0
    %1779 = vmatprep.subr.bf16.mxu0 0
    %1780 = vmatpush1.bf16.xpose.msra.mxu0 0
    %1781 = vmatprep.subr.bf16.mxu0 0
    %1782 = vmatpush1.bf16.xpose.msra.mxu0 0
    %1783 = vmatprep.subr.bf16.mxu0 0
    %1784 = vmatpush1.bf16.xpose.msra.mxu0 0
    %1785 = vmatprep.subr.bf16.mxu0 0
    %1786 = vmatpush1.bf16.xpose.msra.mxu0 0
    %1787 = vmatprep.subr.bf16.mxu0 0
    %1788 = vmatpush1.bf16.xpose.msra.mxu0 0
    %1789 = vmatprep.subr.bf16.mxu0 0
    %1790 = vmatpush1.bf16.xpose.msra.mxu0 0
    %1791 = vmatprep.subr.bf16.mxu0 0
    %1792 = vmatpush1.bf16.xpose.msra.mxu0 0
    %1793 = vmatprep.subr.bf16.mxu0 0
    %1794 = vmatpush1.bf16.xpose.msra.mxu0 0
    %1795 = vmatprep.subr.bf16.mxu0 0
    %1796 = vmatpush1.bf16.xpose.msra.mxu0 0
    %1797 = vmatprep.subr.bf16.mxu0 0
    %1798 = vmatpush1.bf16.xpose.msra.mxu0 0
    %1799 = vmatprep.subr.bf16.mxu0 0
    %1800 = vmatpush1.bf16.xpose.msra.mxu0 0
    %1801 = vmatprep.subr.bf16.mxu0 0
    %1802 = vmatpush1.bf16.xpose.msra.mxu0 0
    %1803 = vmatprep.subr.bf16.mxu0 0
    %1804 = vmatpush1.bf16.xpose.msra.mxu0 0
    %1805 = vmatprep.mubr.bf16.mxu0 0
    %1806 = vmatmul.mubr.bf16.gmra.mrb[0].mxu0 %v1768
    %v1807 = vpop.f32.mrb[0].mxu0
    %v1808 = vadd.f32 0.0, %v1807
    %v1809 = vpop.f32.mrb[0].mxu0
    %v1810 = vpop.f32.mrb[0].mxu0
    %v1811 = vpop.f32.mrb[0].mxu0
    %1812 = vdwg.mxu0
    %v1813 = vmul.f32 %v1808, 0.35355338
    %v1814 = vsel %vm453, %v1813, -inf
    %1815 = vmax.xlane.f32.xlu0 %v1814
    %v1816 = vpop.xlane.xlu0 %1815
    %v1817 = vsub.f32 %v1813, %v1816
    %v1818 = vmul.f32 %v1817, 1.442695
    %v1819 = vpow.pop %v1818
    %v1820 = vsel %vm453, %v1819, 0.0
    %1821 = vadd.xlane.f32.xlu0 %v1820
    %v1822 = vpop.xlane.xlu0 %1821
    %v1823 = vrcp.pop %v1822
    %v1824 = vmul.f32 %v1819, %v1823
    %v1825 = vpack.c.bf16 %v1824, %v1824
    %1827 = vrot.lane.b32.xlu0 %v1654, 120
    %v1828 = vpop.permute.xlu0 %1827
    %v1830 = vsel %vm453, %v1825, 0
    %v1833 = vsel %vm516, %v1828, 0
    %1835 = vmatprep.subr.bf16.mxu0 0
    %1836 = vmatpush1.bf16.msra.mxu0 %v1833
    %1837 = vmatprep.subr.bf16.mxu0 0
    %1838 = vmatpush1.bf16.msra.mxu0 0
    %1839 = vmatprep.subr.bf16.mxu0 0
    %1840 = vmatpush1.bf16.msra.mxu0 0
    %1841 = vmatprep.subr.bf16.mxu0 0
    %1842 = vmatpush1.bf16.msra.mxu0 0
    %1843 = vmatprep.subr.bf16.mxu0 0
    %1844 = vmatpush1.bf16.msra.mxu0 0
    %1845 = vmatprep.subr.bf16.mxu0 0
    %1846 = vmatpush1.bf16.msra.mxu0 0
    %1847 = vmatprep.subr.bf16.mxu0 0
    %1848 = vmatpush1.bf16.msra.mxu0 0
    %1849 = vmatprep.subr.bf16.mxu0 0
    %1850 = vmatpush1.bf16.msra.mxu0 0
    %1851 = vmatprep.subr.bf16.mxu0 0
    %1852 = vmatpush1.bf16.msra.mxu0 0
    %1853 = vmatprep.subr.bf16.mxu0 0
    %1854 = vmatpush1.bf16.msra.mxu0 0
    %1855 = vmatprep.subr.bf16.mxu0 0
    %1856 = vmatpush1.bf16.msra.mxu0 0
    %1857 = vmatprep.subr.bf16.mxu0 0
    %1858 = vmatpush1.bf16.msra.mxu0 0
    %1859 = vmatprep.subr.bf16.mxu0 0
    %1860 = vmatpush1.bf16.msra.mxu0 0
    %1861 = vmatprep.subr.bf16.mxu0 0
    %1862 = vmatpush1.bf16.msra.mxu0 0
    %1863 = vmatprep.subr.bf16.mxu0 0
    %1864 = vmatpush1.bf16.msra.mxu0 0
    %1865 = vmatprep.subr.bf16.mxu0 0
    %1866 = vmatpush1.bf16.msra.mxu0 0
    %1867 = vmatprep.mubr.bf16.mxu0 0
    %1868 = vmatmul.mubr.bf16.gmra.mrb[0].mxu0 %v1830
    %v1869 = vpop.f32.mrb[0].mxu0
    %v1870 = vadd.f32 0.0, %v1869
    %v1871 = vpop.f32.mrb[0].mxu0
    %v1872 = vpop.f32.mrb[0].mxu0
    %v1873 = vpop.f32.mrb[0].mxu0
    %1874 = vdwg.mxu0
    %1876 = vrot.lane.b32.xlu0 %v1870, 8
    %v1877 = vpop.permute.xlu0 %1876
    %1879 = vst.msk [vmem:[#allocation2] sm:$0xff] %vm679, %v1877
    %1880 = vrot.lane.b32.xlu0 %v1526, 112
    %v1881 = vpop.permute.xlu0 %1880
    %1882 = vrot.lane.b32.xlu0 %v1592, 112
    %v1883 = vpop.permute.xlu0 %1882
    %v1885 = vsel %vm453, %v1881, 0
    %v1888 = vsel %vm453, %v1883, 0
    %1890 = vmatprep.subr.bf16.mxu0 0
    %1891 = vmatpush1.bf16.xpose.msra.mxu0 %v1888
    %1892 = vmatprep.subr.bf16.mxu0 0
    %1893 = vmatpush1.bf16.xpose.msra.mxu0 0
    %1894 = vmatprep.subr.bf16.mxu0 0
    %1895 = vmatpush1.bf16.xpose.msra.mxu0 0
    %1896 = vmatprep.subr.bf16.mxu0 0
    %1897 = vmatpush1.bf16.xpose.msra.mxu0 0
    %1898 = vmatprep.subr.bf16.mxu0 0
    %1899 = vmatpush1.bf16.xpose.msra.mxu0 0
    %1900 = vmatprep.subr.bf16.mxu0 0
    %1901 = vmatpush1.bf16.xpose.msra.mxu0 0
    %1902 = vmatprep.subr.bf16.mxu0 0
    %1903 = vmatpush1.bf16.xpose.msra.mxu0 0
    %1904 = vmatprep.subr.bf16.mxu0 0
    %1905 = vmatpush1.bf16.xpose.msra.mxu0 0
    %1906 = vmatprep.subr.bf16.mxu0 0
    %1907 = vmatpush1.bf16.xpose.msra.mxu0 0
    %1908 = vmatprep.subr.bf16.mxu0 0
    %1909 = vmatpush1.bf16.xpose.msra.mxu0 0
    %1910 = vmatprep.subr.bf16.mxu0 0
    %1911 = vmatpush1.bf16.xpose.msra.mxu0 0
    %1912 = vmatprep.subr.bf16.mxu0 0
    %1913 = vmatpush1.bf16.xpose.msra.mxu0 0
    %1914 = vmatprep.subr.bf16.mxu0 0
    %1915 = vmatpush1.bf16.xpose.msra.mxu0 0
    %1916 = vmatprep.subr.bf16.mxu0 0
    %1917 = vmatpush1.bf16.xpose.msra.mxu0 0
    %1918 = vmatprep.subr.bf16.mxu0 0
    %1919 = vmatpush1.bf16.xpose.msra.mxu0 0
    %1920 = vmatprep.subr.bf16.mxu0 0
    %1921 = vmatpush1.bf16.xpose.msra.mxu0 0
    %1922 = vmatprep.mubr.bf16.mxu0 0
    %1923 = vmatmul.mubr.bf16.gmra.mrb[0].mxu0 %v1885
    %v1924 = vpop.f32.mrb[0].mxu0
    %v1925 = vadd.f32 0.0, %v1924
    %v1926 = vpop.f32.mrb[0].mxu0
    %v1927 = vpop.f32.mrb[0].mxu0
    %v1928 = vpop.f32.mrb[0].mxu0
    %1929 = vdwg.mxu0
    %v1930 = vmul.f32 %v1925, 0.35355338
    %v1931 = vsel %vm453, %v1930, -inf
    %1932 = vmax.xlane.f32.xlu0 %v1931
    %v1933 = vpop.xlane.xlu0 %1932
    %v1934 = vsub.f32 %v1930, %v1933
    %v1935 = vmul.f32 %v1934, 1.442695
    %v1936 = vpow.pop %v1935
    %v1937 = vsel %vm453, %v1936, 0.0
    %1938 = vadd.xlane.f32.xlu0 %v1937
    %v1939 = vpop.xlane.xlu0 %1938
    %v1940 = vrcp.pop %v1939
    %v1941 = vmul.f32 %v1936, %v1940
    %v1942 = vpack.c.bf16 %v1941, %v1941
    %1943 = vrot.lane.b32.xlu0 %v1654, 112
    %v1944 = vpop.permute.xlu0 %1943
    %v1946 = vsel %vm453, %v1942, 0
    %v1949 = vsel %vm516, %v1944, 0
    %1951 = vmatprep.subr.bf16.mxu0 0
    %1952 = vmatpush1.bf16.msra.mxu0 %v1949
    %1953 = vmatprep.subr.bf16.mxu0 0
    %1954 = vmatpush1.bf16.msra.mxu0 0
    %1955 = vmatprep.subr.bf16.mxu0 0
    %1956 = vmatpush1.bf16.msra.mxu0 0
    %1957 = vmatprep.subr.bf16.mxu0 0
    %1958 = vmatpush1.bf16.msra.mxu0 0
    %1959 = vmatprep.subr.bf16.mxu0 0
    %1960 = vmatpush1.bf16.msra.mxu0 0
    %1961 = vmatprep.subr.bf16.mxu0 0
    %1962 = vmatpush1.bf16.msra.mxu0 0
    %1963 = vmatprep.subr.bf16.mxu0 0
    %1964 = vmatpush1.bf16.msra.mxu0 0
    %1965 = vmatprep.subr.bf16.mxu0 0
    %1966 = vmatpush1.bf16.msra.mxu0 0
    %1967 = vmatprep.subr.bf16.mxu0 0
    %1968 = vmatpush1.bf16.msra.mxu0 0
    %1969 = vmatprep.subr.bf16.mxu0 0
    %1970 = vmatpush1.bf16.msra.mxu0 0
    %1971 = vmatprep.subr.bf16.mxu0 0
    %1972 = vmatpush1.bf16.msra.mxu0 0
    %1973 = vmatprep.subr.bf16.mxu0 0
    %1974 = vmatpush1.bf16.msra.mxu0 0
    %1975 = vmatprep.subr.bf16.mxu0 0
    %1976 = vmatpush1.bf16.msra.mxu0 0
    %1977 = vmatprep.subr.bf16.mxu0 0
    %1978 = vmatpush1.bf16.msra.mxu0 0
    %1979 = vmatprep.subr.bf16.mxu0 0
    %1980 = vmatpush1.bf16.msra.mxu0 0
    %1981 = vmatprep.subr.bf16.mxu0 0
    %1982 = vmatpush1.bf16.msra.mxu0 0
    %1983 = vmatprep.mubr.bf16.mxu0 0
    %1984 = vmatmul.mubr.bf16.gmra.mrb[0].mxu0 %v1946
    %v1985 = vpop.f32.mrb[0].mxu0
    %v1986 = vadd.f32 0.0, %v1985
    %v1987 = vpop.f32.mrb[0].mxu0
    %v1988 = vpop.f32.mrb[0].mxu0
    %v1989 = vpop.f32.mrb[0].mxu0
    %1990 = vdwg.mxu0
    %1992 = vrot.lane.b32.xlu0 %v1986, 16
    %v1993 = vpop.permute.xlu0 %1992
    %1995 = vst.msk [vmem:[#allocation2] sm:$0xff] %vm796, %v1993
    %1996 = vrot.lane.b32.xlu0 %v1526, 104
    %v1997 = vpop.permute.xlu0 %1996
    %1998 = vrot.lane.b32.xlu0 %v1592, 104
    %v1999 = vpop.permute.xlu0 %1998
    %v2001 = vsel %vm453, %v1997, 0
    %v2004 = vsel %vm453, %v1999, 0
    %2006 = vmatprep.subr.bf16.mxu0 0
    %2007 = vmatpush1.bf16.xpose.msra.mxu0 %v2004
    %2008 = vmatprep.subr.bf16.mxu0 0
    %2009 = vmatpush1.bf16.xpose.msra.mxu0 0
    %2010 = vmatprep.subr.bf16.mxu0 0
    %2011 = vmatpush1.bf16.xpose.msra.mxu0 0
    %2012 = vmatprep.subr.bf16.mxu0 0
    %2013 = vmatpush1.bf16.xpose.msra.mxu0 0
    %2014 = vmatprep.subr.bf16.mxu0 0
    %2015 = vmatpush1.bf16.xpose.msra.mxu0 0
    %2016 = vmatprep.subr.bf16.mxu0 0
    %2017 = vmatpush1.bf16.xpose.msra.mxu0 0
    %2018 = vmatprep.subr.bf16.mxu0 0
    %2019 = vmatpush1.bf16.xpose.msra.mxu0 0
    %2020 = vmatprep.subr.bf16.mxu0 0
    %2021 = vmatpush1.bf16.xpose.msra.mxu0 0
    %2022 = vmatprep.subr.bf16.mxu0 0
    %2023 = vmatpush1.bf16.xpose.msra.mxu0 0
    %2024 = vmatprep.subr.bf16.mxu0 0
    %2025 = vmatpush1.bf16.xpose.msra.mxu0 0
    %2026 = vmatprep.subr.bf16.mxu0 0
    %2027 = vmatpush1.bf16.xpose.msra.mxu0 0
    %2028 = vmatprep.subr.bf16.mxu0 0
    %2029 = vmatpush1.bf16.xpose.msra.mxu0 0
    %2030 = vmatprep.subr.bf16.mxu0 0
    %2031 = vmatpush1.bf16.xpose.msra.mxu0 0
    %2032 = vmatprep.subr.bf16.mxu0 0
    %2033 = vmatpush1.bf16.xpose.msra.mxu0 0
    %2034 = vmatprep.subr.bf16.mxu0 0
    %2035 = vmatpush1.bf16.xpose.msra.mxu0 0
    %2036 = vmatprep.subr.bf16.mxu0 0
    %2037 = vmatpush1.bf16.xpose.msra.mxu0 0
    %2038 = vmatprep.mubr.bf16.mxu0 0
    %2039 = vmatmul.mubr.bf16.gmra.mrb[0].mxu0 %v2001
    %v2040 = vpop.f32.mrb[0].mxu0
    %v2041 = vadd.f32 0.0, %v2040
    %v2042 = vpop.f32.mrb[0].mxu0
    %v2043 = vpop.f32.mrb[0].mxu0
    %v2044 = vpop.f32.mrb[0].mxu0
    %2045 = vdwg.mxu0
    %v2046 = vmul.f32 %v2041, 0.35355338
    %v2047 = vsel %vm453, %v2046, -inf
    %2048 = vmax.xlane.f32.xlu0 %v2047
    %v2049 = vpop.xlane.xlu0 %2048
    %v2050 = vsub.f32 %v2046, %v2049
    %v2051 = vmul.f32 %v2050, 1.442695
    %v2052 = vpow.pop %v2051
    %v2053 = vsel %vm453, %v2052, 0.0
    %2054 = vadd.xlane.f32.xlu0 %v2053
    %v2055 = vpop.xlane.xlu0 %2054
    %v2056 = vrcp.pop %v2055
    %v2057 = vmul.f32 %v2052, %v2056
    %v2058 = vpack.c.bf16 %v2057, %v2057
    %2059 = vrot.lane.b32.xlu0 %v1654, 104
    %v2060 = vpop.permute.xlu0 %2059
    %v2062 = vsel %vm453, %v2058, 0
    %v2065 = vsel %vm516, %v2060, 0
    %2067 = vmatprep.subr.bf16.mxu0 0
    %2068 = vmatpush1.bf16.msra.mxu0 %v2065
    %2069 = vmatprep.subr.bf16.mxu0 0
    %2070 = vmatpush1.bf16.msra.mxu0 0
    %2071 = vmatprep.subr.bf16.mxu0 0
    %2072 = vmatpush1.bf16.msra.mxu0 0
    %2073 = vmatprep.subr.bf16.mxu0 0
    %2074 = vmatpush1.bf16.msra.mxu0 0
    %2075 = vmatprep.subr.bf16.mxu0 0
    %2076 = vmatpush1.bf16.msra.mxu0 0
    %2077 = vmatprep.subr.bf16.mxu0 0
    %2078 = vmatpush1.bf16.msra.mxu0 0
    %2079 = vmatprep.subr.bf16.mxu0 0
    %2080 = vmatpush1.bf16.msra.mxu0 0
    %2081 = vmatprep.subr.bf16.mxu0 0
    %2082 = vmatpush1.bf16.msra.mxu0 0
    %2083 = vmatprep.subr.bf16.mxu0 0
    %2084 = vmatpush1.bf16.msra.mxu0 0
    %2085 = vmatprep.subr.bf16.mxu0 0
    %2086 = vmatpush1.bf16.msra.mxu0 0
    %2087 = vmatprep.subr.bf16.mxu0 0
    %2088 = vmatpush1.bf16.msra.mxu0 0
    %2089 = vmatprep.subr.bf16.mxu0 0
    %2090 = vmatpush1.bf16.msra.mxu0 0
    %2091 = vmatprep.subr.bf16.mxu0 0
    %2092 = vmatpush1.bf16.msra.mxu0 0
    %2093 = vmatprep.subr.bf16.mxu0 0
    %2094 = vmatpush1.bf16.msra.mxu0 0
    %2095 = vmatprep.subr.bf16.mxu0 0
    %2096 = vmatpush1.bf16.msra.mxu0 0
    %2097 = vmatprep.subr.bf16.mxu0 0
    %2098 = vmatpush1.bf16.msra.mxu0 0
    %2099 = vmatprep.mubr.bf16.mxu0 0
    %2100 = vmatmul.mubr.bf16.gmra.mrb[0].mxu0 %v2062
    %v2101 = vpop.f32.mrb[0].mxu0
    %v2102 = vadd.f32 0.0, %v2101
    %v2103 = vpop.f32.mrb[0].mxu0
    %v2104 = vpop.f32.mrb[0].mxu0
    %v2105 = vpop.f32.mrb[0].mxu0
    %2106 = vdwg.mxu0
    %2108 = vrot.lane.b32.xlu0 %v2102, 24
    %v2109 = vpop.permute.xlu0 %2108
    %2111 = vst.msk [vmem:[#allocation2] sm:$0xff] %vm913, %v2109
    %v2112 = vrot.slane %v1526, 4
    %v2113 = vrot.slane %v1592, 4
    %v2115 = vsel %vm453, %v2112, 0
    %v2118 = vsel %vm453, %v2113, 0
    %2120 = vmatprep.subr.bf16.mxu0 0
    %2121 = vmatpush1.bf16.xpose.msra.mxu0 %v2118
    %2122 = vmatprep.subr.bf16.mxu0 0
    %2123 = vmatpush1.bf16.xpose.msra.mxu0 0
    %2124 = vmatprep.subr.bf16.mxu0 0
    %2125 = vmatpush1.bf16.xpose.msra.mxu0 0
    %2126 = vmatprep.subr.bf16.mxu0 0
    %2127 = vmatpush1.bf16.xpose.msra.mxu0 0
    %2128 = vmatprep.subr.bf16.mxu0 0
    %2129 = vmatpush1.bf16.xpose.msra.mxu0 0
    %2130 = vmatprep.subr.bf16.mxu0 0
    %2131 = vmatpush1.bf16.xpose.msra.mxu0 0
    %2132 = vmatprep.subr.bf16.mxu0 0
    %2133 = vmatpush1.bf16.xpose.msra.mxu0 0
    %2134 = vmatprep.subr.bf16.mxu0 0
    %2135 = vmatpush1.bf16.xpose.msra.mxu0 0
    %2136 = vmatprep.subr.bf16.mxu0 0
    %2137 = vmatpush1.bf16.xpose.msra.mxu0 0
    %2138 = vmatprep.subr.bf16.mxu0 0
    %2139 = vmatpush1.bf16.xpose.msra.mxu0 0
    %2140 = vmatprep.subr.bf16.mxu0 0
    %2141 = vmatpush1.bf16.xpose.msra.mxu0 0
    %2142 = vmatprep.subr.bf16.mxu0 0
    %2143 = vmatpush1.bf16.xpose.msra.mxu0 0
    %2144 = vmatprep.subr.bf16.mxu0 0
    %2145 = vmatpush1.bf16.xpose.msra.mxu0 0
    %2146 = vmatprep.subr.bf16.mxu0 0
    %2147 = vmatpush1.bf16.xpose.msra.mxu0 0
    %2148 = vmatprep.subr.bf16.mxu0 0
    %2149 = vmatpush1.bf16.xpose.msra.mxu0 0
    %2150 = vmatprep.subr.bf16.mxu0 0
    %2151 = vmatpush1.bf16.xpose.msra.mxu0 0
    %2152 = vmatprep.mubr.bf16.mxu0 0
    %2153 = vmatmul.mubr.bf16.gmra.mrb[0].mxu0 %v2115
    %v2154 = vpop.f32.mrb[0].mxu0
    %v2155 = vadd.f32 0.0, %v2154
    %v2156 = vpop.f32.mrb[0].mxu0
    %v2157 = vpop.f32.mrb[0].mxu0
    %v2158 = vpop.f32.mrb[0].mxu0
    %2159 = vdwg.mxu0
    %v2160 = vmul.f32 %v2155, 0.35355338
    %v2161 = vsel %vm453, %v2160, -inf
    %2162 = vmax.xlane.f32.xlu0 %v2161
    %v2163 = vpop.xlane.xlu0 %2162
    %v2164 = vsub.f32 %v2160, %v2163
    %v2165 = vmul.f32 %v2164, 1.442695
    %v2166 = vpow.pop %v2165
    %v2167 = vsel %vm453, %v2166, 0.0
    %2168 = vadd.xlane.f32.xlu0 %v2167
    %v2169 = vpop.xlane.xlu0 %2168
    %v2170 = vrcp.pop %v2169
    %v2171 = vmul.f32 %v2166, %v2170
    %v2172 = vpack.c.bf16 %v2171, %v2171
    %v2173 = vrot.slane %v1654, 4
    %v2175 = vsel %vm453, %v2172, 0
    %v2178 = vsel %vm516, %v2173, 0
    %2180 = vmatprep.subr.bf16.mxu0 0
    %2181 = vmatpush1.bf16.msra.mxu0 %v2178
    %2182 = vmatprep.subr.bf16.mxu0 0
    %2183 = vmatpush1.bf16.msra.mxu0 0
    %2184 = vmatprep.subr.bf16.mxu0 0
    %2185 = vmatpush1.bf16.msra.mxu0 0
    %2186 = vmatprep.subr.bf16.mxu0 0
    %2187 = vmatpush1.bf16.msra.mxu0 0
    %2188 = vmatprep.subr.bf16.mxu0 0
    %2189 = vmatpush1.bf16.msra.mxu0 0
    %2190 = vmatprep.subr.bf16.mxu0 0
    %2191 = vmatpush1.bf16.msra.mxu0 0
    %2192 = vmatprep.subr.bf16.mxu0 0
    %2193 = vmatpush1.bf16.msra.mxu0 0
    %2194 = vmatprep.subr.bf16.mxu0 0
    %2195 = vmatpush1.bf16.msra.mxu0 0
    %2196 = vmatprep.subr.bf16.mxu0 0
    %2197 = vmatpush1.bf16.msra.mxu0 0
    %2198 = vmatprep.subr.bf16.mxu0 0
    %2199 = vmatpush1.bf16.msra.mxu0 0
    %2200 = vmatprep.subr.bf16.mxu0 0
    %2201 = vmatpush1.bf16.msra.mxu0 0
    %2202 = vmatprep.subr.bf16.mxu0 0
    %2203 = vmatpush1.bf16.msra.mxu0 0
    %2204 = vmatprep.subr.bf16.mxu0 0
    %2205 = vmatpush1.bf16.msra.mxu0 0
    %2206 = vmatprep.subr.bf16.mxu0 0
    %2207 = vmatpush1.bf16.msra.mxu0 0
    %2208 = vmatprep.subr.bf16.mxu0 0
    %2209 = vmatpush1.bf16.msra.mxu0 0
    %2210 = vmatprep.subr.bf16.mxu0 0
    %2211 = vmatpush1.bf16.msra.mxu0 0
    %2212 = vmatprep.mubr.bf16.mxu0 0
    %2213 = vmatmul.mubr.bf16.gmra.mrb[0].mxu0 %v2175
    %v2214 = vpop.f32.mrb[0].mxu0
    %v2215 = vadd.f32 0.0, %v2214
    %v2216 = vpop.f32.mrb[0].mxu0
    %v2217 = vpop.f32.mrb[0].mxu0
    %v2218 = vpop.f32.mrb[0].mxu0
    %2219 = vdwg.mxu0
    %2220 = vst.msk [vmem:[#allocation2 + $0x8] sm:$0xff] %vm453, %v2215
    %2221 = vrot.lane.b32.xlu0 %v2112, 120
    %v2222 = vpop.permute.xlu0 %2221
    %2223 = vrot.lane.b32.xlu0 %v2113, 120
    %v2224 = vpop.permute.xlu0 %2223
    %v2226 = vsel %vm453, %v2222, 0
    %v2229 = vsel %vm453, %v2224, 0
    %2231 = vmatprep.subr.bf16.mxu0 0
    %2232 = vmatpush1.bf16.xpose.msra.mxu0 %v2229
    %2233 = vmatprep.subr.bf16.mxu0 0
    %2234 = vmatpush1.bf16.xpose.msra.mxu0 0
    %2235 = vmatprep.subr.bf16.mxu0 0
    %2236 = vmatpush1.bf16.xpose.msra.mxu0 0
    %2237 = vmatprep.subr.bf16.mxu0 0
    %2238 = vmatpush1.bf16.xpose.msra.mxu0 0
    %2239 = vmatprep.subr.bf16.mxu0 0
    %2240 = vmatpush1.bf16.xpose.msra.mxu0 0
    %2241 = vmatprep.subr.bf16.mxu0 0
    %2242 = vmatpush1.bf16.xpose.msra.mxu0 0
    %2243 = vmatprep.subr.bf16.mxu0 0
    %2244 = vmatpush1.bf16.xpose.msra.mxu0 0
    %2245 = vmatprep.subr.bf16.mxu0 0
    %2246 = vmatpush1.bf16.xpose.msra.mxu0 0
    %2247 = vmatprep.subr.bf16.mxu0 0
    %2248 = vmatpush1.bf16.xpose.msra.mxu0 0
    %2249 = vmatprep.subr.bf16.mxu0 0
    %2250 = vmatpush1.bf16.xpose.msra.mxu0 0
    %2251 = vmatprep.subr.bf16.mxu0 0
    %2252 = vmatpush1.bf16.xpose.msra.mxu0 0
    %2253 = vmatprep.subr.bf16.mxu0 0
    %2254 = vmatpush1.bf16.xpose.msra.mxu0 0
    %2255 = vmatprep.subr.bf16.mxu0 0
    %2256 = vmatpush1.bf16.xpose.msra.mxu0 0
    %2257 = vmatprep.subr.bf16.mxu0 0
    %2258 = vmatpush1.bf16.xpose.msra.mxu0 0
    %2259 = vmatprep.subr.bf16.mxu0 0
    %2260 = vmatpush1.bf16.xpose.msra.mxu0 0
    %2261 = vmatprep.subr.bf16.mxu0 0
    %2262 = vmatpush1.bf16.xpose.msra.mxu0 0
    %2263 = vmatprep.mubr.bf16.mxu0 0
    %2264 = vmatmul.mubr.bf16.gmra.mrb[0].mxu0 %v2226
    %v2265 = vpop.f32.mrb[0].mxu0
    %v2266 = vadd.f32 0.0, %v2265
    %v2267 = vpop.f32.mrb[0].mxu0
    %v2268 = vpop.f32.mrb[0].mxu0
    %v2269 = vpop.f32.mrb[0].mxu0
    %2270 = vdwg.mxu0
    %v2271 = vmul.f32 %v2266, 0.35355338
    %v2272 = vsel %vm453, %v2271, -inf
    %2273 = vmax.xlane.f32.xlu0 %v2272
    %v2274 = vpop.xlane.xlu0 %2273
    %v2275 = vsub.f32 %v2271, %v2274
    %v2276 = vmul.f32 %v2275, 1.442695
    %v2277 = vpow.pop %v2276
    %v2278 = vsel %vm453, %v2277, 0.0
    %2279 = vadd.xlane.f32.xlu0 %v2278
    %v2280 = vpop.xlane.xlu0 %2279
    %v2281 = vrcp.pop %v2280
    %v2282 = vmul.f32 %v2277, %v2281
    %v2283 = vpack.c.bf16 %v2282, %v2282
    %2284 = vrot.lane.b32.xlu0 %v2173, 120
    %v2285 = vpop.permute.xlu0 %2284
    %v2287 = vsel %vm453, %v2283, 0
    %v2290 = vsel %vm516, %v2285, 0
    %2292 = vmatprep.subr.bf16.mxu0 0
    %2293 = vmatpush1.bf16.msra.mxu0 %v2290
    %2294 = vmatprep.subr.bf16.mxu0 0
    %2295 = vmatpush1.bf16.msra.mxu0 0
    %2296 = vmatprep.subr.bf16.mxu0 0
    %2297 = vmatpush1.bf16.msra.mxu0 0
    %2298 = vmatprep.subr.bf16.mxu0 0
    %2299 = vmatpush1.bf16.msra.mxu0 0
    %2300 = vmatprep.subr.bf16.mxu0 0
    %2301 = vmatpush1.bf16.msra.mxu0 0
    %2302 = vmatprep.subr.bf16.mxu0 0
    %2303 = vmatpush1.bf16.msra.mxu0 0
    %2304 = vmatprep.subr.bf16.mxu0 0
    %2305 = vmatpush1.bf16.msra.mxu0 0
    %2306 = vmatprep.subr.bf16.mxu0 0
    %2307 = vmatpush1.bf16.msra.mxu0 0
    %2308 = vmatprep.subr.bf16.mxu0 0
    %2309 = vmatpush1.bf16.msra.mxu0 0
    %2310 = vmatprep.subr.bf16.mxu0 0
    %2311 = vmatpush1.bf16.msra.mxu0 0
    %2312 = vmatprep.subr.bf16.mxu0 0
    %2313 = vmatpush1.bf16.msra.mxu0 0
    %2314 = vmatprep.subr.bf16.mxu0 0
    %2315 = vmatpush1.bf16.msra.mxu0 0
    %2316 = vmatprep.subr.bf16.mxu0 0
    %2317 = vmatpush1.bf16.msra.mxu0 0
    %2318 = vmatprep.subr.bf16.mxu0 0
    %2319 = vmatpush1.bf16.msra.mxu0 0
    %2320 = vmatprep.subr.bf16.mxu0 0
    %2321 = vmatpush1.bf16.msra.mxu0 0
    %2322 = vmatprep.subr.bf16.mxu0 0
    %2323 = vmatpush1.bf16.msra.mxu0 0
    %2324 = vmatprep.mubr.bf16.mxu0 0
    %2325 = vmatmul.mubr.bf16.gmra.mrb[0].mxu0 %v2287
    %v2326 = vpop.f32.mrb[0].mxu0
    %v2327 = vadd.f32 0.0, %v2326
    %v2328 = vpop.f32.mrb[0].mxu0
    %v2329 = vpop.f32.mrb[0].mxu0
    %v2330 = vpop.f32.mrb[0].mxu0
    %2331 = vdwg.mxu0
    %2333 = vrot.lane.b32.xlu0 %v2327, 8
    %v2334 = vpop.permute.xlu0 %2333
    %2336 = vst.msk [vmem:[#allocation2 + $0x8] sm:$0xff] %vm679, %v2334
    %2337 = vrot.lane.b32.xlu0 %v2112, 112
    %v2338 = vpop.permute.xlu0 %2337
    %2339 = vrot.lane.b32.xlu0 %v2113, 112
    %v2340 = vpop.permute.xlu0 %2339
    %v2342 = vsel %vm453, %v2338, 0
    %v2345 = vsel %vm453, %v2340, 0
    %2347 = vmatprep.subr.bf16.mxu0 0
    %2348 = vmatpush1.bf16.xpose.msra.mxu0 %v2345
    %2349 = vmatprep.subr.bf16.mxu0 0
    %2350 = vmatpush1.bf16.xpose.msra.mxu0 0
    %2351 = vmatprep.subr.bf16.mxu0 0
    %2352 = vmatpush1.bf16.xpose.msra.mxu0 0
    %2353 = vmatprep.subr.bf16.mxu0 0
    %2354 = vmatpush1.bf16.xpose.msra.mxu0 0
    %2355 = vmatprep.subr.bf16.mxu0 0
    %2356 = vmatpush1.bf16.xpose.msra.mxu0 0
    %2357 = vmatprep.subr.bf16.mxu0 0
    %2358 = vmatpush1.bf16.xpose.msra.mxu0 0
    %2359 = vmatprep.subr.bf16.mxu0 0
    %2360 = vmatpush1.bf16.xpose.msra.mxu0 0
    %2361 = vmatprep.subr.bf16.mxu0 0
    %2362 = vmatpush1.bf16.xpose.msra.mxu0 0
    %2363 = vmatprep.subr.bf16.mxu0 0
    %2364 = vmatpush1.bf16.xpose.msra.mxu0 0
    %2365 = vmatprep.subr.bf16.mxu0 0
    %2366 = vmatpush1.bf16.xpose.msra.mxu0 0
    %2367 = vmatprep.subr.bf16.mxu0 0
    %2368 = vmatpush1.bf16.xpose.msra.mxu0 0
    %2369 = vmatprep.subr.bf16.mxu0 0
    %2370 = vmatpush1.bf16.xpose.msra.mxu0 0
    %2371 = vmatprep.subr.bf16.mxu0 0
    %2372 = vmatpush1.bf16.xpose.msra.mxu0 0
    %2373 = vmatprep.subr.bf16.mxu0 0
    %2374 = vmatpush1.bf16.xpose.msra.mxu0 0
    %2375 = vmatprep.subr.bf16.mxu0 0
    %2376 = vmatpush1.bf16.xpose.msra.mxu0 0
    %2377 = vmatprep.subr.bf16.mxu0 0
    %2378 = vmatpush1.bf16.xpose.msra.mxu0 0
    %2379 = vmatprep.mubr.bf16.mxu0 0
    %2380 = vmatmul.mubr.bf16.gmra.mrb[0].mxu0 %v2342
    %v2381 = vpop.f32.mrb[0].mxu0
    %v2382 = vadd.f32 0.0, %v2381
    %v2383 = vpop.f32.mrb[0].mxu0
    %v2384 = vpop.f32.mrb[0].mxu0
    %v2385 = vpop.f32.mrb[0].mxu0
    %2386 = vdwg.mxu0
    %v2387 = vmul.f32 %v2382, 0.35355338
    %v2388 = vsel %vm453, %v2387, -inf
    %2389 = vmax.xlane.f32.xlu0 %v2388
    %v2390 = vpop.xlane.xlu0 %2389
    %v2391 = vsub.f32 %v2387, %v2390
    %v2392 = vmul.f32 %v2391, 1.442695
    %v2393 = vpow.pop %v2392
    %v2394 = vsel %vm453, %v2393, 0.0
    %2395 = vadd.xlane.f32.xlu0 %v2394
    %v2396 = vpop.xlane.xlu0 %2395
    %v2397 = vrcp.pop %v2396
    %v2398 = vmul.f32 %v2393, %v2397
    %v2399 = vpack.c.bf16 %v2398, %v2398
    %2400 = vrot.lane.b32.xlu0 %v2173, 112
    %v2401 = vpop.permute.xlu0 %2400
    %v2403 = vsel %vm453, %v2399, 0
    %v2406 = vsel %vm516, %v2401, 0
    %2408 = vmatprep.subr.bf16.mxu0 0
    %2409 = vmatpush1.bf16.msra.mxu0 %v2406
    %2410 = vmatprep.subr.bf16.mxu0 0
    %2411 = vmatpush1.bf16.msra.mxu0 0
    %2412 = vmatprep.subr.bf16.mxu0 0
    %2413 = vmatpush1.bf16.msra.mxu0 0
    %2414 = vmatprep.subr.bf16.mxu0 0
    %2415 = vmatpush1.bf16.msra.mxu0 0
    %2416 = vmatprep.subr.bf16.mxu0 0
    %2417 = vmatpush1.bf16.msra.mxu0 0
    %2418 = vmatprep.subr.bf16.mxu0 0
    %2419 = vmatpush1.bf16.msra.mxu0 0
    %2420 = vmatprep.subr.bf16.mxu0 0
    %2421 = vmatpush1.bf16.msra.mxu0 0
    %2422 = vmatprep.subr.bf16.mxu0 0
    %2423 = vmatpush1.bf16.msra.mxu0 0
    %2424 = vmatprep.subr.bf16.mxu0 0
    %2425 = vmatpush1.bf16.msra.mxu0 0
    %2426 = vmatprep.subr.bf16.mxu0 0
    %2427 = vmatpush1.bf16.msra.mxu0 0
    %2428 = vmatprep.subr.bf16.mxu0 0
    %2429 = vmatpush1.bf16.msra.mxu0 0
    %2430 = vmatprep.subr.bf16.mxu0 0
    %2431 = vmatpush1.bf16.msra.mxu0 0
    %2432 = vmatprep.subr.bf16.mxu0 0
    %2433 = vmatpush1.bf16.msra.mxu0 0
    %2434 = vmatprep.subr.bf16.mxu0 0
    %2435 = vmatpush1.bf16.msra.mxu0 0
    %2436 = vmatprep.subr.bf16.mxu0 0
    %2437 = vmatpush1.bf16.msra.mxu0 0
    %2438 = vmatprep.subr.bf16.mxu0 0
    %2439 = vmatpush1.bf16.msra.mxu0 0
    %2440 = vmatprep.mubr.bf16.mxu0 0
    %2441 = vmatmul.mubr.bf16.gmra.mrb[0].mxu0 %v2403
    %v2442 = vpop.f32.mrb[0].mxu0
    %v2443 = vadd.f32 0.0, %v2442
    %v2444 = vpop.f32.mrb[0].mxu0
    %v2445 = vpop.f32.mrb[0].mxu0
    %v2446 = vpop.f32.mrb[0].mxu0
    %2447 = vdwg.mxu0
    %2449 = vrot.lane.b32.xlu0 %v2443, 16
    %v2450 = vpop.permute.xlu0 %2449
    %2452 = vst.msk [vmem:[#allocation2 + $0x8] sm:$0xff] %vm796, %v2450
    %2453 = vrot.lane.b32.xlu0 %v2112, 104
    %v2454 = vpop.permute.xlu0 %2453
    %2455 = vrot.lane.b32.xlu0 %v2113, 104
    %v2456 = vpop.permute.xlu0 %2455
    %v2458 = vsel %vm453, %v2454, 0
    %v2461 = vsel %vm453, %v2456, 0
    %2463 = vmatprep.subr.bf16.mxu0 0
    %2464 = vmatpush1.bf16.xpose.msra.mxu0 %v2461
    %2465 = vmatprep.subr.bf16.mxu0 0
    %2466 = vmatpush1.bf16.xpose.msra.mxu0 0
    %2467 = vmatprep.subr.bf16.mxu0 0
    %2468 = vmatpush1.bf16.xpose.msra.mxu0 0
    %2469 = vmatprep.subr.bf16.mxu0 0
    %2470 = vmatpush1.bf16.xpose.msra.mxu0 0
    %2471 = vmatprep.subr.bf16.mxu0 0
    %2472 = vmatpush1.bf16.xpose.msra.mxu0 0
    %2473 = vmatprep.subr.bf16.mxu0 0
    %2474 = vmatpush1.bf16.xpose.msra.mxu0 0
    %2475 = vmatprep.subr.bf16.mxu0 0
    %2476 = vmatpush1.bf16.xpose.msra.mxu0 0
    %2477 = vmatprep.subr.bf16.mxu0 0
    %2478 = vmatpush1.bf16.xpose.msra.mxu0 0
    %2479 = vmatprep.subr.bf16.mxu0 0
    %2480 = vmatpush1.bf16.xpose.msra.mxu0 0
    %2481 = vmatprep.subr.bf16.mxu0 0
    %2482 = vmatpush1.bf16.xpose.msra.mxu0 0
    %2483 = vmatprep.subr.bf16.mxu0 0
    %2484 = vmatpush1.bf16.xpose.msra.mxu0 0
    %2485 = vmatprep.subr.bf16.mxu0 0
    %2486 = vmatpush1.bf16.xpose.msra.mxu0 0
    %2487 = vmatprep.subr.bf16.mxu0 0
    %2488 = vmatpush1.bf16.xpose.msra.mxu0 0
    %2489 = vmatprep.subr.bf16.mxu0 0
    %2490 = vmatpush1.bf16.xpose.msra.mxu0 0
    %2491 = vmatprep.subr.bf16.mxu0 0
    %2492 = vmatpush1.bf16.xpose.msra.mxu0 0
    %2493 = vmatprep.subr.bf16.mxu0 0
    %2494 = vmatpush1.bf16.xpose.msra.mxu0 0
    %2495 = vmatprep.mubr.bf16.mxu0 0
    %2496 = vmatmul.mubr.bf16.gmra.mrb[0].mxu0 %v2458
    %v2497 = vpop.f32.mrb[0].mxu0
    %v2498 = vadd.f32 0.0, %v2497
    %v2499 = vpop.f32.mrb[0].mxu0
    %v2500 = vpop.f32.mrb[0].mxu0
    %v2501 = vpop.f32.mrb[0].mxu0
    %2502 = vdwg.mxu0
    %v2503 = vmul.f32 %v2498, 0.35355338
    %v2504 = vsel %vm453, %v2503, -inf
    %2505 = vmax.xlane.f32.xlu0 %v2504
    %v2506 = vpop.xlane.xlu0 %2505
    %v2507 = vsub.f32 %v2503, %v2506
    %v2508 = vmul.f32 %v2507, 1.442695
    %v2509 = vpow.pop %v2508
    %v2510 = vsel %vm453, %v2509, 0.0
    %2511 = vadd.xlane.f32.xlu0 %v2510
    %v2512 = vpop.xlane.xlu0 %2511
    %v2513 = vrcp.pop %v2512
    %v2514 = vmul.f32 %v2509, %v2513
    %v2515 = vpack.c.bf16 %v2514, %v2514
    %2516 = vrot.lane.b32.xlu0 %v2173, 104
    %v2517 = vpop.permute.xlu0 %2516
    %v2519 = vsel %vm453, %v2515, 0
    %v2522 = vsel %vm516, %v2517, 0
    %2524 = vmatprep.subr.bf16.mxu0 0
    %2525 = vmatpush1.bf16.msra.mxu0 %v2522
    %2526 = vmatprep.subr.bf16.mxu0 0
    %2527 = vmatpush1.bf16.msra.mxu0 0
    %2528 = vmatprep.subr.bf16.mxu0 0
    %2529 = vmatpush1.bf16.msra.mxu0 0
    %2530 = vmatprep.subr.bf16.mxu0 0
    %2531 = vmatpush1.bf16.msra.mxu0 0
    %2532 = vmatprep.subr.bf16.mxu0 0
    %2533 = vmatpush1.bf16.msra.mxu0 0
    %2534 = vmatprep.subr.bf16.mxu0 0
    %2535 = vmatpush1.bf16.msra.mxu0 0
    %2536 = vmatprep.subr.bf16.mxu0 0
    %2537 = vmatpush1.bf16.msra.mxu0 0
    %2538 = vmatprep.subr.bf16.mxu0 0
    %2539 = vmatpush1.bf16.msra.mxu0 0
    %2540 = vmatprep.subr.bf16.mxu0 0
    %2541 = vmatpush1.bf16.msra.mxu0 0
    %2542 = vmatprep.subr.bf16.mxu0 0
    %2543 = vmatpush1.bf16.msra.mxu0 0
    %2544 = vmatprep.subr.bf16.mxu0 0
    %2545 = vmatpush1.bf16.msra.mxu0 0
    %2546 = vmatprep.subr.bf16.mxu0 0
    %2547 = vmatpush1.bf16.msra.mxu0 0
    %2548 = vmatprep.subr.bf16.mxu0 0
    %2549 = vmatpush1.bf16.msra.mxu0 0
    %2550 = vmatprep.subr.bf16.mxu0 0
    %2551 = vmatpush1.bf16.msra.mxu0 0
    %2552 = vmatprep.subr.bf16.mxu0 0
    %2553 = vmatpush1.bf16.msra.mxu0 0
    %2554 = vmatprep.subr.bf16.mxu0 0
    %2555 = vmatpush1.bf16.msra.mxu0 0
    %2556 = vmatprep.mubr.bf16.mxu0 0
    %2557 = vmatmul.mubr.bf16.gmra.mrb[0].mxu0 %v2519
    %v2558 = vpop.f32.mrb[0].mxu0
    %v2559 = vadd.f32 0.0, %v2558
    %v2560 = vpop.f32.mrb[0].mxu0
    %v2561 = vpop.f32.mrb[0].mxu0
    %v2562 = vpop.f32.mrb[0].mxu0
    %2563 = vdwg.mxu0
    %2565 = vrot.lane.b32.xlu0 %v2559, 24
    %v2566 = vpop.permute.xlu0 %2565
    %2568 = vst.msk [vmem:[#allocation2 + $0x8] sm:$0xff] %vm913, %v2566
    %v2569 = vld [vmem:[#allocation2] sm:$0xff]
    %v2570 = vld [vmem:[#allocation2 + $0x8] sm:$0xff]
    %v2571 = vpack.c.bf16 %v2570, %v2569
    %v2572 = vld [vmem:[#allocation18] sm:$0xf]
    %v2573 = vld [vmem:[#allocation18 + $0x4] sm:$0xf]
    %v2574 = vld [vmem:[#allocation18 + $0x8] sm:$0xf]
    %v2575 = vld [vmem:[#allocation18 + $0xc] sm:$0xf]
    %v2576 = vlaneseq
    %v2577 = vshrl.u32 %v2576, 7
    %v2578 = vsub.s32 0, %v2577
    %v2579 = vrot.slane %v1460, %v2578
    %v2584 = vunpack.c.l.b16 %v2572
    %v2585 = vunpack.c.l.b16 %v2573
    %v2586 = vunpack.c.l.b16 %v2574
    %v2587 = vunpack.c.l.b16 %v2575
    %v2588 = vpack.c.b16 %v2585, %v2584
    %v2589 = vpack.c.b16 %v2587, %v2586
    %v2593 = vsel %vm243, %v2571, 0
    %2595 = vmatprep.subr.bf16.mxu0 0
    %2596 = vmatpush1.bf16.msra.mxu0 %v2588
    %2597 = vmatprep.subr.bf16.mxu0 0
    %2598 = vmatpush1.bf16.msra.mxu0 %v2589
    %2599 = vmatprep.subr.bf16.mxu0 0
    %2600 = vmatpush1.bf16.msra.mxu0 0
    %2601 = vmatprep.subr.bf16.mxu0 0
    %2602 = vmatpush1.bf16.msra.mxu0 0
    %2603 = vmatprep.subr.bf16.mxu0 0
    %2604 = vmatpush1.bf16.msra.mxu0 0
    %2605 = vmatprep.subr.bf16.mxu0 0
    %2606 = vmatpush1.bf16.msra.mxu0 0
    %2607 = vmatprep.subr.bf16.mxu0 0
    %2608 = vmatpush1.bf16.msra.mxu0 0
    %2609 = vmatprep.subr.bf16.mxu0 0
    %2610 = vmatpush1.bf16.msra.mxu0 0
    %2611 = vmatprep.subr.bf16.mxu0 0
    %2612 = vmatpush1.bf16.msra.mxu0 0
    %2613 = vmatprep.subr.bf16.mxu0 0
    %2614 = vmatpush1.bf16.msra.mxu0 0
    %2615 = vmatprep.subr.bf16.mxu0 0
    %2616 = vmatpush1.bf16.msra.mxu0 0
    %2617 = vmatprep.subr.bf16.mxu0 0
    %2618 = vmatpush1.bf16.msra.mxu0 0
    %2619 = vmatprep.subr.bf16.mxu0 0
    %2620 = vmatpush1.bf16.msra.mxu0 0
    %2621 = vmatprep.subr.bf16.mxu0 0
    %2622 = vmatpush1.bf16.msra.mxu0 0
    %2623 = vmatprep.subr.bf16.mxu0 0
    %2624 = vmatpush1.bf16.msra.mxu0 0
    %2625 = vmatprep.subr.bf16.mxu0 0
    %2626 = vmatpush1.bf16.msra.mxu0 0
    %2627 = vmatprep.mubr.bf16.mxu0 0
    %2628 = vmatmul.mubr.bf16.gmra.mrb[0].mxu0 %v2593
    %v2629 = vpop.f32.mrb[0].mxu0
    %v2630 = vadd.f32 %v2579, %v2629
    %v2631 = vpop.f32.mrb[0].mxu0
    %v2632 = vpop.f32.mrb[0].mxu0
    %v2633 = vadd.f32 %v2579, %v2632
    %v2634 = vpop.f32.mrb[0].mxu0
    %2635 = vdwg.mxu0
    %v2636 = vadd.f32 %v1439, %v2630
    %v2637 = vadd.f32 %v1440, %v2633
    %v2638 = vmul.f32 %v2636, %v2636
    %v2639 = vmul.f32 %v2637, %v2637
    %v2640 = vsel %vm243, %v2638, 0.0
    %2641 = vadd.xlane.f32.xlu0 %v2640
    %v2642 = vpop.xlane.xlu0 %2641
    %v2643 = vsel %vm243, %v2639, 0.0
    %2644 = vadd.xlane.f32.xlu0 %v2643
    %v2645 = vpop.xlane.xlu0 %2644
    %v2646 = vmul.f32 %v2642, %v250
    %v2647 = vmul.f32 %v2645, %v250
    %v2648 = vadd.f32 %v2646, 1.1920929e-07
    %v2649 = vadd.f32 %v2647, 1.1920929e-07
    %v2650 = vrsqrt.pop %v2648
    %v2651 = vrsqrt.pop %v2649
    %v2652 = vmul.f32 %v2636, %v2650
    %v2653 = vmul.f32 %v2637, %v2651
    %v2654 = vld [vmem:[#allocation24] sm:$0x1]
    %v2655 = vld [vmem:[#allocation23 + $0x8] sm:$0x1]
    %v2656 = vpack.c.bf16 %v2653, %v2652
    %v2657 = vld [vmem:[#allocation20] sm:$0xf]
    %v2658 = vld [vmem:[#allocation20 + $0x4] sm:$0xf]
    %v2659 = vld [vmem:[#allocation20 + $0x8] sm:$0xf]
    %v2660 = vld [vmem:[#allocation20 + $0xc] sm:$0xf]
    %v2662 = vlaneseq
    %v2663 = vshrl.u32 %v2662, 7
    %v2664 = vsub.s32 0, %v2663
    %v2665 = vrot.slane %v2654, %v2664
    %v2671 = vunpack.c.l.b16 %v2657
    %v2672 = vunpack.c.l.b16 %v2658
    %v2673 = vunpack.c.l.b16 %v2659
    %v2674 = vunpack.c.l.b16 %v2660
    %v2675 = vpack.c.b16 %v2672, %v2671
    %v2676 = vpack.c.b16 %v2674, %v2673
    %v2680 = vsel %vm243, %v2656, 0
    %2682 = vmatprep.subr.bf16.mxu0 0
    %2683 = vmatpush1.bf16.msra.mxu0 %v2675
    %2684 = vmatprep.subr.bf16.mxu0 0
    %2685 = vmatpush1.bf16.msra.mxu0 %v2676
    %2686 = vmatprep.subr.bf16.mxu0 0
    %2687 = vmatpush1.bf16.msra.mxu0 0
    %2688 = vmatprep.subr.bf16.mxu0 0
    %2689 = vmatpush1.bf16.msra.mxu0 0
    %2690 = vmatprep.subr.bf16.mxu0 0
    %2691 = vmatpush1.bf16.msra.mxu0 0
    %2692 = vmatprep.subr.bf16.mxu0 0
    %2693 = vmatpush1.bf16.msra.mxu0 0
    %2694 = vmatprep.subr.bf16.mxu0 0
    %2695 = vmatpush1.bf16.msra.mxu0 0
    %2696 = vmatprep.subr.bf16.mxu0 0
    %2697 = vmatpush1.bf16.msra.mxu0 0
    %2698 = vmatprep.subr.bf16.mxu0 0
    %2699 = vmatpush1.bf16.msra.mxu0 0
    %2700 = vmatprep.subr.bf16.mxu0 0
    %2701 = vmatpush1.bf16.msra.mxu0 0
    %2702 = vmatprep.subr.bf16.mxu0 0
    %2703 = vmatpush1.bf16.msra.mxu0 0
    %2704 = vmatprep.subr.bf16.mxu0 0
    %2705 = vmatpush1.bf16.msra.mxu0 0
    %2706 = vmatprep.subr.bf16.mxu0 0
    %2707 = vmatpush1.bf16.msra.mxu0 0
    %2708 = vmatprep.subr.bf16.mxu0 0
    %2709 = vmatpush1.bf16.msra.mxu0 0
    %2710 = vmatprep.subr.bf16.mxu0 0
    %2711 = vmatpush1.bf16.msra.mxu0 0
    %2712 = vmatprep.subr.bf16.mxu0 0
    %2713 = vmatpush1.bf16.msra.mxu0 0
    %2714 = vmatprep.mubr.bf16.mxu0 0
    %2715 = vmatmul.mubr.bf16.gmra.mrb[0].mxu0 %v2680
    %v2716 = vpop.f32.mrb[0].mxu0
    %v2717 = vadd.f32 %v2665, %v2716
    %v2718 = vpop.f32.mrb[0].mxu0
    %v2719 = vpop.f32.mrb[0].mxu0
    %v2720 = vadd.f32 %v2665, %v2719
    %v2721 = vpop.f32.mrb[0].mxu0
    %2722 = vdwg.mxu0
    %v2723 = vxor.u32 %v2717, 2147483648
    %v2724 = vxor.u32 %v2720, 2147483648
    %v2725 = vmul.f32 %v2723, 1.442695
    %v2726 = vpow.pop %v2725
    %v2727 = vmul.f32 %v2724, 1.442695
    %v2728 = vpow.pop %v2727
    %v2729 = vadd.f32 %v2726, 1.0
    %v2730 = vadd.f32 %v2728, 1.0
    %v2731 = vrcp.pop %v2729
    %v2732 = vmul.f32 1.0, %v2731
    %v2733 = vrcp.pop %v2730
    %v2734 = vmul.f32 1.0, %v2733
    %v2735 = vmul.f32 %v2717, %v2732
    %v2736 = vmul.f32 %v2720, %v2734
    %v2737 = vpack.c.bf16 %v2736, %v2735
    %v2738 = vld [vmem:[#allocation21] sm:$0xf]
    %v2739 = vld [vmem:[#allocation21 + $0x4] sm:$0xf]
    %v2740 = vld [vmem:[#allocation21 + $0x8] sm:$0xf]
    %v2741 = vld [vmem:[#allocation21 + $0xc] sm:$0xf]
    %v2742 = vld [vmem:[#allocation21 + $0x10] sm:$0xf]
    %v2743 = vld [vmem:[#allocation21 + $0x14] sm:$0xf]
    %v2744 = vld [vmem:[#allocation21 + $0x18] sm:$0xf]
    %v2745 = vld [vmem:[#allocation21 + $0x1c] sm:$0xf]
    %v2746 = vld [vmem:[#allocation21 + $0x20] sm:$0xf]
    %v2747 = vld [vmem:[#allocation21 + $0x24] sm:$0xf]
    %v2748 = vld [vmem:[#allocation21 + $0x28] sm:$0xf]
    %v2749 = vld [vmem:[#allocation21 + $0x2c] sm:$0xf]
    %v2750 = vld [vmem:[#allocation21 + $0x30] sm:$0xf]
    %v2751 = vld [vmem:[#allocation21 + $0x34] sm:$0xf]
    %v2752 = vld [vmem:[#allocation21 + $0x38] sm:$0xf]
    %v2753 = vld [vmem:[#allocation21 + $0x3c] sm:$0xf]
    %v2754 = vlaneseq
    %v2755 = vshrl.u32 %v2754, 7
    %v2756 = vsub.s32 0, %v2755
    %v2757 = vrot.slane %v2655, %v2756
    %v2774 = vunpack.c.l.b16 %v2738
    %v2775 = vunpack.c.l.b16 %v2739
    %v2776 = vunpack.c.l.b16 %v2740
    %v2777 = vunpack.c.l.b16 %v2741
    %v2778 = vunpack.c.l.b16 %v2742
    %v2779 = vunpack.c.l.b16 %v2743
    %v2780 = vunpack.c.l.b16 %v2744
    %v2781 = vunpack.c.l.b16 %v2745
    %v2782 = vunpack.c.l.b16 %v2746
    %v2783 = vunpack.c.l.b16 %v2747
    %v2784 = vunpack.c.l.b16 %v2748
    %v2785 = vunpack.c.l.b16 %v2749
    %v2786 = vunpack.c.l.b16 %v2750
    %v2787 = vunpack.c.l.b16 %v2751
    %v2788 = vunpack.c.l.b16 %v2752
    %v2789 = vunpack.c.l.b16 %v2753
    %v2790 = vpack.c.b16 %v2775, %v2774
    %v2791 = vpack.c.b16 %v2777, %v2776
    %v2792 = vpack.c.b16 %v2779, %v2778
    %v2793 = vpack.c.b16 %v2781, %v2780
    %v2794 = vpack.c.b16 %v2783, %v2782
    %v2795 = vpack.c.b16 %v2785, %v2784
    %v2796 = vpack.c.b16 %v2787, %v2786
    %v2797 = vpack.c.b16 %v2789, %v2788
    %2806 = vmatprep.subr.bf16.mxu0 0
    %2807 = vmatpush1.bf16.msra.mxu0 %v2790
    %2808 = vmatprep.subr.bf16.mxu0 0
    %2809 = vmatpush1.bf16.msra.mxu0 %v2791
    %2810 = vmatprep.subr.bf16.mxu0 0
    %2811 = vmatpush1.bf16.msra.mxu0 %v2792
    %2812 = vmatprep.subr.bf16.mxu0 0
    %2813 = vmatpush1.bf16.msra.mxu0 %v2793
    %2814 = vmatprep.subr.bf16.mxu0 0
    %2815 = vmatpush1.bf16.msra.mxu0 %v2794
    %2816 = vmatprep.subr.bf16.mxu0 0
    %2817 = vmatpush1.bf16.msra.mxu0 %v2795
    %2818 = vmatprep.subr.bf16.mxu0 0
    %2819 = vmatpush1.bf16.msra.mxu0 %v2796
    %2820 = vmatprep.subr.bf16.mxu0 0
    %2821 = vmatpush1.bf16.msra.mxu0 %v2797
    %2822 = vmatprep.subr.bf16.mxu0 0
    %2823 = vmatpush1.bf16.msra.mxu0 0
    %2824 = vmatprep.subr.bf16.mxu0 0
    %2825 = vmatpush1.bf16.msra.mxu0 0
    %2826 = vmatprep.subr.bf16.mxu0 0
    %2827 = vmatpush1.bf16.msra.mxu0 0
    %2828 = vmatprep.subr.bf16.mxu0 0
    %2829 = vmatpush1.bf16.msra.mxu0 0
    %2830 = vmatprep.subr.bf16.mxu0 0
    %2831 = vmatpush1.bf16.msra.mxu0 0
    %2832 = vmatprep.subr.bf16.mxu0 0
    %2833 = vmatpush1.bf16.msra.mxu0 0
    %2834 = vmatprep.subr.bf16.mxu0 0
    %2835 = vmatpush1.bf16.msra.mxu0 0
    %2836 = vmatprep.subr.bf16.mxu0 0
    %2837 = vmatpush1.bf16.msra.mxu0 0
    %2838 = vmatprep.mubr.bf16.mxu0 0
    %2839 = vmatmul.mubr.bf16.gmra.mrb[0].mxu0 %v2737
    %v2840 = vpop.f32.mrb[0].mxu0
    %v2841 = vadd.f32 %v2757, %v2840
    %v2842 = vpop.f32.mrb[0].mxu0
    %v2843 = vpop.f32.mrb[0].mxu0
    %v2844 = vadd.f32 %v2757, %v2843
    %v2845 = vpop.f32.mrb[0].mxu0
    %2846 = vdwg.mxu0
    %v2847 = vadd.f32 %v2636, %v2841
    %v2848 = vadd.f32 %v2637, %v2844
    %2849 = vst.msk [vmem:[#allocation26] sm:$0xff] %vm243, %v2847
    %2850 = vst.msk [vmem:[#allocation26 + $0x8] sm:$0xff] %vm243, %v2848
    // Predicated region
    $region114: #{tpu_custom_call.1} parent=1 // pred_check
      _
    $region115: #{tpu_custom_call.1} parent=1 // pred_check_branch
      %2852 = sbr.rel (0) target = $region117
    $region116: #{tpu_custom_call.1} parent=1 // pred_region
      %s2854 = ssub.s32 256, 256
      %2855 = vsyncadd [#allocation5], %s2854
      %s2856 = sshll.u32 [#allocation26], 4
      %s2857 = int_to_ptr.vmem [resolvable:$true] %s2856
      %2862 = dma.vmem_to_hbm [thread:$0]  %s2857, 256, %s14, [#allocation5], 128, 128, 8
    $region117: #{tpu_custom_call.1} parent=1 // pred_fallthru
      _
    // Predicated region
    $region118: #{tpu_custom_call.1} parent=1 // pred_check
      _
    $region119: #{tpu_custom_call.1} parent=1 // pred_check_branch
      %2864 = sbr.rel (0) target = $region121
    $region120: #{tpu_custom_call.1} parent=1 // pred_region
      %2865 = dma.done [#allocation5], 256
    $region121: #{tpu_custom_call.1} parent=1 // pred_fallthru
      _
    %2866 = vsyncpa [#allocation4], 1
    %2867 = vsyncpa [#allocation7], 1
    %2868 = vsyncpa [#allocation10], 1
    %2869 = vsyncpa [#allocation13], 1
    %2870 = vsyncpa [#allocation16], 1
    %2871 = vsyncpa [#allocation19], 1
    %2872 = vsyncpa [#allocation22], 1
    %2873 = vsyncpa [#allocation25], 1
    %2874 = vsyncpa [#allocation5], 1

// kernel: tpu_custom_call.1
$region0: #{tpu_custom_call.1}
  #allocation0 [shape = 'u32[]', space=smem, size = 0x4, offset = 0x4, fixed_abs, tag = 'smem constant byte address 0x4 - core index']
  #allocation1 [shape = 'u32[144,128]{1,0:T(1,128)}', space=vmem, size = 0x12000, scoped, tag = 'internal scratch']
  #allocation2 [shape = 'f32[16,32]{1,0:T(8,128)}', space=vmem, size = 0x2000, scoped, tag = 'scratch operand']
  %s0 = inlined_call_operand.hbm [shape: f32[16,32], index: 0, kind: input, shape index: {}]
  %s1 = inlined_call_operand.hbm [shape: f32[16,32], index: 1, kind: input, shape index: {}]
  %s2 = inlined_call_operand.hbm [shape: bf16[32,32], index: 2, kind: input, shape index: {}]
  %s3 = inlined_call_operand.hbm [shape: bf16[32,32], index: 3, kind: input, shape index: {}]
  %s4 = inlined_call_operand.hbm [shape: bf16[32,32], index: 4, kind: input, shape index: {}]
  %s5 = inlined_call_operand.hbm [shape: bf16[32,32], index: 5, kind: input, shape index: {}]
  %s6 = inlined_call_operand.hbm [shape: bf16[32,32], index: 6, kind: input, shape index: {}]
  %s7 = inlined_call_operand.hbm [shape: bf16[32,32], index: 7, kind: input, shape index: {}]
  %s8 = inlined_call_operand.hbm [shape: bf16[32,32], index: 8, kind: input, shape index: {}]
  %s9 = inlined_call_operand.hbm [shape: bf16[32,32], index: 9, kind: input, shape index: {}]
  %s10 = inlined_call_operand.hbm [shape: bf16[32,128], index: 10, kind: input, shape index: {}]
  %s11 = inlined_call_operand.hbm [shape: bf16[128,32], index: 11, kind: input, shape index: {}]
  %s12 = inlined_call_operand.hbm [shape: f32[9,32], index: 12, kind: input, shape index: {}]
  %s13 = inlined_call_operand.hbm [shape: f32[1,128], index: 13, kind: input, shape index: {}]
  %s14 = inlined_call_operand.hbm [shape: f32[16,32], index: 14, kind: output, shape index: {}]
  %s15 = sld [smem:[#allocation0]]
  $region122: #{tpu_custom_call.1} parent=0
    _
  %s17 = ssub.s32 1, %s15
  %s18 = scalar_select 0, %s17, %s15
  $region1: #{tpu_custom_call.1} parent=0
    #allocation3 [shape = 'u8[8192]{0}', space=vmem, size = 0x2000, scoped, tag = 'input window, operand 0, single buffered']
    #allocation4 [shape = 's32[1]{0}', space=sflag, size = 0x4, scoped, tag = 'scoped memory for tpu_custom_call.1']
    #allocation5 [shape = 's32[1]{0}', space=sflag, size = 0x4, scoped, tag = 'scoped memory for tpu_custom_call.1']
    #allocation6 [shape = 'u8[8192]{0}', space=vmem, size = 0x2000, scoped, tag = 'input window, operand 1, single buffered']
    #allocation7 [shape = 's32[1]{0}', space=sflag, size = 0x4, scoped, tag = 'scoped memory for tpu_custom_call.1']
    #allocation8 [shape = 'u8[8192]{0}', space=vmem, size = 0x2000, scoped, tag = 'input window, operand 2, single buffered']
    #allocation9 [shape = 'u8[8192]{0}', space=vmem, size = 0x2000, scoped, tag = 'input window, operand 3, single buffered']
    #allocation10 [shape = 's32[1]{0}', space=sflag, size = 0x4, scoped, tag = 'scoped memory for tpu_custom_call.1']
    #allocation11 [shape = 'u8[8192]{0}', space=vmem, size = 0x2000, scoped, tag = 'input window, operand 4, single buffered']
    #allocation12 [shape = 'u8[8192]{0}', space=vmem, size = 0x2000, scoped, tag = 'input window, operand 5, single buffered']
    #allocation13 [shape = 's32[1]{0}', space=sflag, size = 0x4, scoped, tag = 'scoped memory for tpu_custom_call.1']
    #allocation14 [shape = 'u8[8192]{0}', space=vmem, size = 0x2000, scoped, tag = 'input window, operand 6, single buffered']
    #allocation15 [shape = 'u8[8192]{0}', space=vmem, size = 0x2000, scoped, tag = 'input window, operand 7, single buffered']
    #allocation16 [shape = 's32[1]{0}', space=sflag, size = 0x4, scoped, tag = 'scoped memory for tpu_custom_call.1']
    #allocation17 [shape = 'u8[8192]{0}', space=vmem, size = 0x2000, scoped, tag = 'input window, operand 8, single buffered']
    #allocation18 [shape = 'u8[8192]{0}', space=vmem, size = 0x2000, scoped, tag = 'input window, operand 9, single buffered']
    #allocation19 [shape = 's32[1]{0}', space=sflag, size = 0x4, scoped, tag = 'scoped memory for tpu_custom_call.1']
    #allocation20 [shape = 'u8[8192]{0}', space=vmem, size = 0x2000, scoped, tag = 'input window, operand 10, single buffered']
    #allocation21 [shape = 'u8[32768]{0}', space=vmem, size = 0x8000, scoped, tag = 'input window, operand 11, single buffered']
    #allocation22 [shape = 's32[1]{0}', space=sflag, size = 0x4, scoped, tag = 'scoped memory for tpu_custom_call.1']
    #allocation23 [shape = 'u8[8192]{0}', space=vmem, size = 0x2000, scoped, tag = 'input window, operand 12, single buffered']
    #allocation24 [shape = 'u8[512]{0}', space=vmem, size = 0x400, scoped, tag = 'input window, operand 13, single buffered']
    #allocation25 [shape = 's32[1]{0}', space=sflag, size = 0x4, scoped, tag = 'scoped memory for tpu_custom_call.1']
    #allocation26 [shape = 'u8[8192]{0}', space=vmem, size = 0x2000, scoped, tag = 'output window, operand 0, single buffered']
    %19 = vsyncpa [#allocation4], 0
    %20 = vsyncpa [#allocation7], 0
    %21 = vsyncpa [#allocation10], 0
    %22 = vsyncpa [#allocation13], 0
    %23 = vsyncpa [#allocation16], 0
    %24 = vsyncpa [#allocation19], 0
    %25 = vsyncpa [#allocation22], 0
    %26 = vsyncpa [#allocation25], 0
    %27 = vsyncpa [#allocation5], 0
    // Predicated region
    $region2: #{tpu_custom_call.1} parent=1 // pred_check
      _
    $region3: #{tpu_custom_call.1} parent=1 // pred_check_branch
      %29 = sbr.rel (0) target = $region5
    $region4: #{tpu_custom_call.1} parent=1 // pred_region
      %s31 = ssub.s32 256, 256
      %32 = vsyncadd [#allocation4], %s31
      %s33 = sshll.u32 [#allocation3], 4
      %s34 = int_to_ptr.vmem [resolvable:$true] %s33
      %39 = dma.hbm_to_vmem [thread:$0]  %s0, 256, %s34, [#allocation4], 128, 128, 8
    $region5: #{tpu_custom_call.1} parent=1 // pred_fallthru
      _
    // Predicated region
    $region6: #{tpu_custom_call.1} parent=1 // pred_check
      _
    $region7: #{tpu_custom_call.1} parent=1 // pred_check_branch
      %41 = sbr.rel (0) target = $region9
    $region8: #{tpu_custom_call.1} parent=1 // pred_region
      %s43 = ssub.s32 256, 256
      %44 = vsyncadd [#allocation7], %s43
      %s45 = sshll.u32 [#allocation6], 4
      %s46 = int_to_ptr.vmem [resolvable:$true] %s45
      %51 = dma.hbm_to_vmem [thread:$0]  %s1, 256, %s46, [#allocation7], 128, 128, 8
    $region9: #{tpu_custom_call.1} parent=1 // pred_fallthru
      _
    // Predicated region
    $region10: #{tpu_custom_call.1} parent=1 // pred_check
      _
    $region11: #{tpu_custom_call.1} parent=1 // pred_check_branch
      %53 = sbr.rel (0) target = $region13
    $region12: #{tpu_custom_call.1} parent=1 // pred_region
      %s55 = ssub.s32 256, 256
      %56 = vsyncadd [#allocation7], %s55
      %s57 = sshll.u32 [#allocation8], 4
      %s58 = int_to_ptr.vmem [resolvable:$true] %s57
      %63 = dma.hbm_to_vmem [thread:$0]  %s2, 256, %s58, [#allocation7], 64, 64, 4
    $region13: #{tpu_custom_call.1} parent=1 // pred_fallthru
      _
    // Predicated region
    $region14: #{tpu_custom_call.1} parent=1 // pred_check
      _
    $region15: #{tpu_custom_call.1} parent=1 // pred_check_branch
      %65 = sbr.rel (0) target = $region17
    $region16: #{tpu_custom_call.1} parent=1 // pred_region
      %s67 = ssub.s32 256, 256
      %68 = vsyncadd [#allocation10], %s67
      %s69 = sshll.u32 [#allocation9], 4
      %s70 = int_to_ptr.vmem [resolvable:$true] %s69
      %75 = dma.hbm_to_vmem [thread:$0]  %s3, 256, %s70, [#allocation10], 64, 64, 4
    $region17: #{tpu_custom_call.1} parent=1 // pred_fallthru
      _
    // Predicated region
    $region18: #{tpu_custom_call.1} parent=1 // pred_check
      _
    $region19: #{tpu_custom_call.1} parent=1 // pred_check_branch
      %77 = sbr.rel (0) target = $region21
    $region20: #{tpu_custom_call.1} parent=1 // pred_region
      %s79 = ssub.s32 256, 256
      %80 = vsyncadd [#allocation10], %s79
      %s81 = sshll.u32 [#allocation11], 4
      %s82 = int_to_ptr.vmem [resolvable:$true] %s81
      %87 = dma.hbm_to_vmem [thread:$0]  %s4, 256, %s82, [#allocation10], 64, 64, 4
    $region21: #{tpu_custom_call.1} parent=1 // pred_fallthru
      _
    // Predicated region
    $region22: #{tpu_custom_call.1} parent=1 // pred_check
      _
    $region23: #{tpu_custom_call.1} parent=1 // pred_check_branch
      %89 = sbr.rel (0) target = $region25
    $region24: #{tpu_custom_call.1} parent=1 // pred_region
      %s91 = ssub.s32 256, 256
      %92 = vsyncadd [#allocation13], %s91
      %s93 = sshll.u32 [#allocation12], 4
      %s94 = int_to_ptr.vmem [resolvable:$true] %s93
      %99 = dma.hbm_to_vmem [thread:$0]  %s5, 256, %s94, [#allocation13], 64, 64, 4
    $region25: #{tpu_custom_call.1} parent=1 // pred_fallthru
      _
    // Predicated region
    $region26: #{tpu_custom_call.1} parent=1 // pred_check
      _
    $region27: #{tpu_custom_call.1} parent=1 // pred_check_branch
      %101 = sbr.rel (0) target = $region29
    $region28: #{tpu_custom_call.1} parent=1 // pred_region
      %s103 = ssub.s32 256, 256
      %104 = vsyncadd [#allocation13], %s103
      %s105 = sshll.u32 [#allocation14], 4
      %s106 = int_to_ptr.vmem [resolvable:$true] %s105
      %111 = dma.hbm_to_vmem [thread:$0]  %s6, 256, %s106, [#allocation13], 64, 64, 4
    $region29: #{tpu_custom_call.1} parent=1 // pred_fallthru
      _
    // Predicated region
    $region30: #{tpu_custom_call.1} parent=1 // pred_check
      _
    $region31: #{tpu_custom_call.1} parent=1 // pred_check_branch
      %113 = sbr.rel (0) target = $region33
    $region32: #{tpu_custom_call.1} parent=1 // pred_region
      %s115 = ssub.s32 256, 256
      %116 = vsyncadd [#allocation16], %s115
      %s117 = sshll.u32 [#allocation15], 4
      %s118 = int_to_ptr.vmem [resolvable:$true] %s117
      %123 = dma.hbm_to_vmem [thread:$0]  %s7, 256, %s118, [#allocation16], 64, 64, 4
    $region33: #{tpu_custom_call.1} parent=1 // pred_fallthru
      _
    // Predicated region
    $region34: #{tpu_custom_call.1} parent=1 // pred_check
      _
    $region35: #{tpu_custom_call.1} parent=1 // pred_check_branch
      %125 = sbr.rel (0) target = $region37
    $region36: #{tpu_custom_call.1} parent=1 // pred_region
      %s127 = ssub.s32 256, 256
      %128 = vsyncadd [#allocation16], %s127
      %s129 = sshll.u32 [#allocation17], 4
      %s130 = int_to_ptr.vmem [resolvable:$true] %s129
      %135 = dma.hbm_to_vmem [thread:$0]  %s8, 256, %s130, [#allocation16], 64, 64, 4
    $region37: #{tpu_custom_call.1} parent=1 // pred_fallthru
      _
    // Predicated region
    $region38: #{tpu_custom_call.1} parent=1 // pred_check
      _
    $region39: #{tpu_custom_call.1} parent=1 // pred_check_branch
      %137 = sbr.rel (0) target = $region41
    $region40: #{tpu_custom_call.1} parent=1 // pred_region
      %s139 = ssub.s32 256, 256
      %140 = vsyncadd [#allocation19], %s139
      %s141 = sshll.u32 [#allocation18], 4
      %s142 = int_to_ptr.vmem [resolvable:$true] %s141
      %147 = dma.hbm_to_vmem [thread:$0]  %s9, 256, %s142, [#allocation19], 64, 64, 4
    $region41: #{tpu_custom_call.1} parent=1 // pred_fallthru
      _
    // Predicated region
    $region42: #{tpu_custom_call.1} parent=1 // pred_check
      _
    $region43: #{tpu_custom_call.1} parent=1 // pred_check_branch
      %149 = sbr.rel (0) target = $region45
    $region44: #{tpu_custom_call.1} parent=1 // pred_region
      %s151 = ssub.s32 256, 256
      %152 = vsyncadd [#allocation19], %s151
      %s153 = sshll.u32 [#allocation20], 4
      %s154 = int_to_ptr.vmem [resolvable:$true] %s153
      %159 = dma.hbm_to_vmem [thread:$0]  %s10, 256, %s154, [#allocation19], 64, 64, 4
    $region45: #{tpu_custom_call.1} parent=1 // pred_fallthru
      _
    // Predicated region
    $region46: #{tpu_custom_call.1} parent=1 // pred_check
      _
    $region47: #{tpu_custom_call.1} parent=1 // pred_check_branch
      %161 = sbr.rel (0) target = $region49
    $region48: #{tpu_custom_call.1} parent=1 // pred_region
      %s163 = ssub.s32 1024, 1024
      %164 = vsyncadd [#allocation22], %s163
      %s165 = sshll.u32 [#allocation21], 4
      %s166 = int_to_ptr.vmem [resolvable:$true] %s165
      %171 = dma.hbm_to_vmem [thread:$0]  %s11, 1024, %s166, [#allocation22], 64, 64, 4
    $region49: #{tpu_custom_call.1} parent=1 // pred_fallthru
      _
    // Predicated region
    $region50: #{tpu_custom_call.1} parent=1 // pred_check
      _
    $region51: #{tpu_custom_call.1} parent=1 // pred_check_branch
      %173 = sbr.rel (0) target = $region53
    $region52: #{tpu_custom_call.1} parent=1 // pred_region
      %s175 = ssub.s32 256, 256
      %176 = vsyncadd [#allocation22], %s175
      %s177 = sshll.u32 [#allocation23], 4
      %s178 = int_to_ptr.vmem [resolvable:$true] %s177
      %183 = dma.hbm_to_vmem [thread:$0]  %s12, 256, %s178, [#allocation22], 128, 128, 8
    $region53: #{tpu_custom_call.1} parent=1 // pred_fallthru
      _
    // Predicated region
    $region54: #{tpu_custom_call.1} parent=1 // pred_check
      _
    $region55: #{tpu_custom_call.1} parent=1 // pred_check_branch
      %185 = sbr.rel (0) target = $region57
    $region56: #{tpu_custom_call.1} parent=1 // pred_region
      %s187 = ssub.s32 16, 16
      %188 = vsyncadd [#allocation25], %s187
      %s190 = sshll.u32 [#allocation24], 4
      %s191 = int_to_ptr.vmem [resolvable:$true] %s190
      %193 = dma.hbm_to_vmem [thread:$0]  %s13, 16, %s191, [#allocation25]
    $region57: #{tpu_custom_call.1} parent=1 // pred_fallthru
      _
    // Predicated region
    $region58: #{tpu_custom_call.1} parent=1 // pred_check
      _
    $region59: #{tpu_custom_call.1} parent=1 // pred_check_branch
      %195 = sbr.rel (0) target = $region61
    $region60: #{tpu_custom_call.1} parent=1 // pred_region
      %196 = dma.done [#allocation4], 256
    $region61: #{tpu_custom_call.1} parent=1 // pred_fallthru
      _
    // Predicated region
    $region62: #{tpu_custom_call.1} parent=1 // pred_check
      _
    $region63: #{tpu_custom_call.1} parent=1 // pred_check_branch
      %198 = sbr.rel (0) target = $region65
    $region64: #{tpu_custom_call.1} parent=1 // pred_region
      %199 = dma.done [#allocation7], 256
    $region65: #{tpu_custom_call.1} parent=1 // pred_fallthru
      _
    // Predicated region
    $region66: #{tpu_custom_call.1} parent=1 // pred_check
      _
    $region67: #{tpu_custom_call.1} parent=1 // pred_check_branch
      %201 = sbr.rel (0) target = $region69
    $region68: #{tpu_custom_call.1} parent=1 // pred_region
      %202 = dma.done [#allocation7], 256
    $region69: #{tpu_custom_call.1} parent=1 // pred_fallthru
      _
    // Predicated region
    $region70: #{tpu_custom_call.1} parent=1 // pred_check
      _
    $region71: #{tpu_custom_call.1} parent=1 // pred_check_branch
      %204 = sbr.rel (0) target = $region73
    $region72: #{tpu_custom_call.1} parent=1 // pred_region
      %205 = dma.done [#allocation10], 256
    $region73: #{tpu_custom_call.1} parent=1 // pred_fallthru
      _
    // Predicated region
    $region74: #{tpu_custom_call.1} parent=1 // pred_check
      _
    $region75: #{tpu_custom_call.1} parent=1 // pred_check_branch
      %207 = sbr.rel (0) target = $region77
    $region76: #{tpu_custom_call.1} parent=1 // pred_region
      %208 = dma.done [#allocation10], 256
    $region77: #{tpu_custom_call.1} parent=1 // pred_fallthru
      _
    // Predicated region
    $region78: #{tpu_custom_call.1} parent=1 // pred_check
      _
    $region79: #{tpu_custom_call.1} parent=1 // pred_check_branch
      %210 = sbr.rel (0) target = $region81
    $region80: #{tpu_custom_call.1} parent=1 // pred_region
      %211 = dma.done [#allocation13], 256
    $region81: #{tpu_custom_call.1} parent=1 // pred_fallthru
      _
    // Predicated region
    $region82: #{tpu_custom_call.1} parent=1 // pred_check
      _
    $region83: #{tpu_custom_call.1} parent=1 // pred_check_branch
      %213 = sbr.rel (0) target = $region85
    $region84: #{tpu_custom_call.1} parent=1 // pred_region
      %214 = dma.done [#allocation13], 256
    $region85: #{tpu_custom_call.1} parent=1 // pred_fallthru
      _
    // Predicated region
    $region86: #{tpu_custom_call.1} parent=1 // pred_check
      _
    $region87: #{tpu_custom_call.1} parent=1 // pred_check_branch
      %216 = sbr.rel (0) target = $region89
    $region88: #{tpu_custom_call.1} parent=1 // pred_region
      %217 = dma.done [#allocation16], 256
    $region89: #{tpu_custom_call.1} parent=1 // pred_fallthru
      _
    // Predicated region
    $region90: #{tpu_custom_call.1} parent=1 // pred_check
      _
    $region91: #{tpu_custom_call.1} parent=1 // pred_check_branch
      %219 = sbr.rel (0) target = $region93
    $region92: #{tpu_custom_call.1} parent=1 // pred_region
      %220 = dma.done [#allocation16], 256
    $region93: #{tpu_custom_call.1} parent=1 // pred_fallthru
      _
    // Predicated region
    $region94: #{tpu_custom_call.1} parent=1 // pred_check
      _
    $region95: #{tpu_custom_call.1} parent=1 // pred_check_branch
      %222 = sbr.rel (0) target = $region97
    $region96: #{tpu_custom_call.1} parent=1 // pred_region
      %223 = dma.done [#allocation19], 256
    $region97: #{tpu_custom_call.1} parent=1 // pred_fallthru
      _
    // Predicated region
    $region98: #{tpu_custom_call.1} parent=1 // pred_check
      _
    $region99: #{tpu_custom_call.1} parent=1 // pred_check_branch
      %225 = sbr.rel (0) target = $region101
    $region100: #{tpu_custom_call.1} parent=1 // pred_region
      %226 = dma.done [#allocation19], 256
    $region101: #{tpu_custom_call.1} parent=1 // pred_fallthru
      _
    // Predicated region
    $region102: #{tpu_custom_call.1} parent=1 // pred_check
      _
    $region103: #{tpu_custom_call.1} parent=1 // pred_check_branch
      %228 = sbr.rel (0) target = $region105
    $region104: #{tpu_custom_call.1} parent=1 // pred_region
      %229 = dma.done [#allocation22], 1024
    $region105: #{tpu_custom_call.1} parent=1 // pred_fallthru
      _
    // Predicated region
    $region106: #{tpu_custom_call.1} parent=1 // pred_check
      _
    $region107: #{tpu_custom_call.1} parent=1 // pred_check_branch
      %231 = sbr.rel (0) target = $region109
    $region108: #{tpu_custom_call.1} parent=1 // pred_region
      %232 = dma.done [#allocation22], 256
    $region109: #{tpu_custom_call.1} parent=1 // pred_fallthru
      _
    // Predicated region
    $region110: #{tpu_custom_call.1} parent=1 // pred_check
      _
    $region111: #{tpu_custom_call.1} parent=1 // pred_check_branch
      %234 = sbr.rel (0) target = $region113
    $region112: #{tpu_custom_call.1} parent=1 // pred_region
      %235 = dma.done [#allocation25], 16
    $region113: #{tpu_custom_call.1} parent=1 // pred_fallthru
      _
    %v237 = vld [vmem:[#allocation3] sm:$0xff]
    %v238 = vld [vmem:[#allocation3 + $0x8] sm:$0xff]
    %v239 = vld [vmem:[#allocation6] sm:$0xff]
    %v240 = vld [vmem:[#allocation6 + $0x8] sm:$0xff]
    %v241 = vmul.f32 %v237, %v237
    %v242 = vmul.f32 %v238, %v238
    %vm243 = vcmask 261120
    %v244 = vsel %vm243, %v241, 0.0
    %245 = vadd.xlane.f32.xlu0 %v244
    %v246 = vpop.xlane.xlu0 %245
    %v247 = vsel %vm243, %v242, 0.0
    %248 = vadd.xlane.f32.xlu0 %v247
    %v249 = vpop.xlane.xlu0 %248
    %v250 = vrcp.pop 32.0
    %v251 = vmul.f32 %v246, %v250
    %v252 = vmul.f32 %v249, %v250
    %v253 = vadd.f32 %v251, 1.1920929e-07
    %v254 = vadd.f32 %v252, 1.1920929e-07
    %v255 = vrsqrt.pop %v253
    %v256 = vrsqrt.pop %v254
    %v257 = vmul.f32 %v237, %v255
    %v258 = vmul.f32 %v238, %v256
    %v259 = vld [vmem:[#allocation23] sm:$0x1]
    %v260 = vld [vmem:[#allocation23 + $0x1] sm:$0x1]
    %v261 = vld [vmem:[#allocation23 + $0x2] sm:$0x1]
    %v262 = vld [vmem:[#allocation23 + $0x3] sm:$0x1]
    %v263 = vpack.c.bf16 %v258, %v257
    %v264 = vld [vmem:[#allocation8] sm:$0xf]
    %v265 = vld [vmem:[#allocation8 + $0x4] sm:$0xf]
    %v266 = vld [vmem:[#allocation8 + $0x8] sm:$0xf]
    %v267 = vld [vmem:[#allocation8 + $0xc] sm:$0xf]
    %v268 = vlaneseq
    %v269 = vshrl.u32 %v268, 7
    %v270 = vsub.s32 0, %v269
    %v271 = vrot.slane %v259, %v270
    %v276 = vunpack.c.l.b16 %v264
    %v277 = vunpack.c.l.b16 %v265
    %v278 = vunpack.c.l.b16 %v266
    %v279 = vunpack.c.l.b16 %v267
    %v280 = vpack.c.b16 %v277, %v276
    %v281 = vpack.c.b16 %v279, %v278
    %v285 = vsel %vm243, %v263, 0
    %287 = vmatprep.subr.bf16.mxu0 0
    %288 = vmatpush1.bf16.msra.mxu0 %v280
    %289 = vmatprep.subr.bf16.mxu0 0
    %290 = vmatpush1.bf16.msra.mxu0 %v281
    %291 = vmatprep.subr.bf16.mxu0 0
    %292 = vmatpush1.bf16.msra.mxu0 0
    %293 = vmatprep.subr.bf16.mxu0 0
    %294 = vmatpush1.bf16.msra.mxu0 0
    %295 = vmatprep.subr.bf16.mxu0 0
    %296 = vmatpush1.bf16.msra.mxu0 0
    %297 = vmatprep.subr.bf16.mxu0 0
    %298 = vmatpush1.bf16.msra.mxu0 0
    %299 = vmatprep.subr.bf16.mxu0 0
    %300 = vmatpush1.bf16.msra.mxu0 0
    %301 = vmatprep.subr.bf16.mxu0 0
    %302 = vmatpush1.bf16.msra.mxu0 0
    %303 = vmatprep.subr.bf16.mxu0 0
    %304 = vmatpush1.bf16.msra.mxu0 0
    %305 = vmatprep.subr.bf16.mxu0 0
    %306 = vmatpush1.bf16.msra.mxu0 0
    %307 = vmatprep.subr.bf16.mxu0 0
    %308 = vmatpush1.bf16.msra.mxu0 0
    %309 = vmatprep.subr.bf16.mxu0 0
    %310 = vmatpush1.bf16.msra.mxu0 0
    %311 = vmatprep.subr.bf16.mxu0 0
    %312 = vmatpush1.bf16.msra.mxu0 0
    %313 = vmatprep.subr.bf16.mxu0 0
    %314 = vmatpush1.bf16.msra.mxu0 0
    %315 = vmatprep.subr.bf16.mxu0 0
    %316 = vmatpush1.bf16.msra.mxu0 0
    %317 = vmatprep.subr.bf16.mxu0 0
    %318 = vmatpush1.bf16.msra.mxu0 0
    %319 = vmatprep.mubr.bf16.mxu0 0
    %320 = vmatmul.mubr.bf16.gmra.mrb[0].mxu0 %v285
    %v321 = vpop.f32.mrb[0].mxu0
    %v322 = vadd.f32 %v271, %v321
    %v323 = vpop.f32.mrb[0].mxu0
    %v324 = vpop.f32.mrb[0].mxu0
    %v325 = vadd.f32 %v271, %v324
    %v326 = vpop.f32.mrb[0].mxu0
    %327 = vdwg.mxu0
    %v328 = vpack.c.bf16 %v325, %v322
    %v329 = vld [vmem:[#allocation9] sm:$0xf]
    %v330 = vld [vmem:[#allocation9 + $0x4] sm:$0xf]
    %v331 = vld [vmem:[#allocation9 + $0x8] sm:$0xf]
    %v332 = vld [vmem:[#allocation9 + $0xc] sm:$0xf]
    %v333 = vlaneseq
    %v334 = vshrl.u32 %v333, 7
    %v335 = vsub.s32 0, %v334
    %v336 = vrot.slane %v260, %v335
    %v341 = vunpack.c.l.b16 %v329
    %v342 = vunpack.c.l.b16 %v330
    %v343 = vunpack.c.l.b16 %v331
    %v344 = vunpack.c.l.b16 %v332
    %v345 = vpack.c.b16 %v342, %v341
    %v346 = vpack.c.b16 %v344, %v343
    %349 = vmatprep.subr.bf16.mxu0 0
    %350 = vmatpush1.bf16.msra.mxu0 %v345
    %351 = vmatprep.subr.bf16.mxu0 0
    %352 = vmatpush1.bf16.msra.mxu0 %v346
    %353 = vmatprep.subr.bf16.mxu0 0
    %354 = vmatpush1.bf16.msra.mxu0 0
    %355 = vmatprep.subr.bf16.mxu0 0
    %356 = vmatpush1.bf16.msra.mxu0 0
    %357 = vmatprep.subr.bf16.mxu0 0
    %358 = vmatpush1.bf16.msra.mxu0 0
    %359 = vmatprep.subr.bf16.mxu0 0
    %360 = vmatpush1.bf16.msra.mxu0 0
    %361 = vmatprep.subr.bf16.mxu0 0
    %362 = vmatpush1.bf16.msra.mxu0 0
    %363 = vmatprep.subr.bf16.mxu0 0
    %364 = vmatpush1.bf16.msra.mxu0 0
    %365 = vmatprep.subr.bf16.mxu0 0
    %366 = vmatpush1.bf16.msra.mxu0 0
    %367 = vmatprep.subr.bf16.mxu0 0
    %368 = vmatpush1.bf16.msra.mxu0 0
    %369 = vmatprep.subr.bf16.mxu0 0
    %370 = vmatpush1.bf16.msra.mxu0 0
    %371 = vmatprep.subr.bf16.mxu0 0
    %372 = vmatpush1.bf16.msra.mxu0 0
    %373 = vmatprep.subr.bf16.mxu0 0
    %374 = vmatpush1.bf16.msra.mxu0 0
    %375 = vmatprep.subr.bf16.mxu0 0
    %376 = vmatpush1.bf16.msra.mxu0 0
    %377 = vmatprep.subr.bf16.mxu0 0
    %378 = vmatpush1.bf16.msra.mxu0 0
    %379 = vmatprep.subr.bf16.mxu0 0
    %380 = vmatpush1.bf16.msra.mxu0 0
    %381 = vmatprep.mubr.bf16.mxu0 0
    %382 = vmatmul.mubr.bf16.gmra.mrb[0].mxu0 %v285
    %v383 = vpop.f32.mrb[0].mxu0
    %v384 = vadd.f32 %v336, %v383
    %v385 = vpop.f32.mrb[0].mxu0
    %v386 = vpop.f32.mrb[0].mxu0
    %v387 = vadd.f32 %v336, %v386
    %v388 = vpop.f32.mrb[0].mxu0
    %389 = vdwg.mxu0
    %v390 = vpack.c.bf16 %v387, %v384
    %v391 = vld [vmem:[#allocation11] sm:$0xf]
    %v392 = vld [vmem:[#allocation11 + $0x4] sm:$0xf]
    %v393 = vld [vmem:[#allocation11 + $0x8] sm:$0xf]
    %v394 = vld [vmem:[#allocation11 + $0xc] sm:$0xf]
    %v395 = vlaneseq
    %v396 = vshrl.u32 %v395, 7
    %v397 = vsub.s32 0, %v396
    %v398 = vrot.slane %v261, %v397
    %v403 = vunpack.c.l.b16 %v391
    %v404 = vunpack.c.l.b16 %v392
    %v405 = vunpack.c.l.b16 %v393
    %v406 = vunpack.c.l.b16 %v394
    %v407 = vpack.c.b16 %v404, %v403
    %v408 = vpack.c.b16 %v406, %v405
    %411 = vmatprep.subr.bf16.mxu0 0
    %412 = vmatpush1.bf16.msra.mxu0 %v407
    %413 = vmatprep.subr.bf16.mxu0 0
    %414 = vmatpush1.bf16.msra.mxu0 %v408
    %415 = vmatprep.subr.bf16.mxu0 0
    %416 = vmatpush1.bf16.msra.mxu0 0
    %417 = vmatprep.subr.bf16.mxu0 0
    %418 = vmatpush1.bf16.msra.mxu0 0
    %419 = vmatprep.subr.bf16.mxu0 0
    %420 = vmatpush1.bf16.msra.mxu0 0
    %421 = vmatprep.subr.bf16.mxu0 0
    %422 = vmatpush1.bf16.msra.mxu0 0
    %423 = vmatprep.subr.bf16.mxu0 0
    %424 = vmatpush1.bf16.msra.mxu0 0
    %425 = vmatprep.subr.bf16.mxu0 0
    %426 = vmatpush1.bf16.msra.mxu0 0
    %427 = vmatprep.subr.bf16.mxu0 0
    %428 = vmatpush1.bf16.msra.mxu0 0
    %429 = vmatprep.subr.bf16.mxu0 0
    %430 = vmatpush1.bf16.msra.mxu0 0
    %431 = vmatprep.subr.bf16.mxu0 0
    %432 = vmatpush1.bf16.msra.mxu0 0
    %433 = vmatprep.subr.bf16.mxu0 0
    %434 = vmatpush1.bf16.msra.mxu0 0
    %435 = vmatprep.subr.bf16.mxu0 0
    %436 = vmatpush1.bf16.msra.mxu0 0
    %437 = vmatprep.subr.bf16.mxu0 0
    %438 = vmatpush1.bf16.msra.mxu0 0
    %439 = vmatprep.subr.bf16.mxu0 0
    %440 = vmatpush1.bf16.msra.mxu0 0
    %441 = vmatprep.subr.bf16.mxu0 0
    %442 = vmatpush1.bf16.msra.mxu0 0
    %443 = vmatprep.mubr.bf16.mxu0 0
    %444 = vmatmul.mubr.bf16.gmra.mrb[0].mxu0 %v285
    %v445 = vpop.f32.mrb[0].mxu0
    %v446 = vadd.f32 %v398, %v445
    %v447 = vpop.f32.mrb[0].mxu0
    %v448 = vpop.f32.mrb[0].mxu0
    %v449 = vadd.f32 %v398, %v448
    %v450 = vpop.f32.mrb[0].mxu0
    %451 = vdwg.mxu0
    %v452 = vpack.c.bf16 %v449, %v446
    %vm453 = vcmask 64512
    %v455 = vsel %vm453, %v328, 0
    %v458 = vsel %vm453, %v390, 0
    %460 = vmatprep.subr.bf16.mxu0 0
    %461 = vmatpush1.bf16.xpose.msra.mxu0 %v458
    %462 = vmatprep.subr.bf16.mxu0 0
    %463 = vmatpush1.bf16.xpose.msra.mxu0 0
    %464 = vmatprep.subr.bf16.mxu0 0
    %465 = vmatpush1.bf16.xpose.msra.mxu0 0
    %466 = vmatprep.subr.bf16.mxu0 0
    %467 = vmatpush1.bf16.xpose.msra.mxu0 0
    %468 = vmatprep.subr.bf16.mxu0 0
    %469 = vmatpush1.bf16.xpose.msra.mxu0 0
    %470 = vmatprep.subr.bf16.mxu0 0
    %471 = vmatpush1.bf16.xpose.msra.mxu0 0
    %472 = vmatprep.subr.bf16.mxu0 0
    %473 = vmatpush1.bf16.xpose.msra.mxu0 0
    %474 = vmatprep.subr.bf16.mxu0 0
    %475 = vmatpush1.bf16.xpose.msra.mxu0 0
    %476 = vmatprep.subr.bf16.mxu0 0
    %477 = vmatpush1.bf16.xpose.msra.mxu0 0
    %478 = vmatprep.subr.bf16.mxu0 0
    %479 = vmatpush1.bf16.xpose.msra.mxu0 0
    %480 = vmatprep.subr.bf16.mxu0 0
    %481 = vmatpush1.bf16.xpose.msra.mxu0 0
    %482 = vmatprep.subr.bf16.mxu0 0
    %483 = vmatpush1.bf16.xpose.msra.mxu0 0
    %484 = vmatprep.subr.bf16.mxu0 0
    %485 = vmatpush1.bf16.xpose.msra.mxu0 0
    %486 = vmatprep.subr.bf16.mxu0 0
    %487 = vmatpush1.bf16.xpose.msra.mxu0 0
    %488 = vmatprep.subr.bf16.mxu0 0
    %489 = vmatpush1.bf16.xpose.msra.mxu0 0
    %490 = vmatprep.subr.bf16.mxu0 0
    %491 = vmatpush1.bf16.xpose.msra.mxu0 0
    %492 = vmatprep.mubr.bf16.mxu0 0
    %493 = vmatmul.mubr.bf16.gmra.mrb[0].mxu0 %v455
    %v494 = vpop.f32.mrb[0].mxu0
    %v495 = vadd.f32 0.0, %v494
    %v496 = vpop.f32.mrb[0].mxu0
    %v497 = vpop.f32.mrb[0].mxu0
    %v498 = vpop.f32.mrb[0].mxu0
    %499 = vdwg.mxu0
    %v500 = vmul.f32 %v495, 0.35355338
    %v501 = vsel %vm453, %v500, -inf
    %502 = vmax.xlane.f32.xlu0 %v501
    %v503 = vpop.xlane.xlu0 %502
    %v504 = vsub.f32 %v500, %v503
    %v505 = vmul.f32 %v504, 1.442695
    %v506 = vpow.pop %v505
    %v507 = vsel %vm453, %v506, 0.0
    %508 = vadd.xlane.f32.xlu0 %v507
    %v509 = vpop.xlane.xlu0 %508
    %v510 = vrcp.pop %v509
    %v511 = vmul.f32 %v506, %v510
    %v512 = vpack.c.bf16 %v511, %v511
    %v514 = vsel %vm453, %v512, 0
    %vm516 = vcmask 1043456
    %v518 = vsel %vm516, %v452, 0
    %520 = vmatprep.subr.bf16.mxu0 0
    %521 = vmatpush1.bf16.msra.mxu0 %v518
    %522 = vmatprep.subr.bf16.mxu0 0
    %523 = vmatpush1.bf16.msra.mxu0 0
    %524 = vmatprep.subr.bf16.mxu0 0
    %525 = vmatpush1.bf16.msra.mxu0 0
    %526 = vmatprep.subr.bf16.mxu0 0
    %527 = vmatpush1.bf16.msra.mxu0 0
    %528 = vmatprep.subr.bf16.mxu0 0
    %529 = vmatpush1.bf16.msra.mxu0 0
    %530 = vmatprep.subr.bf16.mxu0 0
    %531 = vmatpush1.bf16.msra.mxu0 0
    %532 = vmatprep.subr.bf16.mxu0 0
    %533 = vmatpush1.bf16.msra.mxu0 0
    %534 = vmatprep.subr.bf16.mxu0 0
    %535 = vmatpush1.bf16.msra.mxu0 0
    %536 = vmatprep.subr.bf16.mxu0 0
    %537 = vmatpush1.bf16.msra.mxu0 0
    %538 = vmatprep.subr.bf16.mxu0 0
    %539 = vmatpush1.bf16.msra.mxu0 0
    %540 = vmatprep.subr.bf16.mxu0 0
    %541 = vmatpush1.bf16.msra.mxu0 0
    %542 = vmatprep.subr.bf16.mxu0 0
    %543 = vmatpush1.bf16.msra.mxu0 0
    %544 = vmatprep.subr.bf16.mxu0 0
    %545 = vmatpush1.bf16.msra.mxu0 0
    %546 = vmatprep.subr.bf16.mxu0 0
    %547 = vmatpush1.bf16.msra.mxu0 0
    %548 = vmatprep.subr.bf16.mxu0 0
    %549 = vmatpush1.bf16.msra.mxu0 0
    %550 = vmatprep.subr.bf16.mxu0 0
    %551 = vmatpush1.bf16.msra.mxu0 0
    %552 = vmatprep.mubr.bf16.mxu0 0
    %553 = vmatmul.mubr.bf16.gmra.mrb[0].mxu0 %v514
    %v554 = vpop.f32.mrb[0].mxu0
    %v555 = vadd.f32 0.0, %v554
    %v556 = vpop.f32.mrb[0].mxu0
    %v557 = vpop.f32.mrb[0].mxu0
    %v558 = vpop.f32.mrb[0].mxu0
    %559 = vdwg.mxu0
    %560 = vst.msk [vmem:[#allocation2] sm:$0xff] %vm453, %v555
    %562 = vrot.lane.b32.xlu0 %v328, 120
    %v563 = vpop.permute.xlu0 %562
    %565 = vrot.lane.b32.xlu0 %v390, 120
    %v566 = vpop.permute.xlu0 %565
    %v568 = vsel %vm453, %v563, 0
    %v571 = vsel %vm453, %v566, 0
    %573 = vmatprep.subr.bf16.mxu0 0
    %574 = vmatpush1.bf16.xpose.msra.mxu0 %v571
    %575 = vmatprep.subr.bf16.mxu0 0
    %576 = vmatpush1.bf16.xpose.msra.mxu0 0
    %577 = vmatprep.subr.bf16.mxu0 0
    %578 = vmatpush1.bf16.xpose.msra.mxu0 0
    %579 = vmatprep.subr.bf16.mxu0 0
    %580 = vmatpush1.bf16.xpose.msra.mxu0 0
    %581 = vmatprep.subr.bf16.mxu0 0
    %582 = vmatpush1.bf16.xpose.msra.mxu0 0
    %583 = vmatprep.subr.bf16.mxu0 0
    %584 = vmatpush1.bf16.xpose.msra.mxu0 0
    %585 = vmatprep.subr.bf16.mxu0 0
    %586 = vmatpush1.bf16.xpose.msra.mxu0 0
    %587 = vmatprep.subr.bf16.mxu0 0
    %588 = vmatpush1.bf16.xpose.msra.mxu0 0
    %589 = vmatprep.subr.bf16.mxu0 0
    %590 = vmatpush1.bf16.xpose.msra.mxu0 0
    %591 = vmatprep.subr.bf16.mxu0 0
    %592 = vmatpush1.bf16.xpose.msra.mxu0 0
    %593 = vmatprep.subr.bf16.mxu0 0
    %594 = vmatpush1.bf16.xpose.msra.mxu0 0
    %595 = vmatprep.subr.bf16.mxu0 0
    %596 = vmatpush1.bf16.xpose.msra.mxu0 0
    %597 = vmatprep.subr.bf16.mxu0 0
    %598 = vmatpush1.bf16.xpose.msra.mxu0 0
    %599 = vmatprep.subr.bf16.mxu0 0
    %600 = vmatpush1.bf16.xpose.msra.mxu0 0
    %601 = vmatprep.subr.bf16.mxu0 0
    %602 = vmatpush1.bf16.xpose.msra.mxu0 0
    %603 = vmatprep.subr.bf16.mxu0 0
    %604 = vmatpush1.bf16.xpose.msra.mxu0 0
    %605 = vmatprep.mubr.bf16.mxu0 0
    %606 = vmatmul.mubr.bf16.gmra.mrb[0].mxu0 %v568
    %v607 = vpop.f32.mrb[0].mxu0
    %v608 = vadd.f32 0.0, %v607
    %v609 = vpop.f32.mrb[0].mxu0
    %v610 = vpop.f32.mrb[0].mxu0
    %v611 = vpop.f32.mrb[0].mxu0
    %612 = vdwg.mxu0
    %v613 = vmul.f32 %v608, 0.35355338
    %v614 = vsel %vm453, %v613, -inf
    %615 = vmax.xlane.f32.xlu0 %v614
    %v616 = vpop.xlane.xlu0 %615
    %v617 = vsub.f32 %v613, %v616
    %v618 = vmul.f32 %v617, 1.442695
    %v619 = vpow.pop %v618
    %v620 = vsel %vm453, %v619, 0.0
    %621 = vadd.xlane.f32.xlu0 %v620
    %v622 = vpop.xlane.xlu0 %621
    %v623 = vrcp.pop %v622
    %v624 = vmul.f32 %v619, %v623
    %v625 = vpack.c.bf16 %v624, %v624
    %627 = vrot.lane.b32.xlu0 %v452, 120
    %v628 = vpop.permute.xlu0 %627
    %v630 = vsel %vm453, %v625, 0
    %v633 = vsel %vm516, %v628, 0
    %635 = vmatprep.subr.bf16.mxu0 0
    %636 = vmatpush1.bf16.msra.mxu0 %v633
    %637 = vmatprep.subr.bf16.mxu0 0
    %638 = vmatpush1.bf16.msra.mxu0 0
    %639 = vmatprep.subr.bf16.mxu0 0
    %640 = vmatpush1.bf16.msra.mxu0 0
    %641 = vmatprep.subr.bf16.mxu0 0
    %642 = vmatpush1.bf16.msra.mxu0 0
    %643 = vmatprep.subr.bf16.mxu0 0
    %644 = vmatpush1.bf16.msra.mxu0 0
    %645 = vmatprep.subr.bf16.mxu0 0
    %646 = vmatpush1.bf16.msra.mxu0 0
    %647 = vmatprep.subr.bf16.mxu0 0
    %648 = vmatpush1.bf16.msra.mxu0 0
    %649 = vmatprep.subr.bf16.mxu0 0
    %650 = vmatpush1.bf16.msra.mxu0 0
    %651 = vmatprep.subr.bf16.mxu0 0
    %652 = vmatpush1.bf16.msra.mxu0 0
    %653 = vmatprep.subr.bf16.mxu0 0
    %654 = vmatpush1.bf16.msra.mxu0 0
    %655 = vmatprep.subr.bf16.mxu0 0
    %656 = vmatpush1.bf16.msra.mxu0 0
    %657 = vmatprep.subr.bf16.mxu0 0
    %658 = vmatpush1.bf16.msra.mxu0 0
    %659 = vmatprep.subr.bf16.mxu0 0
    %660 = vmatpush1.bf16.msra.mxu0 0
    %661 = vmatprep.subr.bf16.mxu0 0
    %662 = vmatpush1.bf16.msra.mxu0 0
    %663 = vmatprep.subr.bf16.mxu0 0
    %664 = vmatpush1.bf16.msra.mxu0 0
    %665 = vmatprep.subr.bf16.mxu0 0
    %666 = vmatpush1.bf16.msra.mxu0 0
    %667 = vmatprep.mubr.bf16.mxu0 0
    %668 = vmatmul.mubr.bf16.gmra.mrb[0].mxu0 %v630
    %v669 = vpop.f32.mrb[0].mxu0
    %v670 = vadd.f32 0.0, %v669
    %v671 = vpop.f32.mrb[0].mxu0
    %v672 = vpop.f32.mrb[0].mxu0
    %v673 = vpop.f32.mrb[0].mxu0
    %674 = vdwg.mxu0
    %676 = vrot.lane.b32.xlu0 %v670, 8
    %v677 = vpop.permute.xlu0 %676
    %vm679 = vcmask 130112
    %680 = vst.msk [vmem:[#allocation2] sm:$0xff] %vm679, %v677
    %681 = vrot.lane.b32.xlu0 %v328, 112
    %v682 = vpop.permute.xlu0 %681
    %683 = vrot.lane.b32.xlu0 %v390, 112
    %v684 = vpop.permute.xlu0 %683
    %v686 = vsel %vm453, %v682, 0
    %v689 = vsel %vm453, %v684, 0
    %691 = vmatprep.subr.bf16.mxu0 0
    %692 = vmatpush1.bf16.xpose.msra.mxu0 %v689
    %693 = vmatprep.subr.bf16.mxu0 0
    %694 = vmatpush1.bf16.xpose.msra.mxu0 0
    %695 = vmatprep.subr.bf16.mxu0 0
    %696 = vmatpush1.bf16.xpose.msra.mxu0 0
    %697 = vmatprep.subr.bf16.mxu0 0
    %698 = vmatpush1.bf16.xpose.msra.mxu0 0
    %699 = vmatprep.subr.bf16.mxu0 0
    %700 = vmatpush1.bf16.xpose.msra.mxu0 0
    %701 = vmatprep.subr.bf16.mxu0 0
    %702 = vmatpush1.bf16.xpose.msra.mxu0 0
    %703 = vmatprep.subr.bf16.mxu0 0
    %704 = vmatpush1.bf16.xpose.msra.mxu0 0
    %705 = vmatprep.subr.bf16.mxu0 0
    %706 = vmatpush1.bf16.xpose.msra.mxu0 0
    %707 = vmatprep.subr.bf16.mxu0 0
    %708 = vmatpush1.bf16.xpose.msra.mxu0 0
    %709 = vmatprep.subr.bf16.mxu0 0
    %710 = vmatpush1.bf16.xpose.msra.mxu0 0
    %711 = vmatprep.subr.bf16.mxu0 0
    %712 = vmatpush1.bf16.xpose.msra.mxu0 0
    %713 = vmatprep.subr.bf16.mxu0 0
    %714 = vmatpush1.bf16.xpose.msra.mxu0 0
    %715 = vmatprep.subr.bf16.mxu0 0
    %716 = vmatpush1.bf16.xpose.msra.mxu0 0
    %717 = vmatprep.subr.bf16.mxu0 0
    %718 = vmatpush1.bf16.xpose.msra.mxu0 0
    %719 = vmatprep.subr.bf16.mxu0 0
    %720 = vmatpush1.bf16.xpose.msra.mxu0 0
    %721 = vmatprep.subr.bf16.mxu0 0
    %722 = vmatpush1.bf16.xpose.msra.mxu0 0
    %723 = vmatprep.mubr.bf16.mxu0 0
    %724 = vmatmul.mubr.bf16.gmra.mrb[0].mxu0 %v686
    %v725 = vpop.f32.mrb[0].mxu0
    %v726 = vadd.f32 0.0, %v725
    %v727 = vpop.f32.mrb[0].mxu0
    %v728 = vpop.f32.mrb[0].mxu0
    %v729 = vpop.f32.mrb[0].mxu0
    %730 = vdwg.mxu0
    %v731 = vmul.f32 %v726, 0.35355338
    %v732 = vsel %vm453, %v731, -inf
    %733 = vmax.xlane.f32.xlu0 %v732
    %v734 = vpop.xlane.xlu0 %733
    %v735 = vsub.f32 %v731, %v734
    %v736 = vmul.f32 %v735, 1.442695
    %v737 = vpow.pop %v736
    %v738 = vsel %vm453, %v737, 0.0
    %739 = vadd.xlane.f32.xlu0 %v738
    %v740 = vpop.xlane.xlu0 %739
    %v741 = vrcp.pop %v740
    %v742 = vmul.f32 %v737, %v741
    %v743 = vpack.c.bf16 %v742, %v742
    %744 = vrot.lane.b32.xlu0 %v452, 112
    %v745 = vpop.permute.xlu0 %744
    %v747 = vsel %vm453, %v743, 0
    %v750 = vsel %vm516, %v745, 0
    %752 = vmatprep.subr.bf16.mxu0 0
    %753 = vmatpush1.bf16.msra.mxu0 %v750
    %754 = vmatprep.subr.bf16.mxu0 0
    %755 = vmatpush1.bf16.msra.mxu0 0
    %756 = vmatprep.subr.bf16.mxu0 0
    %757 = vmatpush1.bf16.msra.mxu0 0
    %758 = vmatprep.subr.bf16.mxu0 0
    %759 = vmatpush1.bf16.msra.mxu0 0
    %760 = vmatprep.subr.bf16.mxu0 0
    %761 = vmatpush1.bf16.msra.mxu0 0
    %762 = vmatprep.subr.bf16.mxu0 0
    %763 = vmatpush1.bf16.msra.mxu0 0
    %764 = vmatprep.subr.bf16.mxu0 0
    %765 = vmatpush1.bf16.msra.mxu0 0
    %766 = vmatprep.subr.bf16.mxu0 0
    %767 = vmatpush1.bf16.msra.mxu0 0
    %768 = vmatprep.subr.bf16.mxu0 0
    %769 = vmatpush1.bf16.msra.mxu0 0
    %770 = vmatprep.subr.bf16.mxu0 0
    %771 = vmatpush1.bf16.msra.mxu0 0
    %772 = vmatprep.subr.bf16.mxu0 0
    %773 = vmatpush1.bf16.msra.mxu0 0
    %774 = vmatprep.subr.bf16.mxu0 0
    %775 = vmatpush1.bf16.msra.mxu0 0
    %776 = vmatprep.subr.bf16.mxu0 0
    %777 = vmatpush1.bf16.msra.mxu0 0
    %778 = vmatprep.subr.bf16.mxu0 0
    %779 = vmatpush1.bf16.msra.mxu0 0
    %780 = vmatprep.subr.bf16.mxu0 0
    %781 = vmatpush1.bf16.msra.mxu0 0
    %782 = vmatprep.subr.bf16.mxu0 0
    %783 = vmatpush1.bf16.msra.mxu0 0
    %784 = vmatprep.mubr.bf16.mxu0 0
    %785 = vmatmul.mubr.bf16.gmra.mrb[0].mxu0 %v747
    %v786 = vpop.f32.mrb[0].mxu0
    %v787 = vadd.f32 0.0, %v786
    %v788 = vpop.f32.mrb[0].mxu0
    %v789 = vpop.f32.mrb[0].mxu0
    %v790 = vpop.f32.mrb[0].mxu0
    %791 = vdwg.mxu0
    %793 = vrot.lane.b32.xlu0 %v787, 16
    %v794 = vpop.permute.xlu0 %793
    %vm796 = vcmask 195712
    %797 = vst.msk [vmem:[#allocation2] sm:$0xff] %vm796, %v794
    %798 = vrot.lane.b32.xlu0 %v328, 104
    %v799 = vpop.permute.xlu0 %798
    %800 = vrot.lane.b32.xlu0 %v390, 104
    %v801 = vpop.permute.xlu0 %800
    %v803 = vsel %vm453, %v799, 0
    %v806 = vsel %vm453, %v801, 0
    %808 = vmatprep.subr.bf16.mxu0 0
    %809 = vmatpush1.bf16.xpose.msra.mxu0 %v806
    %810 = vmatprep.subr.bf16.mxu0 0
    %811 = vmatpush1.bf16.xpose.msra.mxu0 0
    %812 = vmatprep.subr.bf16.mxu0 0
    %813 = vmatpush1.bf16.xpose.msra.mxu0 0
    %814 = vmatprep.subr.bf16.mxu0 0
    %815 = vmatpush1.bf16.xpose.msra.mxu0 0
    %816 = vmatprep.subr.bf16.mxu0 0
    %817 = vmatpush1.bf16.xpose.msra.mxu0 0
    %818 = vmatprep.subr.bf16.mxu0 0
    %819 = vmatpush1.bf16.xpose.msra.mxu0 0
    %820 = vmatprep.subr.bf16.mxu0 0
    %821 = vmatpush1.bf16.xpose.msra.mxu0 0
    %822 = vmatprep.subr.bf16.mxu0 0
    %823 = vmatpush1.bf16.xpose.msra.mxu0 0
    %824 = vmatprep.subr.bf16.mxu0 0
    %825 = vmatpush1.bf16.xpose.msra.mxu0 0
    %826 = vmatprep.subr.bf16.mxu0 0
    %827 = vmatpush1.bf16.xpose.msra.mxu0 0
    %828 = vmatprep.subr.bf16.mxu0 0
    %829 = vmatpush1.bf16.xpose.msra.mxu0 0
    %830 = vmatprep.subr.bf16.mxu0 0
    %831 = vmatpush1.bf16.xpose.msra.mxu0 0
    %832 = vmatprep.subr.bf16.mxu0 0
    %833 = vmatpush1.bf16.xpose.msra.mxu0 0
    %834 = vmatprep.subr.bf16.mxu0 0
    %835 = vmatpush1.bf16.xpose.msra.mxu0 0
    %836 = vmatprep.subr.bf16.mxu0 0
    %837 = vmatpush1.bf16.xpose.msra.mxu0 0
    %838 = vmatprep.subr.bf16.mxu0 0
    %839 = vmatpush1.bf16.xpose.msra.mxu0 0
    %840 = vmatprep.mubr.bf16.mxu0 0
    %841 = vmatmul.mubr.bf16.gmra.mrb[0].mxu0 %v803
    %v842 = vpop.f32.mrb[0].mxu0
    %v843 = vadd.f32 0.0, %v842
    %v844 = vpop.f32.mrb[0].mxu0
    %v845 = vpop.f32.mrb[0].mxu0
    %v846 = vpop.f32.mrb[0].mxu0
    %847 = vdwg.mxu0
    %v848 = vmul.f32 %v843, 0.35355338
    %v849 = vsel %vm453, %v848, -inf
    %850 = vmax.xlane.f32.xlu0 %v849
    %v851 = vpop.xlane.xlu0 %850
    %v852 = vsub.f32 %v848, %v851
    %v853 = vmul.f32 %v852, 1.442695
    %v854 = vpow.pop %v853
    %v855 = vsel %vm453, %v854, 0.0
    %856 = vadd.xlane.f32.xlu0 %v855
    %v857 = vpop.xlane.xlu0 %856
    %v858 = vrcp.pop %v857
    %v859 = vmul.f32 %v854, %v858
    %v860 = vpack.c.bf16 %v859, %v859
    %861 = vrot.lane.b32.xlu0 %v452, 104
    %v862 = vpop.permute.xlu0 %861
    %v864 = vsel %vm453, %v860, 0
    %v867 = vsel %vm516, %v862, 0
    %869 = vmatprep.subr.bf16.mxu0 0
    %870 = vmatpush1.bf16.msra.mxu0 %v867
    %871 = vmatprep.subr.bf16.mxu0 0
    %872 = vmatpush1.bf16.msra.mxu0 0
    %873 = vmatprep.subr.bf16.mxu0 0
    %874 = vmatpush1.bf16.msra.mxu0 0
    %875 = vmatprep.subr.bf16.mxu0 0
    %876 = vmatpush1.bf16.msra.mxu0 0
    %877 = vmatprep.subr.bf16.mxu0 0
    %878 = vmatpush1.bf16.msra.mxu0 0
    %879 = vmatprep.subr.bf16.mxu0 0
    %880 = vmatpush1.bf16.msra.mxu0 0
    %881 = vmatprep.subr.bf16.mxu0 0
    %882 = vmatpush1.bf16.msra.mxu0 0
    %883 = vmatprep.subr.bf16.mxu0 0
    %884 = vmatpush1.bf16.msra.mxu0 0
    %885 = vmatprep.subr.bf16.mxu0 0
    %886 = vmatpush1.bf16.msra.mxu0 0
    %887 = vmatprep.subr.bf16.mxu0 0
    %888 = vmatpush1.bf16.msra.mxu0 0
    %889 = vmatprep.subr.bf16.mxu0 0
    %890 = vmatpush1.bf16.msra.mxu0 0
    %891 = vmatprep.subr.bf16.mxu0 0
    %892 = vmatpush1.bf16.msra.mxu0 0
    %893 = vmatprep.subr.bf16.mxu0 0
    %894 = vmatpush1.bf16.msra.mxu0 0
    %895 = vmatprep.subr.bf16.mxu0 0
    %896 = vmatpush1.bf16.msra.mxu0 0
    %897 = vmatprep.subr.bf16.mxu0 0
    %898 = vmatpush1.bf16.msra.mxu0 0
    %899 = vmatprep.subr.bf16.mxu0 0
    %900 = vmatpush1.bf16.msra.mxu0 0
    %901 = vmatprep.mubr.bf16.mxu0 0
    %902 = vmatmul.mubr.bf16.gmra.mrb[0].mxu0 %v864
    %v903 = vpop.f32.mrb[0].mxu0
    %v904 = vadd.f32 0.0, %v903
    %v905 = vpop.f32.mrb[0].mxu0
    %v906 = vpop.f32.mrb[0].mxu0
    %v907 = vpop.f32.mrb[0].mxu0
    %908 = vdwg.mxu0
    %910 = vrot.lane.b32.xlu0 %v904, 24
    %v911 = vpop.permute.xlu0 %910
    %vm913 = vcmask 261312
    %914 = vst.msk [vmem:[#allocation2] sm:$0xff] %vm913, %v911
    %v915 = vrot.slane %v328, 4
    %v916 = vrot.slane %v390, 4
    %v918 = vsel %vm453, %v915, 0
    %v921 = vsel %vm453, %v916, 0
    %923 = vmatprep.subr.bf16.mxu0 0
    %924 = vmatpush1.bf16.xpose.msra.mxu0 %v921
    %925 = vmatprep.subr.bf16.mxu0 0
    %926 = vmatpush1.bf16.xpose.msra.mxu0 0
    %927 = vmatprep.subr.bf16.mxu0 0
    %928 = vmatpush1.bf16.xpose.msra.mxu0 0
    %929 = vmatprep.subr.bf16.mxu0 0
    %930 = vmatpush1.bf16.xpose.msra.mxu0 0
    %931 = vmatprep.subr.bf16.mxu0 0
    %932 = vmatpush1.bf16.xpose.msra.mxu0 0
    %933 = vmatprep.subr.bf16.mxu0 0
    %934 = vmatpush1.bf16.xpose.msra.mxu0 0
    %935 = vmatprep.subr.bf16.mxu0 0
    %936 = vmatpush1.bf16.xpose.msra.mxu0 0
    %937 = vmatprep.subr.bf16.mxu0 0
    %938 = vmatpush1.bf16.xpose.msra.mxu0 0
    %939 = vmatprep.subr.bf16.mxu0 0
    %940 = vmatpush1.bf16.xpose.msra.mxu0 0
    %941 = vmatprep.subr.bf16.mxu0 0
    %942 = vmatpush1.bf16.xpose.msra.mxu0 0
    %943 = vmatprep.subr.bf16.mxu0 0
    %944 = vmatpush1.bf16.xpose.msra.mxu0 0
    %945 = vmatprep.subr.bf16.mxu0 0
    %946 = vmatpush1.bf16.xpose.msra.mxu0 0
    %947 = vmatprep.subr.bf16.mxu0 0
    %948 = vmatpush1.bf16.xpose.msra.mxu0 0
    %949 = vmatprep.subr.bf16.mxu0 0
    %950 = vmatpush1.bf16.xpose.msra.mxu0 0
    %951 = vmatprep.subr.bf16.mxu0 0
    %952 = vmatpush1.bf16.xpose.msra.mxu0 0
    %953 = vmatprep.subr.bf16.mxu0 0
    %954 = vmatpush1.bf16.xpose.msra.mxu0 0
    %955 = vmatprep.mubr.bf16.mxu0 0
    %956 = vmatmul.mubr.bf16.gmra.mrb[0].mxu0 %v918
    %v957 = vpop.f32.mrb[0].mxu0
    %v958 = vadd.f32 0.0, %v957
    %v959 = vpop.f32.mrb[0].mxu0
    %v960 = vpop.f32.mrb[0].mxu0
    %v961 = vpop.f32.mrb[0].mxu0
    %962 = vdwg.mxu0
    %v963 = vmul.f32 %v958, 0.35355338
    %v964 = vsel %vm453, %v963, -inf
    %965 = vmax.xlane.f32.xlu0 %v964
    %v966 = vpop.xlane.xlu0 %965
    %v967 = vsub.f32 %v963, %v966
    %v968 = vmul.f32 %v967, 1.442695
    %v969 = vpow.pop %v968
    %v970 = vsel %vm453, %v969, 0.0
    %971 = vadd.xlane.f32.xlu0 %v970
    %v972 = vpop.xlane.xlu0 %971
    %v973 = vrcp.pop %v972
    %v974 = vmul.f32 %v969, %v973
    %v975 = vpack.c.bf16 %v974, %v974
    %v976 = vrot.slane %v452, 4
    %v978 = vsel %vm453, %v975, 0
    %v981 = vsel %vm516, %v976, 0
    %983 = vmatprep.subr.bf16.mxu0 0
    %984 = vmatpush1.bf16.msra.mxu0 %v981
    %985 = vmatprep.subr.bf16.mxu0 0
    %986 = vmatpush1.bf16.msra.mxu0 0
    %987 = vmatprep.subr.bf16.mxu0 0
    %988 = vmatpush1.bf16.msra.mxu0 0
    %989 = vmatprep.subr.bf16.mxu0 0
    %990 = vmatpush1.bf16.msra.mxu0 0
    %991 = vmatprep.subr.bf16.mxu0 0
    %992 = vmatpush1.bf16.msra.mxu0 0
    %993 = vmatprep.subr.bf16.mxu0 0
    %994 = vmatpush1.bf16.msra.mxu0 0
    %995 = vmatprep.subr.bf16.mxu0 0
    %996 = vmatpush1.bf16.msra.mxu0 0
    %997 = vmatprep.subr.bf16.mxu0 0
    %998 = vmatpush1.bf16.msra.mxu0 0
    %999 = vmatprep.subr.bf16.mxu0 0
    %1000 = vmatpush1.bf16.msra.mxu0 0
    %1001 = vmatprep.subr.bf16.mxu0 0
    %1002 = vmatpush1.bf16.msra.mxu0 0
    %1003 = vmatprep.subr.bf16.mxu0 0
    %1004 = vmatpush1.bf16.msra.mxu0 0
    %1005 = vmatprep.subr.bf16.mxu0 0
    %1006 = vmatpush1.bf16.msra.mxu0 0
    %1007 = vmatprep.subr.bf16.mxu0 0
    %1008 = vmatpush1.bf16.msra.mxu0 0
    %1009 = vmatprep.subr.bf16.mxu0 0
    %1010 = vmatpush1.bf16.msra.mxu0 0
    %1011 = vmatprep.subr.bf16.mxu0 0
    %1012 = vmatpush1.bf16.msra.mxu0 0
    %1013 = vmatprep.subr.bf16.mxu0 0
    %1014 = vmatpush1.bf16.msra.mxu0 0
    %1015 = vmatprep.mubr.bf16.mxu0 0
    %1016 = vmatmul.mubr.bf16.gmra.mrb[0].mxu0 %v978
    %v1017 = vpop.f32.mrb[0].mxu0
    %v1018 = vadd.f32 0.0, %v1017
    %v1019 = vpop.f32.mrb[0].mxu0
    %v1020 = vpop.f32.mrb[0].mxu0
    %v1021 = vpop.f32.mrb[0].mxu0
    %1022 = vdwg.mxu0
    %1023 = vst.msk [vmem:[#allocation2 + $0x8] sm:$0xff] %vm453, %v1018
    %1024 = vrot.lane.b32.xlu0 %v915, 120
    %v1025 = vpop.permute.xlu0 %1024
    %1026 = vrot.lane.b32.xlu0 %v916, 120
    %v1027 = vpop.permute.xlu0 %1026
    %v1029 = vsel %vm453, %v1025, 0
    %v1032 = vsel %vm453, %v1027, 0
    %1034 = vmatprep.subr.bf16.mxu0 0
    %1035 = vmatpush1.bf16.xpose.msra.mxu0 %v1032
    %1036 = vmatprep.subr.bf16.mxu0 0
    %1037 = vmatpush1.bf16.xpose.msra.mxu0 0
    %1038 = vmatprep.subr.bf16.mxu0 0
    %1039 = vmatpush1.bf16.xpose.msra.mxu0 0
    %1040 = vmatprep.subr.bf16.mxu0 0
    %1041 = vmatpush1.bf16.xpose.msra.mxu0 0
    %1042 = vmatprep.subr.bf16.mxu0 0
    %1043 = vmatpush1.bf16.xpose.msra.mxu0 0
    %1044 = vmatprep.subr.bf16.mxu0 0
    %1045 = vmatpush1.bf16.xpose.msra.mxu0 0
    %1046 = vmatprep.subr.bf16.mxu0 0
    %1047 = vmatpush1.bf16.xpose.msra.mxu0 0
    %1048 = vmatprep.subr.bf16.mxu0 0
    %1049 = vmatpush1.bf16.xpose.msra.mxu0 0
    %1050 = vmatprep.subr.bf16.mxu0 0
    %1051 = vmatpush1.bf16.xpose.msra.mxu0 0
    %1052 = vmatprep.subr.bf16.mxu0 0
    %1053 = vmatpush1.bf16.xpose.msra.mxu0 0
    %1054 = vmatprep.subr.bf16.mxu0 0
    %1055 = vmatpush1.bf16.xpose.msra.mxu0 0
    %1056 = vmatprep.subr.bf16.mxu0 0
    %1057 = vmatpush1.bf16.xpose.msra.mxu0 0
    %1058 = vmatprep.subr.bf16.mxu0 0
    %1059 = vmatpush1.bf16.xpose.msra.mxu0 0
    %1060 = vmatprep.subr.bf16.mxu0 0
    %1061 = vmatpush1.bf16.xpose.msra.mxu0 0
    %1062 = vmatprep.subr.bf16.mxu0 0
    %1063 = vmatpush1.bf16.xpose.msra.mxu0 0
    %1064 = vmatprep.subr.bf16.mxu0 0
    %1065 = vmatpush1.bf16.xpose.msra.mxu0 0
    %1066 = vmatprep.mubr.bf16.mxu0 0
    %1067 = vmatmul.mubr.bf16.gmra.mrb[0].mxu0 %v1029
    %v1068 = vpop.f32.mrb[0].mxu0
    %v1069 = vadd.f32 0.0, %v1068
    %v1070 = vpop.f32.mrb[0].mxu0
    %v1071 = vpop.f32.mrb[0].mxu0
    %v1072 = vpop.f32.mrb[0].mxu0
    %1073 = vdwg.mxu0
    %v1074 = vmul.f32 %v1069, 0.35355338
    %v1075 = vsel %vm453, %v1074, -inf
    %1076 = vmax.xlane.f32.xlu0 %v1075
    %v1077 = vpop.xlane.xlu0 %1076
    %v1078 = vsub.f32 %v1074, %v1077
    %v1079 = vmul.f32 %v1078, 1.442695
    %v1080 = vpow.pop %v1079
    %v1081 = vsel %vm453, %v1080, 0.0
    %1082 = vadd.xlane.f32.xlu0 %v1081
    %v1083 = vpop.xlane.xlu0 %1082
    %v1084 = vrcp.pop %v1083
    %v1085 = vmul.f32 %v1080, %v1084
    %v1086 = vpack.c.bf16 %v1085, %v1085
    %1087 = vrot.lane.b32.xlu0 %v976, 120
    %v1088 = vpop.permute.xlu0 %1087
    %v1090 = vsel %vm453, %v1086, 0
    %v1093 = vsel %vm516, %v1088, 0
    %1095 = vmatprep.subr.bf16.mxu0 0
    %1096 = vmatpush1.bf16.msra.mxu0 %v1093
    %1097 = vmatprep.subr.bf16.mxu0 0
    %1098 = vmatpush1.bf16.msra.mxu0 0
    %1099 = vmatprep.subr.bf16.mxu0 0
    %1100 = vmatpush1.bf16.msra.mxu0 0
    %1101 = vmatprep.subr.bf16.mxu0 0
    %1102 = vmatpush1.bf16.msra.mxu0 0
    %1103 = vmatprep.subr.bf16.mxu0 0
    %1104 = vmatpush1.bf16.msra.mxu0 0
    %1105 = vmatprep.subr.bf16.mxu0 0
    %1106 = vmatpush1.bf16.msra.mxu0 0
    %1107 = vmatprep.subr.bf16.mxu0 0
    %1108 = vmatpush1.bf16.msra.mxu0 0
    %1109 = vmatprep.subr.bf16.mxu0 0
    %1110 = vmatpush1.bf16.msra.mxu0 0
    %1111 = vmatprep.subr.bf16.mxu0 0
    %1112 = vmatpush1.bf16.msra.mxu0 0
    %1113 = vmatprep.subr.bf16.mxu0 0
    %1114 = vmatpush1.bf16.msra.mxu0 0
    %1115 = vmatprep.subr.bf16.mxu0 0
    %1116 = vmatpush1.bf16.msra.mxu0 0
    %1117 = vmatprep.subr.bf16.mxu0 0
    %1118 = vmatpush1.bf16.msra.mxu0 0
    %1119 = vmatprep.subr.bf16.mxu0 0
    %1120 = vmatpush1.bf16.msra.mxu0 0
    %1121 = vmatprep.subr.bf16.mxu0 0
    %1122 = vmatpush1.bf16.msra.mxu0 0
    %1123 = vmatprep.subr.bf16.mxu0 0
    %1124 = vmatpush1.bf16.msra.mxu0 0
    %1125 = vmatprep.subr.bf16.mxu0 0
    %1126 = vmatpush1.bf16.msra.mxu0 0
    %1127 = vmatprep.mubr.bf16.mxu0 0
    %1128 = vmatmul.mubr.bf16.gmra.mrb[0].mxu0 %v1090
    %v1129 = vpop.f32.mrb[0].mxu0
    %v1130 = vadd.f32 0.0, %v1129
    %v1131 = vpop.f32.mrb[0].mxu0
    %v1132 = vpop.f32.mrb[0].mxu0
    %v1133 = vpop.f32.mrb[0].mxu0
    %1134 = vdwg.mxu0
    %1136 = vrot.lane.b32.xlu0 %v1130, 8
    %v1137 = vpop.permute.xlu0 %1136
    %1139 = vst.msk [vmem:[#allocation2 + $0x8] sm:$0xff] %vm679, %v1137
    %1140 = vrot.lane.b32.xlu0 %v915, 112
    %v1141 = vpop.permute.xlu0 %1140
    %1142 = vrot.lane.b32.xlu0 %v916, 112
    %v1143 = vpop.permute.xlu0 %1142
    %v1145 = vsel %vm453, %v1141, 0
    %v1148 = vsel %vm453, %v1143, 0
    %1150 = vmatprep.subr.bf16.mxu0 0
    %1151 = vmatpush1.bf16.xpose.msra.mxu0 %v1148
    %1152 = vmatprep.subr.bf16.mxu0 0
    %1153 = vmatpush1.bf16.xpose.msra.mxu0 0
    %1154 = vmatprep.subr.bf16.mxu0 0
    %1155 = vmatpush1.bf16.xpose.msra.mxu0 0
    %1156 = vmatprep.subr.bf16.mxu0 0
    %1157 = vmatpush1.bf16.xpose.msra.mxu0 0
    %1158 = vmatprep.subr.bf16.mxu0 0
    %1159 = vmatpush1.bf16.xpose.msra.mxu0 0
    %1160 = vmatprep.subr.bf16.mxu0 0
    %1161 = vmatpush1.bf16.xpose.msra.mxu0 0
    %1162 = vmatprep.subr.bf16.mxu0 0
    %1163 = vmatpush1.bf16.xpose.msra.mxu0 0
    %1164 = vmatprep.subr.bf16.mxu0 0
    %1165 = vmatpush1.bf16.xpose.msra.mxu0 0
    %1166 = vmatprep.subr.bf16.mxu0 0
    %1167 = vmatpush1.bf16.xpose.msra.mxu0 0
    %1168 = vmatprep.subr.bf16.mxu0 0
    %1169 = vmatpush1.bf16.xpose.msra.mxu0 0
    %1170 = vmatprep.subr.bf16.mxu0 0
    %1171 = vmatpush1.bf16.xpose.msra.mxu0 0
    %1172 = vmatprep.subr.bf16.mxu0 0
    %1173 = vmatpush1.bf16.xpose.msra.mxu0 0
    %1174 = vmatprep.subr.bf16.mxu0 0
    %1175 = vmatpush1.bf16.xpose.msra.mxu0 0
    %1176 = vmatprep.subr.bf16.mxu0 0
    %1177 = vmatpush1.bf16.xpose.msra.mxu0 0
    %1178 = vmatprep.subr.bf16.mxu0 0
    %1179 = vmatpush1.bf16.xpose.msra.mxu0 0
    %1180 = vmatprep.subr.bf16.mxu0 0
    %1181 = vmatpush1.bf16.xpose.msra.mxu0 0
    %1182 = vmatprep.mubr.bf16.mxu0 0
    %1183 = vmatmul.mubr.bf16.gmra.mrb[0].mxu0 %v1145
    %v1184 = vpop.f32.mrb[0].mxu0
    %v1185 = vadd.f32 0.0, %v1184
    %v1186 = vpop.f32.mrb[0].mxu0
    %v1187 = vpop.f32.mrb[0].mxu0
    %v1188 = vpop.f32.mrb[0].mxu0
    %1189 = vdwg.mxu0
    %v1190 = vmul.f32 %v1185, 0.35355338
    %v1191 = vsel %vm453, %v1190, -inf
    %1192 = vmax.xlane.f32.xlu0 %v1191
    %v1193 = vpop.xlane.xlu0 %1192
    %v1194 = vsub.f32 %v1190, %v1193
    %v1195 = vmul.f32 %v1194, 1.442695
    %v1196 = vpow.pop %v1195
    %v1197 = vsel %vm453, %v1196, 0.0
    %1198 = vadd.xlane.f32.xlu0 %v1197
    %v1199 = vpop.xlane.xlu0 %1198
    %v1200 = vrcp.pop %v1199
    %v1201 = vmul.f32 %v1196, %v1200
    %v1202 = vpack.c.bf16 %v1201, %v1201
    %1203 = vrot.lane.b32.xlu0 %v976, 112
    %v1204 = vpop.permute.xlu0 %1203
    %v1206 = vsel %vm453, %v1202, 0
    %v1209 = vsel %vm516, %v1204, 0
    %1211 = vmatprep.subr.bf16.mxu0 0
    %1212 = vmatpush1.bf16.msra.mxu0 %v1209
    %1213 = vmatprep.subr.bf16.mxu0 0
    %1214 = vmatpush1.bf16.msra.mxu0 0
    %1215 = vmatprep.subr.bf16.mxu0 0
    %1216 = vmatpush1.bf16.msra.mxu0 0
    %1217 = vmatprep.subr.bf16.mxu0 0
    %1218 = vmatpush1.bf16.msra.mxu0 0
    %1219 = vmatprep.subr.bf16.mxu0 0
    %1220 = vmatpush1.bf16.msra.mxu0 0
    %1221 = vmatprep.subr.bf16.mxu0 0
    %1222 = vmatpush1.bf16.msra.mxu0 0
    %1223 = vmatprep.subr.bf16.mxu0 0
    %1224 = vmatpush1.bf16.msra.mxu0 0
    %1225 = vmatprep.subr.bf16.mxu0 0
    %1226 = vmatpush1.bf16.msra.mxu0 0
    %1227 = vmatprep.subr.bf16.mxu0 0
    %1228 = vmatpush1.bf16.msra.mxu0 0
    %1229 = vmatprep.subr.bf16.mxu0 0
    %1230 = vmatpush1.bf16.msra.mxu0 0
    %1231 = vmatprep.subr.bf16.mxu0 0
    %1232 = vmatpush1.bf16.msra.mxu0 0
    %1233 = vmatprep.subr.bf16.mxu0 0
    %1234 = vmatpush1.bf16.msra.mxu0 0
    %1235 = vmatprep.subr.bf16.mxu0 0
    %1236 = vmatpush1.bf16.msra.mxu0 0
    %1237 = vmatprep.subr.bf16.mxu0 0
    %1238 = vmatpush1.bf16.msra.mxu0 0
    %1239 = vmatprep.subr.bf16.mxu0 0
    %1240 = vmatpush1.bf16.msra.mxu0 0
    %1241 = vmatprep.subr.bf16.mxu0 0
    %1242 = vmatpush1.bf16.msra.mxu0 0
    %1243 = vmatprep.mubr.bf16.mxu0 0
    %1244 = vmatmul.mubr.bf16.gmra.mrb[0].mxu0 %v1206
    %v1245 = vpop.f32.mrb[0].mxu0
    %v1246 = vadd.f32 0.0, %v1245
    %v1247 = vpop.f32.mrb[0].mxu0
    %v1248 = vpop.f32.mrb[0].mxu0
    %v1249 = vpop.f32.mrb[0].mxu0
    %1250 = vdwg.mxu0
    %1252 = vrot.lane.b32.xlu0 %v1246, 16
    %v1253 = vpop.permute.xlu0 %1252
    %1255 = vst.msk [vmem:[#allocation2 + $0x8] sm:$0xff] %vm796, %v1253
    %1256 = vrot.lane.b32.xlu0 %v915, 104
    %v1257 = vpop.permute.xlu0 %1256
    %1258 = vrot.lane.b32.xlu0 %v916, 104
    %v1259 = vpop.permute.xlu0 %1258
    %v1261 = vsel %vm453, %v1257, 0
    %v1264 = vsel %vm453, %v1259, 0
    %1266 = vmatprep.subr.bf16.mxu0 0
    %1267 = vmatpush1.bf16.xpose.msra.mxu0 %v1264
    %1268 = vmatprep.subr.bf16.mxu0 0
    %1269 = vmatpush1.bf16.xpose.msra.mxu0 0
    %1270 = vmatprep.subr.bf16.mxu0 0
    %1271 = vmatpush1.bf16.xpose.msra.mxu0 0
    %1272 = vmatprep.subr.bf16.mxu0 0
    %1273 = vmatpush1.bf16.xpose.msra.mxu0 0
    %1274 = vmatprep.subr.bf16.mxu0 0
    %1275 = vmatpush1.bf16.xpose.msra.mxu0 0
    %1276 = vmatprep.subr.bf16.mxu0 0
    %1277 = vmatpush1.bf16.xpose.msra.mxu0 0
    %1278 = vmatprep.subr.bf16.mxu0 0
    %1279 = vmatpush1.bf16.xpose.msra.mxu0 0
    %1280 = vmatprep.subr.bf16.mxu0 0
    %1281 = vmatpush1.bf16.xpose.msra.mxu0 0
    %1282 = vmatprep.subr.bf16.mxu0 0
    %1283 = vmatpush1.bf16.xpose.msra.mxu0 0
    %1284 = vmatprep.subr.bf16.mxu0 0
    %1285 = vmatpush1.bf16.xpose.msra.mxu0 0
    %1286 = vmatprep.subr.bf16.mxu0 0
    %1287 = vmatpush1.bf16.xpose.msra.mxu0 0
    %1288 = vmatprep.subr.bf16.mxu0 0
    %1289 = vmatpush1.bf16.xpose.msra.mxu0 0
    %1290 = vmatprep.subr.bf16.mxu0 0
    %1291 = vmatpush1.bf16.xpose.msra.mxu0 0
    %1292 = vmatprep.subr.bf16.mxu0 0
    %1293 = vmatpush1.bf16.xpose.msra.mxu0 0
    %1294 = vmatprep.subr.bf16.mxu0 0
    %1295 = vmatpush1.bf16.xpose.msra.mxu0 0
    %1296 = vmatprep.subr.bf16.mxu0 0
    %1297 = vmatpush1.bf16.xpose.msra.mxu0 0
    %1298 = vmatprep.mubr.bf16.mxu0 0
    %1299 = vmatmul.mubr.bf16.gmra.mrb[0].mxu0 %v1261
    %v1300 = vpop.f32.mrb[0].mxu0
    %v1301 = vadd.f32 0.0, %v1300
    %v1302 = vpop.f32.mrb[0].mxu0
    %v1303 = vpop.f32.mrb[0].mxu0
    %v1304 = vpop.f32.mrb[0].mxu0
    %1305 = vdwg.mxu0
    %v1306 = vmul.f32 %v1301, 0.35355338
    %v1307 = vsel %vm453, %v1306, -inf
    %1308 = vmax.xlane.f32.xlu0 %v1307
    %v1309 = vpop.xlane.xlu0 %1308
    %v1310 = vsub.f32 %v1306, %v1309
    %v1311 = vmul.f32 %v1310, 1.442695
    %v1312 = vpow.pop %v1311
    %v1313 = vsel %vm453, %v1312, 0.0
    %1314 = vadd.xlane.f32.xlu0 %v1313
    %v1315 = vpop.xlane.xlu0 %1314
    %v1316 = vrcp.pop %v1315
    %v1317 = vmul.f32 %v1312, %v1316
    %v1318 = vpack.c.bf16 %v1317, %v1317
    %1319 = vrot.lane.b32.xlu0 %v976, 104
    %v1320 = vpop.permute.xlu0 %1319
    %v1322 = vsel %vm453, %v1318, 0
    %v1325 = vsel %vm516, %v1320, 0
    %1327 = vmatprep.subr.bf16.mxu0 0
    %1328 = vmatpush1.bf16.msra.mxu0 %v1325
    %1329 = vmatprep.subr.bf16.mxu0 0
    %1330 = vmatpush1.bf16.msra.mxu0 0
    %1331 = vmatprep.subr.bf16.mxu0 0
    %1332 = vmatpush1.bf16.msra.mxu0 0
    %1333 = vmatprep.subr.bf16.mxu0 0
    %1334 = vmatpush1.bf16.msra.mxu0 0
    %1335 = vmatprep.subr.bf16.mxu0 0
    %1336 = vmatpush1.bf16.msra.mxu0 0
    %1337 = vmatprep.subr.bf16.mxu0 0
    %1338 = vmatpush1.bf16.msra.mxu0 0
    %1339 = vmatprep.subr.bf16.mxu0 0
    %1340 = vmatpush1.bf16.msra.mxu0 0
    %1341 = vmatprep.subr.bf16.mxu0 0
    %1342 = vmatpush1.bf16.msra.mxu0 0
    %1343 = vmatprep.subr.bf16.mxu0 0
    %1344 = vmatpush1.bf16.msra.mxu0 0
    %1345 = vmatprep.subr.bf16.mxu0 0
    %1346 = vmatpush1.bf16.msra.mxu0 0
    %1347 = vmatprep.subr.bf16.mxu0 0
    %1348 = vmatpush1.bf16.msra.mxu0 0
    %1349 = vmatprep.subr.bf16.mxu0 0
    %1350 = vmatpush1.bf16.msra.mxu0 0
    %1351 = vmatprep.subr.bf16.mxu0 0
    %1352 = vmatpush1.bf16.msra.mxu0 0
    %1353 = vmatprep.subr.bf16.mxu0 0
    %1354 = vmatpush1.bf16.msra.mxu0 0
    %1355 = vmatprep.subr.bf16.mxu0 0
    %1356 = vmatpush1.bf16.msra.mxu0 0
    %1357 = vmatprep.subr.bf16.mxu0 0
    %1358 = vmatpush1.bf16.msra.mxu0 0
    %1359 = vmatprep.mubr.bf16.mxu0 0
    %1360 = vmatmul.mubr.bf16.gmra.mrb[0].mxu0 %v1322
    %v1361 = vpop.f32.mrb[0].mxu0
    %v1362 = vadd.f32 0.0, %v1361
    %v1363 = vpop.f32.mrb[0].mxu0
    %v1364 = vpop.f32.mrb[0].mxu0
    %v1365 = vpop.f32.mrb[0].mxu0
    %1366 = vdwg.mxu0
    %1368 = vrot.lane.b32.xlu0 %v1362, 24
    %v1369 = vpop.permute.xlu0 %1368
    %1371 = vst.msk [vmem:[#allocation2 + $0x8] sm:$0xff] %vm913, %v1369
    %v1372 = vld [vmem:[#allocation2] sm:$0xff]
    %v1373 = vld [vmem:[#allocation2 + $0x8] sm:$0xff]
    %v1374 = vpack.c.bf16 %v1373, %v1372
    %v1375 = vld [vmem:[#allocation12] sm:$0xf]
    %v1376 = vld [vmem:[#allocation12 + $0x4] sm:$0xf]
    %v1377 = vld [vmem:[#allocation12 + $0x8] sm:$0xf]
    %v1378 = vld [vmem:[#allocation12 + $0xc] sm:$0xf]
    %v1379 = vlaneseq
    %v1380 = vshrl.u32 %v1379, 7
    %v1381 = vsub.s32 0, %v1380
    %v1382 = vrot.slane %v262, %v1381
    %v1387 = vunpack.c.l.b16 %v1375
    %v1388 = vunpack.c.l.b16 %v1376
    %v1389 = vunpack.c.l.b16 %v1377
    %v1390 = vunpack.c.l.b16 %v1378
    %v1391 = vpack.c.b16 %v1388, %v1387
    %v1392 = vpack.c.b16 %v1390, %v1389
    %v1396 = vsel %vm243, %v1374, 0
    %1398 = vmatprep.subr.bf16.mxu0 0
    %1399 = vmatpush1.bf16.msra.mxu0 %v1391
    %1400 = vmatprep.subr.bf16.mxu0 0
    %1401 = vmatpush1.bf16.msra.mxu0 %v1392
    %1402 = vmatprep.subr.bf16.mxu0 0
    %1403 = vmatpush1.bf16.msra.mxu0 0
    %1404 = vmatprep.subr.bf16.mxu0 0
    %1405 = vmatpush1.bf16.msra.mxu0 0
    %1406 = vmatprep.subr.bf16.mxu0 0
    %1407 = vmatpush1.bf16.msra.mxu0 0
    %1408 = vmatprep.subr.bf16.mxu0 0
    %1409 = vmatpush1.bf16.msra.mxu0 0
    %1410 = vmatprep.subr.bf16.mxu0 0
    %1411 = vmatpush1.bf16.msra.mxu0 0
    %1412 = vmatprep.subr.bf16.mxu0 0
    %1413 = vmatpush1.bf16.msra.mxu0 0
    %1414 = vmatprep.subr.bf16.mxu0 0
    %1415 = vmatpush1.bf16.msra.mxu0 0
    %1416 = vmatprep.subr.bf16.mxu0 0
    %1417 = vmatpush1.bf16.msra.mxu0 0
    %1418 = vmatprep.subr.bf16.mxu0 0
    %1419 = vmatpush1.bf16.msra.mxu0 0
    %1420 = vmatprep.subr.bf16.mxu0 0
    %1421 = vmatpush1.bf16.msra.mxu0 0
    %1422 = vmatprep.subr.bf16.mxu0 0
    %1423 = vmatpush1.bf16.msra.mxu0 0
    %1424 = vmatprep.subr.bf16.mxu0 0
    %1425 = vmatpush1.bf16.msra.mxu0 0
    %1426 = vmatprep.subr.bf16.mxu0 0
    %1427 = vmatpush1.bf16.msra.mxu0 0
    %1428 = vmatprep.subr.bf16.mxu0 0
    %1429 = vmatpush1.bf16.msra.mxu0 0
    %1430 = vmatprep.mubr.bf16.mxu0 0
    %1431 = vmatmul.mubr.bf16.gmra.mrb[0].mxu0 %v1396
    %v1432 = vpop.f32.mrb[0].mxu0
    %v1433 = vadd.f32 %v1382, %v1432
    %v1434 = vpop.f32.mrb[0].mxu0
    %v1435 = vpop.f32.mrb[0].mxu0
    %v1436 = vadd.f32 %v1382, %v1435
    %v1437 = vpop.f32.mrb[0].mxu0
    %1438 = vdwg.mxu0
    %v1439 = vadd.f32 %v237, %v1433
    %v1440 = vadd.f32 %v238, %v1436
    %v1441 = vmul.f32 %v1439, %v1439
    %v1442 = vmul.f32 %v1440, %v1440
    %v1443 = vsel %vm243, %v1441, 0.0
    %1444 = vadd.xlane.f32.xlu0 %v1443
    %v1445 = vpop.xlane.xlu0 %1444
    %v1446 = vsel %vm243, %v1442, 0.0
    %1447 = vadd.xlane.f32.xlu0 %v1446
    %v1448 = vpop.xlane.xlu0 %1447
    %v1449 = vmul.f32 %v1445, %v250
    %v1450 = vmul.f32 %v1448, %v250
    %v1451 = vadd.f32 %v1449, 1.1920929e-07
    %v1452 = vadd.f32 %v1450, 1.1920929e-07
    %v1453 = vrsqrt.pop %v1451
    %v1454 = vrsqrt.pop %v1452
    %v1455 = vmul.f32 %v1439, %v1453
    %v1456 = vmul.f32 %v1440, %v1454
    %v1457 = vld [vmem:[#allocation23 + $0x4] sm:$0x1]
    %v1458 = vld [vmem:[#allocation23 + $0x5] sm:$0x1]
    %v1459 = vld [vmem:[#allocation23 + $0x6] sm:$0x1]
    %v1460 = vld [vmem:[#allocation23 + $0x7] sm:$0x1]
    %v1461 = vpack.c.bf16 %v1456, %v1455
    %v1462 = vld [vmem:[#allocation14] sm:$0xf]
    %v1463 = vld [vmem:[#allocation14 + $0x4] sm:$0xf]
    %v1464 = vld [vmem:[#allocation14 + $0x8] sm:$0xf]
    %v1465 = vld [vmem:[#allocation14 + $0xc] sm:$0xf]
    %v1466 = vlaneseq
    %v1467 = vshrl.u32 %v1466, 7
    %v1468 = vsub.s32 0, %v1467
    %v1469 = vrot.slane %v1457, %v1468
    %v1474 = vunpack.c.l.b16 %v1462
    %v1475 = vunpack.c.l.b16 %v1463
    %v1476 = vunpack.c.l.b16 %v1464
    %v1477 = vunpack.c.l.b16 %v1465
    %v1478 = vpack.c.b16 %v1475, %v1474
    %v1479 = vpack.c.b16 %v1477, %v1476
    %v1483 = vsel %vm243, %v1461, 0
    %1485 = vmatprep.subr.bf16.mxu0 0
    %1486 = vmatpush1.bf16.msra.mxu0 %v1478
    %1487 = vmatprep.subr.bf16.mxu0 0
    %1488 = vmatpush1.bf16.msra.mxu0 %v1479
    %1489 = vmatprep.subr.bf16.mxu0 0
    %1490 = vmatpush1.bf16.msra.mxu0 0
    %1491 = vmatprep.subr.bf16.mxu0 0
    %1492 = vmatpush1.bf16.msra.mxu0 0
    %1493 = vmatprep.subr.bf16.mxu0 0
    %1494 = vmatpush1.bf16.msra.mxu0 0
    %1495 = vmatprep.subr.bf16.mxu0 0
    %1496 = vmatpush1.bf16.msra.mxu0 0
    %1497 = vmatprep.subr.bf16.mxu0 0
    %1498 = vmatpush1.bf16.msra.mxu0 0
    %1499 = vmatprep.subr.bf16.mxu0 0
    %1500 = vmatpush1.bf16.msra.mxu0 0
    %1501 = vmatprep.subr.bf16.mxu0 0
    %1502 = vmatpush1.bf16.msra.mxu0 0
    %1503 = vmatprep.subr.bf16.mxu0 0
    %1504 = vmatpush1.bf16.msra.mxu0 0
    %1505 = vmatprep.subr.bf16.mxu0 0
    %1506 = vmatpush1.bf16.msra.mxu0 0
    %1507 = vmatprep.subr.bf16.mxu0 0
    %1508 = vmatpush1.bf16.msra.mxu0 0
    %1509 = vmatprep.subr.bf16.mxu0 0
    %1510 = vmatpush1.bf16.msra.mxu0 0
    %1511 = vmatprep.subr.bf16.mxu0 0
    %1512 = vmatpush1.bf16.msra.mxu0 0
    %1513 = vmatprep.subr.bf16.mxu0 0
    %1514 = vmatpush1.bf16.msra.mxu0 0
    %1515 = vmatprep.subr.bf16.mxu0 0
    %1516 = vmatpush1.bf16.msra.mxu0 0
    %1517 = vmatprep.mubr.bf16.mxu0 0
    %1518 = vmatmul.mubr.bf16.gmra.mrb[0].mxu0 %v1483
    %v1519 = vpop.f32.mrb[0].mxu0
    %v1520 = vadd.f32 %v1469, %v1519
    %v1521 = vpop.f32.mrb[0].mxu0
    %v1522 = vpop.f32.mrb[0].mxu0
    %v1523 = vadd.f32 %v1469, %v1522
    %v1524 = vpop.f32.mrb[0].mxu0
    %1525 = vdwg.mxu0
    %v1526 = vpack.c.bf16 %v1523, %v1520
    %v1527 = vpack.c.bf16 %v240, %v239
    %v1528 = vld [vmem:[#allocation15] sm:$0xf]
    %v1529 = vld [vmem:[#allocation15 + $0x4] sm:$0xf]
    %v1530 = vld [vmem:[#allocation15 + $0x8] sm:$0xf]
    %v1531 = vld [vmem:[#allocation15 + $0xc] sm:$0xf]
    %v1532 = vlaneseq
    %v1533 = vshrl.u32 %v1532, 7
    %v1534 = vsub.s32 0, %v1533
    %v1535 = vrot.slane %v1458, %v1534
    %v1540 = vunpack.c.l.b16 %v1528
    %v1541 = vunpack.c.l.b16 %v1529
    %v1542 = vunpack.c.l.b16 %v1530
    %v1543 = vunpack.c.l.b16 %v1531
    %v1544 = vpack.c.b16 %v1541, %v1540
    %v1545 = vpack.c.b16 %v1543, %v1542
    %v1549 = vsel %vm243, %v1527, 0
    %1551 = vmatprep.subr.bf16.mxu0 0
    %1552 = vmatpush1.bf16.msra.mxu0 %v1544
    %1553 = vmatprep.subr.bf16.mxu0 0
    %1554 = vmatpush1.bf16.msra.mxu0 %v1545
    %1555 = vmatprep.subr.bf16.mxu0 0
    %1556 = vmatpush1.bf16.msra.mxu0 0
    %1557 = vmatprep.subr.bf16.mxu0 0
    %1558 = vmatpush1.bf16.msra.mxu0 0
    %1559 = vmatprep.subr.bf16.mxu0 0
    %1560 = vmatpush1.bf16.msra.mxu0 0
    %1561 = vmatprep.subr.bf16.mxu0 0
    %1562 = vmatpush1.bf16.msra.mxu0 0
    %1563 = vmatprep.subr.bf16.mxu0 0
    %1564 = vmatpush1.bf16.msra.mxu0 0
    %1565 = vmatprep.subr.bf16.mxu0 0
    %1566 = vmatpush1.bf16.msra.mxu0 0
    %1567 = vmatprep.subr.bf16.mxu0 0
    %1568 = vmatpush1.bf16.msra.mxu0 0
    %1569 = vmatprep.subr.bf16.mxu0 0
    %1570 = vmatpush1.bf16.msra.mxu0 0
    %1571 = vmatprep.subr.bf16.mxu0 0
    %1572 = vmatpush1.bf16.msra.mxu0 0
    %1573 = vmatprep.subr.bf16.mxu0 0
    %1574 = vmatpush1.bf16.msra.mxu0 0
    %1575 = vmatprep.subr.bf16.mxu0 0
    %1576 = vmatpush1.bf16.msra.mxu0 0
    %1577 = vmatprep.subr.bf16.mxu0 0
    %1578 = vmatpush1.bf16.msra.mxu0 0
    %1579 = vmatprep.subr.bf16.mxu0 0
    %1580 = vmatpush1.bf16.msra.mxu0 0
    %1581 = vmatprep.subr.bf16.mxu0 0
    %1582 = vmatpush1.bf16.msra.mxu0 0
    %1583 = vmatprep.mubr.bf16.mxu0 0
    %1584 = vmatmul.mubr.bf16.gmra.mrb[0].mxu0 %v1549
    %v1585 = vpop.f32.mrb[0].mxu0
    %v1586 = vadd.f32 %v1535, %v1585
    %v1587 = vpop.f32.mrb[0].mxu0
    %v1588 = vpop.f32.mrb[0].mxu0
    %v1589 = vadd.f32 %v1535, %v1588
    %v1590 = vpop.f32.mrb[0].mxu0
    %1591 = vdwg.mxu0
    %v1592 = vpack.c.bf16 %v1589, %v1586
    %v1593 = vld [vmem:[#allocation17] sm:$0xf]
    %v1594 = vld [vmem:[#allocation17 + $0x4] sm:$0xf]
    %v1595 = vld [vmem:[#allocation17 + $0x8] sm:$0xf]
    %v1596 = vld [vmem:[#allocation17 + $0xc] sm:$0xf]
    %v1597 = vlaneseq
    %v1598 = vshrl.u32 %v1597, 7
    %v1599 = vsub.s32 0, %v1598
    %v1600 = vrot.slane %v1459, %v1599
    %v1605 = vunpack.c.l.b16 %v1593
    %v1606 = vunpack.c.l.b16 %v1594
    %v1607 = vunpack.c.l.b16 %v1595
    %v1608 = vunpack.c.l.b16 %v1596
    %v1609 = vpack.c.b16 %v1606, %v1605
    %v1610 = vpack.c.b16 %v1608, %v1607
    %1613 = vmatprep.subr.bf16.mxu0 0
    %1614 = vmatpush1.bf16.msra.mxu0 %v1609
    %1615 = vmatprep.subr.bf16.mxu0 0
    %1616 = vmatpush1.bf16.msra.mxu0 %v1610
    %1617 = vmatprep.subr.bf16.mxu0 0
    %1618 = vmatpush1.bf16.msra.mxu0 0
    %1619 = vmatprep.subr.bf16.mxu0 0
    %1620 = vmatpush1.bf16.msra.mxu0 0
    %1621 = vmatprep.subr.bf16.mxu0 0
    %1622 = vmatpush1.bf16.msra.mxu0 0
    %1623 = vmatprep.subr.bf16.mxu0 0
    %1624 = vmatpush1.bf16.msra.mxu0 0
    %1625 = vmatprep.subr.bf16.mxu0 0
    %1626 = vmatpush1.bf16.msra.mxu0 0
    %1627 = vmatprep.subr.bf16.mxu0 0
    %1628 = vmatpush1.bf16.msra.mxu0 0
    %1629 = vmatprep.subr.bf16.mxu0 0
    %1630 = vmatpush1.bf16.msra.mxu0 0
    %1631 = vmatprep.subr.bf16.mxu0 0
    %1632 = vmatpush1.bf16.msra.mxu0 0
    %1633 = vmatprep.subr.bf16.mxu0 0
    %1634 = vmatpush1.bf16.msra.mxu0 0
    %1635 = vmatprep.subr.bf16.mxu0 0
    %1636 = vmatpush1.bf16.msra.mxu0 0
    %1637 = vmatprep.subr.bf16.mxu0 0
    %1638 = vmatpush1.bf16.msra.mxu0 0
    %1639 = vmatprep.subr.bf16.mxu0 0
    %1640 = vmatpush1.bf16.msra.mxu0 0
    %1641 = vmatprep.subr.bf16.mxu0 0
    %1642 = vmatpush1.bf16.msra.mxu0 0
    %1643 = vmatprep.subr.bf16.mxu0 0
    %1644 = vmatpush1.bf16.msra.mxu0 0
    %1645 = vmatprep.mubr.bf16.mxu0 0
    %1646 = vmatmul.mubr.bf16.gmra.mrb[0].mxu0 %v1549
    %v1647 = vpop.f32.mrb[0].mxu0
    %v1648 = vadd.f32 %v1600, %v1647
    %v1649 = vpop.f32.mrb[0].mxu0
    %v1650 = vpop.f32.mrb[0].mxu0
    %v1651 = vadd.f32 %v1600, %v1650
    %v1652 = vpop.f32.mrb[0].mxu0
    %1653 = vdwg.mxu0
    %v1654 = vpack.c.bf16 %v1651, %v1648
    %v1656 = vsel %vm453, %v1526, 0
    %v1659 = vsel %vm453, %v1592, 0
    %1661 = vmatprep.subr.bf16.mxu0 0
    %1662 = vmatpush1.bf16.xpose.msra.mxu0 %v1659
    %1663 = vmatprep.subr.bf16.mxu0 0
    %1664 = vmatpush1.bf16.xpose.msra.mxu0 0
    %1665 = vmatprep.subr.bf16.mxu0 0
    %1666 = vmatpush1.bf16.xpose.msra.mxu0 0
    %1667 = vmatprep.subr.bf16.mxu0 0
    %1668 = vmatpush1.bf16.xpose.msra.mxu0 0
    %1669 = vmatprep.subr.bf16.mxu0 0
    %1670 = vmatpush1.bf16.xpose.msra.mxu0 0
    %1671 = vmatprep.subr.bf16.mxu0 0
    %1672 = vmatpush1.bf16.xpose.msra.mxu0 0
    %1673 = vmatprep.subr.bf16.mxu0 0
    %1674 = vmatpush1.bf16.xpose.msra.mxu0 0
    %1675 = vmatprep.subr.bf16.mxu0 0
    %1676 = vmatpush1.bf16.xpose.msra.mxu0 0
    %1677 = vmatprep.subr.bf16.mxu0 0
    %1678 = vmatpush1.bf16.xpose.msra.mxu0 0
    %1679 = vmatprep.subr.bf16.mxu0 0
    %1680 = vmatpush1.bf16.xpose.msra.mxu0 0
    %1681 = vmatprep.subr.bf16.mxu0 0
    %1682 = vmatpush1.bf16.xpose.msra.mxu0 0
    %1683 = vmatprep.subr.bf16.mxu0 0
    %1684 = vmatpush1.bf16.xpose.msra.mxu0 0
    %1685 = vmatprep.subr.bf16.mxu0 0
    %1686 = vmatpush1.bf16.xpose.msra.mxu0 0
    %1687 = vmatprep.subr.bf16.mxu0 0
    %1688 = vmatpush1.bf16.xpose.msra.mxu0 0
    %1689 = vmatprep.subr.bf16.mxu0 0
    %1690 = vmatpush1.bf16.xpose.msra.mxu0 0
    %1691 = vmatprep.subr.bf16.mxu0 0
    %1692 = vmatpush1.bf16.xpose.msra.mxu0 0
    %1693 = vmatprep.mubr.bf16.mxu0 0
    %1694 = vmatmul.mubr.bf16.gmra.mrb[0].mxu0 %v1656
    %v1695 = vpop.f32.mrb[0].mxu0
    %v1696 = vadd.f32 0.0, %v1695
    %v1697 = vpop.f32.mrb[0].mxu0
    %v1698 = vpop.f32.mrb[0].mxu0
    %v1699 = vpop.f32.mrb[0].mxu0
    %1700 = vdwg.mxu0
    %v1701 = vmul.f32 %v1696, 0.35355338
    %v1702 = vsel %vm453, %v1701, -inf
    %1703 = vmax.xlane.f32.xlu0 %v1702
    %v1704 = vpop.xlane.xlu0 %1703
    %v1705 = vsub.f32 %v1701, %v1704
    %v1706 = vmul.f32 %v1705, 1.442695
    %v1707 = vpow.pop %v1706
    %v1708 = vsel %vm453, %v1707, 0.0
    %1709 = vadd.xlane.f32.xlu0 %v1708
    %v1710 = vpop.xlane.xlu0 %1709
    %v1711 = vrcp.pop %v1710
    %v1712 = vmul.f32 %v1707, %v1711
    %v1713 = vpack.c.bf16 %v1712, %v1712
    %v1715 = vsel %vm453, %v1713, 0
    %v1718 = vsel %vm516, %v1654, 0
    %1720 = vmatprep.subr.bf16.mxu0 0
    %1721 = vmatpush1.bf16.msra.mxu0 %v1718
    %1722 = vmatprep.subr.bf16.mxu0 0
    %1723 = vmatpush1.bf16.msra.mxu0 0
    %1724 = vmatprep.subr.bf16.mxu0 0
    %1725 = vmatpush1.bf16.msra.mxu0 0
    %1726 = vmatprep.subr.bf16.mxu0 0
    %1727 = vmatpush1.bf16.msra.mxu0 0
    %1728 = vmatprep.subr.bf16.mxu0 0
    %1729 = vmatpush1.bf16.msra.mxu0 0
    %1730 = vmatprep.subr.bf16.mxu0 0
    %1731 = vmatpush1.bf16.msra.mxu0 0
    %1732 = vmatprep.subr.bf16.mxu0 0
    %1733 = vmatpush1.bf16.msra.mxu0 0
    %1734 = vmatprep.subr.bf16.mxu0 0
    %1735 = vmatpush1.bf16.msra.mxu0 0
    %1736 = vmatprep.subr.bf16.mxu0 0
    %1737 = vmatpush1.bf16.msra.mxu0 0
    %1738 = vmatprep.subr.bf16.mxu0 0
    %1739 = vmatpush1.bf16.msra.mxu0 0
    %1740 = vmatprep.subr.bf16.mxu0 0
    %1741 = vmatpush1.bf16.msra.mxu0 0
    %1742 = vmatprep.subr.bf16.mxu0 0
    %1743 = vmatpush1.bf16.msra.mxu0 0
    %1744 = vmatprep.subr.bf16.mxu0 0
    %1745 = vmatpush1.bf16.msra.mxu0 0
    %1746 = vmatprep.subr.bf16.mxu0 0
    %1747 = vmatpush1.bf16.msra.mxu0 0
    %1748 = vmatprep.subr.bf16.mxu0 0
    %1749 = vmatpush1.bf16.msra.mxu0 0
    %1750 = vmatprep.subr.bf16.mxu0 0
    %1751 = vmatpush1.bf16.msra.mxu0 0
    %1752 = vmatprep.mubr.bf16.mxu0 0
    %1753 = vmatmul.mubr.bf16.gmra.mrb[0].mxu0 %v1715
    %v1754 = vpop.f32.mrb[0].mxu0
    %v1755 = vadd.f32 0.0, %v1754
    %v1756 = vpop.f32.mrb[0].mxu0
    %v1757 = vpop.f32.mrb[0].mxu0
    %v1758 = vpop.f32.mrb[0].mxu0
    %1759 = vdwg.mxu0
    %1760 = vst.msk [vmem:[#allocation2] sm:$0xff] %vm453, %v1755
    %1762 = vrot.lane.b32.xlu0 %v1526, 120
    %v1763 = vpop.permute.xlu0 %1762
    %1765 = vrot.lane.b32.xlu0 %v1592, 120
    %v1766 = vpop.permute.xlu0 %1765
    %v1768 = vsel %vm453, %v1763, 0
    %v1771 = vsel %vm453, %v1766, 0
    %1773 = vmatprep.subr.bf16.mxu0 0
    %1774 = vmatpush1.bf16.xpose.msra.mxu0 %v1771
    %1775 = vmatprep.subr.bf16.mxu0 0
    %1776 = vmatpush1.bf16.xpose.msra.mxu0 0
    %1777 = vmatprep.subr.bf16.mxu0 0
    %1778 = vmatpush1.bf16.xpose.msra.mxu0 0
    %1779 = vmatprep.subr.bf16.mxu0 0
    %1780 = vmatpush1.bf16.xpose.msra.mxu0 0
    %1781 = vmatprep.subr.bf16.mxu0 0
    %1782 = vmatpush1.bf16.xpose.msra.mxu0 0
    %1783 = vmatprep.subr.bf16.mxu0 0
    %1784 = vmatpush1.bf16.xpose.msra.mxu0 0
    %1785 = vmatprep.subr.bf16.mxu0 0
    %1786 = vmatpush1.bf16.xpose.msra.mxu0 0
    %1787 = vmatprep.subr.bf16.mxu0 0
    %1788 = vmatpush1.bf16.xpose.msra.mxu0 0
    %1789 = vmatprep.subr.bf16.mxu0 0
    %1790 = vmatpush1.bf16.xpose.msra.mxu0 0
    %1791 = vmatprep.subr.bf16.mxu0 0
    %1792 = vmatpush1.bf16.xpose.msra.mxu0 0
    %1793 = vmatprep.subr.bf16.mxu0 0
    %1794 = vmatpush1.bf16.xpose.msra.mxu0 0
    %1795 = vmatprep.subr.bf16.mxu0 0
    %1796 = vmatpush1.bf16.xpose.msra.mxu0 0
    %1797 = vmatprep.subr.bf16.mxu0 0
    %1798 = vmatpush1.bf16.xpose.msra.mxu0 0
    %1799 = vmatprep.subr.bf16.mxu0 0
    %1800 = vmatpush1.bf16.xpose.msra.mxu0 0
    %1801 = vmatprep.subr.bf16.mxu0 0
    %1802 = vmatpush1.bf16.xpose.msra.mxu0 0
    %1803 = vmatprep.subr.bf16.mxu0 0
    %1804 = vmatpush1.bf16.xpose.msra.mxu0 0
    %1805 = vmatprep.mubr.bf16.mxu0 0
    %1806 = vmatmul.mubr.bf16.gmra.mrb[0].mxu0 %v1768
    %v1807 = vpop.f32.mrb[0].mxu0
    %v1808 = vadd.f32 0.0, %v1807
    %v1809 = vpop.f32.mrb[0].mxu0
    %v1810 = vpop.f32.mrb[0].mxu0
    %v1811 = vpop.f32.mrb[0].mxu0
    %1812 = vdwg.mxu0
    %v1813 = vmul.f32 %v1808, 0.35355338
    %v1814 = vsel %vm453, %v1813, -inf
    %1815 = vmax.xlane.f32.xlu0 %v1814
    %v1816 = vpop.xlane.xlu0 %1815
    %v1817 = vsub.f32 %v1813, %v1816
    %v1818 = vmul.f32 %v1817, 1.442695
    %v1819 = vpow.pop %v1818
    %v1820 = vsel %vm453, %v1819, 0.0
    %1821 = vadd.xlane.f32.xlu0 %v1820
    %v1822 = vpop.xlane.xlu0 %1821
    %v1823 = vrcp.pop %v1822
    %v1824 = vmul.f32 %v1819, %v1823
    %v1825 = vpack.c.bf16 %v1824, %v1824
    %1827 = vrot.lane.b32.xlu0 %v1654, 120
    %v1828 = vpop.permute.xlu0 %1827
    %v1830 = vsel %vm453, %v1825, 0
    %v1833 = vsel %vm516, %v1828, 0
    %1835 = vmatprep.subr.bf16.mxu0 0
    %1836 = vmatpush1.bf16.msra.mxu0 %v1833
    %1837 = vmatprep.subr.bf16.mxu0 0
    %1838 = vmatpush1.bf16.msra.mxu0 0
    %1839 = vmatprep.subr.bf16.mxu0 0
    %1840 = vmatpush1.bf16.msra.mxu0 0
    %1841 = vmatprep.subr.bf16.mxu0 0
    %1842 = vmatpush1.bf16.msra.mxu0 0
    %1843 = vmatprep.subr.bf16.mxu0 0
    %1844 = vmatpush1.bf16.msra.mxu0 0
    %1845 = vmatprep.subr.bf16.mxu0 0
    %1846 = vmatpush1.bf16.msra.mxu0 0
    %1847 = vmatprep.subr.bf16.mxu0 0
    %1848 = vmatpush1.bf16.msra.mxu0 0
    %1849 = vmatprep.subr.bf16.mxu0 0
    %1850 = vmatpush1.bf16.msra.mxu0 0
    %1851 = vmatprep.subr.bf16.mxu0 0
    %1852 = vmatpush1.bf16.msra.mxu0 0
    %1853 = vmatprep.subr.bf16.mxu0 0
    %1854 = vmatpush1.bf16.msra.mxu0 0
    %1855 = vmatprep.subr.bf16.mxu0 0
    %1856 = vmatpush1.bf16.msra.mxu0 0
    %1857 = vmatprep.subr.bf16.mxu0 0
    %1858 = vmatpush1.bf16.msra.mxu0 0
    %1859 = vmatprep.subr.bf16.mxu0 0
    %1860 = vmatpush1.bf16.msra.mxu0 0
    %1861 = vmatprep.subr.bf16.mxu0 0
    %1862 = vmatpush1.bf16.msra.mxu0 0
    %1863 = vmatprep.subr.bf16.mxu0 0
    %1864 = vmatpush1.bf16.msra.mxu0 0
    %1865 = vmatprep.subr.bf16.mxu0 0
    %1866 = vmatpush1.bf16.msra.mxu0 0
    %1867 = vmatprep.mubr.bf16.mxu0 0
    %1868 = vmatmul.mubr.bf16.gmra.mrb[0].mxu0 %v1830
    %v1869 = vpop.f32.mrb[0].mxu0
    %v1870 = vadd.f32 0.0, %v1869
    %v1871 = vpop.f32.mrb[0].mxu0
    %v1872 = vpop.f32.mrb[0].mxu0
    %v1873 = vpop.f32.mrb[0].mxu0
    %1874 = vdwg.mxu0
    %1876 = vrot.lane.b32.xlu0 %v1870, 8
    %v1877 = vpop.permute.xlu0 %1876
    %1879 = vst.msk [vmem:[#allocation2] sm:$0xff] %vm679, %v1877
    %1880 = vrot.lane.b32.xlu0 %v1526, 112
    %v1881 = vpop.permute.xlu0 %1880
    %1882 = vrot.lane.b32.xlu0 %v1592, 112
    %v1883 = vpop.permute.xlu0 %1882
    %v1885 = vsel %vm453, %v1881, 0
    %v1888 = vsel %vm453, %v1883, 0
    %1890 = vmatprep.subr.bf16.mxu0 0
    %1891 = vmatpush1.bf16.xpose.msra.mxu0 %v1888
    %1892 = vmatprep.subr.bf16.mxu0 0
    %1893 = vmatpush1.bf16.xpose.msra.mxu0 0
    %1894 = vmatprep.subr.bf16.mxu0 0
    %1895 = vmatpush1.bf16.xpose.msra.mxu0 0
    %1896 = vmatprep.subr.bf16.mxu0 0
    %1897 = vmatpush1.bf16.xpose.msra.mxu0 0
    %1898 = vmatprep.subr.bf16.mxu0 0
    %1899 = vmatpush1.bf16.xpose.msra.mxu0 0
    %1900 = vmatprep.subr.bf16.mxu0 0
    %1901 = vmatpush1.bf16.xpose.msra.mxu0 0
    %1902 = vmatprep.subr.bf16.mxu0 0
    %1903 = vmatpush1.bf16.xpose.msra.mxu0 0
    %1904 = vmatprep.subr.bf16.mxu0 0
    %1905 = vmatpush1.bf16.xpose.msra.mxu0 0
    %1906 = vmatprep.subr.bf16.mxu0 0
    %1907 = vmatpush1.bf16.xpose.msra.mxu0 0
    %1908 = vmatprep.subr.bf16.mxu0 0
    %1909 = vmatpush1.bf16.xpose.msra.mxu0 0
    %1910 = vmatprep.subr.bf16.mxu0 0
    %1911 = vmatpush1.bf16.xpose.msra.mxu0 0
    %1912 = vmatprep.subr.bf16.mxu0 0
    %1913 = vmatpush1.bf16.xpose.msra.mxu0 0
    %1914 = vmatprep.subr.bf16.mxu0 0
    %1915 = vmatpush1.bf16.xpose.msra.mxu0 0
    %1916 = vmatprep.subr.bf16.mxu0 0
    %1917 = vmatpush1.bf16.xpose.msra.mxu0 0
    %1918 = vmatprep.subr.bf16.mxu0 0
    %1919 = vmatpush1.bf16.xpose.msra.mxu0 0
    %1920 = vmatprep.subr.bf16.mxu0 0
    %1921 = vmatpush1.bf16.xpose.msra.mxu0 0
    %1922 = vmatprep.mubr.bf16.mxu0 0
    %1923 = vmatmul.mubr.bf16.gmra.mrb[0].mxu0 %v1885
    %v1924 = vpop.f32.mrb[0].mxu0
    %v1925 = vadd.f32 0.0, %v1924
    %v1926 = vpop.f32.mrb[0].mxu0
    %v1927 = vpop.f32.mrb[0].mxu0
    %v1928 = vpop.f32.mrb[0].mxu0
    %1929 = vdwg.mxu0
    %v1930 = vmul.f32 %v1925, 0.35355338
    %v1931 = vsel %vm453, %v1930, -inf
    %1932 = vmax.xlane.f32.xlu0 %v1931
    %v1933 = vpop.xlane.xlu0 %1932
    %v1934 = vsub.f32 %v1930, %v1933
    %v1935 = vmul.f32 %v1934, 1.442695
    %v1936 = vpow.pop %v1935
    %v1937 = vsel %vm453, %v1936, 0.0
    %1938 = vadd.xlane.f32.xlu0 %v1937
    %v1939 = vpop.xlane.xlu0 %1938
    %v1940 = vrcp.pop %v1939
    %v1941 = vmul.f32 %v1936, %v1940
    %v1942 = vpack.c.bf16 %v1941, %v1941
    %1943 = vrot.lane.b32.xlu0 %v1654, 112
    %v1944 = vpop.permute.xlu0 %1943
    %v1946 = vsel %vm453, %v1942, 0
    %v1949 = vsel %vm516, %v1944, 0
    %1951 = vmatprep.subr.bf16.mxu0 0
    %1952 = vmatpush1.bf16.msra.mxu0 %v1949
    %1953 = vmatprep.subr.bf16.mxu0 0
    %1954 = vmatpush1.bf16.msra.mxu0 0
    %1955 = vmatprep.subr.bf16.mxu0 0
    %1956 = vmatpush1.bf16.msra.mxu0 0
    %1957 = vmatprep.subr.bf16.mxu0 0
    %1958 = vmatpush1.bf16.msra.mxu0 0
    %1959 = vmatprep.subr.bf16.mxu0 0
    %1960 = vmatpush1.bf16.msra.mxu0 0
    %1961 = vmatprep.subr.bf16.mxu0 0
    %1962 = vmatpush1.bf16.msra.mxu0 0
    %1963 = vmatprep.subr.bf16.mxu0 0
    %1964 = vmatpush1.bf16.msra.mxu0 0
    %1965 = vmatprep.subr.bf16.mxu0 0
    %1966 = vmatpush1.bf16.msra.mxu0 0
    %1967 = vmatprep.subr.bf16.mxu0 0
    %1968 = vmatpush1.bf16.msra.mxu0 0
    %1969 = vmatprep.subr.bf16.mxu0 0
    %1970 = vmatpush1.bf16.msra.mxu0 0
    %1971 = vmatprep.subr.bf16.mxu0 0
    %1972 = vmatpush1.bf16.msra.mxu0 0
    %1973 = vmatprep.subr.bf16.mxu0 0
    %1974 = vmatpush1.bf16.msra.mxu0 0
    %1975 = vmatprep.subr.bf16.mxu0 0
    %1976 = vmatpush1.bf16.msra.mxu0 0
    %1977 = vmatprep.subr.bf16.mxu0 0
    %1978 = vmatpush1.bf16.msra.mxu0 0
    %1979 = vmatprep.subr.bf16.mxu0 0
    %1980 = vmatpush1.bf16.msra.mxu0 0
    %1981 = vmatprep.subr.bf16.mxu0 0
    %1982 = vmatpush1.bf16.msra.mxu0 0
    %1983 = vmatprep.mubr.bf16.mxu0 0
    %1984 = vmatmul.mubr.bf16.gmra.mrb[0].mxu0 %v1946
    %v1985 = vpop.f32.mrb[0].mxu0
    %v1986 = vadd.f32 0.0, %v1985
    %v1987 = vpop.f32.mrb[0].mxu0
    %v1988 = vpop.f32.mrb[0].mxu0
    %v1989 = vpop.f32.mrb[0].mxu0
    %1990 = vdwg.mxu0
    %1992 = vrot.lane.b32.xlu0 %v1986, 16
    %v1993 = vpop.permute.xlu0 %1992
    %1995 = vst.msk [vmem:[#allocation2] sm:$0xff] %vm796, %v1993
    %1996 = vrot.lane.b32.xlu0 %v1526, 104
    %v1997 = vpop.permute.xlu0 %1996
    %1998 = vrot.lane.b32.xlu0 %v1592, 104
    %v1999 = vpop.permute.xlu0 %1998
    %v2001 = vsel %vm453, %v1997, 0
    %v2004 = vsel %vm453, %v1999, 0
    %2006 = vmatprep.subr.bf16.mxu0 0
    %2007 = vmatpush1.bf16.xpose.msra.mxu0 %v2004
    %2008 = vmatprep.subr.bf16.mxu0 0
    %2009 = vmatpush1.bf16.xpose.msra.mxu0 0
    %2010 = vmatprep.subr.bf16.mxu0 0
    %2011 = vmatpush1.bf16.xpose.msra.mxu0 0
    %2012 = vmatprep.subr.bf16.mxu0 0
    %2013 = vmatpush1.bf16.xpose.msra.mxu0 0
    %2014 = vmatprep.subr.bf16.mxu0 0
    %2015 = vmatpush1.bf16.xpose.msra.mxu0 0
    %2016 = vmatprep.subr.bf16.mxu0 0
    %2017 = vmatpush1.bf16.xpose.msra.mxu0 0
    %2018 = vmatprep.subr.bf16.mxu0 0
    %2019 = vmatpush1.bf16.xpose.msra.mxu0 0
    %2020 = vmatprep.subr.bf16.mxu0 0
    %2021 = vmatpush1.bf16.xpose.msra.mxu0 0
    %2022 = vmatprep.subr.bf16.mxu0 0
    %2023 = vmatpush1.bf16.xpose.msra.mxu0 0
    %2024 = vmatprep.subr.bf16.mxu0 0
    %2025 = vmatpush1.bf16.xpose.msra.mxu0 0
    %2026 = vmatprep.subr.bf16.mxu0 0
    %2027 = vmatpush1.bf16.xpose.msra.mxu0 0
    %2028 = vmatprep.subr.bf16.mxu0 0
    %2029 = vmatpush1.bf16.xpose.msra.mxu0 0
    %2030 = vmatprep.subr.bf16.mxu0 0
    %2031 = vmatpush1.bf16.xpose.msra.mxu0 0
    %2032 = vmatprep.subr.bf16.mxu0 0
    %2033 = vmatpush1.bf16.xpose.msra.mxu0 0
    %2034 = vmatprep.subr.bf16.mxu0 0
    %2035 = vmatpush1.bf16.xpose.msra.mxu0 0
    %2036 = vmatprep.subr.bf16.mxu0 0
    %2037 = vmatpush1.bf16.xpose.msra.mxu0 0
    %2038 = vmatprep.mubr.bf16.mxu0 0
    %2039 = vmatmul.mubr.bf16.gmra.mrb[0].mxu0 %v2001
    %v2040 = vpop.f32.mrb[0].mxu0
    %v2041 = vadd.f32 0.0, %v2040
    %v2042 = vpop.f32.mrb[0].mxu0
    %v2043 = vpop.f32.mrb[0].mxu0
    %v2044 = vpop.f32.mrb[0].mxu0
    %2045 = vdwg.mxu0
    %v2046 = vmul.f32 %v2041, 0.35355338
    %v2047 = vsel %vm453, %v2046, -inf
    %2048 = vmax.xlane.f32.xlu0 %v2047
    %v2049 = vpop.xlane.xlu0 %2048
    %v2050 = vsub.f32 %v2046, %v2049
    %v2051 = vmul.f32 %v2050, 1.442695
    %v2052 = vpow.pop %v2051
    %v2053 = vsel %vm453, %v2052, 0.0
    %2054 = vadd.xlane.f32.xlu0 %v2053
    %v2055 = vpop.xlane.xlu0 %2054
    %v2056 = vrcp.pop %v2055
    %v2057 = vmul.f32 %v2052, %v2056
    %v2058 = vpack.c.bf16 %v2057, %v2057
    %2059 = vrot.lane.b32.xlu0 %v1654, 104
    %v2060 = vpop.permute.xlu0 %2059
    %v2062 = vsel %vm453, %v2058, 0
    %v2065 = vsel %vm516, %v2060, 0
    %2067 = vmatprep.subr.bf16.mxu0 0
    %2068 = vmatpush1.bf16.msra.mxu0 %v2065
    %2069 = vmatprep.subr.bf16.mxu0 0
    %2070 = vmatpush1.bf16.msra.mxu0 0
    %2071 = vmatprep.subr.bf16.mxu0 0
    %2072 = vmatpush1.bf16.msra.mxu0 0
    %2073 = vmatprep.subr.bf16.mxu0 0
    %2074 = vmatpush1.bf16.msra.mxu0 0
    %2075 = vmatprep.subr.bf16.mxu0 0
    %2076 = vmatpush1.bf16.msra.mxu0 0
    %2077 = vmatprep.subr.bf16.mxu0 0
    %2078 = vmatpush1.bf16.msra.mxu0 0
    %2079 = vmatprep.subr.bf16.mxu0 0
    %2080 = vmatpush1.bf16.msra.mxu0 0
    %2081 = vmatprep.subr.bf16.mxu0 0
    %2082 = vmatpush1.bf16.msra.mxu0 0
    %2083 = vmatprep.subr.bf16.mxu0 0
    %2084 = vmatpush1.bf16.msra.mxu0 0
    %2085 = vmatprep.subr.bf16.mxu0 0
    %2086 = vmatpush1.bf16.msra.mxu0 0
    %2087 = vmatprep.subr.bf16.mxu0 0
    %2088 = vmatpush1.bf16.msra.mxu0 0
    %2089 = vmatprep.subr.bf16.mxu0 0
    %2090 = vmatpush1.bf16.msra.mxu0 0
    %2091 = vmatprep.subr.bf16.mxu0 0
    %2092 = vmatpush1.bf16.msra.mxu0 0
    %2093 = vmatprep.subr.bf16.mxu0 0
    %2094 = vmatpush1.bf16.msra.mxu0 0
    %2095 = vmatprep.subr.bf16.mxu0 0
    %2096 = vmatpush1.bf16.msra.mxu0 0
    %2097 = vmatprep.subr.bf16.mxu0 0
    %2098 = vmatpush1.bf16.msra.mxu0 0
    %2099 = vmatprep.mubr.bf16.mxu0 0
    %2100 = vmatmul.mubr.bf16.gmra.mrb[0].mxu0 %v2062
    %v2101 = vpop.f32.mrb[0].mxu0
    %v2102 = vadd.f32 0.0, %v2101
    %v2103 = vpop.f32.mrb[0].mxu0
    %v2104 = vpop.f32.mrb[0].mxu0
    %v2105 = vpop.f32.mrb[0].mxu0
    %2106 = vdwg.mxu0
    %2108 = vrot.lane.b32.xlu0 %v2102, 24
    %v2109 = vpop.permute.xlu0 %2108
    %2111 = vst.msk [vmem:[#allocation2] sm:$0xff] %vm913, %v2109
    %v2112 = vrot.slane %v1526, 4
    %v2113 = vrot.slane %v1592, 4
    %v2115 = vsel %vm453, %v2112, 0
    %v2118 = vsel %vm453, %v2113, 0
    %2120 = vmatprep.subr.bf16.mxu0 0
    %2121 = vmatpush1.bf16.xpose.msra.mxu0 %v2118
    %2122 = vmatprep.subr.bf16.mxu0 0
    %2123 = vmatpush1.bf16.xpose.msra.mxu0 0
    %2124 = vmatprep.subr.bf16.mxu0 0
    %2125 = vmatpush1.bf16.xpose.msra.mxu0 0
    %2126 = vmatprep.subr.bf16.mxu0 0
    %2127 = vmatpush1.bf16.xpose.msra.mxu0 0
    %2128 = vmatprep.subr.bf16.mxu0 0
    %2129 = vmatpush1.bf16.xpose.msra.mxu0 0
    %2130 = vmatprep.subr.bf16.mxu0 0
    %2131 = vmatpush1.bf16.xpose.msra.mxu0 0
    %2132 = vmatprep.subr.bf16.mxu0 0
    %2133 = vmatpush1.bf16.xpose.msra.mxu0 0
    %2134 = vmatprep.subr.bf16.mxu0 0
    %2135 = vmatpush1.bf16.xpose.msra.mxu0 0
    %2136 = vmatprep.subr.bf16.mxu0 0
    %2137 = vmatpush1.bf16.xpose.msra.mxu0 0
    %2138 = vmatprep.subr.bf16.mxu0 0
    %2139 = vmatpush1.bf16.xpose.msra.mxu0 0
    %2140 = vmatprep.subr.bf16.mxu0 0
    %2141 = vmatpush1.bf16.xpose.msra.mxu0 0
    %2142 = vmatprep.subr.bf16.mxu0 0
    %2143 = vmatpush1.bf16.xpose.msra.mxu0 0
    %2144 = vmatprep.subr.bf16.mxu0 0
    %2145 = vmatpush1.bf16.xpose.msra.mxu0 0
    %2146 = vmatprep.subr.bf16.mxu0 0
    %2147 = vmatpush1.bf16.xpose.msra.mxu0 0
    %2148 = vmatprep.subr.bf16.mxu0 0
    %2149 = vmatpush1.bf16.xpose.msra.mxu0 0
    %2150 = vmatprep.subr.bf16.mxu0 0
    %2151 = vmatpush1.bf16.xpose.msra.mxu0 0
    %2152 = vmatprep.mubr.bf16.mxu0 0
    %2153 = vmatmul.mubr.bf16.gmra.mrb[0].mxu0 %v2115
    %v2154 = vpop.f32.mrb[0].mxu0
    %v2155 = vadd.f32 0.0, %v2154
    %v2156 = vpop.f32.mrb[0].mxu0
    %v2157 = vpop.f32.mrb[0].mxu0
    %v2158 = vpop.f32.mrb[0].mxu0
    %2159 = vdwg.mxu0
    %v2160 = vmul.f32 %v2155, 0.35355338
    %v2161 = vsel %vm453, %v2160, -inf
    %2162 = vmax.xlane.f32.xlu0 %v2161
    %v2163 = vpop.xlane.xlu0 %2162
    %v2164 = vsub.f32 %v2160, %v2163
    %v2165 = vmul.f32 %v2164, 1.442695
    %v2166 = vpow.pop %v2165
    %v2167 = vsel %vm453, %v2166, 0.0
    %2168 = vadd.xlane.f32.xlu0 %v2167
    %v2169 = vpop.xlane.xlu0 %2168
    %v2170 = vrcp.pop %v2169
    %v2171 = vmul.f32 %v2166, %v2170
    %v2172 = vpack.c.bf16 %v2171, %v2171
    %v2173 = vrot.slane %v1654, 4
    %v2175 = vsel %vm453, %v2172, 0
    %v2178 = vsel %vm516, %v2173, 0
    %2180 = vmatprep.subr.bf16.mxu0 0
    %2181 = vmatpush1.bf16.msra.mxu0 %v2178
    %2182 = vmatprep.subr.bf16.mxu0 0
    %2183 = vmatpush1.bf16.msra.mxu0 0
    %2184 = vmatprep.subr.bf16.mxu0 0
    %2185 = vmatpush1.bf16.msra.mxu0 0
    %2186 = vmatprep.subr.bf16.mxu0 0
    %2187 = vmatpush1.bf16.msra.mxu0 0
    %2188 = vmatprep.subr.bf16.mxu0 0
    %2189 = vmatpush1.bf16.msra.mxu0 0
    %2190 = vmatprep.subr.bf16.mxu0 0
    %2191 = vmatpush1.bf16.msra.mxu0 0
    %2192 = vmatprep.subr.bf16.mxu0 0
    %2193 = vmatpush1.bf16.msra.mxu0 0
    %2194 = vmatprep.subr.bf16.mxu0 0
    %2195 = vmatpush1.bf16.msra.mxu0 0
    %2196 = vmatprep.subr.bf16.mxu0 0
    %2197 = vmatpush1.bf16.msra.mxu0 0
    %2198 = vmatprep.subr.bf16.mxu0 0
    %2199 = vmatpush1.bf16.msra.mxu0 0
    %2200 = vmatprep.subr.bf16.mxu0 0
    %2201 = vmatpush1.bf16.msra.mxu0 0
    %2202 = vmatprep.subr.bf16.mxu0 0
    %2203 = vmatpush1.bf16.msra.mxu0 0
    %2204 = vmatprep.subr.bf16.mxu0 0
    %2205 = vmatpush1.bf16.msra.mxu0 0
    %2206 = vmatprep.subr.bf16.mxu0 0
    %2207 = vmatpush1.bf16.msra.mxu0 0
    %2208 = vmatprep.subr.bf16.mxu0 0
    %2209 = vmatpush1.bf16.msra.mxu0 0
    %2210 = vmatprep.subr.bf16.mxu0 0
    %2211 = vmatpush1.bf16.msra.mxu0 0
    %2212 = vmatprep.mubr.bf16.mxu0 0
    %2213 = vmatmul.mubr.bf16.gmra.mrb[0].mxu0 %v2175
    %v2214 = vpop.f32.mrb[0].mxu0
    %v2215 = vadd.f32 0.0, %v2214
    %v2216 = vpop.f32.mrb[0].mxu0
    %v2217 = vpop.f32.mrb[0].mxu0
    %v2218 = vpop.f32.mrb[0].mxu0
    %2219 = vdwg.mxu0
    %2220 = vst.msk [vmem:[#allocation2 + $0x8] sm:$0xff] %vm453, %v2215
    %2221 = vrot.lane.b32.xlu0 %v2112, 120
    %v2222 = vpop.permute.xlu0 %2221
    %2223 = vrot.lane.b32.xlu0 %v2113, 120
    %v2224 = vpop.permute.xlu0 %2223
    %v2226 = vsel %vm453, %v2222, 0
    %v2229 = vsel %vm453, %v2224, 0
    %2231 = vmatprep.subr.bf16.mxu0 0
    %2232 = vmatpush1.bf16.xpose.msra.mxu0 %v2229
    %2233 = vmatprep.subr.bf16.mxu0 0
    %2234 = vmatpush1.bf16.xpose.msra.mxu0 0
    %2235 = vmatprep.subr.bf16.mxu0 0
    %2236 = vmatpush1.bf16.xpose.msra.mxu0 0
    %2237 = vmatprep.subr.bf16.mxu0 0
    %2238 = vmatpush1.bf16.xpose.msra.mxu0 0
    %2239 = vmatprep.subr.bf16.mxu0 0
    %2240 = vmatpush1.bf16.xpose.msra.mxu0 0
    %2241 = vmatprep.subr.bf16.mxu0 0
    %2242 = vmatpush1.bf16.xpose.msra.mxu0 0
    %2243 = vmatprep.subr.bf16.mxu0 0
    %2244 = vmatpush1.bf16.xpose.msra.mxu0 0
    %2245 = vmatprep.subr.bf16.mxu0 0
    %2246 = vmatpush1.bf16.xpose.msra.mxu0 0
    %2247 = vmatprep.subr.bf16.mxu0 0
    %2248 = vmatpush1.bf16.xpose.msra.mxu0 0
    %2249 = vmatprep.subr.bf16.mxu0 0
    %2250 = vmatpush1.bf16.xpose.msra.mxu0 0
    %2251 = vmatprep.subr.bf16.mxu0 0
    %2252 = vmatpush1.bf16.xpose.msra.mxu0 0
    %2253 = vmatprep.subr.bf16.mxu0 0
    %2254 = vmatpush1.bf16.xpose.msra.mxu0 0
    %2255 = vmatprep.subr.bf16.mxu0 0
    %2256 = vmatpush1.bf16.xpose.msra.mxu0 0
    %2257 = vmatprep.subr.bf16.mxu0 0
    %2258 = vmatpush1.bf16.xpose.msra.mxu0 0
    %2259 = vmatprep.subr.bf16.mxu0 0
    %2260 = vmatpush1.bf16.xpose.msra.mxu0 0
    %2261 = vmatprep.subr.bf16.mxu0 0
    %2262 = vmatpush1.bf16.xpose.msra.mxu0 0
    %2263 = vmatprep.mubr.bf16.mxu0 0
    %2264 = vmatmul.mubr.bf16.gmra.mrb[0].mxu0 %v2226
    %v2265 = vpop.f32.mrb[0].mxu0
    %v2266 = vadd.f32 0.0, %v2265
    %v2267 = vpop.f32.mrb[0].mxu0
    %v2268 = vpop.f32.mrb[0].mxu0
    %v2269 = vpop.f32.mrb[0].mxu0
    %2270 = vdwg.mxu0
    %v2271 = vmul.f32 %v2266, 0.35355338
    %v2272 = vsel %vm453, %v2271, -inf
    %2273 = vmax.xlane.f32.xlu0 %v2272
    %v2274 = vpop.xlane.xlu0 %2273
    %v2275 = vsub.f32 %v2271, %v2274
    %v2276 = vmul.f32 %v2275, 1.442695
    %v2277 = vpow.pop %v2276
    %v2278 = vsel %vm453, %v2277, 0.0
    %2279 = vadd.xlane.f32.xlu0 %v2278
    %v2280 = vpop.xlane.xlu0 %2279
    %v2281 = vrcp.pop %v2280
    %v2282 = vmul.f32 %v2277, %v2281
    %v2283 = vpack.c.bf16 %v2282, %v2282
    %2284 = vrot.lane.b32.xlu0 %v2173, 120
    %v2285 = vpop.permute.xlu0 %2284
    %v2287 = vsel %vm453, %v2283, 0
    %v2290 = vsel %vm516, %v2285, 0
    %2292 = vmatprep.subr.bf16.mxu0 0
    %2293 = vmatpush1.bf16.msra.mxu0 %v2290
    %2294 = vmatprep.subr.bf16.mxu0 0
    %2295 = vmatpush1.bf16.msra.mxu0 0
    %2296 = vmatprep.subr.bf16.mxu0 0
    %2297 = vmatpush1.bf16.msra.mxu0 0
    %2298 = vmatprep.subr.bf16.mxu0 0
    %2299 = vmatpush1.bf16.msra.mxu0 0
    %2300 = vmatprep.subr.bf16.mxu0 0
    %2301 = vmatpush1.bf16.msra.mxu0 0
    %2302 = vmatprep.subr.bf16.mxu0 0
    %2303 = vmatpush1.bf16.msra.mxu0 0
    %2304 = vmatprep.subr.bf16.mxu0 0
    %2305 = vmatpush1.bf16.msra.mxu0 0
    %2306 = vmatprep.subr.bf16.mxu0 0
    %2307 = vmatpush1.bf16.msra.mxu0 0
    %2308 = vmatprep.subr.bf16.mxu0 0
    %2309 = vmatpush1.bf16.msra.mxu0 0
    %2310 = vmatprep.subr.bf16.mxu0 0
    %2311 = vmatpush1.bf16.msra.mxu0 0
    %2312 = vmatprep.subr.bf16.mxu0 0
    %2313 = vmatpush1.bf16.msra.mxu0 0
    %2314 = vmatprep.subr.bf16.mxu0 0
    %2315 = vmatpush1.bf16.msra.mxu0 0
    %2316 = vmatprep.subr.bf16.mxu0 0
    %2317 = vmatpush1.bf16.msra.mxu0 0
    %2318 = vmatprep.subr.bf16.mxu0 0
    %2319 = vmatpush1.bf16.msra.mxu0 0
    %2320 = vmatprep.subr.bf16.mxu0 0
    %2321 = vmatpush1.bf16.msra.mxu0 0
    %2322 = vmatprep.subr.bf16.mxu0 0
    %2323 = vmatpush1.bf16.msra.mxu0 0
    %2324 = vmatprep.mubr.bf16.mxu0 0
    %2325 = vmatmul.mubr.bf16.gmra.mrb[0].mxu0 %v2287
    %v2326 = vpop.f32.mrb[0].mxu0
    %v2327 = vadd.f32 0.0, %v2326
    %v2328 = vpop.f32.mrb[0].mxu0
    %v2329 = vpop.f32.mrb[0].mxu0
    %v2330 = vpop.f32.mrb[0].mxu0
    %2331 = vdwg.mxu0
    %2333 = vrot.lane.b32.xlu0 %v2327, 8
    %v2334 = vpop.permute.xlu0 %2333
    %2336 = vst.msk [vmem:[#allocation2 + $0x8] sm:$0xff] %vm679, %v2334
    %2337 = vrot.lane.b32.xlu0 %v2112, 112
    %v2338 = vpop.permute.xlu0 %2337
    %2339 = vrot.lane.b32.xlu0 %v2113, 112
    %v2340 = vpop.permute.xlu0 %2339
    %v2342 = vsel %vm453, %v2338, 0
    %v2345 = vsel %vm453, %v2340, 0
    %2347 = vmatprep.subr.bf16.mxu0 0
    %2348 = vmatpush1.bf16.xpose.msra.mxu0 %v2345
    %2349 = vmatprep.subr.bf16.mxu0 0
    %2350 = vmatpush1.bf16.xpose.msra.mxu0 0
    %2351 = vmatprep.subr.bf16.mxu0 0
    %2352 = vmatpush1.bf16.xpose.msra.mxu0 0
    %2353 = vmatprep.subr.bf16.mxu0 0
    %2354 = vmatpush1.bf16.xpose.msra.mxu0 0
    %2355 = vmatprep.subr.bf16.mxu0 0
    %2356 = vmatpush1.bf16.xpose.msra.mxu0 0
    %2357 = vmatprep.subr.bf16.mxu0 0
    %2358 = vmatpush1.bf16.xpose.msra.mxu0 0
    %2359 = vmatprep.subr.bf16.mxu0 0
    %2360 = vmatpush1.bf16.xpose.msra.mxu0 0
    %2361 = vmatprep.subr.bf16.mxu0 0
    %2362 = vmatpush1.bf16.xpose.msra.mxu0 0
    %2363 = vmatprep.subr.bf16.mxu0 0
    %2364 = vmatpush1.bf16.xpose.msra.mxu0 0
    %2365 = vmatprep.subr.bf16.mxu0 0
    %2366 = vmatpush1.bf16.xpose.msra.mxu0 0
    %2367 = vmatprep.subr.bf16.mxu0 0
    %2368 = vmatpush1.bf16.xpose.msra.mxu0 0
    %2369 = vmatprep.subr.bf16.mxu0 0
    %2370 = vmatpush1.bf16.xpose.msra.mxu0 0
    %2371 = vmatprep.subr.bf16.mxu0 0
    %2372 = vmatpush1.bf16.xpose.msra.mxu0 0
    %2373 = vmatprep.subr.bf16.mxu0 0
    %2374 = vmatpush1.bf16.xpose.msra.mxu0 0
    %2375 = vmatprep.subr.bf16.mxu0 0
    %2376 = vmatpush1.bf16.xpose.msra.mxu0 0
    %2377 = vmatprep.subr.bf16.mxu0 0
    %2378 = vmatpush1.bf16.xpose.msra.mxu0 0
    %2379 = vmatprep.mubr.bf16.mxu0 0
    %2380 = vmatmul.mubr.bf16.gmra.mrb[0].mxu0 %v2342
    %v2381 = vpop.f32.mrb[0].mxu0
    %v2382 = vadd.f32 0.0, %v2381
    %v2383 = vpop.f32.mrb[0].mxu0
    %v2384 = vpop.f32.mrb[0].mxu0
    %v2385 = vpop.f32.mrb[0].mxu0
    %2386 = vdwg.mxu0
    %v2387 = vmul.f32 %v2382, 0.35355338
    %v2388 = vsel %vm453, %v2387, -inf
    %2389 = vmax.xlane.f32.xlu0 %v2388
    %v2390 = vpop.xlane.xlu0 %2389
    %v2391 = vsub.f32 %v2387, %v2390
    %v2392 = vmul.f32 %v2391, 1.442695
    %v2393 = vpow.pop %v2392
    %v2394 = vsel %vm453, %v2393, 0.0
    %2395 = vadd.xlane.f32.xlu0 %v2394
    %v2396 = vpop.xlane.xlu0 %2395
    %v2397 = vrcp.pop %v2396
    %v2398 = vmul.f32 %v2393, %v2397
    %v2399 = vpack.c.bf16 %v2398, %v2398
    %2400 = vrot.lane.b32.xlu0 %v2173, 112
    %v2401 = vpop.permute.xlu0 %2400
    %v2403 = vsel %vm453, %v2399, 0
    %v2406 = vsel %vm516, %v2401, 0
    %2408 = vmatprep.subr.bf16.mxu0 0
    %2409 = vmatpush1.bf16.msra.mxu0 %v2406
    %2410 = vmatprep.subr.bf16.mxu0 0
    %2411 = vmatpush1.bf16.msra.mxu0 0
    %2412 = vmatprep.subr.bf16.mxu0 0
    %2413 = vmatpush1.bf16.msra.mxu0 0
    %2414 = vmatprep.subr.bf16.mxu0 0
    %2415 = vmatpush1.bf16.msra.mxu0 0
    %2416 = vmatprep.subr.bf16.mxu0 0
    %2417 = vmatpush1.bf16.msra.mxu0 0
    %2418 = vmatprep.subr.bf16.mxu0 0
    %2419 = vmatpush1.bf16.msra.mxu0 0
    %2420 = vmatprep.subr.bf16.mxu0 0
    %2421 = vmatpush1.bf16.msra.mxu0 0
    %2422 = vmatprep.subr.bf16.mxu0 0
    %2423 = vmatpush1.bf16.msra.mxu0 0
    %2424 = vmatprep.subr.bf16.mxu0 0
    %2425 = vmatpush1.bf16.msra.mxu0 0
    %2426 = vmatprep.subr.bf16.mxu0 0
    %2427 = vmatpush1.bf16.msra.mxu0 0
    %2428 = vmatprep.subr.bf16.mxu0 0
    %2429 = vmatpush1.bf16.msra.mxu0 0
    %2430 = vmatprep.subr.bf16.mxu0 0
    %2431 = vmatpush1.bf16.msra.mxu0 0
    %2432 = vmatprep.subr.bf16.mxu0 0
    %2433 = vmatpush1.bf16.msra.mxu0 0
    %2434 = vmatprep.subr.bf16.mxu0 0
    %2435 = vmatpush1.bf16.msra.mxu0 0
    %2436 = vmatprep.subr.bf16.mxu0 0
    %2437 = vmatpush1.bf16.msra.mxu0 0
    %2438 = vmatprep.subr.bf16.mxu0 0
    %2439 = vmatpush1.bf16.msra.mxu0 0
    %2440 = vmatprep.mubr.bf16.mxu0 0
    %2441 = vmatmul.mubr.bf16.gmra.mrb[0].mxu0 %v2403
    %v2442 = vpop.f32.mrb[0].mxu0
    %v2443 = vadd.f32 0.0, %v2442
    %v2444 = vpop.f32.mrb[0].mxu0
    %v2445 = vpop.f32.mrb[0].mxu0
    %v2446 = vpop.f32.mrb[0].mxu0
    %2447 = vdwg.mxu0
    %2449 = vrot.lane.b32.xlu0 %v2443, 16
    %v2450 = vpop.permute.xlu0 %2449
    %2452 = vst.msk [vmem:[#allocation2 + $0x8] sm:$0xff] %vm796, %v2450
    %2453 = vrot.lane.b32.xlu0 %v2112, 104
    %v2454 = vpop.permute.xlu0 %2453
    %2455 = vrot.lane.b32.xlu0 %v2113, 104
    %v2456 = vpop.permute.xlu0 %2455
    %v2458 = vsel %vm453, %v2454, 0
    %v2461 = vsel %vm453, %v2456, 0
    %2463 = vmatprep.subr.bf16.mxu0 0
    %2464 = vmatpush1.bf16.xpose.msra.mxu0 %v2461
    %2465 = vmatprep.subr.bf16.mxu0 0
    %2466 = vmatpush1.bf16.xpose.msra.mxu0 0
    %2467 = vmatprep.subr.bf16.mxu0 0
    %2468 = vmatpush1.bf16.xpose.msra.mxu0 0
    %2469 = vmatprep.subr.bf16.mxu0 0
    %2470 = vmatpush1.bf16.xpose.msra.mxu0 0
    %2471 = vmatprep.subr.bf16.mxu0 0
    %2472 = vmatpush1.bf16.xpose.msra.mxu0 0
    %2473 = vmatprep.subr.bf16.mxu0 0
    %2474 = vmatpush1.bf16.xpose.msra.mxu0 0
    %2475 = vmatprep.subr.bf16.mxu0 0
    %2476 = vmatpush1.bf16.xpose.msra.mxu0 0
    %2477 = vmatprep.subr.bf16.mxu0 0
    %2478 = vmatpush1.bf16.xpose.msra.mxu0 0
    %2479 = vmatprep.subr.bf16.mxu0 0
    %2480 = vmatpush1.bf16.xpose.msra.mxu0 0
    %2481 = vmatprep.subr.bf16.mxu0 0
    %2482 = vmatpush1.bf16.xpose.msra.mxu0 0
    %2483 = vmatprep.subr.bf16.mxu0 0
    %2484 = vmatpush1.bf16.xpose.msra.mxu0 0
    %2485 = vmatprep.subr.bf16.mxu0 0
    %2486 = vmatpush1.bf16.xpose.msra.mxu0 0
    %2487 = vmatprep.subr.bf16.mxu0 0
    %2488 = vmatpush1.bf16.xpose.msra.mxu0 0
    %2489 = vmatprep.subr.bf16.mxu0 0
    %2490 = vmatpush1.bf16.xpose.msra.mxu0 0
    %2491 = vmatprep.subr.bf16.mxu0 0
    %2492 = vmatpush1.bf16.xpose.msra.mxu0 0
    %2493 = vmatprep.subr.bf16.mxu0 0
    %2494 = vmatpush1.bf16.xpose.msra.mxu0 0
    %2495 = vmatprep.mubr.bf16.mxu0 0
    %2496 = vmatmul.mubr.bf16.gmra.mrb[0].mxu0 %v2458
    %v2497 = vpop.f32.mrb[0].mxu0
    %v2498 = vadd.f32 0.0, %v2497
    %v2499 = vpop.f32.mrb[0].mxu0
    %v2500 = vpop.f32.mrb[0].mxu0
    %v2501 = vpop.f32.mrb[0].mxu0
    %2502 = vdwg.mxu0
    %v2503 = vmul.f32 %v2498, 0.35355338
    %v2504 = vsel %vm453, %v2503, -inf
    %2505 = vmax.xlane.f32.xlu0 %v2504
    %v2506 = vpop.xlane.xlu0 %2505
    %v2507 = vsub.f32 %v2503, %v2506
    %v2508 = vmul.f32 %v2507, 1.442695
    %v2509 = vpow.pop %v2508
    %v2510 = vsel %vm453, %v2509, 0.0
    %2511 = vadd.xlane.f32.xlu0 %v2510
    %v2512 = vpop.xlane.xlu0 %2511
    %v2513 = vrcp.pop %v2512
    %v2514 = vmul.f32 %v2509, %v2513
    %v2515 = vpack.c.bf16 %v2514, %v2514
    %2516 = vrot.lane.b32.xlu0 %v2173, 104
    %v2517 = vpop.permute.xlu0 %2516
    %v2519 = vsel %vm453, %v2515, 0
    %v2522 = vsel %vm516, %v2517, 0
    %2524 = vmatprep.subr.bf16.mxu0 0
    %2525 = vmatpush1.bf16.msra.mxu0 %v2522
    %2526 = vmatprep.subr.bf16.mxu0 0
    %2527 = vmatpush1.bf16.msra.mxu0 0
    %2528 = vmatprep.subr.bf16.mxu0 0
    %2529 = vmatpush1.bf16.msra.mxu0 0
    %2530 = vmatprep.subr.bf16.mxu0 0
    %2531 = vmatpush1.bf16.msra.mxu0 0
    %2532 = vmatprep.subr.bf16.mxu0 0
    %2533 = vmatpush1.bf16.msra.mxu0 0
    %2534 = vmatprep.subr.bf16.mxu0 0
    %2535 = vmatpush1.bf16.msra.mxu0 0
    %2536 = vmatprep.subr.bf16.mxu0 0
    %2537 = vmatpush1.bf16.msra.mxu0 0
    %2538 = vmatprep.subr.bf16.mxu0 0
    %2539 = vmatpush1.bf16.msra.mxu0 0
    %2540 = vmatprep.subr.bf16.mxu0 0
    %2541 = vmatpush1.bf16.msra.mxu0 0
    %2542 = vmatprep.subr.bf16.mxu0 0
    %2543 = vmatpush1.bf16.msra.mxu0 0
    %2544 = vmatprep.subr.bf16.mxu0 0
    %2545 = vmatpush1.bf16.msra.mxu0 0
    %2546 = vmatprep.subr.bf16.mxu0 0
    %2547 = vmatpush1.bf16.msra.mxu0 0
    %2548 = vmatprep.subr.bf16.mxu0 0
    %2549 = vmatpush1.bf16.msra.mxu0 0
    %2550 = vmatprep.subr.bf16.mxu0 0
    %2551 = vmatpush1.bf16.msra.mxu0 0
    %2552 = vmatprep.subr.bf16.mxu0 0
    %2553 = vmatpush1.bf16.msra.mxu0 0
    %2554 = vmatprep.subr.bf16.mxu0 0
    %2555 = vmatpush1.bf16.msra.mxu0 0
    %2556 = vmatprep.mubr.bf16.mxu0 0
    %2557 = vmatmul.mubr.bf16.gmra.mrb[0].mxu0 %v2519
    %v2558 = vpop.f32.mrb[0].mxu0
    %v2559 = vadd.f32 0.0, %v2558
    %v2560 = vpop.f32.mrb[0].mxu0
    %v2561 = vpop.f32.mrb[0].mxu0
    %v2562 = vpop.f32.mrb[0].mxu0
    %2563 = vdwg.mxu0
    %2565 = vrot.lane.b32.xlu0 %v2559, 24
    %v2566 = vpop.permute.xlu0 %2565
    %2568 = vst.msk [vmem:[#allocation2 + $0x8] sm:$0xff] %vm913, %v2566
    %v2569 = vld [vmem:[#allocation2] sm:$0xff]
    %v2570 = vld [vmem:[#allocation2 + $0x8] sm:$0xff]
    %v2571 = vpack.c.bf16 %v2570, %v2569
    %v2572 = vld [vmem:[#allocation18] sm:$0xf]
    %v2573 = vld [vmem:[#allocation18 + $0x4] sm:$0xf]
    %v2574 = vld [vmem:[#allocation18 + $0x8] sm:$0xf]
    %v2575 = vld [vmem:[#allocation18 + $0xc] sm:$0xf]
    %v2576 = vlaneseq
    %v2577 = vshrl.u32 %v2576, 7
    %v2578 = vsub.s32 0, %v2577
    %v2579 = vrot.slane %v1460, %v2578
    %v2584 = vunpack.c.l.b16 %v2572
    %v2585 = vunpack.c.l.b16 %v2573
    %v2586 = vunpack.c.l.b16 %v2574
    %v2587 = vunpack.c.l.b16 %v2575
    %v2588 = vpack.c.b16 %v2585, %v2584
    %v2589 = vpack.c.b16 %v2587, %v2586
    %v2593 = vsel %vm243, %v2571, 0
    %2595 = vmatprep.subr.bf16.mxu0 0
    %2596 = vmatpush1.bf16.msra.mxu0 %v2588
    %2597 = vmatprep.subr.bf16.mxu0 0
    %2598 = vmatpush1.bf16.msra.mxu0 %v2589
    %2599 = vmatprep.subr.bf16.mxu0 0
    %2600 = vmatpush1.bf16.msra.mxu0 0
    %2601 = vmatprep.subr.bf16.mxu0 0
    %2602 = vmatpush1.bf16.msra.mxu0 0
    %2603 = vmatprep.subr.bf16.mxu0 0
    %2604 = vmatpush1.bf16.msra.mxu0 0
    %2605 = vmatprep.subr.bf16.mxu0 0
    %2606 = vmatpush1.bf16.msra.mxu0 0
    %2607 = vmatprep.subr.bf16.mxu0 0
    %2608 = vmatpush1.bf16.msra.mxu0 0
    %2609 = vmatprep.subr.bf16.mxu0 0
    %2610 = vmatpush1.bf16.msra.mxu0 0
    %2611 = vmatprep.subr.bf16.mxu0 0
    %2612 = vmatpush1.bf16.msra.mxu0 0
    %2613 = vmatprep.subr.bf16.mxu0 0
    %2614 = vmatpush1.bf16.msra.mxu0 0
    %2615 = vmatprep.subr.bf16.mxu0 0
    %2616 = vmatpush1.bf16.msra.mxu0 0
    %2617 = vmatprep.subr.bf16.mxu0 0
    %2618 = vmatpush1.bf16.msra.mxu0 0
    %2619 = vmatprep.subr.bf16.mxu0 0
    %2620 = vmatpush1.bf16.msra.mxu0 0
    %2621 = vmatprep.subr.bf16.mxu0 0
    %2622 = vmatpush1.bf16.msra.mxu0 0
    %2623 = vmatprep.subr.bf16.mxu0 0
    %2624 = vmatpush1.bf16.msra.mxu0 0
    %2625 = vmatprep.subr.bf16.mxu0 0
    %2626 = vmatpush1.bf16.msra.mxu0 0
    %2627 = vmatprep.mubr.bf16.mxu0 0
    %2628 = vmatmul.mubr.bf16.gmra.mrb[0].mxu0 %v2593
    %v2629 = vpop.f32.mrb[0].mxu0
    %v2630 = vadd.f32 %v2579, %v2629
    %v2631 = vpop.f32.mrb[0].mxu0
    %v2632 = vpop.f32.mrb[0].mxu0
    %v2633 = vadd.f32 %v2579, %v2632
    %v2634 = vpop.f32.mrb[0].mxu0
    %2635 = vdwg.mxu0
    %v2636 = vadd.f32 %v1439, %v2630
    %v2637 = vadd.f32 %v1440, %v2633
    %v2638 = vmul.f32 %v2636, %v2636
    %v2639 = vmul.f32 %v2637, %v2637
    %v2640 = vsel %vm243, %v2638, 0.0
    %2641 = vadd.xlane.f32.xlu0 %v2640
    %v2642 = vpop.xlane.xlu0 %2641
    %v2643 = vsel %vm243, %v2639, 0.0
    %2644 = vadd.xlane.f32.xlu0 %v2643
    %v2645 = vpop.xlane.xlu0 %2644
    %v2646 = vmul.f32 %v2642, %v250
    %v2647 = vmul.f32 %v2645, %v250
    %v2648 = vadd.f32 %v2646, 1.1920929e-07
    %v2649 = vadd.f32 %v2647, 1.1920929e-07
    %v2650 = vrsqrt.pop %v2648
    %v2651 = vrsqrt.pop %v2649
    %v2652 = vmul.f32 %v2636, %v2650
    %v2653 = vmul.f32 %v2637, %v2651
    %v2654 = vld [vmem:[#allocation24] sm:$0x1]
    %v2655 = vld [vmem:[#allocation23 + $0x8] sm:$0x1]
    %v2656 = vpack.c.bf16 %v2653, %v2652
    %v2657 = vld [vmem:[#allocation20] sm:$0xf]
    %v2658 = vld [vmem:[#allocation20 + $0x4] sm:$0xf]
    %v2659 = vld [vmem:[#allocation20 + $0x8] sm:$0xf]
    %v2660 = vld [vmem:[#allocation20 + $0xc] sm:$0xf]
    %v2662 = vlaneseq
    %v2663 = vshrl.u32 %v2662, 7
    %v2664 = vsub.s32 0, %v2663
    %v2665 = vrot.slane %v2654, %v2664
    %v2671 = vunpack.c.l.b16 %v2657
    %v2672 = vunpack.c.l.b16 %v2658
    %v2673 = vunpack.c.l.b16 %v2659
    %v2674 = vunpack.c.l.b16 %v2660
    %v2675 = vpack.c.b16 %v2672, %v2671
    %v2676 = vpack.c.b16 %v2674, %v2673
    %v2680 = vsel %vm243, %v2656, 0
    %2682 = vmatprep.subr.bf16.mxu0 0
    %2683 = vmatpush1.bf16.msra.mxu0 %v2675
    %2684 = vmatprep.subr.bf16.mxu0 0
    %2685 = vmatpush1.bf16.msra.mxu0 %v2676
    %2686 = vmatprep.subr.bf16.mxu0 0
    %2687 = vmatpush1.bf16.msra.mxu0 0
    %2688 = vmatprep.subr.bf16.mxu0 0
    %2689 = vmatpush1.bf16.msra.mxu0 0
    %2690 = vmatprep.subr.bf16.mxu0 0
    %2691 = vmatpush1.bf16.msra.mxu0 0
    %2692 = vmatprep.subr.bf16.mxu0 0
    %2693 = vmatpush1.bf16.msra.mxu0 0
    %2694 = vmatprep.subr.bf16.mxu0 0
    %2695 = vmatpush1.bf16.msra.mxu0 0
    %2696 = vmatprep.subr.bf16.mxu0 0
    %2697 = vmatpush1.bf16.msra.mxu0 0
    %2698 = vmatprep.subr.bf16.mxu0 0
    %2699 = vmatpush1.bf16.msra.mxu0 0
    %2700 = vmatprep.subr.bf16.mxu0 0
    %2701 = vmatpush1.bf16.msra.mxu0 0
    %2702 = vmatprep.subr.bf16.mxu0 0
    %2703 = vmatpush1.bf16.msra.mxu0 0
    %2704 = vmatprep.subr.bf16.mxu0 0
    %2705 = vmatpush1.bf16.msra.mxu0 0
    %2706 = vmatprep.subr.bf16.mxu0 0
    %2707 = vmatpush1.bf16.msra.mxu0 0
    %2708 = vmatprep.subr.bf16.mxu0 0
    %2709 = vmatpush1.bf16.msra.mxu0 0
    %2710 = vmatprep.subr.bf16.mxu0 0
    %2711 = vmatpush1.bf16.msra.mxu0 0
    %2712 = vmatprep.subr.bf16.mxu0 0
    %2713 = vmatpush1.bf16.msra.mxu0 0
    %2714 = vmatprep.mubr.bf16.mxu0 0
    %2715 = vmatmul.mubr.bf16.gmra.mrb[0].mxu0 %v2680
    %v2716 = vpop.f32.mrb[0].mxu0
    %v2717 = vadd.f32 %v2665, %v2716
    %v2718 = vpop.f32.mrb[0].mxu0
    %v2719 = vpop.f32.mrb[0].mxu0
    %v2720 = vadd.f32 %v2665, %v2719
    %v2721 = vpop.f32.mrb[0].mxu0
    %2722 = vdwg.mxu0
    %v2723 = vxor.u32 %v2717, 2147483648
    %v2724 = vxor.u32 %v2720, 2147483648
    %v2725 = vmul.f32 %v2723, 1.442695
    %v2726 = vpow.pop %v2725
    %v2727 = vmul.f32 %v2724, 1.442695
    %v2728 = vpow.pop %v2727
    %v2729 = vadd.f32 %v2726, 1.0
    %v2730 = vadd.f32 %v2728, 1.0
    %v2731 = vrcp.pop %v2729
    %v2732 = vmul.f32 1.0, %v2731
    %v2733 = vrcp.pop %v2730
    %v2734 = vmul.f32 1.0, %v2733
    %v2735 = vmul.f32 %v2717, %v2732
    %v2736 = vmul.f32 %v2720, %v2734
    %v2737 = vpack.c.bf16 %v2736, %v2735
    %v2738 = vld [vmem:[#allocation21] sm:$0xf]
    %v2739 = vld [vmem:[#allocation21 + $0x4] sm:$0xf]
    %v2740 = vld [vmem:[#allocation21 + $0x8] sm:$0xf]
    %v2741 = vld [vmem:[#allocation21 + $0xc] sm:$0xf]
    %v2742 = vld [vmem:[#allocation21 + $0x10] sm:$0xf]
    %v2743 = vld [vmem:[#allocation21 + $0x14] sm:$0xf]
    %v2744 = vld [vmem:[#allocation21 + $0x18] sm:$0xf]
    %v2745 = vld [vmem:[#allocation21 + $0x1c] sm:$0xf]
    %v2746 = vld [vmem:[#allocation21 + $0x20] sm:$0xf]
    %v2747 = vld [vmem:[#allocation21 + $0x24] sm:$0xf]
    %v2748 = vld [vmem:[#allocation21 + $0x28] sm:$0xf]
    %v2749 = vld [vmem:[#allocation21 + $0x2c] sm:$0xf]
    %v2750 = vld [vmem:[#allocation21 + $0x30] sm:$0xf]
    %v2751 = vld [vmem:[#allocation21 + $0x34] sm:$0xf]
    %v2752 = vld [vmem:[#allocation21 + $0x38] sm:$0xf]
    %v2753 = vld [vmem:[#allocation21 + $0x3c] sm:$0xf]
    %v2754 = vlaneseq
    %v2755 = vshrl.u32 %v2754, 7
    %v2756 = vsub.s32 0, %v2755
    %v2757 = vrot.slane %v2655, %v2756
    %v2774 = vunpack.c.l.b16 %v2738
    %v2775 = vunpack.c.l.b16 %v2739
    %v2776 = vunpack.c.l.b16 %v2740
    %v2777 = vunpack.c.l.b16 %v2741
    %v2778 = vunpack.c.l.b16 %v2742
    %v2779 = vunpack.c.l.b16 %v2743
    %v2780 = vunpack.c.l.b16 %v2744
    %v2781 = vunpack.c.l.b16 %v2745
    %v2782 = vunpack.c.l.b16 %v2746
    %v2783 = vunpack.c.l.b16 %v2747
    %v2784 = vunpack.c.l.b16 %v2748
    %v2785 = vunpack.c.l.b16 %v2749
    %v2786 = vunpack.c.l.b16 %v2750
    %v2787 = vunpack.c.l.b16 %v2751
    %v2788 = vunpack.c.l.b16 %v2752
    %v2789 = vunpack.c.l.b16 %v2753
    %v2790 = vpack.c.b16 %v2775, %v2774
    %v2791 = vpack.c.b16 %v2777, %v2776
    %v2792 = vpack.c.b16 %v2779, %v2778
    %v2793 = vpack.c.b16 %v2781, %v2780
    %v2794 = vpack.c.b16 %v2783, %v2782
    %v2795 = vpack.c.b16 %v2785, %v2784
    %v2796 = vpack.c.b16 %v2787, %v2786
    %v2797 = vpack.c.b16 %v2789, %v2788
    %2806 = vmatprep.subr.bf16.mxu0 0
    %2807 = vmatpush1.bf16.msra.mxu0 %v2790
    %2808 = vmatprep.subr.bf16.mxu0 0
    %2809 = vmatpush1.bf16.msra.mxu0 %v2791
    %2810 = vmatprep.subr.bf16.mxu0 0
    %2811 = vmatpush1.bf16.msra.mxu0 %v2792
    %2812 = vmatprep.subr.bf16.mxu0 0
    %2813 = vmatpush1.bf16.msra.mxu0 %v2793
    %2814 = vmatprep.subr.bf16.mxu0 0
    %2815 = vmatpush1.bf16.msra.mxu0 %v2794
    %2816 = vmatprep.subr.bf16.mxu0 0
    %2817 = vmatpush1.bf16.msra.mxu0 %v2795
    %2818 = vmatprep.subr.bf16.mxu0 0
    %2819 = vmatpush1.bf16.msra.mxu0 %v2796
    %2820 = vmatprep.subr.bf16.mxu0 0
    %2821 = vmatpush1.bf16.msra.mxu0 %v2797
    %2822 = vmatprep.subr.bf16.mxu0 0
    %2823 = vmatpush1.bf16.msra.mxu0 0
    %2824 = vmatprep.subr.bf16.mxu0 0
    %2825 = vmatpush1.bf16.msra.mxu0 0
    %2826 = vmatprep.subr.bf16.mxu0 0
    %2827 = vmatpush1.bf16.msra.mxu0 0
    %2828 = vmatprep.subr.bf16.mxu0 0
    %2829 = vmatpush1.bf16.msra.mxu0 0
    %2830 = vmatprep.subr.bf16.mxu0 0
    %2831 = vmatpush1.bf16.msra.mxu0 0
    %2832 = vmatprep.subr.bf16.mxu0 0
    %2833 = vmatpush1.bf16.msra.mxu0 0
    %2834 = vmatprep.subr.bf16.mxu0 0
    %2835 = vmatpush1.bf16.msra.mxu0 0
    %2836 = vmatprep.subr.bf16.mxu0 0
    %2837 = vmatpush1.bf16.msra.mxu0 0
    %2838 = vmatprep.mubr.bf16.mxu0 0
    %2839 = vmatmul.mubr.bf16.gmra.mrb[0].mxu0 %v2737
    %v2840 = vpop.f32.mrb[0].mxu0
    %v2841 = vadd.f32 %v2757, %v2840
    %v2842 = vpop.f32.mrb[0].mxu0
    %v2843 = vpop.f32.mrb[0].mxu0
    %v2844 = vadd.f32 %v2757, %v2843
    %v2845 = vpop.f32.mrb[0].mxu0
    %2846 = vdwg.mxu0
    %v2847 = vadd.f32 %v2636, %v2841
    %v2848 = vadd.f32 %v2637, %v2844
    %2849 = vst.msk [vmem:[#allocation26] sm:$0xff] %vm243, %v2847
    %2850 = vst.msk [vmem:[#allocation26 + $0x8] sm:$0xff] %vm243, %v2848
    // Predicated region
    $region114: #{tpu_custom_call.1} parent=1 // pred_check
      _
    $region115: #{tpu_custom_call.1} parent=1 // pred_check_branch
      %2852 = sbr.rel (0) target = $region117
    $region116: #{tpu_custom_call.1} parent=1 // pred_region
      %s2854 = ssub.s32 256, 256
      %2855 = vsyncadd [#allocation5], %s2854
      %s2856 = sshll.u32 [#allocation26], 4
      %s2857 = int_to_ptr.vmem [resolvable:$true] %s2856
      %2862 = dma.vmem_to_hbm [thread:$0]  %s2857, 256, %s14, [#allocation5], 128, 128, 8
    $region117: #{tpu_custom_call.1} parent=1 // pred_fallthru
      _
    // Predicated region
    $region118: #{tpu_custom_call.1} parent=1 // pred_check
      _
    $region119: #{tpu_custom_call.1} parent=1 // pred_check_branch
      %2864 = sbr.rel (0) target = $region121
    $region120: #{tpu_custom_call.1} parent=1 // pred_region
      %2865 = dma.done [#allocation5], 256
    $region121: #{tpu_custom_call.1} parent=1 // pred_fallthru
      _
    %2866 = vsyncpa [#allocation4], 1
    %2867 = vsyncpa [#allocation7], 1
    %2868 = vsyncpa [#allocation10], 1
    %2869 = vsyncpa [#allocation13], 1
    %2870 = vsyncpa [#allocation16], 1
    %2871 = vsyncpa [#allocation19], 1
    %2872 = vsyncpa [#allocation22], 1
    %2873 = vsyncpa [#allocation25], 1
    %2874 = vsyncpa [#allocation5], 1

</llo_original>
